<compile_context>
chip_gen: v5e
topology: v5e:2x2
jax: 0.10.0
libtpu: 0.0.40
codegen_flags: <defaults>
</compile_context>

<pallas_src>
import functools

import jax
import jax.numpy as jnp
import numpy as np
from jax.experimental import pallas as pl
from jax.experimental.pallas import tpu as pltpu

LANE = 128                         # TPU lane width; latent dims padded to this
_VMEM_LIMIT = 32 * 1024 * 1024     # safe on v5e/v6e (128 MiB) and v7x (64 MiB)


def _round_up(a, b):
    return (a + b - 1) // b * b


# ------------------------- fused encoder kernel ----------------------------- #
# Per image: conv3x3(+bias,+ReLU) -> FC -> params; then z = mu + (min_std+softplus)*eps.
def _encoder_kernel(x_ref, wconv_ref, bconv_ref, wfc_ref, bfc_ref, eps_ref,
                    params_ref, z_ref, *, H, W, size, min_std):
    Wp = W + 2
    HWs = H * Wp
    x = x_ref[0].astype(jnp.float32)                       # (CP, PADLEN)
    # in-VMEM im2col: 9 static lane-shifted slices stacked along sublanes
    taps = [x[:, kh * Wp + kw: kh * Wp + kw + HWs]
            for kh in range(3) for kw in range(3)]
    im2col = jnp.concatenate(taps, axis=0).astype(jnp.bfloat16)   # (9*CP, HWs)
    h = jnp.dot(wconv_ref[...], im2col,
                preferred_element_type=jnp.float32)               # (size, HWs)
    h = jnp.maximum(h + bconv_ref[...], 0.0)

    # FC: params = sum_c h[c,:] @ Wfc[c]  (Wfc already in skewed-position layout with
    # zero columns at the junk positions, so no masking is needed).
    acc = jnp.zeros((1, 2 * LANE), jnp.float32)
    for c in range(size):
        acc = acc + jnp.dot(h[c:c + 1, :].astype(jnp.bfloat16), wfc_ref[c],
                            preferred_element_type=jnp.float32)
    out = acc + bfc_ref[...]                                      # (1, 2*LANE)
    params_ref[0] = out.astype(params_ref.dtype)

    # fused reparameterization epilogue (EUP work rides for free)
    mu = out[:, :LANE]
    log_std = out[:, LANE:]
    softplus = jnp.log1p(jnp.exp(-jnp.abs(log_std))) + jnp.maximum(log_std, 0.0)
    std = min_std + softplus
    z_ref[0] = (mu + std * eps_ref[0]).astype(z_ref.dtype)        # (Ksamp, LANE)


# ------------------------- fused decoder kernel ----------------------------- #
# Per sample: FC(+bias,+ReLU) directly into padded-skewed layout -> conv3x3(+bias).
def _decoder_kernel(z_ref, wfc_ref, bfc_ref, wconv_ref, bconv_ref, o_ref,
                    *, H, W, size):
    Wp = W + 2
    HWs = H * Wp
    zb = z_ref[0].astype(jnp.bfloat16)                            # (1, LANE)
    # FC: one row per feature channel, already placed on the zero-padded (H+2)x(W+2)
    # grid (padding ring has zero weights/bias -> exactly 0 after ReLU).
    rows = []
    for c in range(size):
        r = jnp.dot(zb, wfc_ref[c], preferred_element_type=jnp.float32)  # (1, PADLEN)
        rows.append(jnp.maximum(r + bfc_ref[c:c + 1, :], 0.0))
    hdec = jnp.concatenate(rows, axis=0)                          # (size, PADLEN) f32

    taps = [hdec[:, kh * Wp + kw: kh * Wp + kw + HWs]
            for kh in range(3) for kw in range(3)]
    im2col = jnp.concatenate(taps, axis=0).astype(jnp.bfloat16)   # (9*size, HWs)
    out = jnp.dot(wconv_ref[...], im2col,
                  preferred_element_type=jnp.float32)             # (COP, HWs)
    o_ref[0] = (out + bconv_ref[...]).astype(o_ref.dtype)


# ------------------------------ pallas_call wrappers ------------------------- #

def _encode_call(xp, p, eps_nk, *, H, W, size, min_std):
    N, CP, PADLEN = xp.shape
    Ksamp = eps_nk.shape[1]
    Wp = W + 2
    HWs = H * Wp
    return pl.pallas_call(
        functools.partial(_encoder_kernel, H=H, W=W, size=size, min_std=min_std),
        out_shape=(jax.ShapeDtypeStruct((N, 1, 2 * LANE), jnp.float32),
                   jax.ShapeDtypeStruct((N, Ksamp, LANE), jnp.float32)),
        grid=(N,),
        in_specs=[pl.BlockSpec((1, CP, PADLEN), lambda i: (i, 0, 0)),
                  pl.BlockSpec((size, 9 * CP), lambda i: (0, 0)),
                  pl.BlockSpec((size, 1), lambda i: (0, 0)),
                  pl.BlockSpec((size, HWs, 2 * LANE), lambda i: (0, 0, 0)),
                  pl.BlockSpec((1, 2 * LANE), lambda i: (0, 0)),
                  pl.BlockSpec((1, Ksamp, LANE), lambda i: (i, 0, 0))],
        out_specs=(pl.BlockSpec((1, 1, 2 * LANE), lambda i: (i, 0, 0)),
                   pl.BlockSpec((1, Ksamp, LANE), lambda i: (i, 0, 0))),
        compiler_params=pltpu.CompilerParams(
            dimension_semantics=("parallel",),
            vmem_limit_bytes=_VMEM_LIMIT),
    )(xp, p["w_enc_conv_t"], p["b_enc_conv_col"], p["w_enc_fc_k"],
      p["b_enc_fc"], eps_nk)


def _decode_call(z2, p, *, H, W, size):
    M2 = z2.shape[0]
    Wp = W + 2
    HWs = H * Wp
    COP = p["w_dec_conv_t"].shape[0]
    PADLEN = p["w_dec_fc_k"].shape[-1]
    return pl.pallas_call(
        functools.partial(_decoder_kernel, H=H, W=W, size=size),
        out_shape=jax.ShapeDtypeStruct((M2, COP, HWs), jnp.float32),
        grid=(M2,),
        in_specs=[pl.BlockSpec((1, 1, LANE), lambda i: (i, 0, 0)),
                  pl.BlockSpec((size, LANE, PADLEN), lambda i: (0, 0, 0)),
                  pl.BlockSpec((size, PADLEN), lambda i: (0, 0)),
                  pl.BlockSpec((COP, 9 * size), lambda i: (0, 0)),
                  pl.BlockSpec((COP, 1), lambda i: (0, 0))],
        out_specs=pl.BlockSpec((1, COP, HWs), lambda i: (i, 0, 0)),
        compiler_params=pltpu.CompilerParams(
            dimension_semantics=("parallel",),
            vmem_limit_bytes=_VMEM_LIMIT),
    )(z2, p["w_dec_fc_k"], p["b_dec_fc_k"], p["w_dec_conv_t"], p["b_dec_conv_col"])


# -------------------------------- forward ----------------------------------- #

def vae_forward(x_nchw, eps, p, *, latent_dim, min_std, size):
    """Mirrors VAE.forward(input, K): returns (decode(z) [K*N,C,H,W], params [N,2*latent])."""
    N, C, H, W = x_nchw.shape
    Ksamp = eps.shape[0]
    Wp = W + 2
    CP = p["w_enc_conv_t"].shape[1] // 9
    PADLEN = p["w_dec_fc_k"].shape[-1]

    # Encoder input: NCHW -> channels on sublanes (zero-padded to CP), zero-padded
    # (H+2)x(W+2) ring flattened onto lanes, bf16 (half the DMA of f32).
    xp = jnp.pad(x_nchw.astype(jnp.bfloat16),
                 ((0, 0), (0, CP - C), (1, 1), (1, 1))).reshape(N, CP, (H + 2) * Wp)
    xp = jnp.pad(xp, ((0, 0), (0, 0), (0, PADLEN - (H + 2) * Wp)))

    # eps latent lanes zero-padded to 128 (invariant: padded lanes stay exactly 0).
    eps_pad = jnp.pad(eps.astype(jnp.float32),
                      ((0, 0), (0, 0), (0, LANE - latent_dim)))
    eps_nk = jnp.transpose(eps_pad, (1, 0, 2))                      # (N, K, LANE)

    params3, z_nk = _encode_call(xp, p, eps_nk, H=H, W=W, size=size, min_std=min_std)
    params_pad = params3[:, 0, :]
    params = jnp.concatenate([params_pad[:, :latent_dim],
                              params_pad[:, LANE:LANE + latent_dim]], axis=1)

    z2 = jnp.transpose(z_nk, (1, 0, 2)).reshape(Ksamp * N, 1, LANE)  # K-major order
    out_skew = _decode_call(z2, p, H=H, W=W, size=size)              # (K*N, COP, H*Wp)
    COP = out_skew.shape[1]
    recon = out_skew.reshape(Ksamp * N, COP, H, Wp)[:, :C, :, :W]
    return recon, params


# --------------------------- parameter preparation --------------------------- #

def prepare_params(lw, *, latent_dim, H, W):
    """Pad/relayout the logical f32 weights into lane-dense, skew-aware bf16 layouts."""
    size = lw["w_enc_conv"].shape[-1]
    C_in = lw["w_enc_conv"].shape[1]
    C_out = lw["w_dec_conv"].shape[-1]
    Wp = W + 2
    HWs = H * Wp
    PADLEN = _round_up((H + 2) * Wp + 2, 128)
    CP = _round_up(C_in, 8)
    COP = _round_up(C_out, 8)
    lat = latent_dim
    assert lat <= LANE and C_in <= CP and C_out <= COP

    p = {}
    # encoder conv weight: (size, 9*CP), col index = tap*CP + cin (zero-padded cin)
    w = jnp.zeros((9, CP, size), jnp.float32).at[:, :C_in, :].set(lw["w_enc_conv"])
    p["w_enc_conv_t"] = jnp.transpose(w.reshape(9 * CP, size)).astype(jnp.bfloat16)
    p["b_enc_conv_col"] = lw["b_enc_conv"].astype(jnp.float32).reshape(size, 1)

    # encoder FC weight: (size, H*Wp, 2*LANE) — skewed positions, junk columns zeroed,
    # mu in lanes [0,LANE), log_std in lanes [LANE, 2*LANE).
    wfc4 = jnp.transpose(lw["w_enc_fc"].reshape(H, W, size, 2 * lat), (2, 0, 1, 3))
    buf = jnp.zeros((size, H, Wp, 2 * LANE), jnp.float32)
    buf = buf.at[:, :, :W, :lat].set(wfc4[..., :lat])
    buf = buf.at[:, :, :W, LANE:LANE + lat].set(wfc4[..., lat:])
    p["w_enc_fc_k"] = buf.reshape(size, HWs, 2 * LANE).astype(jnp.bfloat16)
    bfc = jnp.zeros((1, 2 * LANE), jnp.float32)
    bfc = bfc.at[0, :lat].set(lw["b_enc_fc"][:lat])
    bfc = bfc.at[0, LANE:LANE + lat].set(lw["b_enc_fc"][lat:])
    p["b_enc_fc"] = bfc

    # decoder FC weight: (size, LANE, PADLEN) — latent on K rows (zero-padded to 128),
    # output placed directly on the zero-padded (H+2)x(W+2) grid (ring columns = 0).
    wd4 = jnp.transpose(lw["w_dec_fc"].reshape(lat, H, W, size), (3, 0, 1, 2))
    bufd = jnp.zeros((size, LANE, H + 2, Wp), jnp.float32)
    bufd = bufd.at[:, :lat, 1:H + 1, 1:W + 1].set(wd4)
    bufd = bufd.reshape(size, LANE, (H + 2) * Wp)
    p["w_dec_fc_k"] = jnp.pad(
        bufd, ((0, 0), (0, 0), (0, PADLEN - (H + 2) * Wp))).astype(jnp.bfloat16)
    bd3 = jnp.transpose(lw["b_dec_fc"].reshape(H, W, size), (2, 0, 1))
    bufb = jnp.zeros((size, H + 2, Wp), jnp.float32).at[:, 1:H + 1, 1:W + 1].set(bd3)
    p["b_dec_fc_k"] = jnp.pad(bufb.reshape(size, (H + 2) * Wp),
                              ((0, 0), (0, PADLEN - (H + 2) * Wp)))

    # decoder conv weight: (COP, 9*size), output channels on sublanes (zero-padded)
    wdc = jnp.zeros((9, size, COP), jnp.float32).at[:, :, :C_out].set(lw["w_dec_conv"])
    p["w_dec_conv_t"] = jnp.transpose(wdc.reshape(9 * size, COP)).astype(jnp.bfloat16)
    p["b_dec_conv_col"] = (jnp.zeros((COP,), jnp.float32)
                           .at[:C_out].set(lw["b_dec_conv"]).reshape(COP, 1))
    return p


# ------------------------------ pure-JAX reference --------------------------- #

def _ref_conv3x3(x_nhwc, w9, b, act):
    N, H, W, Cin = x_nhwc.shape
    Cout = w9.shape[-1]
    xp = jnp.pad(x_nhwc, ((0, 0), (1, 1), (1, 1), (0, 0)))
    cols = jnp.concatenate(
        [xp[:, dh:dh + H, dw:dw + W, :] for dh in range(3) for dw in range(3)],
        axis=-1).reshape(N * H * W, 9 * Cin)
    out = jnp.dot(cols.astype(jnp.bfloat16),
                  w9.reshape(9 * Cin, Cout).astype(jnp.bfloat16),
                  preferred_element_type=jnp.float32) + b.reshape(1, Cout)
    if act == "relu":
        out = jnp.maximum(out, 0.0)
    return out.reshape(N, H, W, Cout)


def reference_forward(x_nchw, eps, lw, *, latent_dim, min_std):
    N, C, H, W = x_nchw.shape
    Ksamp = eps.shape[0]
    size = lw["w_enc_conv"].shape[-1]
    x = jnp.transpose(x_nchw, (0, 2, 3, 1))
    h = _ref_conv3x3(x, lw["w_enc_conv"], lw["b_enc_conv"], "relu")
    params = jnp.dot(h.reshape(N, H * W * size).astype(jnp.bfloat16),
                     lw["w_enc_fc"].astype(jnp.bfloat16),
                     preferred_element_type=jnp.float32) + lw["b_enc_fc"]
    mu = params[:, :latent_dim]
    log_std = params[:, latent_dim:]
    std = min_std + jax.nn.softplus(log_std)
    z = mu[None] + std[None] * eps
    hd = jnp.dot(z.reshape(Ksamp * N, latent_dim).astype(jnp.bfloat16),
                 lw["w_dec_fc"].astype(jnp.bfloat16),
                 preferred_element_type=jnp.float32) + lw["b_dec_fc"]
    hd = jnp.maximum(hd, 0.0).reshape(Ksamp * N, H, W, size)
    out = _ref_conv3x3(hd, lw["w_dec_conv"], lw["b_dec_conv"], "none")
    return jnp.transpose(out, (0, 3, 1, 2)), params


# ----------------------------------- main ------------------------------------ #

if __name__ == "__main__":
    N, C, H, W = 2, 4, 16, 16          # [N x C x H x W] input
    size = 16                          # configs.model.size (hidden width)
    latent_dim = 8                     # configs.dist.latent_dim
    min_std = 0.01                     # configs.dist.min_std
    Ksamp = 1                          # forward default K=1

    key = jax.random.PRNGKey(0)
    keys = jax.random.split(key, 12)

    x = jax.random.normal(keys[0], (N, C, H, W), jnp.float32)
    eps = jax.random.normal(keys[1], (Ksamp, N, latent_dim), jnp.float32)

    # Logical (unpadded) synthetic weights; conv weights are [9(kh,kw), Cin, Cout].
    lw = {
        "w_enc_conv": 0.05 * jax.random.normal(keys[2], (9, C, size), jnp.float32),
        "b_enc_conv": 0.01 * jax.random.normal(keys[3], (size,), jnp.float32),
        "w_enc_fc":   0.02 * jax.random.normal(keys[4], (H * W * size, 2 * latent_dim), jnp.float32),
        "b_enc_fc":   0.01 * jax.random.normal(keys[5], (2 * latent_dim,), jnp.float32),
        "w_dec_fc":   0.05 * jax.random.normal(keys[6], (latent_dim, H * W * size), jnp.float32),
        "b_dec_fc":   0.01 * jax.random.normal(keys[7], (H * W * size,), jnp.float32),
        "w_dec_conv": 0.05 * jax.random.normal(keys[8], (9, size, C), jnp.float32),
        "b_dec_conv": 0.01 * jax.random.normal(keys[9], (C,), jnp.float32),
    }
    p = prepare_params(lw, latent_dim=latent_dim, H=H, W=W)

    fwd = jax.jit(functools.partial(vae_forward, latent_dim=latent_dim,
                                    min_std=min_std, size=size))
    recon, enc_params = fwd(x, eps, p)
    jax.block_until_ready((recon, enc_params))

    assert recon.shape == (Ksamp * N, C, H, W), recon.shape
    assert enc_params.shape == (N, 2 * latent_dim), enc_params.shape
    assert recon.dtype == jnp.float32 and enc_params.dtype == jnp.float32

    # Numerical check against a pure-JAX (bf16-matmul) reference.
    ref = jax.jit(functools.partial(reference_forward, latent_dim=latent_dim,
                                    min_std=min_std))
    recon_ref, params_ref = ref(x, eps, lw)
    jax.block_until_ready((recon_ref, params_ref))
    np.testing.assert_allclose(np.asarray(enc_params), np.asarray(params_ref),
                               rtol=2e-2, atol=2e-3)
    np.testing.assert_allclose(np.asarray(recon), np.asarray(recon_ref),
                               rtol=2e-2, atol=2e-3)

    print("KERNEL_OK")
</pallas_src>

<mosaic_0001>
module attributes {stable_mosaic.version = 11 : i64} {
  func.func @_decoder_kernel(%arg0: i32, %arg1: memref<1x1x128xf32, #tpu.memory_space<vmem>>, %arg2: memref<16x128x384xbf16, #tpu.memory_space<vmem>>, %arg3: memref<16x384xf32, #tpu.memory_space<vmem>>, %arg4: memref<8x144xbf16, #tpu.memory_space<vmem>>, %arg5: memref<8x1xf32, #tpu.memory_space<vmem>>, %arg6: memref<1x8x288xf32, #tpu.memory_space<vmem>>) attributes {dimension_semantics = [#tpu.dimension_semantics<parallel>], iteration_bounds = array<i64: 2>, scalar_prefetch = 0 : i64, scratch_operands = 0 : i64, tpu.core_type = #tpu.core_type<tc>, window_params = [{transform_indices = @transform_0, window_bounds = array<i64: 1, 1, 128>}, {pipeline_mode = #tpu.pipeline_mode<synchronous>, transform_indices = @transform_1, window_bounds = array<i64: 16, 128, 384>}, {pipeline_mode = #tpu.pipeline_mode<synchronous>, transform_indices = @transform_2, window_bounds = array<i64: 16, 384>}, {pipeline_mode = #tpu.pipeline_mode<synchronous>, transform_indices = @transform_3, window_bounds = array<i64: 8, 144>}, {pipeline_mode = #tpu.pipeline_mode<synchronous>, transform_indices = @transform_4, window_bounds = array<i64: 8, 1>}, {transform_indices = @transform_5, window_bounds = array<i64: 1, 8, 288>}]} {
    %c0 = arith.constant 0 : index
    %c0_0 = arith.constant 0 : index
    %c0_1 = arith.constant 0 : index
    %0 = vector.load %arg1[%c0, %c0_0, %c0_1] : memref<1x1x128xf32, #tpu.memory_space<vmem>>, vector<1x1x128xf32>
    %1 = vector.shape_cast %0 : vector<1x1x128xf32> to vector<1x128xf32>
    %2 = arith.truncf %1 : vector<1x128xf32> to vector<1x128xbf16>
    %c0_2 = arith.constant 0 : index
    %c0_3 = arith.constant 0 : index
    %c0_4 = arith.constant 0 : index
    %3 = vector.load %arg2[%c0_2, %c0_3, %c0_4] : memref<16x128x384xbf16, #tpu.memory_space<vmem>>, vector<1x128x384xbf16>
    %4 = vector.shape_cast %3 : vector<1x128x384xbf16> to vector<128x384xbf16>
    %cst = arith.constant dense<0.000000e+00> : vector<1x384xf32>
    %5 = tpu.matmul %2, %4, %cst {dimension_numbers = #tpu.dot_dimension_numbers<[1], [0], [0], [1], [0, 0, 1, 1], [], []>} : vector<1x128xbf16>, vector<128x384xbf16>, vector<1x384xf32> -> vector<1x384xf32>
    %c0_5 = arith.constant 0 : index
    %c0_6 = arith.constant 0 : index
    %6 = vector.load %arg3[%c0_5, %c0_6] : memref<16x384xf32, #tpu.memory_space<vmem>>, vector<1x384xf32>
    %7 = arith.addf %5, %6 : vector<1x384xf32>
    %cst_7 = arith.constant 0.000000e+00 : f32
    %8 = vector.broadcast %cst_7 : f32 to vector<1x384xf32>
    %9 = arith.maximumf %7, %8 : vector<1x384xf32>
    %c1 = arith.constant 1 : index
    %c0_8 = arith.constant 0 : index
    %c0_9 = arith.constant 0 : index
    %10 = vector.load %arg2[%c1, %c0_8, %c0_9] : memref<16x128x384xbf16, #tpu.memory_space<vmem>>, vector<1x128x384xbf16>
    %11 = vector.shape_cast %10 : vector<1x128x384xbf16> to vector<128x384xbf16>
    %cst_10 = arith.constant dense<0.000000e+00> : vector<1x384xf32>
    %12 = tpu.matmul %2, %11, %cst_10 {dimension_numbers = #tpu.dot_dimension_numbers<[1], [0], [0], [1], [0, 0, 1, 1], [], []>} : vector<1x128xbf16>, vector<128x384xbf16>, vector<1x384xf32> -> vector<1x384xf32>
    %c1_11 = arith.constant 1 : index
    %c0_12 = arith.constant 0 : index
    %13 = vector.load %arg3[%c1_11, %c0_12] : memref<16x384xf32, #tpu.memory_space<vmem>>, vector<1x384xf32>
    %14 = arith.addf %12, %13 : vector<1x384xf32>
    %cst_13 = arith.constant 0.000000e+00 : f32
    %15 = vector.broadcast %cst_13 : f32 to vector<1x384xf32>
    %16 = arith.maximumf %14, %15 : vector<1x384xf32>
    %c2 = arith.constant 2 : index
    %c0_14 = arith.constant 0 : index
    %c0_15 = arith.constant 0 : index
    %17 = vector.load %arg2[%c2, %c0_14, %c0_15] : memref<16x128x384xbf16, #tpu.memory_space<vmem>>, vector<1x128x384xbf16>
    %18 = vector.shape_cast %17 : vector<1x128x384xbf16> to vector<128x384xbf16>
    %cst_16 = arith.constant dense<0.000000e+00> : vector<1x384xf32>
    %19 = tpu.matmul %2, %18, %cst_16 {dimension_numbers = #tpu.dot_dimension_numbers<[1], [0], [0], [1], [0, 0, 1, 1], [], []>} : vector<1x128xbf16>, vector<128x384xbf16>, vector<1x384xf32> -> vector<1x384xf32>
    %c2_17 = arith.constant 2 : index
    %c0_18 = arith.constant 0 : index
    %20 = vector.load %arg3[%c2_17, %c0_18] : memref<16x384xf32, #tpu.memory_space<vmem>>, vector<1x384xf32>
    %21 = arith.addf %19, %20 : vector<1x384xf32>
    %cst_19 = arith.constant 0.000000e+00 : f32
    %22 = vector.broadcast %cst_19 : f32 to vector<1x384xf32>
    %23 = arith.maximumf %21, %22 : vector<1x384xf32>
    %c3 = arith.constant 3 : index
    %c0_20 = arith.constant 0 : index
    %c0_21 = arith.constant 0 : index
    %24 = vector.load %arg2[%c3, %c0_20, %c0_21] : memref<16x128x384xbf16, #tpu.memory_space<vmem>>, vector<1x128x384xbf16>
    %25 = vector.shape_cast %24 : vector<1x128x384xbf16> to vector<128x384xbf16>
    %cst_22 = arith.constant dense<0.000000e+00> : vector<1x384xf32>
    %26 = tpu.matmul %2, %25, %cst_22 {dimension_numbers = #tpu.dot_dimension_numbers<[1], [0], [0], [1], [0, 0, 1, 1], [], []>} : vector<1x128xbf16>, vector<128x384xbf16>, vector<1x384xf32> -> vector<1x384xf32>
    %c3_23 = arith.constant 3 : index
    %c0_24 = arith.constant 0 : index
    %27 = vector.load %arg3[%c3_23, %c0_24] : memref<16x384xf32, #tpu.memory_space<vmem>>, vector<1x384xf32>
    %28 = arith.addf %26, %27 : vector<1x384xf32>
    %cst_25 = arith.constant 0.000000e+00 : f32
    %29 = vector.broadcast %cst_25 : f32 to vector<1x384xf32>
    %30 = arith.maximumf %28, %29 : vector<1x384xf32>
    %c4 = arith.constant 4 : index
    %c0_26 = arith.constant 0 : index
    %c0_27 = arith.constant 0 : index
    %31 = vector.load %arg2[%c4, %c0_26, %c0_27] : memref<16x128x384xbf16, #tpu.memory_space<vmem>>, vector<1x128x384xbf16>
    %32 = vector.shape_cast %31 : vector<1x128x384xbf16> to vector<128x384xbf16>
    %cst_28 = arith.constant dense<0.000000e+00> : vector<1x384xf32>
    %33 = tpu.matmul %2, %32, %cst_28 {dimension_numbers = #tpu.dot_dimension_numbers<[1], [0], [0], [1], [0, 0, 1, 1], [], []>} : vector<1x128xbf16>, vector<128x384xbf16>, vector<1x384xf32> -> vector<1x384xf32>
    %c4_29 = arith.constant 4 : index
    %c0_30 = arith.constant 0 : index
    %34 = vector.load %arg3[%c4_29, %c0_30] : memref<16x384xf32, #tpu.memory_space<vmem>>, vector<1x384xf32>
    %35 = arith.addf %33, %34 : vector<1x384xf32>
    %cst_31 = arith.constant 0.000000e+00 : f32
    %36 = vector.broadcast %cst_31 : f32 to vector<1x384xf32>
    %37 = arith.maximumf %35, %36 : vector<1x384xf32>
    %c5 = arith.constant 5 : index
    %c0_32 = arith.constant 0 : index
    %c0_33 = arith.constant 0 : index
    %38 = vector.load %arg2[%c5, %c0_32, %c0_33] : memref<16x128x384xbf16, #tpu.memory_space<vmem>>, vector<1x128x384xbf16>
    %39 = vector.shape_cast %38 : vector<1x128x384xbf16> to vector<128x384xbf16>
    %cst_34 = arith.constant dense<0.000000e+00> : vector<1x384xf32>
    %40 = tpu.matmul %2, %39, %cst_34 {dimension_numbers = #tpu.dot_dimension_numbers<[1], [0], [0], [1], [0, 0, 1, 1], [], []>} : vector<1x128xbf16>, vector<128x384xbf16>, vector<1x384xf32> -> vector<1x384xf32>
    %c5_35 = arith.constant 5 : index
    %c0_36 = arith.constant 0 : index
    %41 = vector.load %arg3[%c5_35, %c0_36] : memref<16x384xf32, #tpu.memory_space<vmem>>, vector<1x384xf32>
    %42 = arith.addf %40, %41 : vector<1x384xf32>
    %cst_37 = arith.constant 0.000000e+00 : f32
    %43 = vector.broadcast %cst_37 : f32 to vector<1x384xf32>
    %44 = arith.maximumf %42, %43 : vector<1x384xf32>
    %c6 = arith.constant 6 : index
    %c0_38 = arith.constant 0 : index
    %c0_39 = arith.constant 0 : index
    %45 = vector.load %arg2[%c6, %c0_38, %c0_39] : memref<16x128x384xbf16, #tpu.memory_space<vmem>>, vector<1x128x384xbf16>
    %46 = vector.shape_cast %45 : vector<1x128x384xbf16> to vector<128x384xbf16>
    %cst_40 = arith.constant dense<0.000000e+00> : vector<1x384xf32>
    %47 = tpu.matmul %2, %46, %cst_40 {dimension_numbers = #tpu.dot_dimension_numbers<[1], [0], [0], [1], [0, 0, 1, 1], [], []>} : vector<1x128xbf16>, vector<128x384xbf16>, vector<1x384xf32> -> vector<1x384xf32>
    %c6_41 = arith.constant 6 : index
    %c0_42 = arith.constant 0 : index
    %48 = vector.load %arg3[%c6_41, %c0_42] : memref<16x384xf32, #tpu.memory_space<vmem>>, vector<1x384xf32>
    %49 = arith.addf %47, %48 : vector<1x384xf32>
    %cst_43 = arith.constant 0.000000e+00 : f32
    %50 = vector.broadcast %cst_43 : f32 to vector<1x384xf32>
    %51 = arith.maximumf %49, %50 : vector<1x384xf32>
    %c7 = arith.constant 7 : index
    %c0_44 = arith.constant 0 : index
    %c0_45 = arith.constant 0 : index
    %52 = vector.load %arg2[%c7, %c0_44, %c0_45] : memref<16x128x384xbf16, #tpu.memory_space<vmem>>, vector<1x128x384xbf16>
    %53 = vector.shape_cast %52 : vector<1x128x384xbf16> to vector<128x384xbf16>
    %cst_46 = arith.constant dense<0.000000e+00> : vector<1x384xf32>
    %54 = tpu.matmul %2, %53, %cst_46 {dimension_numbers = #tpu.dot_dimension_numbers<[1], [0], [0], [1], [0, 0, 1, 1], [], []>} : vector<1x128xbf16>, vector<128x384xbf16>, vector<1x384xf32> -> vector<1x384xf32>
    %c7_47 = arith.constant 7 : index
    %c0_48 = arith.constant 0 : index
    %55 = vector.load %arg3[%c7_47, %c0_48] : memref<16x384xf32, #tpu.memory_space<vmem>>, vector<1x384xf32>
    %56 = arith.addf %54, %55 : vector<1x384xf32>
    %cst_49 = arith.constant 0.000000e+00 : f32
    %57 = vector.broadcast %cst_49 : f32 to vector<1x384xf32>
    %58 = arith.maximumf %56, %57 : vector<1x384xf32>
    %c8 = arith.constant 8 : index
    %c0_50 = arith.constant 0 : index
    %c0_51 = arith.constant 0 : index
    %59 = vector.load %arg2[%c8, %c0_50, %c0_51] : memref<16x128x384xbf16, #tpu.memory_space<vmem>>, vector<1x128x384xbf16>
    %60 = vector.shape_cast %59 : vector<1x128x384xbf16> to vector<128x384xbf16>
    %cst_52 = arith.constant dense<0.000000e+00> : vector<1x384xf32>
    %61 = tpu.matmul %2, %60, %cst_52 {dimension_numbers = #tpu.dot_dimension_numbers<[1], [0], [0], [1], [0, 0, 1, 1], [], []>} : vector<1x128xbf16>, vector<128x384xbf16>, vector<1x384xf32> -> vector<1x384xf32>
    %c8_53 = arith.constant 8 : index
    %c0_54 = arith.constant 0 : index
    %62 = vector.load %arg3[%c8_53, %c0_54] : memref<16x384xf32, #tpu.memory_space<vmem>>, vector<1x384xf32>
    %63 = arith.addf %61, %62 : vector<1x384xf32>
    %cst_55 = arith.constant 0.000000e+00 : f32
    %64 = vector.broadcast %cst_55 : f32 to vector<1x384xf32>
    %65 = arith.maximumf %63, %64 : vector<1x384xf32>
    %c9 = arith.constant 9 : index
    %c0_56 = arith.constant 0 : index
    %c0_57 = arith.constant 0 : index
    %66 = vector.load %arg2[%c9, %c0_56, %c0_57] : memref<16x128x384xbf16, #tpu.memory_space<vmem>>, vector<1x128x384xbf16>
    %67 = vector.shape_cast %66 : vector<1x128x384xbf16> to vector<128x384xbf16>
    %cst_58 = arith.constant dense<0.000000e+00> : vector<1x384xf32>
    %68 = tpu.matmul %2, %67, %cst_58 {dimension_numbers = #tpu.dot_dimension_numbers<[1], [0], [0], [1], [0, 0, 1, 1], [], []>} : vector<1x128xbf16>, vector<128x384xbf16>, vector<1x384xf32> -> vector<1x384xf32>
    %c9_59 = arith.constant 9 : index
    %c0_60 = arith.constant 0 : index
    %69 = vector.load %arg3[%c9_59, %c0_60] : memref<16x384xf32, #tpu.memory_space<vmem>>, vector<1x384xf32>
    %70 = arith.addf %68, %69 : vector<1x384xf32>
    %cst_61 = arith.constant 0.000000e+00 : f32
    %71 = vector.broadcast %cst_61 : f32 to vector<1x384xf32>
    %72 = arith.maximumf %70, %71 : vector<1x384xf32>
    %c10 = arith.constant 10 : index
    %c0_62 = arith.constant 0 : index
    %c0_63 = arith.constant 0 : index
    %73 = vector.load %arg2[%c10, %c0_62, %c0_63] : memref<16x128x384xbf16, #tpu.memory_space<vmem>>, vector<1x128x384xbf16>
    %74 = vector.shape_cast %73 : vector<1x128x384xbf16> to vector<128x384xbf16>
    %cst_64 = arith.constant dense<0.000000e+00> : vector<1x384xf32>
    %75 = tpu.matmul %2, %74, %cst_64 {dimension_numbers = #tpu.dot_dimension_numbers<[1], [0], [0], [1], [0, 0, 1, 1], [], []>} : vector<1x128xbf16>, vector<128x384xbf16>, vector<1x384xf32> -> vector<1x384xf32>
    %c10_65 = arith.constant 10 : index
    %c0_66 = arith.constant 0 : index
    %76 = vector.load %arg3[%c10_65, %c0_66] : memref<16x384xf32, #tpu.memory_space<vmem>>, vector<1x384xf32>
    %77 = arith.addf %75, %76 : vector<1x384xf32>
    %cst_67 = arith.constant 0.000000e+00 : f32
    %78 = vector.broadcast %cst_67 : f32 to vector<1x384xf32>
    %79 = arith.maximumf %77, %78 : vector<1x384xf32>
    %c11 = arith.constant 11 : index
    %c0_68 = arith.constant 0 : index
    %c0_69 = arith.constant 0 : index
    %80 = vector.load %arg2[%c11, %c0_68, %c0_69] : memref<16x128x384xbf16, #tpu.memory_space<vmem>>, vector<1x128x384xbf16>
    %81 = vector.shape_cast %80 : vector<1x128x384xbf16> to vector<128x384xbf16>
    %cst_70 = arith.constant dense<0.000000e+00> : vector<1x384xf32>
    %82 = tpu.matmul %2, %81, %cst_70 {dimension_numbers = #tpu.dot_dimension_numbers<[1], [0], [0], [1], [0, 0, 1, 1], [], []>} : vector<1x128xbf16>, vector<128x384xbf16>, vector<1x384xf32> -> vector<1x384xf32>
    %c11_71 = arith.constant 11 : index
    %c0_72 = arith.constant 0 : index
    %83 = vector.load %arg3[%c11_71, %c0_72] : memref<16x384xf32, #tpu.memory_space<vmem>>, vector<1x384xf32>
    %84 = arith.addf %82, %83 : vector<1x384xf32>
    %cst_73 = arith.constant 0.000000e+00 : f32
    %85 = vector.broadcast %cst_73 : f32 to vector<1x384xf32>
    %86 = arith.maximumf %84, %85 : vector<1x384xf32>
    %c12 = arith.constant 12 : index
    %c0_74 = arith.constant 0 : index
    %c0_75 = arith.constant 0 : index
    %87 = vector.load %arg2[%c12, %c0_74, %c0_75] : memref<16x128x384xbf16, #tpu.memory_space<vmem>>, vector<1x128x384xbf16>
    %88 = vector.shape_cast %87 : vector<1x128x384xbf16> to vector<128x384xbf16>
    %cst_76 = arith.constant dense<0.000000e+00> : vector<1x384xf32>
    %89 = tpu.matmul %2, %88, %cst_76 {dimension_numbers = #tpu.dot_dimension_numbers<[1], [0], [0], [1], [0, 0, 1, 1], [], []>} : vector<1x128xbf16>, vector<128x384xbf16>, vector<1x384xf32> -> vector<1x384xf32>
    %c12_77 = arith.constant 12 : index
    %c0_78 = arith.constant 0 : index
    %90 = vector.load %arg3[%c12_77, %c0_78] : memref<16x384xf32, #tpu.memory_space<vmem>>, vector<1x384xf32>
    %91 = arith.addf %89, %90 : vector<1x384xf32>
    %cst_79 = arith.constant 0.000000e+00 : f32
    %92 = vector.broadcast %cst_79 : f32 to vector<1x384xf32>
    %93 = arith.maximumf %91, %92 : vector<1x384xf32>
    %c13 = arith.constant 13 : index
    %c0_80 = arith.constant 0 : index
    %c0_81 = arith.constant 0 : index
    %94 = vector.load %arg2[%c13, %c0_80, %c0_81] : memref<16x128x384xbf16, #tpu.memory_space<vmem>>, vector<1x128x384xbf16>
    %95 = vector.shape_cast %94 : vector<1x128x384xbf16> to vector<128x384xbf16>
    %cst_82 = arith.constant dense<0.000000e+00> : vector<1x384xf32>
    %96 = tpu.matmul %2, %95, %cst_82 {dimension_numbers = #tpu.dot_dimension_numbers<[1], [0], [0], [1], [0, 0, 1, 1], [], []>} : vector<1x128xbf16>, vector<128x384xbf16>, vector<1x384xf32> -> vector<1x384xf32>
    %c13_83 = arith.constant 13 : index
    %c0_84 = arith.constant 0 : index
    %97 = vector.load %arg3[%c13_83, %c0_84] : memref<16x384xf32, #tpu.memory_space<vmem>>, vector<1x384xf32>
    %98 = arith.addf %96, %97 : vector<1x384xf32>
    %cst_85 = arith.constant 0.000000e+00 : f32
    %99 = vector.broadcast %cst_85 : f32 to vector<1x384xf32>
    %100 = arith.maximumf %98, %99 : vector<1x384xf32>
    %c14 = arith.constant 14 : index
    %c0_86 = arith.constant 0 : index
    %c0_87 = arith.constant 0 : index
    %101 = vector.load %arg2[%c14, %c0_86, %c0_87] : memref<16x128x384xbf16, #tpu.memory_space<vmem>>, vector<1x128x384xbf16>
    %102 = vector.shape_cast %101 : vector<1x128x384xbf16> to vector<128x384xbf16>
    %cst_88 = arith.constant dense<0.000000e+00> : vector<1x384xf32>
    %103 = tpu.matmul %2, %102, %cst_88 {dimension_numbers = #tpu.dot_dimension_numbers<[1], [0], [0], [1], [0, 0, 1, 1], [], []>} : vector<1x128xbf16>, vector<128x384xbf16>, vector<1x384xf32> -> vector<1x384xf32>
    %c14_89 = arith.constant 14 : index
    %c0_90 = arith.constant 0 : index
    %104 = vector.load %arg3[%c14_89, %c0_90] : memref<16x384xf32, #tpu.memory_space<vmem>>, vector<1x384xf32>
    %105 = arith.addf %103, %104 : vector<1x384xf32>
    %cst_91 = arith.constant 0.000000e+00 : f32
    %106 = vector.broadcast %cst_91 : f32 to vector<1x384xf32>
    %107 = arith.maximumf %105, %106 : vector<1x384xf32>
    %c15 = arith.constant 15 : index
    %c0_92 = arith.constant 0 : index
    %c0_93 = arith.constant 0 : index
    %108 = vector.load %arg2[%c15, %c0_92, %c0_93] : memref<16x128x384xbf16, #tpu.memory_space<vmem>>, vector<1x128x384xbf16>
    %109 = vector.shape_cast %108 : vector<1x128x384xbf16> to vector<128x384xbf16>
    %cst_94 = arith.constant dense<0.000000e+00> : vector<1x384xf32>
    %110 = tpu.matmul %2, %109, %cst_94 {dimension_numbers = #tpu.dot_dimension_numbers<[1], [0], [0], [1], [0, 0, 1, 1], [], []>} : vector<1x128xbf16>, vector<128x384xbf16>, vector<1x384xf32> -> vector<1x384xf32>
    %c15_95 = arith.constant 15 : index
    %c0_96 = arith.constant 0 : index
    %111 = vector.load %arg3[%c15_95, %c0_96] : memref<16x384xf32, #tpu.memory_space<vmem>>, vector<1x384xf32>
    %112 = arith.addf %110, %111 : vector<1x384xf32>
    %cst_97 = arith.constant 0.000000e+00 : f32
    %113 = vector.broadcast %cst_97 : f32 to vector<1x384xf32>
    %114 = arith.maximumf %112, %113 : vector<1x384xf32>
    %115 = tpu.concatenate %9, %16, %23, %30, %37, %44, %51, %58, %65, %72, %79, %86, %93, %100, %107, %114 in 0 : vector<1x384xf32>, vector<1x384xf32>, vector<1x384xf32>, vector<1x384xf32>, vector<1x384xf32>, vector<1x384xf32>, vector<1x384xf32>, vector<1x384xf32>, vector<1x384xf32>, vector<1x384xf32>, vector<1x384xf32>, vector<1x384xf32>, vector<1x384xf32>, vector<1x384xf32>, vector<1x384xf32>, vector<1x384xf32> -> vector<16x384xf32>
    %116 = vector.extract_strided_slice %115 {offsets = [0, 0], sizes = [16, 288], strides = [1, 1]} : vector<16x384xf32> to vector<16x288xf32>
    %117 = vector.extract_strided_slice %115 {offsets = [0, 1], sizes = [16, 288], strides = [1, 1]} : vector<16x384xf32> to vector<16x288xf32>
    %118 = vector.extract_strided_slice %115 {offsets = [0, 2], sizes = [16, 288], strides = [1, 1]} : vector<16x384xf32> to vector<16x288xf32>
    %119 = vector.extract_strided_slice %115 {offsets = [0, 18], sizes = [16, 288], strides = [1, 1]} : vector<16x384xf32> to vector<16x288xf32>
    %120 = vector.extract_strided_slice %115 {offsets = [0, 19], sizes = [16, 288], strides = [1, 1]} : vector<16x384xf32> to vector<16x288xf32>
    %121 = vector.extract_strided_slice %115 {offsets = [0, 20], sizes = [16, 288], strides = [1, 1]} : vector<16x384xf32> to vector<16x288xf32>
    %122 = vector.extract_strided_slice %115 {offsets = [0, 36], sizes = [16, 288], strides = [1, 1]} : vector<16x384xf32> to vector<16x288xf32>
    %123 = vector.extract_strided_slice %115 {offsets = [0, 37], sizes = [16, 288], strides = [1, 1]} : vector<16x384xf32> to vector<16x288xf32>
    %124 = vector.extract_strided_slice %115 {offsets = [0, 38], sizes = [16, 288], strides = [1, 1]} : vector<16x384xf32> to vector<16x288xf32>
    %125 = tpu.concatenate %116, %117, %118, %119, %120, %121, %122, %123, %124 in 0 : vector<16x288xf32>, vector<16x288xf32>, vector<16x288xf32>, vector<16x288xf32>, vector<16x288xf32>, vector<16x288xf32>, vector<16x288xf32>, vector<16x288xf32>, vector<16x288xf32> -> vector<144x288xf32>
    %126 = arith.truncf %125 : vector<144x288xf32> to vector<144x288xbf16>
    %c0_98 = arith.constant 0 : index
    %c0_99 = arith.constant 0 : index
    %127 = vector.load %arg4[%c0_98, %c0_99] : memref<8x144xbf16, #tpu.memory_space<vmem>>, vector<8x144xbf16>
    %cst_100 = arith.constant dense<0.000000e+00> : vector<8x288xf32>
    %128 = tpu.matmul %127, %126, %cst_100 {dimension_numbers = #tpu.dot_dimension_numbers<[1], [0], [0], [1], [0, 0, 1, 1], [], []>} : vector<8x144xbf16>, vector<144x288xbf16>, vector<8x288xf32> -> vector<8x288xf32>
    %c0_101 = arith.constant 0 : index
    %c0_102 = arith.constant 0 : index
    %129 = vector.load %arg5[%c0_101, %c0_102] : memref<8x1xf32, #tpu.memory_space<vmem>>, vector<8x1xf32>
    %130 = vector.broadcast %129 : vector<8x1xf32> to vector<8x288xf32>
    %131 = arith.addf %128, %130 : vector<8x288xf32>
    %c0_103 = arith.constant 0 : index
    %c0_104 = arith.constant 0 : index
    %c0_105 = arith.constant 0 : index
    %132 = vector.load %arg6[%c0_103, %c0_104, %c0_105] : memref<1x8x288xf32, #tpu.memory_space<vmem>>, vector<1x8x288xf32>
    %133 = vector.shape_cast %132 : vector<1x8x288xf32> to vector<8x288xf32>
    %134 = vector.shape_cast %131 : vector<8x288xf32> to vector<1x8x288xf32>
    tpu.vector_store %arg6[%c0_103, %c0_104, %c0_105], %134 {strides = array<i32>} : memref<1x8x288xf32, #tpu.memory_space<vmem>>, vector<1x8x288xf32>,
    return
  }
  func.func @transform_0(%arg0: i32) -> (i32, i32, i32) {
    %c0_i32 = arith.constant 0 : i32
    %c0_i32_0 = arith.constant 0 : i32
    %c0_i32_1 = arith.constant 0 : i32
    return %arg0, %c0_i32, %c0_i32_0 : i32, i32, i32
  }
  func.func @transform_1(%arg0: i32) -> (i32, i32, i32) {
    %c0_i32 = arith.constant 0 : i32
    %c0_i32_0 = arith.constant 0 : i32
    %c0_i32_1 = arith.constant 0 : i32
    %c0_i32_2 = arith.constant 0 : i32
    return %c0_i32, %c0_i32_0, %c0_i32_1 : i32, i32, i32
  }
  func.func @transform_2(%arg0: i32) -> (i32, i32) {
    %c0_i32 = arith.constant 0 : i32
    %c0_i32_0 = arith.constant 0 : i32
    %c0_i32_1 = arith.constant 0 : i32
    return %c0_i32, %c0_i32_0 : i32, i32
  }
  func.func @transform_3(%arg0: i32) -> (i32, i32) {
    %c0_i32 = arith.constant 0 : i32
    %c0_i32_0 = arith.constant 0 : i32
    %c0_i32_1 = arith.constant 0 : i32
    return %c0_i32, %c0_i32_0 : i32, i32
  }
  func.func @transform_4(%arg0: i32) -> (i32, i32) {
    %c0_i32 = arith.constant 0 : i32
    %c0_i32_0 = arith.constant 0 : i32
    %c0_i32_1 = arith.constant 0 : i32
    return %c0_i32, %c0_i32_0 : i32, i32
  }
  func.func @transform_5(%arg0: i32) -> (i32, i32, i32) {
    %c0_i32 = arith.constant 0 : i32
    %c0_i32_0 = arith.constant 0 : i32
    %c0_i32_1 = arith.constant 0 : i32
    return %arg0, %c0_i32, %c0_i32_0 : i32, i32, i32
  }
}

module attributes {stable_mosaic.version = 11 : i64} {
  func.func @_encoder_kernel(%arg0: i32, %arg1: memref<1x8x384xbf16, #tpu.memory_space<vmem>>, %arg2: memref<16x72xbf16, #tpu.memory_space<vmem>>, %arg3: memref<16x1xf32, #tpu.memory_space<vmem>>, %arg4: memref<16x288x256xbf16, #tpu.memory_space<vmem>>, %arg5: memref<1x256xf32, #tpu.memory_space<vmem>>, %arg6: memref<1x1x128xf32, #tpu.memory_space<vmem>>, %arg7: memref<1x1x256xf32, #tpu.memory_space<vmem>>, %arg8: memref<1x1x128xf32, #tpu.memory_space<vmem>>) attributes {dimension_semantics = [#tpu.dimension_semantics<parallel>], iteration_bounds = array<i64: 2>, scalar_prefetch = 0 : i64, scratch_operands = 0 : i64, tpu.core_type = #tpu.core_type<tc>, window_params = [{transform_indices = @transform_0, window_bounds = array<i64: 1, 8, 384>}, {pipeline_mode = #tpu.pipeline_mode<synchronous>, transform_indices = @transform_1, window_bounds = array<i64: 16, 72>}, {pipeline_mode = #tpu.pipeline_mode<synchronous>, transform_indices = @transform_2, window_bounds = array<i64: 16, 1>}, {pipeline_mode = #tpu.pipeline_mode<synchronous>, transform_indices = @transform_3, window_bounds = array<i64: 16, 288, 256>}, {pipeline_mode = #tpu.pipeline_mode<synchronous>, transform_indices = @transform_4, window_bounds = array<i64: 1, 256>}, {transform_indices = @transform_5, window_bounds = array<i64: 1, 1, 128>}, {transform_indices = @transform_6, window_bounds = array<i64: 1, 1, 256>}, {transform_indices = @transform_7, window_bounds = array<i64: 1, 1, 128>}]} {
    %c0 = arith.constant 0 : index
    %c0_0 = arith.constant 0 : index
    %c0_1 = arith.constant 0 : index
    %0 = vector.load %arg1[%c0, %c0_0, %c0_1] : memref<1x8x384xbf16, #tpu.memory_space<vmem>>, vector<1x8x384xbf16>
    %1 = vector.shape_cast %0 : vector<1x8x384xbf16> to vector<8x384xbf16>
    %2 = arith.extf %1 : vector<8x384xbf16> to vector<8x384xf32>
    %3 = vector.extract_strided_slice %2 {offsets = [0, 0], sizes = [8, 288], strides = [1, 1]} : vector<8x384xf32> to vector<8x288xf32>
    %4 = vector.extract_strided_slice %2 {offsets = [0, 1], sizes = [8, 288], strides = [1, 1]} : vector<8x384xf32> to vector<8x288xf32>
    %5 = vector.extract_strided_slice %2 {offsets = [0, 2], sizes = [8, 288], strides = [1, 1]} : vector<8x384xf32> to vector<8x288xf32>
    %6 = vector.extract_strided_slice %2 {offsets = [0, 18], sizes = [8, 288], strides = [1, 1]} : vector<8x384xf32> to vector<8x288xf32>
    %7 = vector.extract_strided_slice %2 {offsets = [0, 19], sizes = [8, 288], strides = [1, 1]} : vector<8x384xf32> to vector<8x288xf32>
    %8 = vector.extract_strided_slice %2 {offsets = [0, 20], sizes = [8, 288], strides = [1, 1]} : vector<8x384xf32> to vector<8x288xf32>
    %9 = vector.extract_strided_slice %2 {offsets = [0, 36], sizes = [8, 288], strides = [1, 1]} : vector<8x384xf32> to vector<8x288xf32>
    %10 = vector.extract_strided_slice %2 {offsets = [0, 37], sizes = [8, 288], strides = [1, 1]} : vector<8x384xf32> to vector<8x288xf32>
    %11 = vector.extract_strided_slice %2 {offsets = [0, 38], sizes = [8, 288], strides = [1, 1]} : vector<8x384xf32> to vector<8x288xf32>
    %12 = tpu.concatenate %3, %4, %5, %6, %7, %8, %9, %10, %11 in 0 : vector<8x288xf32>, vector<8x288xf32>, vector<8x288xf32>, vector<8x288xf32>, vector<8x288xf32>, vector<8x288xf32>, vector<8x288xf32>, vector<8x288xf32>, vector<8x288xf32> -> vector<72x288xf32>
    %13 = arith.truncf %12 : vector<72x288xf32> to vector<72x288xbf16>
    %c0_2 = arith.constant 0 : index
    %c0_3 = arith.constant 0 : index
    %14 = vector.load %arg2[%c0_2, %c0_3] : memref<16x72xbf16, #tpu.memory_space<vmem>>, vector<16x72xbf16>
    %cst = arith.constant dense<0.000000e+00> : vector<16x288xf32>
    %15 = tpu.matmul %14, %13, %cst {dimension_numbers = #tpu.dot_dimension_numbers<[1], [0], [0], [1], [0, 0, 1, 1], [], []>} : vector<16x72xbf16>, vector<72x288xbf16>, vector<16x288xf32> -> vector<16x288xf32>
    %c0_4 = arith.constant 0 : index
    %c0_5 = arith.constant 0 : index
    %16 = vector.load %arg3[%c0_4, %c0_5] : memref<16x1xf32, #tpu.memory_space<vmem>>, vector<16x1xf32>
    %17 = vector.broadcast %16 : vector<16x1xf32> to vector<16x288xf32>
    %18 = arith.addf %15, %17 : vector<16x288xf32>
    %cst_6 = arith.constant 0.000000e+00 : f32
    %19 = vector.broadcast %cst_6 : f32 to vector<16x288xf32>
    %20 = arith.maximumf %18, %19 : vector<16x288xf32>
    %cst_7 = arith.constant 0.000000e+00 : f32
    %21 = vector.broadcast %cst_7 : f32 to vector<1x256xf32>
    %22 = vector.extract_strided_slice %20 {offsets = [0, 0], sizes = [1, 288], strides = [1, 1]} : vector<16x288xf32> to vector<1x288xf32>
    %23 = arith.truncf %22 : vector<1x288xf32> to vector<1x288xbf16>
    %c0_8 = arith.constant 0 : index
    %c0_9 = arith.constant 0 : index
    %c0_10 = arith.constant 0 : index
    %24 = vector.load %arg4[%c0_8, %c0_9, %c0_10] : memref<16x288x256xbf16, #tpu.memory_space<vmem>>, vector<1x288x256xbf16>
    %25 = vector.shape_cast %24 : vector<1x288x256xbf16> to vector<288x256xbf16>
    %cst_11 = arith.constant dense<0.000000e+00> : vector<1x256xf32>
    %26 = tpu.matmul %23, %25, %cst_11 {dimension_numbers = #tpu.dot_dimension_numbers<[1], [0], [0], [1], [0, 0, 1, 1], [], []>} : vector<1x288xbf16>, vector<288x256xbf16>, vector<1x256xf32> -> vector<1x256xf32>
    %27 = arith.addf %21, %26 : vector<1x256xf32>
    %28 = vector.extract_strided_slice %20 {offsets = [1, 0], sizes = [1, 288], strides = [1, 1]} : vector<16x288xf32> to vector<1x288xf32>
    %29 = arith.truncf %28 : vector<1x288xf32> to vector<1x288xbf16>
    %c1 = arith.constant 1 : index
    %c0_12 = arith.constant 0 : index
    %c0_13 = arith.constant 0 : index
    %30 = vector.load %arg4[%c1, %c0_12, %c0_13] : memref<16x288x256xbf16, #tpu.memory_space<vmem>>, vector<1x288x256xbf16>
    %31 = vector.shape_cast %30 : vector<1x288x256xbf16> to vector<288x256xbf16>
    %cst_14 = arith.constant dense<0.000000e+00> : vector<1x256xf32>
    %32 = tpu.matmul %29, %31, %cst_14 {dimension_numbers = #tpu.dot_dimension_numbers<[1], [0], [0], [1], [0, 0, 1, 1], [], []>} : vector<1x288xbf16>, vector<288x256xbf16>, vector<1x256xf32> -> vector<1x256xf32>
    %33 = arith.addf %27, %32 : vector<1x256xf32>
    %34 = vector.extract_strided_slice %20 {offsets = [2, 0], sizes = [1, 288], strides = [1, 1]} : vector<16x288xf32> to vector<1x288xf32>
    %35 = arith.truncf %34 : vector<1x288xf32> to vector<1x288xbf16>
    %c2 = arith.constant 2 : index
    %c0_15 = arith.constant 0 : index
    %c0_16 = arith.constant 0 : index
    %36 = vector.load %arg4[%c2, %c0_15, %c0_16] : memref<16x288x256xbf16, #tpu.memory_space<vmem>>, vector<1x288x256xbf16>
    %37 = vector.shape_cast %36 : vector<1x288x256xbf16> to vector<288x256xbf16>
    %cst_17 = arith.constant dense<0.000000e+00> : vector<1x256xf32>
    %38 = tpu.matmul %35, %37, %cst_17 {dimension_numbers = #tpu.dot_dimension_numbers<[1], [0], [0], [1], [0, 0, 1, 1], [], []>} : vector<1x288xbf16>, vector<288x256xbf16>, vector<1x256xf32> -> vector<1x256xf32>
    %39 = arith.addf %33, %38 : vector<1x256xf32>
    %40 = vector.extract_strided_slice %20 {offsets = [3, 0], sizes = [1, 288], strides = [1, 1]} : vector<16x288xf32> to vector<1x288xf32>
    %41 = arith.truncf %40 : vector<1x288xf32> to vector<1x288xbf16>
    %c3 = arith.constant 3 : index
    %c0_18 = arith.constant 0 : index
    %c0_19 = arith.constant 0 : index
    %42 = vector.load %arg4[%c3, %c0_18, %c0_19] : memref<16x288x256xbf16, #tpu.memory_space<vmem>>, vector<1x288x256xbf16>
    %43 = vector.shape_cast %42 : vector<1x288x256xbf16> to vector<288x256xbf16>
    %cst_20 = arith.constant dense<0.000000e+00> : vector<1x256xf32>
    %44 = tpu.matmul %41, %43, %cst_20 {dimension_numbers = #tpu.dot_dimension_numbers<[1], [0], [0], [1], [0, 0, 1, 1], [], []>} : vector<1x288xbf16>, vector<288x256xbf16>, vector<1x256xf32> -> vector<1x256xf32>
    %45 = arith.addf %39, %44 : vector<1x256xf32>
    %46 = vector.extract_strided_slice %20 {offsets = [4, 0], sizes = [1, 288], strides = [1, 1]} : vector<16x288xf32> to vector<1x288xf32>
    %47 = arith.truncf %46 : vector<1x288xf32> to vector<1x288xbf16>
    %c4 = arith.constant 4 : index
    %c0_21 = arith.constant 0 : index
    %c0_22 = arith.constant 0 : index
    %48 = vector.load %arg4[%c4, %c0_21, %c0_22] : memref<16x288x256xbf16, #tpu.memory_space<vmem>>, vector<1x288x256xbf16>
    %49 = vector.shape_cast %48 : vector<1x288x256xbf16> to vector<288x256xbf16>
    %cst_23 = arith.constant dense<0.000000e+00> : vector<1x256xf32>
    %50 = tpu.matmul %47, %49, %cst_23 {dimension_numbers = #tpu.dot_dimension_numbers<[1], [0], [0], [1], [0, 0, 1, 1], [], []>} : vector<1x288xbf16>, vector<288x256xbf16>, vector<1x256xf32> -> vector<1x256xf32>
    %51 = arith.addf %45, %50 : vector<1x256xf32>
    %52 = vector.extract_strided_slice %20 {offsets = [5, 0], sizes = [1, 288], strides = [1, 1]} : vector<16x288xf32> to vector<1x288xf32>
    %53 = arith.truncf %52 : vector<1x288xf32> to vector<1x288xbf16>
    %c5 = arith.constant 5 : index
    %c0_24 = arith.constant 0 : index
    %c0_25 = arith.constant 0 : index
    %54 = vector.load %arg4[%c5, %c0_24, %c0_25] : memref<16x288x256xbf16, #tpu.memory_space<vmem>>, vector<1x288x256xbf16>
    %55 = vector.shape_cast %54 : vector<1x288x256xbf16> to vector<288x256xbf16>
    %cst_26 = arith.constant dense<0.000000e+00> : vector<1x256xf32>
    %56 = tpu.matmul %53, %55, %cst_26 {dimension_numbers = #tpu.dot_dimension_numbers<[1], [0], [0], [1], [0, 0, 1, 1], [], []>} : vector<1x288xbf16>, vector<288x256xbf16>, vector<1x256xf32> -> vector<1x256xf32>
    %57 = arith.addf %51, %56 : vector<1x256xf32>
    %58 = vector.extract_strided_slice %20 {offsets = [6, 0], sizes = [1, 288], strides = [1, 1]} : vector<16x288xf32> to vector<1x288xf32>
    %59 = arith.truncf %58 : vector<1x288xf32> to vector<1x288xbf16>
    %c6 = arith.constant 6 : index
    %c0_27 = arith.constant 0 : index
    %c0_28 = arith.constant 0 : index
    %60 = vector.load %arg4[%c6, %c0_27, %c0_28] : memref<16x288x256xbf16, #tpu.memory_space<vmem>>, vector<1x288x256xbf16>
    %61 = vector.shape_cast %60 : vector<1x288x256xbf16> to vector<288x256xbf16>
    %cst_29 = arith.constant dense<0.000000e+00> : vector<1x256xf32>
    %62 = tpu.matmul %59, %61, %cst_29 {dimension_numbers = #tpu.dot_dimension_numbers<[1], [0], [0], [1], [0, 0, 1, 1], [], []>} : vector<1x288xbf16>, vector<288x256xbf16>, vector<1x256xf32> -> vector<1x256xf32>
    %63 = arith.addf %57, %62 : vector<1x256xf32>
    %64 = vector.extract_strided_slice %20 {offsets = [7, 0], sizes = [1, 288], strides = [1, 1]} : vector<16x288xf32> to vector<1x288xf32>
    %65 = arith.truncf %64 : vector<1x288xf32> to vector<1x288xbf16>
    %c7 = arith.constant 7 : index
    %c0_30 = arith.constant 0 : index
    %c0_31 = arith.constant 0 : index
    %66 = vector.load %arg4[%c7, %c0_30, %c0_31] : memref<16x288x256xbf16, #tpu.memory_space<vmem>>, vector<1x288x256xbf16>
    %67 = vector.shape_cast %66 : vector<1x288x256xbf16> to vector<288x256xbf16>
    %cst_32 = arith.constant dense<0.000000e+00> : vector<1x256xf32>
    %68 = tpu.matmul %65, %67, %cst_32 {dimension_numbers = #tpu.dot_dimension_numbers<[1], [0], [0], [1], [0, 0, 1, 1], [], []>} : vector<1x288xbf16>, vector<288x256xbf16>, vector<1x256xf32> -> vector<1x256xf32>
    %69 = arith.addf %63, %68 : vector<1x256xf32>
    %70 = vector.extract_strided_slice %20 {offsets = [8, 0], sizes = [1, 288], strides = [1, 1]} : vector<16x288xf32> to vector<1x288xf32>
    %71 = arith.truncf %70 : vector<1x288xf32> to vector<1x288xbf16>
    %c8 = arith.constant 8 : index
    %c0_33 = arith.constant 0 : index
    %c0_34 = arith.constant 0 : index
    %72 = vector.load %arg4[%c8, %c0_33, %c0_34] : memref<16x288x256xbf16, #tpu.memory_space<vmem>>, vector<1x288x256xbf16>
    %73 = vector.shape_cast %72 : vector<1x288x256xbf16> to vector<288x256xbf16>
    %cst_35 = arith.constant dense<0.000000e+00> : vector<1x256xf32>
    %74 = tpu.matmul %71, %73, %cst_35 {dimension_numbers = #tpu.dot_dimension_numbers<[1], [0], [0], [1], [0, 0, 1, 1], [], []>} : vector<1x288xbf16>, vector<288x256xbf16>, vector<1x256xf32> -> vector<1x256xf32>
    %75 = arith.addf %69, %74 : vector<1x256xf32>
    %76 = vector.extract_strided_slice %20 {offsets = [9, 0], sizes = [1, 288], strides = [1, 1]} : vector<16x288xf32> to vector<1x288xf32>
    %77 = arith.truncf %76 : vector<1x288xf32> to vector<1x288xbf16>
    %c9 = arith.constant 9 : index
    %c0_36 = arith.constant 0 : index
    %c0_37 = arith.constant 0 : index
    %78 = vector.load %arg4[%c9, %c0_36, %c0_37] : memref<16x288x256xbf16, #tpu.memory_space<vmem>>, vector<1x288x256xbf16>
    %79 = vector.shape_cast %78 : vector<1x288x256xbf16> to vector<288x256xbf16>
    %cst_38 = arith.constant dense<0.000000e+00> : vector<1x256xf32>
    %80 = tpu.matmul %77, %79, %cst_38 {dimension_numbers = #tpu.dot_dimension_numbers<[1], [0], [0], [1], [0, 0, 1, 1], [], []>} : vector<1x288xbf16>, vector<288x256xbf16>, vector<1x256xf32> -> vector<1x256xf32>
    %81 = arith.addf %75, %80 : vector<1x256xf32>
    %82 = vector.extract_strided_slice %20 {offsets = [10, 0], sizes = [1, 288], strides = [1, 1]} : vector<16x288xf32> to vector<1x288xf32>
    %83 = arith.truncf %82 : vector<1x288xf32> to vector<1x288xbf16>
    %c10 = arith.constant 10 : index
    %c0_39 = arith.constant 0 : index
    %c0_40 = arith.constant 0 : index
    %84 = vector.load %arg4[%c10, %c0_39, %c0_40] : memref<16x288x256xbf16, #tpu.memory_space<vmem>>, vector<1x288x256xbf16>
    %85 = vector.shape_cast %84 : vector<1x288x256xbf16> to vector<288x256xbf16>
    %cst_41 = arith.constant dense<0.000000e+00> : vector<1x256xf32>
    %86 = tpu.matmul %83, %85, %cst_41 {dimension_numbers = #tpu.dot_dimension_numbers<[1], [0], [0], [1], [0, 0, 1, 1], [], []>} : vector<1x288xbf16>, vector<288x256xbf16>, vector<1x256xf32> -> vector<1x256xf32>
    %87 = arith.addf %81, %86 : vector<1x256xf32>
    %88 = vector.extract_strided_slice %20 {offsets = [11, 0], sizes = [1, 288], strides = [1, 1]} : vector<16x288xf32> to vector<1x288xf32>
    %89 = arith.truncf %88 : vector<1x288xf32> to vector<1x288xbf16>
    %c11 = arith.constant 11 : index
    %c0_42 = arith.constant 0 : index
    %c0_43 = arith.constant 0 : index
    %90 = vector.load %arg4[%c11, %c0_42, %c0_43] : memref<16x288x256xbf16, #tpu.memory_space<vmem>>, vector<1x288x256xbf16>
    %91 = vector.shape_cast %90 : vector<1x288x256xbf16> to vector<288x256xbf16>
    %cst_44 = arith.constant dense<0.000000e+00> : vector<1x256xf32>
    %92 = tpu.matmul %89, %91, %cst_44 {dimension_numbers = #tpu.dot_dimension_numbers<[1], [0], [0], [1], [0, 0, 1, 1], [], []>} : vector<1x288xbf16>, vector<288x256xbf16>, vector<1x256xf32> -> vector<1x256xf32>
    %93 = arith.addf %87, %92 : vector<1x256xf32>
    %94 = vector.extract_strided_slice %20 {offsets = [12, 0], sizes = [1, 288], strides = [1, 1]} : vector<16x288xf32> to vector<1x288xf32>
    %95 = arith.truncf %94 : vector<1x288xf32> to vector<1x288xbf16>
    %c12 = arith.constant 12 : index
    %c0_45 = arith.constant 0 : index
    %c0_46 = arith.constant 0 : index
    %96 = vector.load %arg4[%c12, %c0_45, %c0_46] : memref<16x288x256xbf16, #tpu.memory_space<vmem>>, vector<1x288x256xbf16>
    %97 = vector.shape_cast %96 : vector<1x288x256xbf16> to vector<288x256xbf16>
    %cst_47 = arith.constant dense<0.000000e+00> : vector<1x256xf32>
    %98 = tpu.matmul %95, %97, %cst_47 {dimension_numbers = #tpu.dot_dimension_numbers<[1], [0], [0], [1], [0, 0, 1, 1], [], []>} : vector<1x288xbf16>, vector<288x256xbf16>, vector<1x256xf32> -> vector<1x256xf32>
    %99 = arith.addf %93, %98 : vector<1x256xf32>
    %100 = vector.extract_strided_slice %20 {offsets = [13, 0], sizes = [1, 288], strides = [1, 1]} : vector<16x288xf32> to vector<1x288xf32>
    %101 = arith.truncf %100 : vector<1x288xf32> to vector<1x288xbf16>
    %c13 = arith.constant 13 : index
    %c0_48 = arith.constant 0 : index
    %c0_49 = arith.constant 0 : index
    %102 = vector.load %arg4[%c13, %c0_48, %c0_49] : memref<16x288x256xbf16, #tpu.memory_space<vmem>>, vector<1x288x256xbf16>
    %103 = vector.shape_cast %102 : vector<1x288x256xbf16> to vector<288x256xbf16>
    %cst_50 = arith.constant dense<0.000000e+00> : vector<1x256xf32>
    %104 = tpu.matmul %101, %103, %cst_50 {dimension_numbers = #tpu.dot_dimension_numbers<[1], [0], [0], [1], [0, 0, 1, 1], [], []>} : vector<1x288xbf16>, vector<288x256xbf16>, vector<1x256xf32> -> vector<1x256xf32>
    %105 = arith.addf %99, %104 : vector<1x256xf32>
    %106 = vector.extract_strided_slice %20 {offsets = [14, 0], sizes = [1, 288], strides = [1, 1]} : vector<16x288xf32> to vector<1x288xf32>
    %107 = arith.truncf %106 : vector<1x288xf32> to vector<1x288xbf16>
    %c14 = arith.constant 14 : index
    %c0_51 = arith.constant 0 : index
    %c0_52 = arith.constant 0 : index
    %108 = vector.load %arg4[%c14, %c0_51, %c0_52] : memref<16x288x256xbf16, #tpu.memory_space<vmem>>, vector<1x288x256xbf16>
    %109 = vector.shape_cast %108 : vector<1x288x256xbf16> to vector<288x256xbf16>
    %cst_53 = arith.constant dense<0.000000e+00> : vector<1x256xf32>
    %110 = tpu.matmul %107, %109, %cst_53 {dimension_numbers = #tpu.dot_dimension_numbers<[1], [0], [0], [1], [0, 0, 1, 1], [], []>} : vector<1x288xbf16>, vector<288x256xbf16>, vector<1x256xf32> -> vector<1x256xf32>
    %111 = arith.addf %105, %110 : vector<1x256xf32>
    %112 = vector.extract_strided_slice %20 {offsets = [15, 0], sizes = [1, 288], strides = [1, 1]} : vector<16x288xf32> to vector<1x288xf32>
    %113 = arith.truncf %112 : vector<1x288xf32> to vector<1x288xbf16>
    %c15 = arith.constant 15 : index
    %c0_54 = arith.constant 0 : index
    %c0_55 = arith.constant 0 : index
    %114 = vector.load %arg4[%c15, %c0_54, %c0_55] : memref<16x288x256xbf16, #tpu.memory_space<vmem>>, vector<1x288x256xbf16>
    %115 = vector.shape_cast %114 : vector<1x288x256xbf16> to vector<288x256xbf16>
    %cst_56 = arith.constant dense<0.000000e+00> : vector<1x256xf32>
    %116 = tpu.matmul %113, %115, %cst_56 {dimension_numbers = #tpu.dot_dimension_numbers<[1], [0], [0], [1], [0, 0, 1, 1], [], []>} : vector<1x288xbf16>, vector<288x256xbf16>, vector<1x256xf32> -> vector<1x256xf32>
    %117 = arith.addf %111, %116 : vector<1x256xf32>
    %c0_57 = arith.constant 0 : index
    %c0_58 = arith.constant 0 : index
    %118 = vector.load %arg5[%c0_57, %c0_58] : memref<1x256xf32, #tpu.memory_space<vmem>>, vector<1x256xf32>
    %119 = arith.addf %117, %118 : vector<1x256xf32>
    %c0_59 = arith.constant 0 : index
    %c0_60 = arith.constant 0 : index
    %c0_61 = arith.constant 0 : index
    %120 = vector.load %arg7[%c0_59, %c0_60, %c0_61] : memref<1x1x256xf32, #tpu.memory_space<vmem>>, vector<1x1x256xf32>
    %121 = vector.shape_cast %120 : vector<1x1x256xf32> to vector<1x256xf32>
    %122 = vector.shape_cast %119 : vector<1x256xf32> to vector<1x1x256xf32>
    tpu.vector_store %arg7[%c0_59, %c0_60, %c0_61], %122 {strides = array<i32>} : memref<1x1x256xf32, #tpu.memory_space<vmem>>, vector<1x1x256xf32>,
    %123 = vector.extract_strided_slice %119 {offsets = [0, 0], sizes = [1, 128], strides = [1, 1]} : vector<1x256xf32> to vector<1x128xf32>
    %124 = vector.extract_strided_slice %119 {offsets = [0, 128], sizes = [1, 128], strides = [1, 1]} : vector<1x256xf32> to vector<1x128xf32>
    %125 = math.absf %124 : vector<1x128xf32>
    %cst_62 = arith.constant 0.000000e+00 : f32
    %126 = vector.broadcast %cst_62 : f32 to vector<1x128xf32>
    %127 = arith.subf %126, %125 : vector<1x128xf32>
    %128 = math.exp %127 : vector<1x128xf32>
    %129 = math.log1p %128 : vector<1x128xf32>
    %cst_63 = arith.constant 0.000000e+00 : f32
    %130 = vector.broadcast %cst_63 : f32 to vector<1x128xf32>
    %131 = arith.maximumf %124, %130 : vector<1x128xf32>
    %132 = arith.addf %129, %131 : vector<1x128xf32>
    %cst_64 = arith.constant 0.00999999977 : f32
    %133 = vector.broadcast %cst_64 : f32 to vector<1x128xf32>
    %134 = arith.addf %133, %132 : vector<1x128xf32>
    %c0_65 = arith.constant 0 : index
    %c0_66 = arith.constant 0 : index
    %c0_67 = arith.constant 0 : index
    %135 = vector.load %arg6[%c0_65, %c0_66, %c0_67] : memref<1x1x128xf32, #tpu.memory_space<vmem>>, vector<1x1x128xf32>
    %136 = vector.shape_cast %135 : vector<1x1x128xf32> to vector<1x128xf32>
    %137 = arith.mulf %134, %136 : vector<1x128xf32>
    %138 = arith.addf %123, %137 : vector<1x128xf32>
    %c0_68 = arith.constant 0 : index
    %c0_69 = arith.constant 0 : index
    %c0_70 = arith.constant 0 : index
    %139 = vector.load %arg8[%c0_68, %c0_69, %c0_70] : memref<1x1x128xf32, #tpu.memory_space<vmem>>, vector<1x1x128xf32>
    %140 = vector.shape_cast %139 : vector<1x1x128xf32> to vector<1x128xf32>
    %141 = vector.shape_cast %138 : vector<1x128xf32> to vector<1x1x128xf32>
    tpu.vector_store %arg8[%c0_68, %c0_69, %c0_70], %141 {strides = array<i32>} : memref<1x1x128xf32, #tpu.memory_space<vmem>>, vector<1x1x128xf32>,
    return
  }
  func.func @transform_0(%arg0: i32) -> (i32, i32, i32) {
    %c0_i32 = arith.constant 0 : i32
    %c0_i32_0 = arith.constant 0 : i32
    %c0_i32_1 = arith.constant 0 : i32
    return %arg0, %c0_i32, %c0_i32_0 : i32, i32, i32
  }
  func.func @transform_1(%arg0: i32) -> (i32, i32) {
    %c0_i32 = arith.constant 0 : i32
    %c0_i32_0 = arith.constant 0 : i32
    %c0_i32_1 = arith.constant 0 : i32
    return %c0_i32, %c0_i32_0 : i32, i32
  }
  func.func @transform_2(%arg0: i32) -> (i32, i32) {
    %c0_i32 = arith.constant 0 : i32
    %c0_i32_0 = arith.constant 0 : i32
    %c0_i32_1 = arith.constant 0 : i32
    return %c0_i32, %c0_i32_0 : i32, i32
  }
  func.func @transform_3(%arg0: i32) -> (i32, i32, i32) {
    %c0_i32 = arith.constant 0 : i32
    %c0_i32_0 = arith.constant 0 : i32
    %c0_i32_1 = arith.constant 0 : i32
    %c0_i32_2 = arith.constant 0 : i32
    return %c0_i32, %c0_i32_0, %c0_i32_1 : i32, i32, i32
  }
  func.func @transform_4(%arg0: i32) -> (i32, i32) {
    %c0_i32 = arith.constant 0 : i32
    %c0_i32_0 = arith.constant 0 : i32
    %c0_i32_1 = arith.constant 0 : i32
    return %c0_i32, %c0_i32_0 : i32, i32
  }
  func.func @transform_5(%arg0: i32) -> (i32, i32, i32) {
    %c0_i32 = arith.constant 0 : i32
    %c0_i32_0 = arith.constant 0 : i32
    %c0_i32_1 = arith.constant 0 : i32
    return %arg0, %c0_i32, %c0_i32_0 : i32, i32, i32
  }
  func.func @transform_6(%arg0: i32) -> (i32, i32, i32) {
    %c0_i32 = arith.constant 0 : i32
    %c0_i32_0 = arith.constant 0 : i32
    %c0_i32_1 = arith.constant 0 : i32
    return %arg0, %c0_i32, %c0_i32_0 : i32, i32, i32
  }
  func.func @transform_7(%arg0: i32) -> (i32, i32, i32) {
    %c0_i32 = arith.constant 0 : i32
    %c0_i32_0 = arith.constant 0 : i32
    %c0_i32_1 = arith.constant 0 : i32
    return %arg0, %c0_i32, %c0_i32_0 : i32, i32, i32
  }
}

</mosaic_0001>

<llo_original>
// kernel: vae_forward.3
$region0: #{vae_forward.3}
  #allocation0 [shape = 'u32[]', space=smem, size = 0x4, offset = 0x4, fixed_abs, tag = 'smem constant byte address 0x4 - core index']
  #allocation1 [shape = 'u32[72,128]{1,0:T(1,128)}', space=vmem, size = 0x9000, scoped, tag = 'internal scratch']
  %s0 = inlined_call_operand.vmem [shape: f32[2,1,128], index: 0, kind: input, shape index: {}]
  %s1 = inlined_call_operand.hbm [shape: bf16[16,128,384], index: 1, kind: input, shape index: {}]
  %s2 = inlined_call_operand.hbm [shape: f32[16,384], index: 2, kind: input, shape index: {}]
  %s3 = inlined_call_operand.hbm [shape: bf16[8,144], index: 3, kind: input, shape index: {}]
  %s4 = inlined_call_operand.vmem [shape: f32[8,1], index: 4, kind: input, shape index: {}]
  %s5 = inlined_call_operand.vmem [shape: f32[2,8,288], index: 5, kind: output, shape index: {}]
  %s6 = sld [smem:[#allocation0]]
  $region65: #{vae_forward.3} parent=0
    _
  %s8 = ssub.s32 1, %s6
  %s9 = scalar_select 0, %s8, %s6
  $region1: #{vae_forward.3} parent=0
    #allocation2 [shape = 'u8[1572864]{0}', space=vmem, size = 0x180000, scoped, tag = 'input window, operand 1, single buffered']
    #allocation3 [shape = 's32[2]{0}', space=sflag, size = 0x8, scoped, tag = 'scoped memory for vae_forward.3']
    #allocation4 [shape = 'u8[24576]{0}', space=vmem, size = 0x6000, scoped, tag = 'input window, operand 2, single buffered']
    #allocation5 [shape = 's32[1]{0}', space=sflag, size = 0x4, scoped, tag = 'scoped memory for vae_forward.3']
    #allocation6 [shape = 'u8[4096]{0}', space=vmem, size = 0x1000, scoped, tag = 'input window, operand 3, single buffered']
    %10 = vsyncpa [#allocation3], 0
    %11 = vsyncpa [#allocation5], 0
    loop: start=0, step=1, limit=4
    $region2: #{vae_forward.3} parent=1 // loop_pre_header
      _
    $region3: #{vae_forward.3} parent=1 // loop_header
      %s13 = sphi 0, %s17
      %p14 = scmp.ge.s32.totalorder %s13, 4
      %s23 = sphi 0, %s25
      %s26 = sphi 0, %s23
      %s27 = sphi 0, %s26
      %s43 = sphi 0, %s27
      %s47 = sphi 0, %s47
      %s49 = sphi 0, %s47
      %s50 = sphi 0, %s49
      %s64 = sphi 0, %s50
      %s68 = sphi 0, %s68
      %s70 = sphi 0, %s68
      %s71 = sphi 0, %s70
      %s85 = sphi 0, %s71
      %s89 = sphi 0, %s89
      %s91 = sphi 0, %s89
      %s92 = sphi 0, %s91
      %s106 = sphi 0, %s92
      %s110 = sphi 0, %s110
      %s112 = sphi 0, %s110
      %s113 = sphi 0, %s112
      %s127 = sphi 0, %s113
      %s133 = sphi 0, %s135
      %s136 = sphi 0, %s133
      %s137 = sphi 0, %s136
      %s153 = sphi 0, %s137
    $region4: #{vae_forward.3} parent=1 // loop_header_branch
      %16 = sbr.rel (%p14) target = $region8
    $region5: #{vae_forward.3} parent=1 // loop_body
      %s18 = ssub.s32 %s13, 1
      %s19 = ssub.s32 %s13, 2
      %s20 = sadd.s32 %s13, 1
      %s21 = ssub.s32 %s13, %s20
      %p22 = scmp.eq.s32.totalorder %s21, 0
      %s24 = sadd.s32 %s23, 1
      %s25 = scalar_select %p22, %s23, %s24
      %p28 = pneg %p22
      %p29 = scmp.eq.s32.totalorder %s13, 1
      %p30 = por %p28, %p29
      %p31 = scmp.ne.s32.totalorder %s23, %s26
      %p32 = scmp.eq.s32.totalorder %s13, 0
      %p33 = por %p31, %p32
      %p34 = scmp.ne.s32.totalorder %s23, %s26
      %p35 = scmp.eq.s32.totalorder %s18, 1
      %p36 = por %p34, %p35
      %p37 = scmp.ne.s32.totalorder %s26, %s27
      %p38 = scmp.eq.s32.totalorder %s18, 0
      %p39 = por %p37, %p38
      %p40 = scmp.ne.s32.totalorder %s26, %s27
      %p41 = scmp.eq.s32.totalorder %s19, 1
      %p42 = por %p40, %p41
      %p44 = scmp.ne.s32.totalorder %s27, %s43
      %p45 = scmp.eq.s32.totalorder %s19, 0
      %p46 = por %p44, %p45
      %s48 = sadd.s32 %s47, 1
      %p51 = scmp.eq.s32.totalorder %s13, 1
      %p52 = scmp.ne.s32.totalorder %s47, %s49
      %p53 = scmp.eq.s32.totalorder %s13, 0
      %p54 = por %p52, %p53
      %p55 = scmp.ne.s32.totalorder %s47, %s49
      %p56 = scmp.eq.s32.totalorder %s18, 1
      %p57 = por %p55, %p56
      %p58 = scmp.ne.s32.totalorder %s49, %s50
      %p59 = scmp.eq.s32.totalorder %s18, 0
      %p60 = por %p58, %p59
      %p61 = scmp.ne.s32.totalorder %s49, %s50
      %p62 = scmp.eq.s32.totalorder %s19, 1
      %p63 = por %p61, %p62
      %p65 = scmp.ne.s32.totalorder %s50, %s64
      %p66 = scmp.eq.s32.totalorder %s19, 0
      %p67 = por %p65, %p66
      %s69 = sadd.s32 %s68, 1
      %p72 = scmp.eq.s32.totalorder %s13, 1
      %p73 = scmp.ne.s32.totalorder %s68, %s70
      %p74 = scmp.eq.s32.totalorder %s13, 0
      %p75 = por %p73, %p74
      %p76 = scmp.ne.s32.totalorder %s68, %s70
      %p77 = scmp.eq.s32.totalorder %s18, 1
      %p78 = por %p76, %p77
      %p79 = scmp.ne.s32.totalorder %s70, %s71
      %p80 = scmp.eq.s32.totalorder %s18, 0
      %p81 = por %p79, %p80
      %p82 = scmp.ne.s32.totalorder %s70, %s71
      %p83 = scmp.eq.s32.totalorder %s19, 1
      %p84 = por %p82, %p83
      %p86 = scmp.ne.s32.totalorder %s71, %s85
      %p87 = scmp.eq.s32.totalorder %s19, 0
      %p88 = por %p86, %p87
      %s90 = sadd.s32 %s89, 1
      %p93 = scmp.eq.s32.totalorder %s13, 1
      %p94 = scmp.ne.s32.totalorder %s89, %s91
      %p95 = scmp.eq.s32.totalorder %s13, 0
      %p96 = por %p94, %p95
      %p97 = scmp.ne.s32.totalorder %s89, %s91
      %p98 = scmp.eq.s32.totalorder %s18, 1
      %p99 = por %p97, %p98
      %p100 = scmp.ne.s32.totalorder %s91, %s92
      %p101 = scmp.eq.s32.totalorder %s18, 0
      %p102 = por %p100, %p101
      %p103 = scmp.ne.s32.totalorder %s91, %s92
      %p104 = scmp.eq.s32.totalorder %s19, 1
      %p105 = por %p103, %p104
      %p107 = scmp.ne.s32.totalorder %s92, %s106
      %p108 = scmp.eq.s32.totalorder %s19, 0
      %p109 = por %p107, %p108
      %s111 = sadd.s32 %s110, 1
      %p114 = scmp.eq.s32.totalorder %s13, 1
      %p115 = scmp.ne.s32.totalorder %s110, %s112
      %p116 = scmp.eq.s32.totalorder %s13, 0
      %p117 = por %p115, %p116
      %p118 = scmp.ne.s32.totalorder %s110, %s112
      %p119 = scmp.eq.s32.totalorder %s18, 1
      %p120 = por %p118, %p119
      %p121 = scmp.ne.s32.totalorder %s112, %s113
      %p122 = scmp.eq.s32.totalorder %s18, 0
      %p123 = por %p121, %p122
      %p124 = scmp.ne.s32.totalorder %s112, %s113
      %p125 = scmp.eq.s32.totalorder %s19, 1
      %p126 = por %p124, %p125
      %p128 = scmp.ne.s32.totalorder %s113, %s127
      %p129 = scmp.eq.s32.totalorder %s19, 0
      %p130 = por %p128, %p129
      %s131 = ssub.s32 %s13, %s20
      %p132 = scmp.eq.s32.totalorder %s131, 0
      %s134 = sadd.s32 %s133, 1
      %s135 = scalar_select %p132, %s133, %s134
      %p138 = pneg %p132
      %p139 = scmp.eq.s32.totalorder %s13, 1
      %p140 = por %p138, %p139
      %p141 = scmp.ne.s32.totalorder %s133, %s136
      %p142 = scmp.eq.s32.totalorder %s13, 0
      %p143 = por %p141, %p142
      %p144 = scmp.ne.s32.totalorder %s133, %s136
      %p145 = scmp.eq.s32.totalorder %s18, 1
      %p146 = por %p144, %p145
      %p147 = scmp.ne.s32.totalorder %s136, %s137
      %p148 = scmp.eq.s32.totalorder %s18, 0
      %p149 = por %p147, %p148
      %p150 = scmp.ne.s32.totalorder %s136, %s137
      %p151 = scmp.eq.s32.totalorder %s19, 1
      %p152 = por %p150, %p151
      %p154 = scmp.ne.s32.totalorder %s137, %s153
      %p155 = scmp.eq.s32.totalorder %s19, 0
      %p156 = por %p154, %p155
      %p157 = scmp.le.s32.totalorder 1, %s13
      %p158 = scmp.lt.s32.totalorder %s13, 3
      %p159 = pnand %p157, %p158
      %p160 = pneg %p159
      // Predicated region
      $region9: #{vae_forward.3} parent=5 // pred_check
        _
      $region10: #{vae_forward.3} parent=5 // pred_check_branch
        %162 = sbr.rel (%p159) target = $region12
      $region11: #{vae_forward.3} parent=5 // pred_region
        %s163 = ssub.s32 %s13, 1
        // Predicated region
        $region13: #{vae_forward.3} parent=11 // pred_check
          %p164 = pneg %p60
        $region14: #{vae_forward.3} parent=11 // pred_check_branch
          %166 = sbr.rel (%p164) target = $region16
        $region15: #{vae_forward.3} parent=11 // pred_region
          %168 = vsyncadd [#allocation3], 0
          %s169 = sshll.u32 %s1, 4
          %s170 = int_to_ptr.hbm [resolvable:$true] %s169
          %s171 = sshll.u32 [#allocation2], 4
          %s172 = int_to_ptr.vmem [resolvable:$true] %s171
          %177 = dma.hbm_to_vmem [thread:$0]  %s170, 49152, %s172, [#allocation3], 192, 192, 12
        $region16: #{vae_forward.3} parent=11 // pred_fallthru
          _
        // Predicated region
        $region17: #{vae_forward.3} parent=11 // pred_check
          %p178 = pneg %p81
        $region18: #{vae_forward.3} parent=11 // pred_check_branch
          %180 = sbr.rel (%p178) target = $region20
        $region19: #{vae_forward.3} parent=11 // pred_region
          %182 = vsyncadd [#allocation5], 0
          %s183 = sshll.u32 %s2, 4
          %s184 = int_to_ptr.hbm [resolvable:$true] %s183
          %s185 = sshll.u32 [#allocation4], 4
          %s186 = int_to_ptr.vmem [resolvable:$true] %s185
          %191 = dma.hbm_to_vmem [thread:$0]  %s184, 768, %s186, [#allocation5], 384, 384, 24
        $region20: #{vae_forward.3} parent=11 // pred_fallthru
          _
        // Predicated region
        $region21: #{vae_forward.3} parent=11 // pred_check
          %p192 = pneg %p102
        $region22: #{vae_forward.3} parent=11 // pred_check_branch
          %194 = sbr.rel (%p192) target = $region24
        $region23: #{vae_forward.3} parent=11 // pred_region
          %196 = vsyncadd [#allocation5], 0
          %s198 = sshll.u32 %s3, 4
          %s199 = int_to_ptr.hbm [resolvable:$true] %s198
          %s200 = sshll.u32 [#allocation6], 4
          %s201 = int_to_ptr.vmem [resolvable:$true] %s200
          %203 = dma.hbm_to_vmem [thread:$0]  %s199, 128, %s201, [#allocation5]
        $region24: #{vae_forward.3} parent=11 // pred_fallthru
          _
        // Predicated region
        $region25: #{vae_forward.3} parent=11 // pred_check
          %p204 = pneg %p123
        $region26: #{vae_forward.3} parent=11 // pred_check_branch
          %206 = sbr.rel (%p204) target = $region28
        $region27: #{vae_forward.3} parent=11 // pred_region
          _
        $region28: #{vae_forward.3} parent=11 // pred_fallthru
          _
      $region12: #{vae_forward.3} parent=5 // pred_fallthru
        _
      %p207 = scmp.lt.s32.totalorder %s13, 2
      // Predicated region
      $region29: #{vae_forward.3} parent=5 // pred_check
        %p208 = pneg %p207
      $region30: #{vae_forward.3} parent=5 // pred_check_branch
        %210 = sbr.rel (%p208) target = $region32
      $region31: #{vae_forward.3} parent=5 // pred_region
        // Predicated region
        $region33: #{vae_forward.3} parent=31 // pred_check
          %p211 = pneg %p33
        $region34: #{vae_forward.3} parent=31 // pred_check_branch
          %213 = sbr.rel (%p211) target = $region36
        $region35: #{vae_forward.3} parent=31 // pred_region
          %p214 = scmp.lt.s32.totalorder %s13, 1
          %s215 = scalar_select %p214, %s13, 1
          %s216 = scalar_lea.vmem %s0, %s215
        $region36: #{vae_forward.3} parent=31 // pred_fallthru
          _
      $region32: #{vae_forward.3} parent=5 // pred_fallthru
        _
      %p217 = scmp.le.s32.totalorder 1, %s13
      %p218 = scmp.lt.s32.totalorder %s13, 3
      %p219 = pnand %p217, %p218
      %p220 = pneg %p219
      // Predicated region
      $region37: #{vae_forward.3} parent=5 // pred_check
        _
      $region38: #{vae_forward.3} parent=5 // pred_check_branch
        %222 = sbr.rel (%p219) target = $region40
      $region39: #{vae_forward.3} parent=5 // pred_region
        %s223 = ssub.s32 %s13, 1
        // Predicated region
        $region41: #{vae_forward.3} parent=39 // pred_check
          %p224 = pneg %p60
        $region42: #{vae_forward.3} parent=39 // pred_check_branch
          %226 = sbr.rel (%p224) target = $region44
        $region43: #{vae_forward.3} parent=39 // pred_region
          %228 = dma.done [#allocation3], 49152
        $region44: #{vae_forward.3} parent=39 // pred_fallthru
          _
        // Predicated region
        $region45: #{vae_forward.3} parent=39 // pred_check
          %p229 = pneg %p81
        $region46: #{vae_forward.3} parent=39 // pred_check_branch
          %231 = sbr.rel (%p229) target = $region48
        $region47: #{vae_forward.3} parent=39 // pred_region
          %233 = dma.done [#allocation5], 768
        $region48: #{vae_forward.3} parent=39 // pred_fallthru
          _
        // Predicated region
        $region49: #{vae_forward.3} parent=39 // pred_check
          %p234 = pneg %p102
        $region50: #{vae_forward.3} parent=39 // pred_check_branch
          %236 = sbr.rel (%p234) target = $region52
        $region51: #{vae_forward.3} parent=39 // pred_region
          %238 = dma.done [#allocation5], 128
        $region52: #{vae_forward.3} parent=39 // pred_fallthru
          _
        %p239 = scmp.lt.s32.totalorder %s18, 1
        %s240 = scalar_select %p239, %s18, 1
        %s241 = scalar_lea.vmem %s0, %s240
        %p242 = pneg %p39
        %p243 = pneg %p36
        %p244 = pneg %p60
        %p245 = pneg %p57
        %p246 = pneg %p81
        %p247 = pneg %p78
        %p248 = pneg %p102
        %p249 = pneg %p99
        %p250 = pneg %p123
        %p251 = pneg %p120
        %p252 = pneg %p149
        %p253 = pneg %p146
        %p254 = scmp.lt.s32.totalorder %s18, 1
        %s255 = scalar_select %p254, %s18, 1
        %s256 = smul.addr %s255, 3
        %s257 = smul.addr %s256, 8
        %s258 = scalar_lea.vmem %s5, %s257
        %p259 = scmp.lt.s32.totalorder %s18, 1
        %s260 = scalar_select %p259, %s18, 1
        %s261 = scalar_lea.vmem %s0, %s260
        %p262 = scmp.lt.s32.totalorder %s18, 1
        %s263 = scalar_select %p262, %s18, 1
        %s264 = smul.addr %s263, 3
        %s265 = smul.addr %s264, 8
        %s266 = scalar_lea.vmem %s5, %s265
        %v268 = vld [vmem:[%s261] sm:$0x1]
        %v269 = vpack.c.bf16 %v268, %v268
        %v270 = vld [vmem:[#allocation2] sm:$0xff]
        %v271 = vld [vmem:[#allocation2 + $0x8] sm:$0xf]
        %v272 = vld [vmem:[#allocation2 + $0xc] sm:$0xff]
        %v273 = vld [vmem:[#allocation2 + $0x14] sm:$0xf]
        %v274 = vld [vmem:[#allocation2 + $0x18] sm:$0xff]
        %v275 = vld [vmem:[#allocation2 + $0x20] sm:$0xf]
        %v276 = vld [vmem:[#allocation2 + $0x24] sm:$0xff]
        %v277 = vld [vmem:[#allocation2 + $0x2c] sm:$0xf]
        %v278 = vld [vmem:[#allocation2 + $0x30] sm:$0xff]
        %v279 = vld [vmem:[#allocation2 + $0x38] sm:$0xf]
        %v280 = vld [vmem:[#allocation2 + $0x3c] sm:$0xff]
        %v281 = vld [vmem:[#allocation2 + $0x44] sm:$0xf]
        %v282 = vld [vmem:[#allocation2 + $0x48] sm:$0xff]
        %v283 = vld [vmem:[#allocation2 + $0x50] sm:$0xf]
        %v284 = vld [vmem:[#allocation2 + $0x54] sm:$0xff]
        %v285 = vld [vmem:[#allocation2 + $0x5c] sm:$0xf]
        %v286 = vld [vmem:[#allocation2 + $0x60] sm:$0xff]
        %v287 = vld [vmem:[#allocation2 + $0x68] sm:$0xf]
        %v288 = vld [vmem:[#allocation2 + $0x6c] sm:$0xff]
        %v289 = vld [vmem:[#allocation2 + $0x74] sm:$0xf]
        %v290 = vld [vmem:[#allocation2 + $0x78] sm:$0xff]
        %v291 = vld [vmem:[#allocation2 + $0x80] sm:$0xf]
        %v292 = vld [vmem:[#allocation2 + $0x84] sm:$0xff]
        %v293 = vld [vmem:[#allocation2 + $0x8c] sm:$0xf]
        %v294 = vld [vmem:[#allocation2 + $0x90] sm:$0xff]
        %v295 = vld [vmem:[#allocation2 + $0x98] sm:$0xf]
        %v296 = vld [vmem:[#allocation2 + $0x9c] sm:$0xff]
        %v297 = vld [vmem:[#allocation2 + $0xa4] sm:$0xf]
        %v298 = vld [vmem:[#allocation2 + $0xa8] sm:$0xff]
        %v299 = vld [vmem:[#allocation2 + $0xb0] sm:$0xf]
        %v300 = vld [vmem:[#allocation2 + $0xb4] sm:$0xff]
        %v301 = vld [vmem:[#allocation2 + $0xbc] sm:$0xf]
        %v302 = vld [vmem:[#allocation4] ss:$8 sm:$0x7]
        %v335 = vunpack.c.l.b16 %v270
        %v336 = vunpack.c.h.b16 %v270
        %v337 = vunpack.c.l.b16 %v271
        %v338 = vunpack.c.l.b16 %v272
        %v339 = vunpack.c.h.b16 %v272
        %v340 = vunpack.c.l.b16 %v273
        %v341 = vunpack.c.l.b16 %v274
        %v342 = vunpack.c.h.b16 %v274
        %v343 = vunpack.c.l.b16 %v275
        %v344 = vunpack.c.l.b16 %v276
        %v345 = vunpack.c.h.b16 %v276
        %v346 = vunpack.c.l.b16 %v277
        %v347 = vunpack.c.l.b16 %v278
        %v348 = vunpack.c.h.b16 %v278
        %v349 = vunpack.c.l.b16 %v279
        %v350 = vunpack.c.l.b16 %v280
        %v351 = vunpack.c.h.b16 %v280
        %v352 = vunpack.c.l.b16 %v281
        %v353 = vunpack.c.l.b16 %v282
        %v354 = vunpack.c.h.b16 %v282
        %v355 = vunpack.c.l.b16 %v283
        %v356 = vunpack.c.l.b16 %v284
        %v357 = vunpack.c.h.b16 %v284
        %v358 = vunpack.c.l.b16 %v285
        %v359 = vunpack.c.l.b16 %v286
        %v360 = vunpack.c.h.b16 %v286
        %v361 = vunpack.c.l.b16 %v287
        %v362 = vunpack.c.l.b16 %v288
        %v363 = vunpack.c.h.b16 %v288
        %v364 = vunpack.c.l.b16 %v289
        %v365 = vunpack.c.l.b16 %v290
        %v366 = vunpack.c.h.b16 %v290
        %v367 = vunpack.c.l.b16 %v291
        %v368 = vunpack.c.l.b16 %v292
        %v369 = vunpack.c.h.b16 %v292
        %v370 = vunpack.c.l.b16 %v293
        %v371 = vunpack.c.l.b16 %v294
        %v372 = vunpack.c.h.b16 %v294
        %v373 = vunpack.c.l.b16 %v295
        %v374 = vunpack.c.l.b16 %v296
        %v375 = vunpack.c.h.b16 %v296
        %v376 = vunpack.c.l.b16 %v297
        %v377 = vunpack.c.l.b16 %v298
        %v378 = vunpack.c.h.b16 %v298
        %v379 = vunpack.c.l.b16 %v299
        %v380 = vunpack.c.l.b16 %v300
        %v381 = vunpack.c.h.b16 %v300
        %v382 = vunpack.c.l.b16 %v301
        %v383 = vpack.c.b16 %v338, %v335
        %v384 = vpack.c.b16 %v339, %v336
        %v385 = vpack.c.b16 %v340, %v337
        %v386 = vpack.c.b16 %v344, %v341
        %v387 = vpack.c.b16 %v345, %v342
        %v388 = vpack.c.b16 %v346, %v343
        %v389 = vpack.c.b16 %v350, %v347
        %v390 = vpack.c.b16 %v351, %v348
        %v391 = vpack.c.b16 %v352, %v349
        %v392 = vpack.c.b16 %v356, %v353
        %v393 = vpack.c.b16 %v357, %v354
        %v394 = vpack.c.b16 %v358, %v355
        %v395 = vpack.c.b16 %v362, %v359
        %v396 = vpack.c.b16 %v363, %v360
        %v397 = vpack.c.b16 %v364, %v361
        %v398 = vpack.c.b16 %v368, %v365
        %v399 = vpack.c.b16 %v369, %v366
        %v400 = vpack.c.b16 %v370, %v367
        %v401 = vpack.c.b16 %v374, %v371
        %v402 = vpack.c.b16 %v375, %v372
        %v403 = vpack.c.b16 %v376, %v373
        %v404 = vpack.c.b16 %v380, %v377
        %v405 = vpack.c.b16 %v381, %v378
        %v406 = vpack.c.b16 %v382, %v379
        %v432 = vperm.slane %v302, 0
        %v433 = vperm.slane %v302, 1
        %v434 = vperm.slane %v302, 2
        %438 = vmatpush.bf16.msra.mxu0 %v404
        %439 = vmatpush.bf16.msra.mxu0 %v401
        %440 = vmatpush.bf16.msra.mxu0 %v398
        %441 = vmatpush.bf16.msra.mxu0 %v395
        %442 = vmatpush.bf16.msra.mxu0 %v392
        %443 = vmatpush.bf16.msra.mxu0 %v389
        %444 = vmatpush.bf16.msra.mxu0 %v386
        %445 = vmatpush.bf16.msra.mxu0 %v383
        %446 = vmatmul.bf16.gmra.mxu0 %v269
        %v447 = vpop.f32.mrf.mxu0
        %v448 = vadd.f32 %v432, %v447
        %v449 = vpop.f32.mrf.mxu0
        %450 = vdwg.mxu0
        %451 = vmatpush.bf16.msra.mxu0 %v405
        %452 = vmatpush.bf16.msra.mxu0 %v402
        %453 = vmatpush.bf16.msra.mxu0 %v399
        %454 = vmatpush.bf16.msra.mxu0 %v396
        %455 = vmatpush.bf16.msra.mxu0 %v393
        %456 = vmatpush.bf16.msra.mxu0 %v390
        %457 = vmatpush.bf16.msra.mxu0 %v387
        %458 = vmatpush.bf16.msra.mxu0 %v384
        %459 = vmatmul.bf16.gmra.mxu0 %v269
        %v460 = vpop.f32.mrf.mxu0
        %v461 = vadd.f32 %v433, %v460
        %v462 = vpop.f32.mrf.mxu0
        %463 = vdwg.mxu0
        %464 = vmatpush.bf16.msra.mxu0 %v406
        %465 = vmatpush.bf16.msra.mxu0 %v403
        %466 = vmatpush.bf16.msra.mxu0 %v400
        %467 = vmatpush.bf16.msra.mxu0 %v397
        %468 = vmatpush.bf16.msra.mxu0 %v394
        %469 = vmatpush.bf16.msra.mxu0 %v391
        %470 = vmatpush.bf16.msra.mxu0 %v388
        %471 = vmatpush.bf16.msra.mxu0 %v385
        %472 = vmatmul.bf16.gmra.mxu0 %v269
        %v473 = vpop.f32.mrf.mxu0
        %v474 = vadd.f32 %v434, %v473
        %v475 = vpop.f32.mrf.mxu0
        %476 = vdwg.mxu0
        %v477 = vmax.f32 %v448, 0.0
        %v478 = vmax.f32 %v461, 0.0
        %v479 = vmax.f32 %v474, 0.0
        %s480 = scalar_lea.vmem [#allocation2], 192
        %v481 = vld [vmem:[%s480] sm:$0xff]
        %v482 = vld [vmem:[%s480 + $0x8] sm:$0xf]
        %v483 = vld [vmem:[%s480 + $0xc] sm:$0xff]
        %v484 = vld [vmem:[%s480 + $0x14] sm:$0xf]
        %v485 = vld [vmem:[%s480 + $0x18] sm:$0xff]
        %v486 = vld [vmem:[%s480 + $0x20] sm:$0xf]
        %v487 = vld [vmem:[%s480 + $0x24] sm:$0xff]
        %v488 = vld [vmem:[%s480 + $0x2c] sm:$0xf]
        %v489 = vld [vmem:[%s480 + $0x30] sm:$0xff]
        %v490 = vld [vmem:[%s480 + $0x38] sm:$0xf]
        %v491 = vld [vmem:[%s480 + $0x3c] sm:$0xff]
        %v492 = vld [vmem:[%s480 + $0x44] sm:$0xf]
        %v493 = vld [vmem:[%s480 + $0x48] sm:$0xff]
        %v494 = vld [vmem:[%s480 + $0x50] sm:$0xf]
        %v495 = vld [vmem:[%s480 + $0x54] sm:$0xff]
        %v496 = vld [vmem:[%s480 + $0x5c] sm:$0xf]
        %v497 = vld [vmem:[%s480 + $0x60] sm:$0xff]
        %v498 = vld [vmem:[%s480 + $0x68] sm:$0xf]
        %v499 = vld [vmem:[%s480 + $0x6c] sm:$0xff]
        %v500 = vld [vmem:[%s480 + $0x74] sm:$0xf]
        %v501 = vld [vmem:[%s480 + $0x78] sm:$0xff]
        %v502 = vld [vmem:[%s480 + $0x80] sm:$0xf]
        %v503 = vld [vmem:[%s480 + $0x84] sm:$0xff]
        %v504 = vld [vmem:[%s480 + $0x8c] sm:$0xf]
        %v505 = vld [vmem:[%s480 + $0x90] sm:$0xff]
        %v506 = vld [vmem:[%s480 + $0x98] sm:$0xf]
        %v507 = vld [vmem:[%s480 + $0x9c] sm:$0xff]
        %v508 = vld [vmem:[%s480 + $0xa4] sm:$0xf]
        %v509 = vld [vmem:[%s480 + $0xa8] sm:$0xff]
        %v510 = vld [vmem:[%s480 + $0xb0] sm:$0xf]
        %v511 = vld [vmem:[%s480 + $0xb4] sm:$0xff]
        %v512 = vld [vmem:[%s480 + $0xbc] sm:$0xf]
        %s513 = scalar_lea.vmem [#allocation4], 1
        %v514 = vld [vmem:[%s513] ss:$8 sm:$0x7]
        %v547 = vunpack.c.l.b16 %v481
        %v548 = vunpack.c.h.b16 %v481
        %v549 = vunpack.c.l.b16 %v482
        %v550 = vunpack.c.l.b16 %v483
        %v551 = vunpack.c.h.b16 %v483
        %v552 = vunpack.c.l.b16 %v484
        %v553 = vunpack.c.l.b16 %v485
        %v554 = vunpack.c.h.b16 %v485
        %v555 = vunpack.c.l.b16 %v486
        %v556 = vunpack.c.l.b16 %v487
        %v557 = vunpack.c.h.b16 %v487
        %v558 = vunpack.c.l.b16 %v488
        %v559 = vunpack.c.l.b16 %v489
        %v560 = vunpack.c.h.b16 %v489
        %v561 = vunpack.c.l.b16 %v490
        %v562 = vunpack.c.l.b16 %v491
        %v563 = vunpack.c.h.b16 %v491
        %v564 = vunpack.c.l.b16 %v492
        %v565 = vunpack.c.l.b16 %v493
        %v566 = vunpack.c.h.b16 %v493
        %v567 = vunpack.c.l.b16 %v494
        %v568 = vunpack.c.l.b16 %v495
        %v569 = vunpack.c.h.b16 %v495
        %v570 = vunpack.c.l.b16 %v496
        %v571 = vunpack.c.l.b16 %v497
        %v572 = vunpack.c.h.b16 %v497
        %v573 = vunpack.c.l.b16 %v498
        %v574 = vunpack.c.l.b16 %v499
        %v575 = vunpack.c.h.b16 %v499
        %v576 = vunpack.c.l.b16 %v500
        %v577 = vunpack.c.l.b16 %v501
        %v578 = vunpack.c.h.b16 %v501
        %v579 = vunpack.c.l.b16 %v502
        %v580 = vunpack.c.l.b16 %v503
        %v581 = vunpack.c.h.b16 %v503
        %v582 = vunpack.c.l.b16 %v504
        %v583 = vunpack.c.l.b16 %v505
        %v584 = vunpack.c.h.b16 %v505
        %v585 = vunpack.c.l.b16 %v506
        %v586 = vunpack.c.l.b16 %v507
        %v587 = vunpack.c.h.b16 %v507
        %v588 = vunpack.c.l.b16 %v508
        %v589 = vunpack.c.l.b16 %v509
        %v590 = vunpack.c.h.b16 %v509
        %v591 = vunpack.c.l.b16 %v510
        %v592 = vunpack.c.l.b16 %v511
        %v593 = vunpack.c.h.b16 %v511
        %v594 = vunpack.c.l.b16 %v512
        %v595 = vpack.c.b16 %v550, %v547
        %v596 = vpack.c.b16 %v551, %v548
        %v597 = vpack.c.b16 %v552, %v549
        %v598 = vpack.c.b16 %v556, %v553
        %v599 = vpack.c.b16 %v557, %v554
        %v600 = vpack.c.b16 %v558, %v555
        %v601 = vpack.c.b16 %v562, %v559
        %v602 = vpack.c.b16 %v563, %v560
        %v603 = vpack.c.b16 %v564, %v561
        %v604 = vpack.c.b16 %v568, %v565
        %v605 = vpack.c.b16 %v569, %v566
        %v606 = vpack.c.b16 %v570, %v567
        %v607 = vpack.c.b16 %v574, %v571
        %v608 = vpack.c.b16 %v575, %v572
        %v609 = vpack.c.b16 %v576, %v573
        %v610 = vpack.c.b16 %v580, %v577
        %v611 = vpack.c.b16 %v581, %v578
        %v612 = vpack.c.b16 %v582, %v579
        %v613 = vpack.c.b16 %v586, %v583
        %v614 = vpack.c.b16 %v587, %v584
        %v615 = vpack.c.b16 %v588, %v585
        %v616 = vpack.c.b16 %v592, %v589
        %v617 = vpack.c.b16 %v593, %v590
        %v618 = vpack.c.b16 %v594, %v591
        %v644 = vperm.slane %v514, 0
        %v645 = vperm.slane %v514, 1
        %v646 = vperm.slane %v514, 2
        %650 = vmatpush.bf16.msra.mxu0 %v616
        %651 = vmatpush.bf16.msra.mxu0 %v613
        %652 = vmatpush.bf16.msra.mxu0 %v610
        %653 = vmatpush.bf16.msra.mxu0 %v607
        %654 = vmatpush.bf16.msra.mxu0 %v604
        %655 = vmatpush.bf16.msra.mxu0 %v601
        %656 = vmatpush.bf16.msra.mxu0 %v598
        %657 = vmatpush.bf16.msra.mxu0 %v595
        %658 = vmatmul.bf16.gmra.mxu0 %v269
        %v659 = vpop.f32.mrf.mxu0
        %v660 = vadd.f32 %v644, %v659
        %v661 = vpop.f32.mrf.mxu0
        %662 = vdwg.mxu0
        %663 = vmatpush.bf16.msra.mxu0 %v617
        %664 = vmatpush.bf16.msra.mxu0 %v614
        %665 = vmatpush.bf16.msra.mxu0 %v611
        %666 = vmatpush.bf16.msra.mxu0 %v608
        %667 = vmatpush.bf16.msra.mxu0 %v605
        %668 = vmatpush.bf16.msra.mxu0 %v602
        %669 = vmatpush.bf16.msra.mxu0 %v599
        %670 = vmatpush.bf16.msra.mxu0 %v596
        %671 = vmatmul.bf16.gmra.mxu0 %v269
        %v672 = vpop.f32.mrf.mxu0
        %v673 = vadd.f32 %v645, %v672
        %v674 = vpop.f32.mrf.mxu0
        %675 = vdwg.mxu0
        %676 = vmatpush.bf16.msra.mxu0 %v618
        %677 = vmatpush.bf16.msra.mxu0 %v615
        %678 = vmatpush.bf16.msra.mxu0 %v612
        %679 = vmatpush.bf16.msra.mxu0 %v609
        %680 = vmatpush.bf16.msra.mxu0 %v606
        %681 = vmatpush.bf16.msra.mxu0 %v603
        %682 = vmatpush.bf16.msra.mxu0 %v600
        %683 = vmatpush.bf16.msra.mxu0 %v597
        %684 = vmatmul.bf16.gmra.mxu0 %v269
        %v685 = vpop.f32.mrf.mxu0
        %v686 = vadd.f32 %v646, %v685
        %v687 = vpop.f32.mrf.mxu0
        %688 = vdwg.mxu0
        %v689 = vmax.f32 %v660, 0.0
        %v690 = vmax.f32 %v673, 0.0
        %v691 = vmax.f32 %v686, 0.0
        %s692 = scalar_lea.vmem [#allocation2], 384
        %v693 = vld [vmem:[%s692] sm:$0xff]
        %v694 = vld [vmem:[%s692 + $0x8] sm:$0xf]
        %v695 = vld [vmem:[%s692 + $0xc] sm:$0xff]
        %v696 = vld [vmem:[%s692 + $0x14] sm:$0xf]
        %v697 = vld [vmem:[%s692 + $0x18] sm:$0xff]
        %v698 = vld [vmem:[%s692 + $0x20] sm:$0xf]
        %v699 = vld [vmem:[%s692 + $0x24] sm:$0xff]
        %v700 = vld [vmem:[%s692 + $0x2c] sm:$0xf]
        %v701 = vld [vmem:[%s692 + $0x30] sm:$0xff]
        %v702 = vld [vmem:[%s692 + $0x38] sm:$0xf]
        %v703 = vld [vmem:[%s692 + $0x3c] sm:$0xff]
        %v704 = vld [vmem:[%s692 + $0x44] sm:$0xf]
        %v705 = vld [vmem:[%s692 + $0x48] sm:$0xff]
        %v706 = vld [vmem:[%s692 + $0x50] sm:$0xf]
        %v707 = vld [vmem:[%s692 + $0x54] sm:$0xff]
        %v708 = vld [vmem:[%s692 + $0x5c] sm:$0xf]
        %v709 = vld [vmem:[%s692 + $0x60] sm:$0xff]
        %v710 = vld [vmem:[%s692 + $0x68] sm:$0xf]
        %v711 = vld [vmem:[%s692 + $0x6c] sm:$0xff]
        %v712 = vld [vmem:[%s692 + $0x74] sm:$0xf]
        %v713 = vld [vmem:[%s692 + $0x78] sm:$0xff]
        %v714 = vld [vmem:[%s692 + $0x80] sm:$0xf]
        %v715 = vld [vmem:[%s692 + $0x84] sm:$0xff]
        %v716 = vld [vmem:[%s692 + $0x8c] sm:$0xf]
        %v717 = vld [vmem:[%s692 + $0x90] sm:$0xff]
        %v718 = vld [vmem:[%s692 + $0x98] sm:$0xf]
        %v719 = vld [vmem:[%s692 + $0x9c] sm:$0xff]
        %v720 = vld [vmem:[%s692 + $0xa4] sm:$0xf]
        %v721 = vld [vmem:[%s692 + $0xa8] sm:$0xff]
        %v722 = vld [vmem:[%s692 + $0xb0] sm:$0xf]
        %v723 = vld [vmem:[%s692 + $0xb4] sm:$0xff]
        %v724 = vld [vmem:[%s692 + $0xbc] sm:$0xf]
        %s725 = scalar_lea.vmem [#allocation4], 2
        %v726 = vld [vmem:[%s725] ss:$8 sm:$0x7]
        %v759 = vunpack.c.l.b16 %v693
        %v760 = vunpack.c.h.b16 %v693
        %v761 = vunpack.c.l.b16 %v694
        %v762 = vunpack.c.l.b16 %v695
        %v763 = vunpack.c.h.b16 %v695
        %v764 = vunpack.c.l.b16 %v696
        %v765 = vunpack.c.l.b16 %v697
        %v766 = vunpack.c.h.b16 %v697
        %v767 = vunpack.c.l.b16 %v698
        %v768 = vunpack.c.l.b16 %v699
        %v769 = vunpack.c.h.b16 %v699
        %v770 = vunpack.c.l.b16 %v700
        %v771 = vunpack.c.l.b16 %v701
        %v772 = vunpack.c.h.b16 %v701
        %v773 = vunpack.c.l.b16 %v702
        %v774 = vunpack.c.l.b16 %v703
        %v775 = vunpack.c.h.b16 %v703
        %v776 = vunpack.c.l.b16 %v704
        %v777 = vunpack.c.l.b16 %v705
        %v778 = vunpack.c.h.b16 %v705
        %v779 = vunpack.c.l.b16 %v706
        %v780 = vunpack.c.l.b16 %v707
        %v781 = vunpack.c.h.b16 %v707
        %v782 = vunpack.c.l.b16 %v708
        %v783 = vunpack.c.l.b16 %v709
        %v784 = vunpack.c.h.b16 %v709
        %v785 = vunpack.c.l.b16 %v710
        %v786 = vunpack.c.l.b16 %v711
        %v787 = vunpack.c.h.b16 %v711
        %v788 = vunpack.c.l.b16 %v712
        %v789 = vunpack.c.l.b16 %v713
        %v790 = vunpack.c.h.b16 %v713
        %v791 = vunpack.c.l.b16 %v714
        %v792 = vunpack.c.l.b16 %v715
        %v793 = vunpack.c.h.b16 %v715
        %v794 = vunpack.c.l.b16 %v716
        %v795 = vunpack.c.l.b16 %v717
        %v796 = vunpack.c.h.b16 %v717
        %v797 = vunpack.c.l.b16 %v718
        %v798 = vunpack.c.l.b16 %v719
        %v799 = vunpack.c.h.b16 %v719
        %v800 = vunpack.c.l.b16 %v720
        %v801 = vunpack.c.l.b16 %v721
        %v802 = vunpack.c.h.b16 %v721
        %v803 = vunpack.c.l.b16 %v722
        %v804 = vunpack.c.l.b16 %v723
        %v805 = vunpack.c.h.b16 %v723
        %v806 = vunpack.c.l.b16 %v724
        %v807 = vpack.c.b16 %v762, %v759
        %v808 = vpack.c.b16 %v763, %v760
        %v809 = vpack.c.b16 %v764, %v761
        %v810 = vpack.c.b16 %v768, %v765
        %v811 = vpack.c.b16 %v769, %v766
        %v812 = vpack.c.b16 %v770, %v767
        %v813 = vpack.c.b16 %v774, %v771
        %v814 = vpack.c.b16 %v775, %v772
        %v815 = vpack.c.b16 %v776, %v773
        %v816 = vpack.c.b16 %v780, %v777
        %v817 = vpack.c.b16 %v781, %v778
        %v818 = vpack.c.b16 %v782, %v779
        %v819 = vpack.c.b16 %v786, %v783
        %v820 = vpack.c.b16 %v787, %v784
        %v821 = vpack.c.b16 %v788, %v785
        %v822 = vpack.c.b16 %v792, %v789
        %v823 = vpack.c.b16 %v793, %v790
        %v824 = vpack.c.b16 %v794, %v791
        %v825 = vpack.c.b16 %v798, %v795
        %v826 = vpack.c.b16 %v799, %v796
        %v827 = vpack.c.b16 %v800, %v797
        %v828 = vpack.c.b16 %v804, %v801
        %v829 = vpack.c.b16 %v805, %v802
        %v830 = vpack.c.b16 %v806, %v803
        %v856 = vperm.slane %v726, 0
        %v857 = vperm.slane %v726, 1
        %v858 = vperm.slane %v726, 2
        %862 = vmatpush.bf16.msra.mxu0 %v828
        %863 = vmatpush.bf16.msra.mxu0 %v825
        %864 = vmatpush.bf16.msra.mxu0 %v822
        %865 = vmatpush.bf16.msra.mxu0 %v819
        %866 = vmatpush.bf16.msra.mxu0 %v816
        %867 = vmatpush.bf16.msra.mxu0 %v813
        %868 = vmatpush.bf16.msra.mxu0 %v810
        %869 = vmatpush.bf16.msra.mxu0 %v807
        %870 = vmatmul.bf16.gmra.mxu0 %v269
        %v871 = vpop.f32.mrf.mxu0
        %v872 = vadd.f32 %v856, %v871
        %v873 = vpop.f32.mrf.mxu0
        %874 = vdwg.mxu0
        %875 = vmatpush.bf16.msra.mxu0 %v829
        %876 = vmatpush.bf16.msra.mxu0 %v826
        %877 = vmatpush.bf16.msra.mxu0 %v823
        %878 = vmatpush.bf16.msra.mxu0 %v820
        %879 = vmatpush.bf16.msra.mxu0 %v817
        %880 = vmatpush.bf16.msra.mxu0 %v814
        %881 = vmatpush.bf16.msra.mxu0 %v811
        %882 = vmatpush.bf16.msra.mxu0 %v808
        %883 = vmatmul.bf16.gmra.mxu0 %v269
        %v884 = vpop.f32.mrf.mxu0
        %v885 = vadd.f32 %v857, %v884
        %v886 = vpop.f32.mrf.mxu0
        %887 = vdwg.mxu0
        %888 = vmatpush.bf16.msra.mxu0 %v830
        %889 = vmatpush.bf16.msra.mxu0 %v827
        %890 = vmatpush.bf16.msra.mxu0 %v824
        %891 = vmatpush.bf16.msra.mxu0 %v821
        %892 = vmatpush.bf16.msra.mxu0 %v818
        %893 = vmatpush.bf16.msra.mxu0 %v815
        %894 = vmatpush.bf16.msra.mxu0 %v812
        %895 = vmatpush.bf16.msra.mxu0 %v809
        %896 = vmatmul.bf16.gmra.mxu0 %v269
        %v897 = vpop.f32.mrf.mxu0
        %v898 = vadd.f32 %v858, %v897
        %v899 = vpop.f32.mrf.mxu0
        %900 = vdwg.mxu0
        %v901 = vmax.f32 %v872, 0.0
        %v902 = vmax.f32 %v885, 0.0
        %v903 = vmax.f32 %v898, 0.0
        %s904 = scalar_lea.vmem [#allocation2], 576
        %v905 = vld [vmem:[%s904] sm:$0xff]
        %v906 = vld [vmem:[%s904 + $0x8] sm:$0xf]
        %v907 = vld [vmem:[%s904 + $0xc] sm:$0xff]
        %v908 = vld [vmem:[%s904 + $0x14] sm:$0xf]
        %v909 = vld [vmem:[%s904 + $0x18] sm:$0xff]
        %v910 = vld [vmem:[%s904 + $0x20] sm:$0xf]
        %v911 = vld [vmem:[%s904 + $0x24] sm:$0xff]
        %v912 = vld [vmem:[%s904 + $0x2c] sm:$0xf]
        %v913 = vld [vmem:[%s904 + $0x30] sm:$0xff]
        %v914 = vld [vmem:[%s904 + $0x38] sm:$0xf]
        %v915 = vld [vmem:[%s904 + $0x3c] sm:$0xff]
        %v916 = vld [vmem:[%s904 + $0x44] sm:$0xf]
        %v917 = vld [vmem:[%s904 + $0x48] sm:$0xff]
        %v918 = vld [vmem:[%s904 + $0x50] sm:$0xf]
        %v919 = vld [vmem:[%s904 + $0x54] sm:$0xff]
        %v920 = vld [vmem:[%s904 + $0x5c] sm:$0xf]
        %v921 = vld [vmem:[%s904 + $0x60] sm:$0xff]
        %v922 = vld [vmem:[%s904 + $0x68] sm:$0xf]
        %v923 = vld [vmem:[%s904 + $0x6c] sm:$0xff]
        %v924 = vld [vmem:[%s904 + $0x74] sm:$0xf]
        %v925 = vld [vmem:[%s904 + $0x78] sm:$0xff]
        %v926 = vld [vmem:[%s904 + $0x80] sm:$0xf]
        %v927 = vld [vmem:[%s904 + $0x84] sm:$0xff]
        %v928 = vld [vmem:[%s904 + $0x8c] sm:$0xf]
        %v929 = vld [vmem:[%s904 + $0x90] sm:$0xff]
        %v930 = vld [vmem:[%s904 + $0x98] sm:$0xf]
        %v931 = vld [vmem:[%s904 + $0x9c] sm:$0xff]
        %v932 = vld [vmem:[%s904 + $0xa4] sm:$0xf]
        %v933 = vld [vmem:[%s904 + $0xa8] sm:$0xff]
        %v934 = vld [vmem:[%s904 + $0xb0] sm:$0xf]
        %v935 = vld [vmem:[%s904 + $0xb4] sm:$0xff]
        %v936 = vld [vmem:[%s904 + $0xbc] sm:$0xf]
        %s937 = scalar_lea.vmem [#allocation4], 3
        %v938 = vld [vmem:[%s937] ss:$8 sm:$0x7]
        %v971 = vunpack.c.l.b16 %v905
        %v972 = vunpack.c.h.b16 %v905
        %v973 = vunpack.c.l.b16 %v906
        %v974 = vunpack.c.l.b16 %v907
        %v975 = vunpack.c.h.b16 %v907
        %v976 = vunpack.c.l.b16 %v908
        %v977 = vunpack.c.l.b16 %v909
        %v978 = vunpack.c.h.b16 %v909
        %v979 = vunpack.c.l.b16 %v910
        %v980 = vunpack.c.l.b16 %v911
        %v981 = vunpack.c.h.b16 %v911
        %v982 = vunpack.c.l.b16 %v912
        %v983 = vunpack.c.l.b16 %v913
        %v984 = vunpack.c.h.b16 %v913
        %v985 = vunpack.c.l.b16 %v914
        %v986 = vunpack.c.l.b16 %v915
        %v987 = vunpack.c.h.b16 %v915
        %v988 = vunpack.c.l.b16 %v916
        %v989 = vunpack.c.l.b16 %v917
        %v990 = vunpack.c.h.b16 %v917
        %v991 = vunpack.c.l.b16 %v918
        %v992 = vunpack.c.l.b16 %v919
        %v993 = vunpack.c.h.b16 %v919
        %v994 = vunpack.c.l.b16 %v920
        %v995 = vunpack.c.l.b16 %v921
        %v996 = vunpack.c.h.b16 %v921
        %v997 = vunpack.c.l.b16 %v922
        %v998 = vunpack.c.l.b16 %v923
        %v999 = vunpack.c.h.b16 %v923
        %v1000 = vunpack.c.l.b16 %v924
        %v1001 = vunpack.c.l.b16 %v925
        %v1002 = vunpack.c.h.b16 %v925
        %v1003 = vunpack.c.l.b16 %v926
        %v1004 = vunpack.c.l.b16 %v927
        %v1005 = vunpack.c.h.b16 %v927
        %v1006 = vunpack.c.l.b16 %v928
        %v1007 = vunpack.c.l.b16 %v929
        %v1008 = vunpack.c.h.b16 %v929
        %v1009 = vunpack.c.l.b16 %v930
        %v1010 = vunpack.c.l.b16 %v931
        %v1011 = vunpack.c.h.b16 %v931
        %v1012 = vunpack.c.l.b16 %v932
        %v1013 = vunpack.c.l.b16 %v933
        %v1014 = vunpack.c.h.b16 %v933
        %v1015 = vunpack.c.l.b16 %v934
        %v1016 = vunpack.c.l.b16 %v935
        %v1017 = vunpack.c.h.b16 %v935
        %v1018 = vunpack.c.l.b16 %v936
        %v1019 = vpack.c.b16 %v974, %v971
        %v1020 = vpack.c.b16 %v975, %v972
        %v1021 = vpack.c.b16 %v976, %v973
        %v1022 = vpack.c.b16 %v980, %v977
        %v1023 = vpack.c.b16 %v981, %v978
        %v1024 = vpack.c.b16 %v982, %v979
        %v1025 = vpack.c.b16 %v986, %v983
        %v1026 = vpack.c.b16 %v987, %v984
        %v1027 = vpack.c.b16 %v988, %v985
        %v1028 = vpack.c.b16 %v992, %v989
        %v1029 = vpack.c.b16 %v993, %v990
        %v1030 = vpack.c.b16 %v994, %v991
        %v1031 = vpack.c.b16 %v998, %v995
        %v1032 = vpack.c.b16 %v999, %v996
        %v1033 = vpack.c.b16 %v1000, %v997
        %v1034 = vpack.c.b16 %v1004, %v1001
        %v1035 = vpack.c.b16 %v1005, %v1002
        %v1036 = vpack.c.b16 %v1006, %v1003
        %v1037 = vpack.c.b16 %v1010, %v1007
        %v1038 = vpack.c.b16 %v1011, %v1008
        %v1039 = vpack.c.b16 %v1012, %v1009
        %v1040 = vpack.c.b16 %v1016, %v1013
        %v1041 = vpack.c.b16 %v1017, %v1014
        %v1042 = vpack.c.b16 %v1018, %v1015
        %v1068 = vperm.slane %v938, 0
        %v1069 = vperm.slane %v938, 1
        %v1070 = vperm.slane %v938, 2
        %1074 = vmatpush.bf16.msra.mxu0 %v1040
        %1075 = vmatpush.bf16.msra.mxu0 %v1037
        %1076 = vmatpush.bf16.msra.mxu0 %v1034
        %1077 = vmatpush.bf16.msra.mxu0 %v1031
        %1078 = vmatpush.bf16.msra.mxu0 %v1028
        %1079 = vmatpush.bf16.msra.mxu0 %v1025
        %1080 = vmatpush.bf16.msra.mxu0 %v1022
        %1081 = vmatpush.bf16.msra.mxu0 %v1019
        %1082 = vmatmul.bf16.gmra.mxu0 %v269
        %v1083 = vpop.f32.mrf.mxu0
        %v1084 = vadd.f32 %v1068, %v1083
        %v1085 = vpop.f32.mrf.mxu0
        %1086 = vdwg.mxu0
        %1087 = vmatpush.bf16.msra.mxu0 %v1041
        %1088 = vmatpush.bf16.msra.mxu0 %v1038
        %1089 = vmatpush.bf16.msra.mxu0 %v1035
        %1090 = vmatpush.bf16.msra.mxu0 %v1032
        %1091 = vmatpush.bf16.msra.mxu0 %v1029
        %1092 = vmatpush.bf16.msra.mxu0 %v1026
        %1093 = vmatpush.bf16.msra.mxu0 %v1023
        %1094 = vmatpush.bf16.msra.mxu0 %v1020
        %1095 = vmatmul.bf16.gmra.mxu0 %v269
        %v1096 = vpop.f32.mrf.mxu0
        %v1097 = vadd.f32 %v1069, %v1096
        %v1098 = vpop.f32.mrf.mxu0
        %1099 = vdwg.mxu0
        %1100 = vmatpush.bf16.msra.mxu0 %v1042
        %1101 = vmatpush.bf16.msra.mxu0 %v1039
        %1102 = vmatpush.bf16.msra.mxu0 %v1036
        %1103 = vmatpush.bf16.msra.mxu0 %v1033
        %1104 = vmatpush.bf16.msra.mxu0 %v1030
        %1105 = vmatpush.bf16.msra.mxu0 %v1027
        %1106 = vmatpush.bf16.msra.mxu0 %v1024
        %1107 = vmatpush.bf16.msra.mxu0 %v1021
        %1108 = vmatmul.bf16.gmra.mxu0 %v269
        %v1109 = vpop.f32.mrf.mxu0
        %v1110 = vadd.f32 %v1070, %v1109
        %v1111 = vpop.f32.mrf.mxu0
        %1112 = vdwg.mxu0
        %v1113 = vmax.f32 %v1084, 0.0
        %v1114 = vmax.f32 %v1097, 0.0
        %v1115 = vmax.f32 %v1110, 0.0
        %s1116 = scalar_lea.vmem [#allocation2], 768
        %v1117 = vld [vmem:[%s1116] sm:$0xff]
        %v1118 = vld [vmem:[%s1116 + $0x8] sm:$0xf]
        %v1119 = vld [vmem:[%s1116 + $0xc] sm:$0xff]
        %v1120 = vld [vmem:[%s1116 + $0x14] sm:$0xf]
        %v1121 = vld [vmem:[%s1116 + $0x18] sm:$0xff]
        %v1122 = vld [vmem:[%s1116 + $0x20] sm:$0xf]
        %v1123 = vld [vmem:[%s1116 + $0x24] sm:$0xff]
        %v1124 = vld [vmem:[%s1116 + $0x2c] sm:$0xf]
        %v1125 = vld [vmem:[%s1116 + $0x30] sm:$0xff]
        %v1126 = vld [vmem:[%s1116 + $0x38] sm:$0xf]
        %v1127 = vld [vmem:[%s1116 + $0x3c] sm:$0xff]
        %v1128 = vld [vmem:[%s1116 + $0x44] sm:$0xf]
        %v1129 = vld [vmem:[%s1116 + $0x48] sm:$0xff]
        %v1130 = vld [vmem:[%s1116 + $0x50] sm:$0xf]
        %v1131 = vld [vmem:[%s1116 + $0x54] sm:$0xff]
        %v1132 = vld [vmem:[%s1116 + $0x5c] sm:$0xf]
        %v1133 = vld [vmem:[%s1116 + $0x60] sm:$0xff]
        %v1134 = vld [vmem:[%s1116 + $0x68] sm:$0xf]
        %v1135 = vld [vmem:[%s1116 + $0x6c] sm:$0xff]
        %v1136 = vld [vmem:[%s1116 + $0x74] sm:$0xf]
        %v1137 = vld [vmem:[%s1116 + $0x78] sm:$0xff]
        %v1138 = vld [vmem:[%s1116 + $0x80] sm:$0xf]
        %v1139 = vld [vmem:[%s1116 + $0x84] sm:$0xff]
        %v1140 = vld [vmem:[%s1116 + $0x8c] sm:$0xf]
        %v1141 = vld [vmem:[%s1116 + $0x90] sm:$0xff]
        %v1142 = vld [vmem:[%s1116 + $0x98] sm:$0xf]
        %v1143 = vld [vmem:[%s1116 + $0x9c] sm:$0xff]
        %v1144 = vld [vmem:[%s1116 + $0xa4] sm:$0xf]
        %v1145 = vld [vmem:[%s1116 + $0xa8] sm:$0xff]
        %v1146 = vld [vmem:[%s1116 + $0xb0] sm:$0xf]
        %v1147 = vld [vmem:[%s1116 + $0xb4] sm:$0xff]
        %v1148 = vld [vmem:[%s1116 + $0xbc] sm:$0xf]
        %s1149 = scalar_lea.vmem [#allocation4], 4
        %v1150 = vld [vmem:[%s1149] ss:$8 sm:$0x7]
        %v1183 = vunpack.c.l.b16 %v1117
        %v1184 = vunpack.c.h.b16 %v1117
        %v1185 = vunpack.c.l.b16 %v1118
        %v1186 = vunpack.c.l.b16 %v1119
        %v1187 = vunpack.c.h.b16 %v1119
        %v1188 = vunpack.c.l.b16 %v1120
        %v1189 = vunpack.c.l.b16 %v1121
        %v1190 = vunpack.c.h.b16 %v1121
        %v1191 = vunpack.c.l.b16 %v1122
        %v1192 = vunpack.c.l.b16 %v1123
        %v1193 = vunpack.c.h.b16 %v1123
        %v1194 = vunpack.c.l.b16 %v1124
        %v1195 = vunpack.c.l.b16 %v1125
        %v1196 = vunpack.c.h.b16 %v1125
        %v1197 = vunpack.c.l.b16 %v1126
        %v1198 = vunpack.c.l.b16 %v1127
        %v1199 = vunpack.c.h.b16 %v1127
        %v1200 = vunpack.c.l.b16 %v1128
        %v1201 = vunpack.c.l.b16 %v1129
        %v1202 = vunpack.c.h.b16 %v1129
        %v1203 = vunpack.c.l.b16 %v1130
        %v1204 = vunpack.c.l.b16 %v1131
        %v1205 = vunpack.c.h.b16 %v1131
        %v1206 = vunpack.c.l.b16 %v1132
        %v1207 = vunpack.c.l.b16 %v1133
        %v1208 = vunpack.c.h.b16 %v1133
        %v1209 = vunpack.c.l.b16 %v1134
        %v1210 = vunpack.c.l.b16 %v1135
        %v1211 = vunpack.c.h.b16 %v1135
        %v1212 = vunpack.c.l.b16 %v1136
        %v1213 = vunpack.c.l.b16 %v1137
        %v1214 = vunpack.c.h.b16 %v1137
        %v1215 = vunpack.c.l.b16 %v1138
        %v1216 = vunpack.c.l.b16 %v1139
        %v1217 = vunpack.c.h.b16 %v1139
        %v1218 = vunpack.c.l.b16 %v1140
        %v1219 = vunpack.c.l.b16 %v1141
        %v1220 = vunpack.c.h.b16 %v1141
        %v1221 = vunpack.c.l.b16 %v1142
        %v1222 = vunpack.c.l.b16 %v1143
        %v1223 = vunpack.c.h.b16 %v1143
        %v1224 = vunpack.c.l.b16 %v1144
        %v1225 = vunpack.c.l.b16 %v1145
        %v1226 = vunpack.c.h.b16 %v1145
        %v1227 = vunpack.c.l.b16 %v1146
        %v1228 = vunpack.c.l.b16 %v1147
        %v1229 = vunpack.c.h.b16 %v1147
        %v1230 = vunpack.c.l.b16 %v1148
        %v1231 = vpack.c.b16 %v1186, %v1183
        %v1232 = vpack.c.b16 %v1187, %v1184
        %v1233 = vpack.c.b16 %v1188, %v1185
        %v1234 = vpack.c.b16 %v1192, %v1189
        %v1235 = vpack.c.b16 %v1193, %v1190
        %v1236 = vpack.c.b16 %v1194, %v1191
        %v1237 = vpack.c.b16 %v1198, %v1195
        %v1238 = vpack.c.b16 %v1199, %v1196
        %v1239 = vpack.c.b16 %v1200, %v1197
        %v1240 = vpack.c.b16 %v1204, %v1201
        %v1241 = vpack.c.b16 %v1205, %v1202
        %v1242 = vpack.c.b16 %v1206, %v1203
        %v1243 = vpack.c.b16 %v1210, %v1207
        %v1244 = vpack.c.b16 %v1211, %v1208
        %v1245 = vpack.c.b16 %v1212, %v1209
        %v1246 = vpack.c.b16 %v1216, %v1213
        %v1247 = vpack.c.b16 %v1217, %v1214
        %v1248 = vpack.c.b16 %v1218, %v1215
        %v1249 = vpack.c.b16 %v1222, %v1219
        %v1250 = vpack.c.b16 %v1223, %v1220
        %v1251 = vpack.c.b16 %v1224, %v1221
        %v1252 = vpack.c.b16 %v1228, %v1225
        %v1253 = vpack.c.b16 %v1229, %v1226
        %v1254 = vpack.c.b16 %v1230, %v1227
        %v1280 = vperm.slane %v1150, 0
        %v1281 = vperm.slane %v1150, 1
        %v1282 = vperm.slane %v1150, 2
        %1286 = vmatpush.bf16.msra.mxu0 %v1252
        %1287 = vmatpush.bf16.msra.mxu0 %v1249
        %1288 = vmatpush.bf16.msra.mxu0 %v1246
        %1289 = vmatpush.bf16.msra.mxu0 %v1243
        %1290 = vmatpush.bf16.msra.mxu0 %v1240
        %1291 = vmatpush.bf16.msra.mxu0 %v1237
        %1292 = vmatpush.bf16.msra.mxu0 %v1234
        %1293 = vmatpush.bf16.msra.mxu0 %v1231
        %1294 = vmatmul.bf16.gmra.mxu0 %v269
        %v1295 = vpop.f32.mrf.mxu0
        %v1296 = vadd.f32 %v1280, %v1295
        %v1297 = vpop.f32.mrf.mxu0
        %1298 = vdwg.mxu0
        %1299 = vmatpush.bf16.msra.mxu0 %v1253
        %1300 = vmatpush.bf16.msra.mxu0 %v1250
        %1301 = vmatpush.bf16.msra.mxu0 %v1247
        %1302 = vmatpush.bf16.msra.mxu0 %v1244
        %1303 = vmatpush.bf16.msra.mxu0 %v1241
        %1304 = vmatpush.bf16.msra.mxu0 %v1238
        %1305 = vmatpush.bf16.msra.mxu0 %v1235
        %1306 = vmatpush.bf16.msra.mxu0 %v1232
        %1307 = vmatmul.bf16.gmra.mxu0 %v269
        %v1308 = vpop.f32.mrf.mxu0
        %v1309 = vadd.f32 %v1281, %v1308
        %v1310 = vpop.f32.mrf.mxu0
        %1311 = vdwg.mxu0
        %1312 = vmatpush.bf16.msra.mxu0 %v1254
        %1313 = vmatpush.bf16.msra.mxu0 %v1251
        %1314 = vmatpush.bf16.msra.mxu0 %v1248
        %1315 = vmatpush.bf16.msra.mxu0 %v1245
        %1316 = vmatpush.bf16.msra.mxu0 %v1242
        %1317 = vmatpush.bf16.msra.mxu0 %v1239
        %1318 = vmatpush.bf16.msra.mxu0 %v1236
        %1319 = vmatpush.bf16.msra.mxu0 %v1233
        %1320 = vmatmul.bf16.gmra.mxu0 %v269
        %v1321 = vpop.f32.mrf.mxu0
        %v1322 = vadd.f32 %v1282, %v1321
        %v1323 = vpop.f32.mrf.mxu0
        %1324 = vdwg.mxu0
        %v1325 = vmax.f32 %v1296, 0.0
        %v1326 = vmax.f32 %v1309, 0.0
        %v1327 = vmax.f32 %v1322, 0.0
        %s1328 = scalar_lea.vmem [#allocation2], 960
        %v1329 = vld [vmem:[%s1328] sm:$0xff]
        %v1330 = vld [vmem:[%s1328 + $0x8] sm:$0xf]
        %v1331 = vld [vmem:[%s1328 + $0xc] sm:$0xff]
        %v1332 = vld [vmem:[%s1328 + $0x14] sm:$0xf]
        %v1333 = vld [vmem:[%s1328 + $0x18] sm:$0xff]
        %v1334 = vld [vmem:[%s1328 + $0x20] sm:$0xf]
        %v1335 = vld [vmem:[%s1328 + $0x24] sm:$0xff]
        %v1336 = vld [vmem:[%s1328 + $0x2c] sm:$0xf]
        %v1337 = vld [vmem:[%s1328 + $0x30] sm:$0xff]
        %v1338 = vld [vmem:[%s1328 + $0x38] sm:$0xf]
        %v1339 = vld [vmem:[%s1328 + $0x3c] sm:$0xff]
        %v1340 = vld [vmem:[%s1328 + $0x44] sm:$0xf]
        %v1341 = vld [vmem:[%s1328 + $0x48] sm:$0xff]
        %v1342 = vld [vmem:[%s1328 + $0x50] sm:$0xf]
        %v1343 = vld [vmem:[%s1328 + $0x54] sm:$0xff]
        %v1344 = vld [vmem:[%s1328 + $0x5c] sm:$0xf]
        %v1345 = vld [vmem:[%s1328 + $0x60] sm:$0xff]
        %v1346 = vld [vmem:[%s1328 + $0x68] sm:$0xf]
        %v1347 = vld [vmem:[%s1328 + $0x6c] sm:$0xff]
        %v1348 = vld [vmem:[%s1328 + $0x74] sm:$0xf]
        %v1349 = vld [vmem:[%s1328 + $0x78] sm:$0xff]
        %v1350 = vld [vmem:[%s1328 + $0x80] sm:$0xf]
        %v1351 = vld [vmem:[%s1328 + $0x84] sm:$0xff]
        %v1352 = vld [vmem:[%s1328 + $0x8c] sm:$0xf]
        %v1353 = vld [vmem:[%s1328 + $0x90] sm:$0xff]
        %v1354 = vld [vmem:[%s1328 + $0x98] sm:$0xf]
        %v1355 = vld [vmem:[%s1328 + $0x9c] sm:$0xff]
        %v1356 = vld [vmem:[%s1328 + $0xa4] sm:$0xf]
        %v1357 = vld [vmem:[%s1328 + $0xa8] sm:$0xff]
        %v1358 = vld [vmem:[%s1328 + $0xb0] sm:$0xf]
        %v1359 = vld [vmem:[%s1328 + $0xb4] sm:$0xff]
        %v1360 = vld [vmem:[%s1328 + $0xbc] sm:$0xf]
        %s1361 = scalar_lea.vmem [#allocation4], 5
        %v1362 = vld [vmem:[%s1361] ss:$8 sm:$0x7]
        %v1395 = vunpack.c.l.b16 %v1329
        %v1396 = vunpack.c.h.b16 %v1329
        %v1397 = vunpack.c.l.b16 %v1330
        %v1398 = vunpack.c.l.b16 %v1331
        %v1399 = vunpack.c.h.b16 %v1331
        %v1400 = vunpack.c.l.b16 %v1332
        %v1401 = vunpack.c.l.b16 %v1333
        %v1402 = vunpack.c.h.b16 %v1333
        %v1403 = vunpack.c.l.b16 %v1334
        %v1404 = vunpack.c.l.b16 %v1335
        %v1405 = vunpack.c.h.b16 %v1335
        %v1406 = vunpack.c.l.b16 %v1336
        %v1407 = vunpack.c.l.b16 %v1337
        %v1408 = vunpack.c.h.b16 %v1337
        %v1409 = vunpack.c.l.b16 %v1338
        %v1410 = vunpack.c.l.b16 %v1339
        %v1411 = vunpack.c.h.b16 %v1339
        %v1412 = vunpack.c.l.b16 %v1340
        %v1413 = vunpack.c.l.b16 %v1341
        %v1414 = vunpack.c.h.b16 %v1341
        %v1415 = vunpack.c.l.b16 %v1342
        %v1416 = vunpack.c.l.b16 %v1343
        %v1417 = vunpack.c.h.b16 %v1343
        %v1418 = vunpack.c.l.b16 %v1344
        %v1419 = vunpack.c.l.b16 %v1345
        %v1420 = vunpack.c.h.b16 %v1345
        %v1421 = vunpack.c.l.b16 %v1346
        %v1422 = vunpack.c.l.b16 %v1347
        %v1423 = vunpack.c.h.b16 %v1347
        %v1424 = vunpack.c.l.b16 %v1348
        %v1425 = vunpack.c.l.b16 %v1349
        %v1426 = vunpack.c.h.b16 %v1349
        %v1427 = vunpack.c.l.b16 %v1350
        %v1428 = vunpack.c.l.b16 %v1351
        %v1429 = vunpack.c.h.b16 %v1351
        %v1430 = vunpack.c.l.b16 %v1352
        %v1431 = vunpack.c.l.b16 %v1353
        %v1432 = vunpack.c.h.b16 %v1353
        %v1433 = vunpack.c.l.b16 %v1354
        %v1434 = vunpack.c.l.b16 %v1355
        %v1435 = vunpack.c.h.b16 %v1355
        %v1436 = vunpack.c.l.b16 %v1356
        %v1437 = vunpack.c.l.b16 %v1357
        %v1438 = vunpack.c.h.b16 %v1357
        %v1439 = vunpack.c.l.b16 %v1358
        %v1440 = vunpack.c.l.b16 %v1359
        %v1441 = vunpack.c.h.b16 %v1359
        %v1442 = vunpack.c.l.b16 %v1360
        %v1443 = vpack.c.b16 %v1398, %v1395
        %v1444 = vpack.c.b16 %v1399, %v1396
        %v1445 = vpack.c.b16 %v1400, %v1397
        %v1446 = vpack.c.b16 %v1404, %v1401
        %v1447 = vpack.c.b16 %v1405, %v1402
        %v1448 = vpack.c.b16 %v1406, %v1403
        %v1449 = vpack.c.b16 %v1410, %v1407
        %v1450 = vpack.c.b16 %v1411, %v1408
        %v1451 = vpack.c.b16 %v1412, %v1409
        %v1452 = vpack.c.b16 %v1416, %v1413
        %v1453 = vpack.c.b16 %v1417, %v1414
        %v1454 = vpack.c.b16 %v1418, %v1415
        %v1455 = vpack.c.b16 %v1422, %v1419
        %v1456 = vpack.c.b16 %v1423, %v1420
        %v1457 = vpack.c.b16 %v1424, %v1421
        %v1458 = vpack.c.b16 %v1428, %v1425
        %v1459 = vpack.c.b16 %v1429, %v1426
        %v1460 = vpack.c.b16 %v1430, %v1427
        %v1461 = vpack.c.b16 %v1434, %v1431
        %v1462 = vpack.c.b16 %v1435, %v1432
        %v1463 = vpack.c.b16 %v1436, %v1433
        %v1464 = vpack.c.b16 %v1440, %v1437
        %v1465 = vpack.c.b16 %v1441, %v1438
        %v1466 = vpack.c.b16 %v1442, %v1439
        %v1492 = vperm.slane %v1362, 0
        %v1493 = vperm.slane %v1362, 1
        %v1494 = vperm.slane %v1362, 2
        %1498 = vmatpush.bf16.msra.mxu0 %v1464
        %1499 = vmatpush.bf16.msra.mxu0 %v1461
        %1500 = vmatpush.bf16.msra.mxu0 %v1458
        %1501 = vmatpush.bf16.msra.mxu0 %v1455
        %1502 = vmatpush.bf16.msra.mxu0 %v1452
        %1503 = vmatpush.bf16.msra.mxu0 %v1449
        %1504 = vmatpush.bf16.msra.mxu0 %v1446
        %1505 = vmatpush.bf16.msra.mxu0 %v1443
        %1506 = vmatmul.bf16.gmra.mxu0 %v269
        %v1507 = vpop.f32.mrf.mxu0
        %v1508 = vadd.f32 %v1492, %v1507
        %v1509 = vpop.f32.mrf.mxu0
        %1510 = vdwg.mxu0
        %1511 = vmatpush.bf16.msra.mxu0 %v1465
        %1512 = vmatpush.bf16.msra.mxu0 %v1462
        %1513 = vmatpush.bf16.msra.mxu0 %v1459
        %1514 = vmatpush.bf16.msra.mxu0 %v1456
        %1515 = vmatpush.bf16.msra.mxu0 %v1453
        %1516 = vmatpush.bf16.msra.mxu0 %v1450
        %1517 = vmatpush.bf16.msra.mxu0 %v1447
        %1518 = vmatpush.bf16.msra.mxu0 %v1444
        %1519 = vmatmul.bf16.gmra.mxu0 %v269
        %v1520 = vpop.f32.mrf.mxu0
        %v1521 = vadd.f32 %v1493, %v1520
        %v1522 = vpop.f32.mrf.mxu0
        %1523 = vdwg.mxu0
        %1524 = vmatpush.bf16.msra.mxu0 %v1466
        %1525 = vmatpush.bf16.msra.mxu0 %v1463
        %1526 = vmatpush.bf16.msra.mxu0 %v1460
        %1527 = vmatpush.bf16.msra.mxu0 %v1457
        %1528 = vmatpush.bf16.msra.mxu0 %v1454
        %1529 = vmatpush.bf16.msra.mxu0 %v1451
        %1530 = vmatpush.bf16.msra.mxu0 %v1448
        %1531 = vmatpush.bf16.msra.mxu0 %v1445
        %1532 = vmatmul.bf16.gmra.mxu0 %v269
        %v1533 = vpop.f32.mrf.mxu0
        %v1534 = vadd.f32 %v1494, %v1533
        %v1535 = vpop.f32.mrf.mxu0
        %1536 = vdwg.mxu0
        %v1537 = vmax.f32 %v1508, 0.0
        %v1538 = vmax.f32 %v1521, 0.0
        %v1539 = vmax.f32 %v1534, 0.0
        %s1540 = scalar_lea.vmem [#allocation2], 1152
        %v1541 = vld [vmem:[%s1540] sm:$0xff]
        %v1542 = vld [vmem:[%s1540 + $0x8] sm:$0xf]
        %v1543 = vld [vmem:[%s1540 + $0xc] sm:$0xff]
        %v1544 = vld [vmem:[%s1540 + $0x14] sm:$0xf]
        %v1545 = vld [vmem:[%s1540 + $0x18] sm:$0xff]
        %v1546 = vld [vmem:[%s1540 + $0x20] sm:$0xf]
        %v1547 = vld [vmem:[%s1540 + $0x24] sm:$0xff]
        %v1548 = vld [vmem:[%s1540 + $0x2c] sm:$0xf]
        %v1549 = vld [vmem:[%s1540 + $0x30] sm:$0xff]
        %v1550 = vld [vmem:[%s1540 + $0x38] sm:$0xf]
        %v1551 = vld [vmem:[%s1540 + $0x3c] sm:$0xff]
        %v1552 = vld [vmem:[%s1540 + $0x44] sm:$0xf]
        %v1553 = vld [vmem:[%s1540 + $0x48] sm:$0xff]
        %v1554 = vld [vmem:[%s1540 + $0x50] sm:$0xf]
        %v1555 = vld [vmem:[%s1540 + $0x54] sm:$0xff]
        %v1556 = vld [vmem:[%s1540 + $0x5c] sm:$0xf]
        %v1557 = vld [vmem:[%s1540 + $0x60] sm:$0xff]
        %v1558 = vld [vmem:[%s1540 + $0x68] sm:$0xf]
        %v1559 = vld [vmem:[%s1540 + $0x6c] sm:$0xff]
        %v1560 = vld [vmem:[%s1540 + $0x74] sm:$0xf]
        %v1561 = vld [vmem:[%s1540 + $0x78] sm:$0xff]
        %v1562 = vld [vmem:[%s1540 + $0x80] sm:$0xf]
        %v1563 = vld [vmem:[%s1540 + $0x84] sm:$0xff]
        %v1564 = vld [vmem:[%s1540 + $0x8c] sm:$0xf]
        %v1565 = vld [vmem:[%s1540 + $0x90] sm:$0xff]
        %v1566 = vld [vmem:[%s1540 + $0x98] sm:$0xf]
        %v1567 = vld [vmem:[%s1540 + $0x9c] sm:$0xff]
        %v1568 = vld [vmem:[%s1540 + $0xa4] sm:$0xf]
        %v1569 = vld [vmem:[%s1540 + $0xa8] sm:$0xff]
        %v1570 = vld [vmem:[%s1540 + $0xb0] sm:$0xf]
        %v1571 = vld [vmem:[%s1540 + $0xb4] sm:$0xff]
        %v1572 = vld [vmem:[%s1540 + $0xbc] sm:$0xf]
        %s1573 = scalar_lea.vmem [#allocation4], 6
        %v1574 = vld [vmem:[%s1573] ss:$8 sm:$0x7]
        %v1607 = vunpack.c.l.b16 %v1541
        %v1608 = vunpack.c.h.b16 %v1541
        %v1609 = vunpack.c.l.b16 %v1542
        %v1610 = vunpack.c.l.b16 %v1543
        %v1611 = vunpack.c.h.b16 %v1543
        %v1612 = vunpack.c.l.b16 %v1544
        %v1613 = vunpack.c.l.b16 %v1545
        %v1614 = vunpack.c.h.b16 %v1545
        %v1615 = vunpack.c.l.b16 %v1546
        %v1616 = vunpack.c.l.b16 %v1547
        %v1617 = vunpack.c.h.b16 %v1547
        %v1618 = vunpack.c.l.b16 %v1548
        %v1619 = vunpack.c.l.b16 %v1549
        %v1620 = vunpack.c.h.b16 %v1549
        %v1621 = vunpack.c.l.b16 %v1550
        %v1622 = vunpack.c.l.b16 %v1551
        %v1623 = vunpack.c.h.b16 %v1551
        %v1624 = vunpack.c.l.b16 %v1552
        %v1625 = vunpack.c.l.b16 %v1553
        %v1626 = vunpack.c.h.b16 %v1553
        %v1627 = vunpack.c.l.b16 %v1554
        %v1628 = vunpack.c.l.b16 %v1555
        %v1629 = vunpack.c.h.b16 %v1555
        %v1630 = vunpack.c.l.b16 %v1556
        %v1631 = vunpack.c.l.b16 %v1557
        %v1632 = vunpack.c.h.b16 %v1557
        %v1633 = vunpack.c.l.b16 %v1558
        %v1634 = vunpack.c.l.b16 %v1559
        %v1635 = vunpack.c.h.b16 %v1559
        %v1636 = vunpack.c.l.b16 %v1560
        %v1637 = vunpack.c.l.b16 %v1561
        %v1638 = vunpack.c.h.b16 %v1561
        %v1639 = vunpack.c.l.b16 %v1562
        %v1640 = vunpack.c.l.b16 %v1563
        %v1641 = vunpack.c.h.b16 %v1563
        %v1642 = vunpack.c.l.b16 %v1564
        %v1643 = vunpack.c.l.b16 %v1565
        %v1644 = vunpack.c.h.b16 %v1565
        %v1645 = vunpack.c.l.b16 %v1566
        %v1646 = vunpack.c.l.b16 %v1567
        %v1647 = vunpack.c.h.b16 %v1567
        %v1648 = vunpack.c.l.b16 %v1568
        %v1649 = vunpack.c.l.b16 %v1569
        %v1650 = vunpack.c.h.b16 %v1569
        %v1651 = vunpack.c.l.b16 %v1570
        %v1652 = vunpack.c.l.b16 %v1571
        %v1653 = vunpack.c.h.b16 %v1571
        %v1654 = vunpack.c.l.b16 %v1572
        %v1655 = vpack.c.b16 %v1610, %v1607
        %v1656 = vpack.c.b16 %v1611, %v1608
        %v1657 = vpack.c.b16 %v1612, %v1609
        %v1658 = vpack.c.b16 %v1616, %v1613
        %v1659 = vpack.c.b16 %v1617, %v1614
        %v1660 = vpack.c.b16 %v1618, %v1615
        %v1661 = vpack.c.b16 %v1622, %v1619
        %v1662 = vpack.c.b16 %v1623, %v1620
        %v1663 = vpack.c.b16 %v1624, %v1621
        %v1664 = vpack.c.b16 %v1628, %v1625
        %v1665 = vpack.c.b16 %v1629, %v1626
        %v1666 = vpack.c.b16 %v1630, %v1627
        %v1667 = vpack.c.b16 %v1634, %v1631
        %v1668 = vpack.c.b16 %v1635, %v1632
        %v1669 = vpack.c.b16 %v1636, %v1633
        %v1670 = vpack.c.b16 %v1640, %v1637
        %v1671 = vpack.c.b16 %v1641, %v1638
        %v1672 = vpack.c.b16 %v1642, %v1639
        %v1673 = vpack.c.b16 %v1646, %v1643
        %v1674 = vpack.c.b16 %v1647, %v1644
        %v1675 = vpack.c.b16 %v1648, %v1645
        %v1676 = vpack.c.b16 %v1652, %v1649
        %v1677 = vpack.c.b16 %v1653, %v1650
        %v1678 = vpack.c.b16 %v1654, %v1651
        %v1704 = vperm.slane %v1574, 0
        %v1705 = vperm.slane %v1574, 1
        %v1706 = vperm.slane %v1574, 2
        %1710 = vmatpush.bf16.msra.mxu0 %v1676
        %1711 = vmatpush.bf16.msra.mxu0 %v1673
        %1712 = vmatpush.bf16.msra.mxu0 %v1670
        %1713 = vmatpush.bf16.msra.mxu0 %v1667
        %1714 = vmatpush.bf16.msra.mxu0 %v1664
        %1715 = vmatpush.bf16.msra.mxu0 %v1661
        %1716 = vmatpush.bf16.msra.mxu0 %v1658
        %1717 = vmatpush.bf16.msra.mxu0 %v1655
        %1718 = vmatmul.bf16.gmra.mxu0 %v269
        %v1719 = vpop.f32.mrf.mxu0
        %v1720 = vadd.f32 %v1704, %v1719
        %v1721 = vpop.f32.mrf.mxu0
        %1722 = vdwg.mxu0
        %1723 = vmatpush.bf16.msra.mxu0 %v1677
        %1724 = vmatpush.bf16.msra.mxu0 %v1674
        %1725 = vmatpush.bf16.msra.mxu0 %v1671
        %1726 = vmatpush.bf16.msra.mxu0 %v1668
        %1727 = vmatpush.bf16.msra.mxu0 %v1665
        %1728 = vmatpush.bf16.msra.mxu0 %v1662
        %1729 = vmatpush.bf16.msra.mxu0 %v1659
        %1730 = vmatpush.bf16.msra.mxu0 %v1656
        %1731 = vmatmul.bf16.gmra.mxu0 %v269
        %v1732 = vpop.f32.mrf.mxu0
        %v1733 = vadd.f32 %v1705, %v1732
        %v1734 = vpop.f32.mrf.mxu0
        %1735 = vdwg.mxu0
        %1736 = vmatpush.bf16.msra.mxu0 %v1678
        %1737 = vmatpush.bf16.msra.mxu0 %v1675
        %1738 = vmatpush.bf16.msra.mxu0 %v1672
        %1739 = vmatpush.bf16.msra.mxu0 %v1669
        %1740 = vmatpush.bf16.msra.mxu0 %v1666
        %1741 = vmatpush.bf16.msra.mxu0 %v1663
        %1742 = vmatpush.bf16.msra.mxu0 %v1660
        %1743 = vmatpush.bf16.msra.mxu0 %v1657
        %1744 = vmatmul.bf16.gmra.mxu0 %v269
        %v1745 = vpop.f32.mrf.mxu0
        %v1746 = vadd.f32 %v1706, %v1745
        %v1747 = vpop.f32.mrf.mxu0
        %1748 = vdwg.mxu0
        %v1749 = vmax.f32 %v1720, 0.0
        %v1750 = vmax.f32 %v1733, 0.0
        %v1751 = vmax.f32 %v1746, 0.0
        %s1752 = scalar_lea.vmem [#allocation2], 1344
        %v1753 = vld [vmem:[%s1752] sm:$0xff]
        %v1754 = vld [vmem:[%s1752 + $0x8] sm:$0xf]
        %v1755 = vld [vmem:[%s1752 + $0xc] sm:$0xff]
        %v1756 = vld [vmem:[%s1752 + $0x14] sm:$0xf]
        %v1757 = vld [vmem:[%s1752 + $0x18] sm:$0xff]
        %v1758 = vld [vmem:[%s1752 + $0x20] sm:$0xf]
        %v1759 = vld [vmem:[%s1752 + $0x24] sm:$0xff]
        %v1760 = vld [vmem:[%s1752 + $0x2c] sm:$0xf]
        %v1761 = vld [vmem:[%s1752 + $0x30] sm:$0xff]
        %v1762 = vld [vmem:[%s1752 + $0x38] sm:$0xf]
        %v1763 = vld [vmem:[%s1752 + $0x3c] sm:$0xff]
        %v1764 = vld [vmem:[%s1752 + $0x44] sm:$0xf]
        %v1765 = vld [vmem:[%s1752 + $0x48] sm:$0xff]
        %v1766 = vld [vmem:[%s1752 + $0x50] sm:$0xf]
        %v1767 = vld [vmem:[%s1752 + $0x54] sm:$0xff]
        %v1768 = vld [vmem:[%s1752 + $0x5c] sm:$0xf]
        %v1769 = vld [vmem:[%s1752 + $0x60] sm:$0xff]
        %v1770 = vld [vmem:[%s1752 + $0x68] sm:$0xf]
        %v1771 = vld [vmem:[%s1752 + $0x6c] sm:$0xff]
        %v1772 = vld [vmem:[%s1752 + $0x74] sm:$0xf]
        %v1773 = vld [vmem:[%s1752 + $0x78] sm:$0xff]
        %v1774 = vld [vmem:[%s1752 + $0x80] sm:$0xf]
        %v1775 = vld [vmem:[%s1752 + $0x84] sm:$0xff]
        %v1776 = vld [vmem:[%s1752 + $0x8c] sm:$0xf]
        %v1777 = vld [vmem:[%s1752 + $0x90] sm:$0xff]
        %v1778 = vld [vmem:[%s1752 + $0x98] sm:$0xf]
        %v1779 = vld [vmem:[%s1752 + $0x9c] sm:$0xff]
        %v1780 = vld [vmem:[%s1752 + $0xa4] sm:$0xf]
        %v1781 = vld [vmem:[%s1752 + $0xa8] sm:$0xff]
        %v1782 = vld [vmem:[%s1752 + $0xb0] sm:$0xf]
        %v1783 = vld [vmem:[%s1752 + $0xb4] sm:$0xff]
        %v1784 = vld [vmem:[%s1752 + $0xbc] sm:$0xf]
        %s1785 = scalar_lea.vmem [#allocation4], 7
        %v1786 = vld [vmem:[%s1785] ss:$8 sm:$0x7]
        %v1819 = vunpack.c.l.b16 %v1753
        %v1820 = vunpack.c.h.b16 %v1753
        %v1821 = vunpack.c.l.b16 %v1754
        %v1822 = vunpack.c.l.b16 %v1755
        %v1823 = vunpack.c.h.b16 %v1755
        %v1824 = vunpack.c.l.b16 %v1756
        %v1825 = vunpack.c.l.b16 %v1757
        %v1826 = vunpack.c.h.b16 %v1757
        %v1827 = vunpack.c.l.b16 %v1758
        %v1828 = vunpack.c.l.b16 %v1759
        %v1829 = vunpack.c.h.b16 %v1759
        %v1830 = vunpack.c.l.b16 %v1760
        %v1831 = vunpack.c.l.b16 %v1761
        %v1832 = vunpack.c.h.b16 %v1761
        %v1833 = vunpack.c.l.b16 %v1762
        %v1834 = vunpack.c.l.b16 %v1763
        %v1835 = vunpack.c.h.b16 %v1763
        %v1836 = vunpack.c.l.b16 %v1764
        %v1837 = vunpack.c.l.b16 %v1765
        %v1838 = vunpack.c.h.b16 %v1765
        %v1839 = vunpack.c.l.b16 %v1766
        %v1840 = vunpack.c.l.b16 %v1767
        %v1841 = vunpack.c.h.b16 %v1767
        %v1842 = vunpack.c.l.b16 %v1768
        %v1843 = vunpack.c.l.b16 %v1769
        %v1844 = vunpack.c.h.b16 %v1769
        %v1845 = vunpack.c.l.b16 %v1770
        %v1846 = vunpack.c.l.b16 %v1771
        %v1847 = vunpack.c.h.b16 %v1771
        %v1848 = vunpack.c.l.b16 %v1772
        %v1849 = vunpack.c.l.b16 %v1773
        %v1850 = vunpack.c.h.b16 %v1773
        %v1851 = vunpack.c.l.b16 %v1774
        %v1852 = vunpack.c.l.b16 %v1775
        %v1853 = vunpack.c.h.b16 %v1775
        %v1854 = vunpack.c.l.b16 %v1776
        %v1855 = vunpack.c.l.b16 %v1777
        %v1856 = vunpack.c.h.b16 %v1777
        %v1857 = vunpack.c.l.b16 %v1778
        %v1858 = vunpack.c.l.b16 %v1779
        %v1859 = vunpack.c.h.b16 %v1779
        %v1860 = vunpack.c.l.b16 %v1780
        %v1861 = vunpack.c.l.b16 %v1781
        %v1862 = vunpack.c.h.b16 %v1781
        %v1863 = vunpack.c.l.b16 %v1782
        %v1864 = vunpack.c.l.b16 %v1783
        %v1865 = vunpack.c.h.b16 %v1783
        %v1866 = vunpack.c.l.b16 %v1784
        %v1867 = vpack.c.b16 %v1822, %v1819
        %v1868 = vpack.c.b16 %v1823, %v1820
        %v1869 = vpack.c.b16 %v1824, %v1821
        %v1870 = vpack.c.b16 %v1828, %v1825
        %v1871 = vpack.c.b16 %v1829, %v1826
        %v1872 = vpack.c.b16 %v1830, %v1827
        %v1873 = vpack.c.b16 %v1834, %v1831
        %v1874 = vpack.c.b16 %v1835, %v1832
        %v1875 = vpack.c.b16 %v1836, %v1833
        %v1876 = vpack.c.b16 %v1840, %v1837
        %v1877 = vpack.c.b16 %v1841, %v1838
        %v1878 = vpack.c.b16 %v1842, %v1839
        %v1879 = vpack.c.b16 %v1846, %v1843
        %v1880 = vpack.c.b16 %v1847, %v1844
        %v1881 = vpack.c.b16 %v1848, %v1845
        %v1882 = vpack.c.b16 %v1852, %v1849
        %v1883 = vpack.c.b16 %v1853, %v1850
        %v1884 = vpack.c.b16 %v1854, %v1851
        %v1885 = vpack.c.b16 %v1858, %v1855
        %v1886 = vpack.c.b16 %v1859, %v1856
        %v1887 = vpack.c.b16 %v1860, %v1857
        %v1888 = vpack.c.b16 %v1864, %v1861
        %v1889 = vpack.c.b16 %v1865, %v1862
        %v1890 = vpack.c.b16 %v1866, %v1863
        %v1916 = vperm.slane %v1786, 0
        %v1917 = vperm.slane %v1786, 1
        %v1918 = vperm.slane %v1786, 2
        %1922 = vmatpush.bf16.msra.mxu0 %v1888
        %1923 = vmatpush.bf16.msra.mxu0 %v1885
        %1924 = vmatpush.bf16.msra.mxu0 %v1882
        %1925 = vmatpush.bf16.msra.mxu0 %v1879
        %1926 = vmatpush.bf16.msra.mxu0 %v1876
        %1927 = vmatpush.bf16.msra.mxu0 %v1873
        %1928 = vmatpush.bf16.msra.mxu0 %v1870
        %1929 = vmatpush.bf16.msra.mxu0 %v1867
        %1930 = vmatmul.bf16.gmra.mxu0 %v269
        %v1931 = vpop.f32.mrf.mxu0
        %v1932 = vadd.f32 %v1916, %v1931
        %v1933 = vpop.f32.mrf.mxu0
        %1934 = vdwg.mxu0
        %1935 = vmatpush.bf16.msra.mxu0 %v1889
        %1936 = vmatpush.bf16.msra.mxu0 %v1886
        %1937 = vmatpush.bf16.msra.mxu0 %v1883
        %1938 = vmatpush.bf16.msra.mxu0 %v1880
        %1939 = vmatpush.bf16.msra.mxu0 %v1877
        %1940 = vmatpush.bf16.msra.mxu0 %v1874
        %1941 = vmatpush.bf16.msra.mxu0 %v1871
        %1942 = vmatpush.bf16.msra.mxu0 %v1868
        %1943 = vmatmul.bf16.gmra.mxu0 %v269
        %v1944 = vpop.f32.mrf.mxu0
        %v1945 = vadd.f32 %v1917, %v1944
        %v1946 = vpop.f32.mrf.mxu0
        %1947 = vdwg.mxu0
        %1948 = vmatpush.bf16.msra.mxu0 %v1890
        %1949 = vmatpush.bf16.msra.mxu0 %v1887
        %1950 = vmatpush.bf16.msra.mxu0 %v1884
        %1951 = vmatpush.bf16.msra.mxu0 %v1881
        %1952 = vmatpush.bf16.msra.mxu0 %v1878
        %1953 = vmatpush.bf16.msra.mxu0 %v1875
        %1954 = vmatpush.bf16.msra.mxu0 %v1872
        %1955 = vmatpush.bf16.msra.mxu0 %v1869
        %1956 = vmatmul.bf16.gmra.mxu0 %v269
        %v1957 = vpop.f32.mrf.mxu0
        %v1958 = vadd.f32 %v1918, %v1957
        %v1959 = vpop.f32.mrf.mxu0
        %1960 = vdwg.mxu0
        %v1961 = vmax.f32 %v1932, 0.0
        %v1962 = vmax.f32 %v1945, 0.0
        %v1963 = vmax.f32 %v1958, 0.0
        %s1964 = scalar_lea.vmem [#allocation2], 1536
        %v1965 = vld [vmem:[%s1964] sm:$0xff]
        %v1966 = vld [vmem:[%s1964 + $0x8] sm:$0xf]
        %v1967 = vld [vmem:[%s1964 + $0xc] sm:$0xff]
        %v1968 = vld [vmem:[%s1964 + $0x14] sm:$0xf]
        %v1969 = vld [vmem:[%s1964 + $0x18] sm:$0xff]
        %v1970 = vld [vmem:[%s1964 + $0x20] sm:$0xf]
        %v1971 = vld [vmem:[%s1964 + $0x24] sm:$0xff]
        %v1972 = vld [vmem:[%s1964 + $0x2c] sm:$0xf]
        %v1973 = vld [vmem:[%s1964 + $0x30] sm:$0xff]
        %v1974 = vld [vmem:[%s1964 + $0x38] sm:$0xf]
        %v1975 = vld [vmem:[%s1964 + $0x3c] sm:$0xff]
        %v1976 = vld [vmem:[%s1964 + $0x44] sm:$0xf]
        %v1977 = vld [vmem:[%s1964 + $0x48] sm:$0xff]
        %v1978 = vld [vmem:[%s1964 + $0x50] sm:$0xf]
        %v1979 = vld [vmem:[%s1964 + $0x54] sm:$0xff]
        %v1980 = vld [vmem:[%s1964 + $0x5c] sm:$0xf]
        %v1981 = vld [vmem:[%s1964 + $0x60] sm:$0xff]
        %v1982 = vld [vmem:[%s1964 + $0x68] sm:$0xf]
        %v1983 = vld [vmem:[%s1964 + $0x6c] sm:$0xff]
        %v1984 = vld [vmem:[%s1964 + $0x74] sm:$0xf]
        %v1985 = vld [vmem:[%s1964 + $0x78] sm:$0xff]
        %v1986 = vld [vmem:[%s1964 + $0x80] sm:$0xf]
        %v1987 = vld [vmem:[%s1964 + $0x84] sm:$0xff]
        %v1988 = vld [vmem:[%s1964 + $0x8c] sm:$0xf]
        %v1989 = vld [vmem:[%s1964 + $0x90] sm:$0xff]
        %v1990 = vld [vmem:[%s1964 + $0x98] sm:$0xf]
        %v1991 = vld [vmem:[%s1964 + $0x9c] sm:$0xff]
        %v1992 = vld [vmem:[%s1964 + $0xa4] sm:$0xf]
        %v1993 = vld [vmem:[%s1964 + $0xa8] sm:$0xff]
        %v1994 = vld [vmem:[%s1964 + $0xb0] sm:$0xf]
        %v1995 = vld [vmem:[%s1964 + $0xb4] sm:$0xff]
        %v1996 = vld [vmem:[%s1964 + $0xbc] sm:$0xf]
        %s1997 = scalar_lea.vmem [#allocation4], 24
        %v1998 = vld [vmem:[%s1997] ss:$8 sm:$0x7]
        %v2031 = vunpack.c.l.b16 %v1965
        %v2032 = vunpack.c.h.b16 %v1965
        %v2033 = vunpack.c.l.b16 %v1966
        %v2034 = vunpack.c.l.b16 %v1967
        %v2035 = vunpack.c.h.b16 %v1967
        %v2036 = vunpack.c.l.b16 %v1968
        %v2037 = vunpack.c.l.b16 %v1969
        %v2038 = vunpack.c.h.b16 %v1969
        %v2039 = vunpack.c.l.b16 %v1970
        %v2040 = vunpack.c.l.b16 %v1971
        %v2041 = vunpack.c.h.b16 %v1971
        %v2042 = vunpack.c.l.b16 %v1972
        %v2043 = vunpack.c.l.b16 %v1973
        %v2044 = vunpack.c.h.b16 %v1973
        %v2045 = vunpack.c.l.b16 %v1974
        %v2046 = vunpack.c.l.b16 %v1975
        %v2047 = vunpack.c.h.b16 %v1975
        %v2048 = vunpack.c.l.b16 %v1976
        %v2049 = vunpack.c.l.b16 %v1977
        %v2050 = vunpack.c.h.b16 %v1977
        %v2051 = vunpack.c.l.b16 %v1978
        %v2052 = vunpack.c.l.b16 %v1979
        %v2053 = vunpack.c.h.b16 %v1979
        %v2054 = vunpack.c.l.b16 %v1980
        %v2055 = vunpack.c.l.b16 %v1981
        %v2056 = vunpack.c.h.b16 %v1981
        %v2057 = vunpack.c.l.b16 %v1982
        %v2058 = vunpack.c.l.b16 %v1983
        %v2059 = vunpack.c.h.b16 %v1983
        %v2060 = vunpack.c.l.b16 %v1984
        %v2061 = vunpack.c.l.b16 %v1985
        %v2062 = vunpack.c.h.b16 %v1985
        %v2063 = vunpack.c.l.b16 %v1986
        %v2064 = vunpack.c.l.b16 %v1987
        %v2065 = vunpack.c.h.b16 %v1987
        %v2066 = vunpack.c.l.b16 %v1988
        %v2067 = vunpack.c.l.b16 %v1989
        %v2068 = vunpack.c.h.b16 %v1989
        %v2069 = vunpack.c.l.b16 %v1990
        %v2070 = vunpack.c.l.b16 %v1991
        %v2071 = vunpack.c.h.b16 %v1991
        %v2072 = vunpack.c.l.b16 %v1992
        %v2073 = vunpack.c.l.b16 %v1993
        %v2074 = vunpack.c.h.b16 %v1993
        %v2075 = vunpack.c.l.b16 %v1994
        %v2076 = vunpack.c.l.b16 %v1995
        %v2077 = vunpack.c.h.b16 %v1995
        %v2078 = vunpack.c.l.b16 %v1996
        %v2079 = vpack.c.b16 %v2034, %v2031
        %v2080 = vpack.c.b16 %v2035, %v2032
        %v2081 = vpack.c.b16 %v2036, %v2033
        %v2082 = vpack.c.b16 %v2040, %v2037
        %v2083 = vpack.c.b16 %v2041, %v2038
        %v2084 = vpack.c.b16 %v2042, %v2039
        %v2085 = vpack.c.b16 %v2046, %v2043
        %v2086 = vpack.c.b16 %v2047, %v2044
        %v2087 = vpack.c.b16 %v2048, %v2045
        %v2088 = vpack.c.b16 %v2052, %v2049
        %v2089 = vpack.c.b16 %v2053, %v2050
        %v2090 = vpack.c.b16 %v2054, %v2051
        %v2091 = vpack.c.b16 %v2058, %v2055
        %v2092 = vpack.c.b16 %v2059, %v2056
        %v2093 = vpack.c.b16 %v2060, %v2057
        %v2094 = vpack.c.b16 %v2064, %v2061
        %v2095 = vpack.c.b16 %v2065, %v2062
        %v2096 = vpack.c.b16 %v2066, %v2063
        %v2097 = vpack.c.b16 %v2070, %v2067
        %v2098 = vpack.c.b16 %v2071, %v2068
        %v2099 = vpack.c.b16 %v2072, %v2069
        %v2100 = vpack.c.b16 %v2076, %v2073
        %v2101 = vpack.c.b16 %v2077, %v2074
        %v2102 = vpack.c.b16 %v2078, %v2075
        %v2128 = vperm.slane %v1998, 0
        %v2129 = vperm.slane %v1998, 1
        %v2130 = vperm.slane %v1998, 2
        %2134 = vmatpush.bf16.msra.mxu0 %v2100
        %2135 = vmatpush.bf16.msra.mxu0 %v2097
        %2136 = vmatpush.bf16.msra.mxu0 %v2094
        %2137 = vmatpush.bf16.msra.mxu0 %v2091
        %2138 = vmatpush.bf16.msra.mxu0 %v2088
        %2139 = vmatpush.bf16.msra.mxu0 %v2085
        %2140 = vmatpush.bf16.msra.mxu0 %v2082
        %2141 = vmatpush.bf16.msra.mxu0 %v2079
        %2142 = vmatmul.bf16.gmra.mxu0 %v269
        %v2143 = vpop.f32.mrf.mxu0
        %v2144 = vadd.f32 %v2128, %v2143
        %v2145 = vpop.f32.mrf.mxu0
        %2146 = vdwg.mxu0
        %2147 = vmatpush.bf16.msra.mxu0 %v2101
        %2148 = vmatpush.bf16.msra.mxu0 %v2098
        %2149 = vmatpush.bf16.msra.mxu0 %v2095
        %2150 = vmatpush.bf16.msra.mxu0 %v2092
        %2151 = vmatpush.bf16.msra.mxu0 %v2089
        %2152 = vmatpush.bf16.msra.mxu0 %v2086
        %2153 = vmatpush.bf16.msra.mxu0 %v2083
        %2154 = vmatpush.bf16.msra.mxu0 %v2080
        %2155 = vmatmul.bf16.gmra.mxu0 %v269
        %v2156 = vpop.f32.mrf.mxu0
        %v2157 = vadd.f32 %v2129, %v2156
        %v2158 = vpop.f32.mrf.mxu0
        %2159 = vdwg.mxu0
        %2160 = vmatpush.bf16.msra.mxu0 %v2102
        %2161 = vmatpush.bf16.msra.mxu0 %v2099
        %2162 = vmatpush.bf16.msra.mxu0 %v2096
        %2163 = vmatpush.bf16.msra.mxu0 %v2093
        %2164 = vmatpush.bf16.msra.mxu0 %v2090
        %2165 = vmatpush.bf16.msra.mxu0 %v2087
        %2166 = vmatpush.bf16.msra.mxu0 %v2084
        %2167 = vmatpush.bf16.msra.mxu0 %v2081
        %2168 = vmatmul.bf16.gmra.mxu0 %v269
        %v2169 = vpop.f32.mrf.mxu0
        %v2170 = vadd.f32 %v2130, %v2169
        %v2171 = vpop.f32.mrf.mxu0
        %2172 = vdwg.mxu0
        %v2173 = vmax.f32 %v2144, 0.0
        %v2174 = vmax.f32 %v2157, 0.0
        %v2175 = vmax.f32 %v2170, 0.0
        %s2176 = scalar_lea.vmem [#allocation2], 1728
        %v2177 = vld [vmem:[%s2176] sm:$0xff]
        %v2178 = vld [vmem:[%s2176 + $0x8] sm:$0xf]
        %v2179 = vld [vmem:[%s2176 + $0xc] sm:$0xff]
        %v2180 = vld [vmem:[%s2176 + $0x14] sm:$0xf]
        %v2181 = vld [vmem:[%s2176 + $0x18] sm:$0xff]
        %v2182 = vld [vmem:[%s2176 + $0x20] sm:$0xf]
        %v2183 = vld [vmem:[%s2176 + $0x24] sm:$0xff]
        %v2184 = vld [vmem:[%s2176 + $0x2c] sm:$0xf]
        %v2185 = vld [vmem:[%s2176 + $0x30] sm:$0xff]
        %v2186 = vld [vmem:[%s2176 + $0x38] sm:$0xf]
        %v2187 = vld [vmem:[%s2176 + $0x3c] sm:$0xff]
        %v2188 = vld [vmem:[%s2176 + $0x44] sm:$0xf]
        %v2189 = vld [vmem:[%s2176 + $0x48] sm:$0xff]
        %v2190 = vld [vmem:[%s2176 + $0x50] sm:$0xf]
        %v2191 = vld [vmem:[%s2176 + $0x54] sm:$0xff]
        %v2192 = vld [vmem:[%s2176 + $0x5c] sm:$0xf]
        %v2193 = vld [vmem:[%s2176 + $0x60] sm:$0xff]
        %v2194 = vld [vmem:[%s2176 + $0x68] sm:$0xf]
        %v2195 = vld [vmem:[%s2176 + $0x6c] sm:$0xff]
        %v2196 = vld [vmem:[%s2176 + $0x74] sm:$0xf]
        %v2197 = vld [vmem:[%s2176 + $0x78] sm:$0xff]
        %v2198 = vld [vmem:[%s2176 + $0x80] sm:$0xf]
        %v2199 = vld [vmem:[%s2176 + $0x84] sm:$0xff]
        %v2200 = vld [vmem:[%s2176 + $0x8c] sm:$0xf]
        %v2201 = vld [vmem:[%s2176 + $0x90] sm:$0xff]
        %v2202 = vld [vmem:[%s2176 + $0x98] sm:$0xf]
        %v2203 = vld [vmem:[%s2176 + $0x9c] sm:$0xff]
        %v2204 = vld [vmem:[%s2176 + $0xa4] sm:$0xf]
        %v2205 = vld [vmem:[%s2176 + $0xa8] sm:$0xff]
        %v2206 = vld [vmem:[%s2176 + $0xb0] sm:$0xf]
        %v2207 = vld [vmem:[%s2176 + $0xb4] sm:$0xff]
        %v2208 = vld [vmem:[%s2176 + $0xbc] sm:$0xf]
        %s2209 = scalar_lea.vmem [#allocation4], 25
        %v2210 = vld [vmem:[%s2209] ss:$8 sm:$0x7]
        %v2243 = vunpack.c.l.b16 %v2177
        %v2244 = vunpack.c.h.b16 %v2177
        %v2245 = vunpack.c.l.b16 %v2178
        %v2246 = vunpack.c.l.b16 %v2179
        %v2247 = vunpack.c.h.b16 %v2179
        %v2248 = vunpack.c.l.b16 %v2180
        %v2249 = vunpack.c.l.b16 %v2181
        %v2250 = vunpack.c.h.b16 %v2181
        %v2251 = vunpack.c.l.b16 %v2182
        %v2252 = vunpack.c.l.b16 %v2183
        %v2253 = vunpack.c.h.b16 %v2183
        %v2254 = vunpack.c.l.b16 %v2184
        %v2255 = vunpack.c.l.b16 %v2185
        %v2256 = vunpack.c.h.b16 %v2185
        %v2257 = vunpack.c.l.b16 %v2186
        %v2258 = vunpack.c.l.b16 %v2187
        %v2259 = vunpack.c.h.b16 %v2187
        %v2260 = vunpack.c.l.b16 %v2188
        %v2261 = vunpack.c.l.b16 %v2189
        %v2262 = vunpack.c.h.b16 %v2189
        %v2263 = vunpack.c.l.b16 %v2190
        %v2264 = vunpack.c.l.b16 %v2191
        %v2265 = vunpack.c.h.b16 %v2191
        %v2266 = vunpack.c.l.b16 %v2192
        %v2267 = vunpack.c.l.b16 %v2193
        %v2268 = vunpack.c.h.b16 %v2193
        %v2269 = vunpack.c.l.b16 %v2194
        %v2270 = vunpack.c.l.b16 %v2195
        %v2271 = vunpack.c.h.b16 %v2195
        %v2272 = vunpack.c.l.b16 %v2196
        %v2273 = vunpack.c.l.b16 %v2197
        %v2274 = vunpack.c.h.b16 %v2197
        %v2275 = vunpack.c.l.b16 %v2198
        %v2276 = vunpack.c.l.b16 %v2199
        %v2277 = vunpack.c.h.b16 %v2199
        %v2278 = vunpack.c.l.b16 %v2200
        %v2279 = vunpack.c.l.b16 %v2201
        %v2280 = vunpack.c.h.b16 %v2201
        %v2281 = vunpack.c.l.b16 %v2202
        %v2282 = vunpack.c.l.b16 %v2203
        %v2283 = vunpack.c.h.b16 %v2203
        %v2284 = vunpack.c.l.b16 %v2204
        %v2285 = vunpack.c.l.b16 %v2205
        %v2286 = vunpack.c.h.b16 %v2205
        %v2287 = vunpack.c.l.b16 %v2206
        %v2288 = vunpack.c.l.b16 %v2207
        %v2289 = vunpack.c.h.b16 %v2207
        %v2290 = vunpack.c.l.b16 %v2208
        %v2291 = vpack.c.b16 %v2246, %v2243
        %v2292 = vpack.c.b16 %v2247, %v2244
        %v2293 = vpack.c.b16 %v2248, %v2245
        %v2294 = vpack.c.b16 %v2252, %v2249
        %v2295 = vpack.c.b16 %v2253, %v2250
        %v2296 = vpack.c.b16 %v2254, %v2251
        %v2297 = vpack.c.b16 %v2258, %v2255
        %v2298 = vpack.c.b16 %v2259, %v2256
        %v2299 = vpack.c.b16 %v2260, %v2257
        %v2300 = vpack.c.b16 %v2264, %v2261
        %v2301 = vpack.c.b16 %v2265, %v2262
        %v2302 = vpack.c.b16 %v2266, %v2263
        %v2303 = vpack.c.b16 %v2270, %v2267
        %v2304 = vpack.c.b16 %v2271, %v2268
        %v2305 = vpack.c.b16 %v2272, %v2269
        %v2306 = vpack.c.b16 %v2276, %v2273
        %v2307 = vpack.c.b16 %v2277, %v2274
        %v2308 = vpack.c.b16 %v2278, %v2275
        %v2309 = vpack.c.b16 %v2282, %v2279
        %v2310 = vpack.c.b16 %v2283, %v2280
        %v2311 = vpack.c.b16 %v2284, %v2281
        %v2312 = vpack.c.b16 %v2288, %v2285
        %v2313 = vpack.c.b16 %v2289, %v2286
        %v2314 = vpack.c.b16 %v2290, %v2287
        %v2340 = vperm.slane %v2210, 0
        %v2341 = vperm.slane %v2210, 1
        %v2342 = vperm.slane %v2210, 2
        %2346 = vmatpush.bf16.msra.mxu0 %v2312
        %2347 = vmatpush.bf16.msra.mxu0 %v2309
        %2348 = vmatpush.bf16.msra.mxu0 %v2306
        %2349 = vmatpush.bf16.msra.mxu0 %v2303
        %2350 = vmatpush.bf16.msra.mxu0 %v2300
        %2351 = vmatpush.bf16.msra.mxu0 %v2297
        %2352 = vmatpush.bf16.msra.mxu0 %v2294
        %2353 = vmatpush.bf16.msra.mxu0 %v2291
        %2354 = vmatmul.bf16.gmra.mxu0 %v269
        %v2355 = vpop.f32.mrf.mxu0
        %v2356 = vadd.f32 %v2340, %v2355
        %v2357 = vpop.f32.mrf.mxu0
        %2358 = vdwg.mxu0
        %2359 = vmatpush.bf16.msra.mxu0 %v2313
        %2360 = vmatpush.bf16.msra.mxu0 %v2310
        %2361 = vmatpush.bf16.msra.mxu0 %v2307
        %2362 = vmatpush.bf16.msra.mxu0 %v2304
        %2363 = vmatpush.bf16.msra.mxu0 %v2301
        %2364 = vmatpush.bf16.msra.mxu0 %v2298
        %2365 = vmatpush.bf16.msra.mxu0 %v2295
        %2366 = vmatpush.bf16.msra.mxu0 %v2292
        %2367 = vmatmul.bf16.gmra.mxu0 %v269
        %v2368 = vpop.f32.mrf.mxu0
        %v2369 = vadd.f32 %v2341, %v2368
        %v2370 = vpop.f32.mrf.mxu0
        %2371 = vdwg.mxu0
        %2372 = vmatpush.bf16.msra.mxu0 %v2314
        %2373 = vmatpush.bf16.msra.mxu0 %v2311
        %2374 = vmatpush.bf16.msra.mxu0 %v2308
        %2375 = vmatpush.bf16.msra.mxu0 %v2305
        %2376 = vmatpush.bf16.msra.mxu0 %v2302
        %2377 = vmatpush.bf16.msra.mxu0 %v2299
        %2378 = vmatpush.bf16.msra.mxu0 %v2296
        %2379 = vmatpush.bf16.msra.mxu0 %v2293
        %2380 = vmatmul.bf16.gmra.mxu0 %v269
        %v2381 = vpop.f32.mrf.mxu0
        %v2382 = vadd.f32 %v2342, %v2381
        %v2383 = vpop.f32.mrf.mxu0
        %2384 = vdwg.mxu0
        %v2385 = vmax.f32 %v2356, 0.0
        %v2386 = vmax.f32 %v2369, 0.0
        %v2387 = vmax.f32 %v2382, 0.0
        %s2388 = scalar_lea.vmem [#allocation2], 1920
        %v2389 = vld [vmem:[%s2388] sm:$0xff]
        %v2390 = vld [vmem:[%s2388 + $0x8] sm:$0xf]
        %v2391 = vld [vmem:[%s2388 + $0xc] sm:$0xff]
        %v2392 = vld [vmem:[%s2388 + $0x14] sm:$0xf]
        %v2393 = vld [vmem:[%s2388 + $0x18] sm:$0xff]
        %v2394 = vld [vmem:[%s2388 + $0x20] sm:$0xf]
        %v2395 = vld [vmem:[%s2388 + $0x24] sm:$0xff]
        %v2396 = vld [vmem:[%s2388 + $0x2c] sm:$0xf]
        %v2397 = vld [vmem:[%s2388 + $0x30] sm:$0xff]
        %v2398 = vld [vmem:[%s2388 + $0x38] sm:$0xf]
        %v2399 = vld [vmem:[%s2388 + $0x3c] sm:$0xff]
        %v2400 = vld [vmem:[%s2388 + $0x44] sm:$0xf]
        %v2401 = vld [vmem:[%s2388 + $0x48] sm:$0xff]
        %v2402 = vld [vmem:[%s2388 + $0x50] sm:$0xf]
        %v2403 = vld [vmem:[%s2388 + $0x54] sm:$0xff]
        %v2404 = vld [vmem:[%s2388 + $0x5c] sm:$0xf]
        %v2405 = vld [vmem:[%s2388 + $0x60] sm:$0xff]
        %v2406 = vld [vmem:[%s2388 + $0x68] sm:$0xf]
        %v2407 = vld [vmem:[%s2388 + $0x6c] sm:$0xff]
        %v2408 = vld [vmem:[%s2388 + $0x74] sm:$0xf]
        %v2409 = vld [vmem:[%s2388 + $0x78] sm:$0xff]
        %v2410 = vld [vmem:[%s2388 + $0x80] sm:$0xf]
        %v2411 = vld [vmem:[%s2388 + $0x84] sm:$0xff]
        %v2412 = vld [vmem:[%s2388 + $0x8c] sm:$0xf]
        %v2413 = vld [vmem:[%s2388 + $0x90] sm:$0xff]
        %v2414 = vld [vmem:[%s2388 + $0x98] sm:$0xf]
        %v2415 = vld [vmem:[%s2388 + $0x9c] sm:$0xff]
        %v2416 = vld [vmem:[%s2388 + $0xa4] sm:$0xf]
        %v2417 = vld [vmem:[%s2388 + $0xa8] sm:$0xff]
        %v2418 = vld [vmem:[%s2388 + $0xb0] sm:$0xf]
        %v2419 = vld [vmem:[%s2388 + $0xb4] sm:$0xff]
        %v2420 = vld [vmem:[%s2388 + $0xbc] sm:$0xf]
        %s2421 = scalar_lea.vmem [#allocation4], 26
        %v2422 = vld [vmem:[%s2421] ss:$8 sm:$0x7]
        %v2455 = vunpack.c.l.b16 %v2389
        %v2456 = vunpack.c.h.b16 %v2389
        %v2457 = vunpack.c.l.b16 %v2390
        %v2458 = vunpack.c.l.b16 %v2391
        %v2459 = vunpack.c.h.b16 %v2391
        %v2460 = vunpack.c.l.b16 %v2392
        %v2461 = vunpack.c.l.b16 %v2393
        %v2462 = vunpack.c.h.b16 %v2393
        %v2463 = vunpack.c.l.b16 %v2394
        %v2464 = vunpack.c.l.b16 %v2395
        %v2465 = vunpack.c.h.b16 %v2395
        %v2466 = vunpack.c.l.b16 %v2396
        %v2467 = vunpack.c.l.b16 %v2397
        %v2468 = vunpack.c.h.b16 %v2397
        %v2469 = vunpack.c.l.b16 %v2398
        %v2470 = vunpack.c.l.b16 %v2399
        %v2471 = vunpack.c.h.b16 %v2399
        %v2472 = vunpack.c.l.b16 %v2400
        %v2473 = vunpack.c.l.b16 %v2401
        %v2474 = vunpack.c.h.b16 %v2401
        %v2475 = vunpack.c.l.b16 %v2402
        %v2476 = vunpack.c.l.b16 %v2403
        %v2477 = vunpack.c.h.b16 %v2403
        %v2478 = vunpack.c.l.b16 %v2404
        %v2479 = vunpack.c.l.b16 %v2405
        %v2480 = vunpack.c.h.b16 %v2405
        %v2481 = vunpack.c.l.b16 %v2406
        %v2482 = vunpack.c.l.b16 %v2407
        %v2483 = vunpack.c.h.b16 %v2407
        %v2484 = vunpack.c.l.b16 %v2408
        %v2485 = vunpack.c.l.b16 %v2409
        %v2486 = vunpack.c.h.b16 %v2409
        %v2487 = vunpack.c.l.b16 %v2410
        %v2488 = vunpack.c.l.b16 %v2411
        %v2489 = vunpack.c.h.b16 %v2411
        %v2490 = vunpack.c.l.b16 %v2412
        %v2491 = vunpack.c.l.b16 %v2413
        %v2492 = vunpack.c.h.b16 %v2413
        %v2493 = vunpack.c.l.b16 %v2414
        %v2494 = vunpack.c.l.b16 %v2415
        %v2495 = vunpack.c.h.b16 %v2415
        %v2496 = vunpack.c.l.b16 %v2416
        %v2497 = vunpack.c.l.b16 %v2417
        %v2498 = vunpack.c.h.b16 %v2417
        %v2499 = vunpack.c.l.b16 %v2418
        %v2500 = vunpack.c.l.b16 %v2419
        %v2501 = vunpack.c.h.b16 %v2419
        %v2502 = vunpack.c.l.b16 %v2420
        %v2503 = vpack.c.b16 %v2458, %v2455
        %v2504 = vpack.c.b16 %v2459, %v2456
        %v2505 = vpack.c.b16 %v2460, %v2457
        %v2506 = vpack.c.b16 %v2464, %v2461
        %v2507 = vpack.c.b16 %v2465, %v2462
        %v2508 = vpack.c.b16 %v2466, %v2463
        %v2509 = vpack.c.b16 %v2470, %v2467
        %v2510 = vpack.c.b16 %v2471, %v2468
        %v2511 = vpack.c.b16 %v2472, %v2469
        %v2512 = vpack.c.b16 %v2476, %v2473
        %v2513 = vpack.c.b16 %v2477, %v2474
        %v2514 = vpack.c.b16 %v2478, %v2475
        %v2515 = vpack.c.b16 %v2482, %v2479
        %v2516 = vpack.c.b16 %v2483, %v2480
        %v2517 = vpack.c.b16 %v2484, %v2481
        %v2518 = vpack.c.b16 %v2488, %v2485
        %v2519 = vpack.c.b16 %v2489, %v2486
        %v2520 = vpack.c.b16 %v2490, %v2487
        %v2521 = vpack.c.b16 %v2494, %v2491
        %v2522 = vpack.c.b16 %v2495, %v2492
        %v2523 = vpack.c.b16 %v2496, %v2493
        %v2524 = vpack.c.b16 %v2500, %v2497
        %v2525 = vpack.c.b16 %v2501, %v2498
        %v2526 = vpack.c.b16 %v2502, %v2499
        %v2552 = vperm.slane %v2422, 0
        %v2553 = vperm.slane %v2422, 1
        %v2554 = vperm.slane %v2422, 2
        %2558 = vmatpush.bf16.msra.mxu0 %v2524
        %2559 = vmatpush.bf16.msra.mxu0 %v2521
        %2560 = vmatpush.bf16.msra.mxu0 %v2518
        %2561 = vmatpush.bf16.msra.mxu0 %v2515
        %2562 = vmatpush.bf16.msra.mxu0 %v2512
        %2563 = vmatpush.bf16.msra.mxu0 %v2509
        %2564 = vmatpush.bf16.msra.mxu0 %v2506
        %2565 = vmatpush.bf16.msra.mxu0 %v2503
        %2566 = vmatmul.bf16.gmra.mxu0 %v269
        %v2567 = vpop.f32.mrf.mxu0
        %v2568 = vadd.f32 %v2552, %v2567
        %v2569 = vpop.f32.mrf.mxu0
        %2570 = vdwg.mxu0
        %2571 = vmatpush.bf16.msra.mxu0 %v2525
        %2572 = vmatpush.bf16.msra.mxu0 %v2522
        %2573 = vmatpush.bf16.msra.mxu0 %v2519
        %2574 = vmatpush.bf16.msra.mxu0 %v2516
        %2575 = vmatpush.bf16.msra.mxu0 %v2513
        %2576 = vmatpush.bf16.msra.mxu0 %v2510
        %2577 = vmatpush.bf16.msra.mxu0 %v2507
        %2578 = vmatpush.bf16.msra.mxu0 %v2504
        %2579 = vmatmul.bf16.gmra.mxu0 %v269
        %v2580 = vpop.f32.mrf.mxu0
        %v2581 = vadd.f32 %v2553, %v2580
        %v2582 = vpop.f32.mrf.mxu0
        %2583 = vdwg.mxu0
        %2584 = vmatpush.bf16.msra.mxu0 %v2526
        %2585 = vmatpush.bf16.msra.mxu0 %v2523
        %2586 = vmatpush.bf16.msra.mxu0 %v2520
        %2587 = vmatpush.bf16.msra.mxu0 %v2517
        %2588 = vmatpush.bf16.msra.mxu0 %v2514
        %2589 = vmatpush.bf16.msra.mxu0 %v2511
        %2590 = vmatpush.bf16.msra.mxu0 %v2508
        %2591 = vmatpush.bf16.msra.mxu0 %v2505
        %2592 = vmatmul.bf16.gmra.mxu0 %v269
        %v2593 = vpop.f32.mrf.mxu0
        %v2594 = vadd.f32 %v2554, %v2593
        %v2595 = vpop.f32.mrf.mxu0
        %2596 = vdwg.mxu0
        %v2597 = vmax.f32 %v2568, 0.0
        %v2598 = vmax.f32 %v2581, 0.0
        %v2599 = vmax.f32 %v2594, 0.0
        %s2600 = scalar_lea.vmem [#allocation2], 2112
        %v2601 = vld [vmem:[%s2600] sm:$0xff]
        %v2602 = vld [vmem:[%s2600 + $0x8] sm:$0xf]
        %v2603 = vld [vmem:[%s2600 + $0xc] sm:$0xff]
        %v2604 = vld [vmem:[%s2600 + $0x14] sm:$0xf]
        %v2605 = vld [vmem:[%s2600 + $0x18] sm:$0xff]
        %v2606 = vld [vmem:[%s2600 + $0x20] sm:$0xf]
        %v2607 = vld [vmem:[%s2600 + $0x24] sm:$0xff]
        %v2608 = vld [vmem:[%s2600 + $0x2c] sm:$0xf]
        %v2609 = vld [vmem:[%s2600 + $0x30] sm:$0xff]
        %v2610 = vld [vmem:[%s2600 + $0x38] sm:$0xf]
        %v2611 = vld [vmem:[%s2600 + $0x3c] sm:$0xff]
        %v2612 = vld [vmem:[%s2600 + $0x44] sm:$0xf]
        %v2613 = vld [vmem:[%s2600 + $0x48] sm:$0xff]
        %v2614 = vld [vmem:[%s2600 + $0x50] sm:$0xf]
        %v2615 = vld [vmem:[%s2600 + $0x54] sm:$0xff]
        %v2616 = vld [vmem:[%s2600 + $0x5c] sm:$0xf]
        %v2617 = vld [vmem:[%s2600 + $0x60] sm:$0xff]
        %v2618 = vld [vmem:[%s2600 + $0x68] sm:$0xf]
        %v2619 = vld [vmem:[%s2600 + $0x6c] sm:$0xff]
        %v2620 = vld [vmem:[%s2600 + $0x74] sm:$0xf]
        %v2621 = vld [vmem:[%s2600 + $0x78] sm:$0xff]
        %v2622 = vld [vmem:[%s2600 + $0x80] sm:$0xf]
        %v2623 = vld [vmem:[%s2600 + $0x84] sm:$0xff]
        %v2624 = vld [vmem:[%s2600 + $0x8c] sm:$0xf]
        %v2625 = vld [vmem:[%s2600 + $0x90] sm:$0xff]
        %v2626 = vld [vmem:[%s2600 + $0x98] sm:$0xf]
        %v2627 = vld [vmem:[%s2600 + $0x9c] sm:$0xff]
        %v2628 = vld [vmem:[%s2600 + $0xa4] sm:$0xf]
        %v2629 = vld [vmem:[%s2600 + $0xa8] sm:$0xff]
        %v2630 = vld [vmem:[%s2600 + $0xb0] sm:$0xf]
        %v2631 = vld [vmem:[%s2600 + $0xb4] sm:$0xff]
        %v2632 = vld [vmem:[%s2600 + $0xbc] sm:$0xf]
        %s2633 = scalar_lea.vmem [#allocation4], 27
        %v2634 = vld [vmem:[%s2633] ss:$8 sm:$0x7]
        %v2667 = vunpack.c.l.b16 %v2601
        %v2668 = vunpack.c.h.b16 %v2601
        %v2669 = vunpack.c.l.b16 %v2602
        %v2670 = vunpack.c.l.b16 %v2603
        %v2671 = vunpack.c.h.b16 %v2603
        %v2672 = vunpack.c.l.b16 %v2604
        %v2673 = vunpack.c.l.b16 %v2605
        %v2674 = vunpack.c.h.b16 %v2605
        %v2675 = vunpack.c.l.b16 %v2606
        %v2676 = vunpack.c.l.b16 %v2607
        %v2677 = vunpack.c.h.b16 %v2607
        %v2678 = vunpack.c.l.b16 %v2608
        %v2679 = vunpack.c.l.b16 %v2609
        %v2680 = vunpack.c.h.b16 %v2609
        %v2681 = vunpack.c.l.b16 %v2610
        %v2682 = vunpack.c.l.b16 %v2611
        %v2683 = vunpack.c.h.b16 %v2611
        %v2684 = vunpack.c.l.b16 %v2612
        %v2685 = vunpack.c.l.b16 %v2613
        %v2686 = vunpack.c.h.b16 %v2613
        %v2687 = vunpack.c.l.b16 %v2614
        %v2688 = vunpack.c.l.b16 %v2615
        %v2689 = vunpack.c.h.b16 %v2615
        %v2690 = vunpack.c.l.b16 %v2616
        %v2691 = vunpack.c.l.b16 %v2617
        %v2692 = vunpack.c.h.b16 %v2617
        %v2693 = vunpack.c.l.b16 %v2618
        %v2694 = vunpack.c.l.b16 %v2619
        %v2695 = vunpack.c.h.b16 %v2619
        %v2696 = vunpack.c.l.b16 %v2620
        %v2697 = vunpack.c.l.b16 %v2621
        %v2698 = vunpack.c.h.b16 %v2621
        %v2699 = vunpack.c.l.b16 %v2622
        %v2700 = vunpack.c.l.b16 %v2623
        %v2701 = vunpack.c.h.b16 %v2623
        %v2702 = vunpack.c.l.b16 %v2624
        %v2703 = vunpack.c.l.b16 %v2625
        %v2704 = vunpack.c.h.b16 %v2625
        %v2705 = vunpack.c.l.b16 %v2626
        %v2706 = vunpack.c.l.b16 %v2627
        %v2707 = vunpack.c.h.b16 %v2627
        %v2708 = vunpack.c.l.b16 %v2628
        %v2709 = vunpack.c.l.b16 %v2629
        %v2710 = vunpack.c.h.b16 %v2629
        %v2711 = vunpack.c.l.b16 %v2630
        %v2712 = vunpack.c.l.b16 %v2631
        %v2713 = vunpack.c.h.b16 %v2631
        %v2714 = vunpack.c.l.b16 %v2632
        %v2715 = vpack.c.b16 %v2670, %v2667
        %v2716 = vpack.c.b16 %v2671, %v2668
        %v2717 = vpack.c.b16 %v2672, %v2669
        %v2718 = vpack.c.b16 %v2676, %v2673
        %v2719 = vpack.c.b16 %v2677, %v2674
        %v2720 = vpack.c.b16 %v2678, %v2675
        %v2721 = vpack.c.b16 %v2682, %v2679
        %v2722 = vpack.c.b16 %v2683, %v2680
        %v2723 = vpack.c.b16 %v2684, %v2681
        %v2724 = vpack.c.b16 %v2688, %v2685
        %v2725 = vpack.c.b16 %v2689, %v2686
        %v2726 = vpack.c.b16 %v2690, %v2687
        %v2727 = vpack.c.b16 %v2694, %v2691
        %v2728 = vpack.c.b16 %v2695, %v2692
        %v2729 = vpack.c.b16 %v2696, %v2693
        %v2730 = vpack.c.b16 %v2700, %v2697
        %v2731 = vpack.c.b16 %v2701, %v2698
        %v2732 = vpack.c.b16 %v2702, %v2699
        %v2733 = vpack.c.b16 %v2706, %v2703
        %v2734 = vpack.c.b16 %v2707, %v2704
        %v2735 = vpack.c.b16 %v2708, %v2705
        %v2736 = vpack.c.b16 %v2712, %v2709
        %v2737 = vpack.c.b16 %v2713, %v2710
        %v2738 = vpack.c.b16 %v2714, %v2711
        %v2764 = vperm.slane %v2634, 0
        %v2765 = vperm.slane %v2634, 1
        %v2766 = vperm.slane %v2634, 2
        %2770 = vmatpush.bf16.msra.mxu0 %v2736
        %2771 = vmatpush.bf16.msra.mxu0 %v2733
        %2772 = vmatpush.bf16.msra.mxu0 %v2730
        %2773 = vmatpush.bf16.msra.mxu0 %v2727
        %2774 = vmatpush.bf16.msra.mxu0 %v2724
        %2775 = vmatpush.bf16.msra.mxu0 %v2721
        %2776 = vmatpush.bf16.msra.mxu0 %v2718
        %2777 = vmatpush.bf16.msra.mxu0 %v2715
        %2778 = vmatmul.bf16.gmra.mxu0 %v269
        %v2779 = vpop.f32.mrf.mxu0
        %v2780 = vadd.f32 %v2764, %v2779
        %v2781 = vpop.f32.mrf.mxu0
        %2782 = vdwg.mxu0
        %2783 = vmatpush.bf16.msra.mxu0 %v2737
        %2784 = vmatpush.bf16.msra.mxu0 %v2734
        %2785 = vmatpush.bf16.msra.mxu0 %v2731
        %2786 = vmatpush.bf16.msra.mxu0 %v2728
        %2787 = vmatpush.bf16.msra.mxu0 %v2725
        %2788 = vmatpush.bf16.msra.mxu0 %v2722
        %2789 = vmatpush.bf16.msra.mxu0 %v2719
        %2790 = vmatpush.bf16.msra.mxu0 %v2716
        %2791 = vmatmul.bf16.gmra.mxu0 %v269
        %v2792 = vpop.f32.mrf.mxu0
        %v2793 = vadd.f32 %v2765, %v2792
        %v2794 = vpop.f32.mrf.mxu0
        %2795 = vdwg.mxu0
        %2796 = vmatpush.bf16.msra.mxu0 %v2738
        %2797 = vmatpush.bf16.msra.mxu0 %v2735
        %2798 = vmatpush.bf16.msra.mxu0 %v2732
        %2799 = vmatpush.bf16.msra.mxu0 %v2729
        %2800 = vmatpush.bf16.msra.mxu0 %v2726
        %2801 = vmatpush.bf16.msra.mxu0 %v2723
        %2802 = vmatpush.bf16.msra.mxu0 %v2720
        %2803 = vmatpush.bf16.msra.mxu0 %v2717
        %2804 = vmatmul.bf16.gmra.mxu0 %v269
        %v2805 = vpop.f32.mrf.mxu0
        %v2806 = vadd.f32 %v2766, %v2805
        %v2807 = vpop.f32.mrf.mxu0
        %2808 = vdwg.mxu0
        %v2809 = vmax.f32 %v2780, 0.0
        %v2810 = vmax.f32 %v2793, 0.0
        %v2811 = vmax.f32 %v2806, 0.0
        %s2812 = scalar_lea.vmem [#allocation2], 2304
        %v2813 = vld [vmem:[%s2812] sm:$0xff]
        %v2814 = vld [vmem:[%s2812 + $0x8] sm:$0xf]
        %v2815 = vld [vmem:[%s2812 + $0xc] sm:$0xff]
        %v2816 = vld [vmem:[%s2812 + $0x14] sm:$0xf]
        %v2817 = vld [vmem:[%s2812 + $0x18] sm:$0xff]
        %v2818 = vld [vmem:[%s2812 + $0x20] sm:$0xf]
        %v2819 = vld [vmem:[%s2812 + $0x24] sm:$0xff]
        %v2820 = vld [vmem:[%s2812 + $0x2c] sm:$0xf]
        %v2821 = vld [vmem:[%s2812 + $0x30] sm:$0xff]
        %v2822 = vld [vmem:[%s2812 + $0x38] sm:$0xf]
        %v2823 = vld [vmem:[%s2812 + $0x3c] sm:$0xff]
        %v2824 = vld [vmem:[%s2812 + $0x44] sm:$0xf]
        %v2825 = vld [vmem:[%s2812 + $0x48] sm:$0xff]
        %v2826 = vld [vmem:[%s2812 + $0x50] sm:$0xf]
        %v2827 = vld [vmem:[%s2812 + $0x54] sm:$0xff]
        %v2828 = vld [vmem:[%s2812 + $0x5c] sm:$0xf]
        %v2829 = vld [vmem:[%s2812 + $0x60] sm:$0xff]
        %v2830 = vld [vmem:[%s2812 + $0x68] sm:$0xf]
        %v2831 = vld [vmem:[%s2812 + $0x6c] sm:$0xff]
        %v2832 = vld [vmem:[%s2812 + $0x74] sm:$0xf]
        %v2833 = vld [vmem:[%s2812 + $0x78] sm:$0xff]
        %v2834 = vld [vmem:[%s2812 + $0x80] sm:$0xf]
        %v2835 = vld [vmem:[%s2812 + $0x84] sm:$0xff]
        %v2836 = vld [vmem:[%s2812 + $0x8c] sm:$0xf]
        %v2837 = vld [vmem:[%s2812 + $0x90] sm:$0xff]
        %v2838 = vld [vmem:[%s2812 + $0x98] sm:$0xf]
        %v2839 = vld [vmem:[%s2812 + $0x9c] sm:$0xff]
        %v2840 = vld [vmem:[%s2812 + $0xa4] sm:$0xf]
        %v2841 = vld [vmem:[%s2812 + $0xa8] sm:$0xff]
        %v2842 = vld [vmem:[%s2812 + $0xb0] sm:$0xf]
        %v2843 = vld [vmem:[%s2812 + $0xb4] sm:$0xff]
        %v2844 = vld [vmem:[%s2812 + $0xbc] sm:$0xf]
        %s2845 = scalar_lea.vmem [#allocation4], 28
        %v2846 = vld [vmem:[%s2845] ss:$8 sm:$0x7]
        %v2879 = vunpack.c.l.b16 %v2813
        %v2880 = vunpack.c.h.b16 %v2813
        %v2881 = vunpack.c.l.b16 %v2814
        %v2882 = vunpack.c.l.b16 %v2815
        %v2883 = vunpack.c.h.b16 %v2815
        %v2884 = vunpack.c.l.b16 %v2816
        %v2885 = vunpack.c.l.b16 %v2817
        %v2886 = vunpack.c.h.b16 %v2817
        %v2887 = vunpack.c.l.b16 %v2818
        %v2888 = vunpack.c.l.b16 %v2819
        %v2889 = vunpack.c.h.b16 %v2819
        %v2890 = vunpack.c.l.b16 %v2820
        %v2891 = vunpack.c.l.b16 %v2821
        %v2892 = vunpack.c.h.b16 %v2821
        %v2893 = vunpack.c.l.b16 %v2822
        %v2894 = vunpack.c.l.b16 %v2823
        %v2895 = vunpack.c.h.b16 %v2823
        %v2896 = vunpack.c.l.b16 %v2824
        %v2897 = vunpack.c.l.b16 %v2825
        %v2898 = vunpack.c.h.b16 %v2825
        %v2899 = vunpack.c.l.b16 %v2826
        %v2900 = vunpack.c.l.b16 %v2827
        %v2901 = vunpack.c.h.b16 %v2827
        %v2902 = vunpack.c.l.b16 %v2828
        %v2903 = vunpack.c.l.b16 %v2829
        %v2904 = vunpack.c.h.b16 %v2829
        %v2905 = vunpack.c.l.b16 %v2830
        %v2906 = vunpack.c.l.b16 %v2831
        %v2907 = vunpack.c.h.b16 %v2831
        %v2908 = vunpack.c.l.b16 %v2832
        %v2909 = vunpack.c.l.b16 %v2833
        %v2910 = vunpack.c.h.b16 %v2833
        %v2911 = vunpack.c.l.b16 %v2834
        %v2912 = vunpack.c.l.b16 %v2835
        %v2913 = vunpack.c.h.b16 %v2835
        %v2914 = vunpack.c.l.b16 %v2836
        %v2915 = vunpack.c.l.b16 %v2837
        %v2916 = vunpack.c.h.b16 %v2837
        %v2917 = vunpack.c.l.b16 %v2838
        %v2918 = vunpack.c.l.b16 %v2839
        %v2919 = vunpack.c.h.b16 %v2839
        %v2920 = vunpack.c.l.b16 %v2840
        %v2921 = vunpack.c.l.b16 %v2841
        %v2922 = vunpack.c.h.b16 %v2841
        %v2923 = vunpack.c.l.b16 %v2842
        %v2924 = vunpack.c.l.b16 %v2843
        %v2925 = vunpack.c.h.b16 %v2843
        %v2926 = vunpack.c.l.b16 %v2844
        %v2927 = vpack.c.b16 %v2882, %v2879
        %v2928 = vpack.c.b16 %v2883, %v2880
        %v2929 = vpack.c.b16 %v2884, %v2881
        %v2930 = vpack.c.b16 %v2888, %v2885
        %v2931 = vpack.c.b16 %v2889, %v2886
        %v2932 = vpack.c.b16 %v2890, %v2887
        %v2933 = vpack.c.b16 %v2894, %v2891
        %v2934 = vpack.c.b16 %v2895, %v2892
        %v2935 = vpack.c.b16 %v2896, %v2893
        %v2936 = vpack.c.b16 %v2900, %v2897
        %v2937 = vpack.c.b16 %v2901, %v2898
        %v2938 = vpack.c.b16 %v2902, %v2899
        %v2939 = vpack.c.b16 %v2906, %v2903
        %v2940 = vpack.c.b16 %v2907, %v2904
        %v2941 = vpack.c.b16 %v2908, %v2905
        %v2942 = vpack.c.b16 %v2912, %v2909
        %v2943 = vpack.c.b16 %v2913, %v2910
        %v2944 = vpack.c.b16 %v2914, %v2911
        %v2945 = vpack.c.b16 %v2918, %v2915
        %v2946 = vpack.c.b16 %v2919, %v2916
        %v2947 = vpack.c.b16 %v2920, %v2917
        %v2948 = vpack.c.b16 %v2924, %v2921
        %v2949 = vpack.c.b16 %v2925, %v2922
        %v2950 = vpack.c.b16 %v2926, %v2923
        %v2976 = vperm.slane %v2846, 0
        %v2977 = vperm.slane %v2846, 1
        %v2978 = vperm.slane %v2846, 2
        %2982 = vmatpush.bf16.msra.mxu0 %v2948
        %2983 = vmatpush.bf16.msra.mxu0 %v2945
        %2984 = vmatpush.bf16.msra.mxu0 %v2942
        %2985 = vmatpush.bf16.msra.mxu0 %v2939
        %2986 = vmatpush.bf16.msra.mxu0 %v2936
        %2987 = vmatpush.bf16.msra.mxu0 %v2933
        %2988 = vmatpush.bf16.msra.mxu0 %v2930
        %2989 = vmatpush.bf16.msra.mxu0 %v2927
        %2990 = vmatmul.bf16.gmra.mxu0 %v269
        %v2991 = vpop.f32.mrf.mxu0
        %v2992 = vadd.f32 %v2976, %v2991
        %v2993 = vpop.f32.mrf.mxu0
        %2994 = vdwg.mxu0
        %2995 = vmatpush.bf16.msra.mxu0 %v2949
        %2996 = vmatpush.bf16.msra.mxu0 %v2946
        %2997 = vmatpush.bf16.msra.mxu0 %v2943
        %2998 = vmatpush.bf16.msra.mxu0 %v2940
        %2999 = vmatpush.bf16.msra.mxu0 %v2937
        %3000 = vmatpush.bf16.msra.mxu0 %v2934
        %3001 = vmatpush.bf16.msra.mxu0 %v2931
        %3002 = vmatpush.bf16.msra.mxu0 %v2928
        %3003 = vmatmul.bf16.gmra.mxu0 %v269
        %v3004 = vpop.f32.mrf.mxu0
        %v3005 = vadd.f32 %v2977, %v3004
        %v3006 = vpop.f32.mrf.mxu0
        %3007 = vdwg.mxu0
        %3008 = vmatpush.bf16.msra.mxu0 %v2950
        %3009 = vmatpush.bf16.msra.mxu0 %v2947
        %3010 = vmatpush.bf16.msra.mxu0 %v2944
        %3011 = vmatpush.bf16.msra.mxu0 %v2941
        %3012 = vmatpush.bf16.msra.mxu0 %v2938
        %3013 = vmatpush.bf16.msra.mxu0 %v2935
        %3014 = vmatpush.bf16.msra.mxu0 %v2932
        %3015 = vmatpush.bf16.msra.mxu0 %v2929
        %3016 = vmatmul.bf16.gmra.mxu0 %v269
        %v3017 = vpop.f32.mrf.mxu0
        %v3018 = vadd.f32 %v2978, %v3017
        %v3019 = vpop.f32.mrf.mxu0
        %3020 = vdwg.mxu0
        %v3021 = vmax.f32 %v2992, 0.0
        %v3022 = vmax.f32 %v3005, 0.0
        %v3023 = vmax.f32 %v3018, 0.0
        %s3024 = scalar_lea.vmem [#allocation2], 2496
        %v3025 = vld [vmem:[%s3024] sm:$0xff]
        %v3026 = vld [vmem:[%s3024 + $0x8] sm:$0xf]
        %v3027 = vld [vmem:[%s3024 + $0xc] sm:$0xff]
        %v3028 = vld [vmem:[%s3024 + $0x14] sm:$0xf]
        %v3029 = vld [vmem:[%s3024 + $0x18] sm:$0xff]
        %v3030 = vld [vmem:[%s3024 + $0x20] sm:$0xf]
        %v3031 = vld [vmem:[%s3024 + $0x24] sm:$0xff]
        %v3032 = vld [vmem:[%s3024 + $0x2c] sm:$0xf]
        %v3033 = vld [vmem:[%s3024 + $0x30] sm:$0xff]
        %v3034 = vld [vmem:[%s3024 + $0x38] sm:$0xf]
        %v3035 = vld [vmem:[%s3024 + $0x3c] sm:$0xff]
        %v3036 = vld [vmem:[%s3024 + $0x44] sm:$0xf]
        %v3037 = vld [vmem:[%s3024 + $0x48] sm:$0xff]
        %v3038 = vld [vmem:[%s3024 + $0x50] sm:$0xf]
        %v3039 = vld [vmem:[%s3024 + $0x54] sm:$0xff]
        %v3040 = vld [vmem:[%s3024 + $0x5c] sm:$0xf]
        %v3041 = vld [vmem:[%s3024 + $0x60] sm:$0xff]
        %v3042 = vld [vmem:[%s3024 + $0x68] sm:$0xf]
        %v3043 = vld [vmem:[%s3024 + $0x6c] sm:$0xff]
        %v3044 = vld [vmem:[%s3024 + $0x74] sm:$0xf]
        %v3045 = vld [vmem:[%s3024 + $0x78] sm:$0xff]
        %v3046 = vld [vmem:[%s3024 + $0x80] sm:$0xf]
        %v3047 = vld [vmem:[%s3024 + $0x84] sm:$0xff]
        %v3048 = vld [vmem:[%s3024 + $0x8c] sm:$0xf]
        %v3049 = vld [vmem:[%s3024 + $0x90] sm:$0xff]
        %v3050 = vld [vmem:[%s3024 + $0x98] sm:$0xf]
        %v3051 = vld [vmem:[%s3024 + $0x9c] sm:$0xff]
        %v3052 = vld [vmem:[%s3024 + $0xa4] sm:$0xf]
        %v3053 = vld [vmem:[%s3024 + $0xa8] sm:$0xff]
        %v3054 = vld [vmem:[%s3024 + $0xb0] sm:$0xf]
        %v3055 = vld [vmem:[%s3024 + $0xb4] sm:$0xff]
        %v3056 = vld [vmem:[%s3024 + $0xbc] sm:$0xf]
        %s3057 = scalar_lea.vmem [#allocation4], 29
        %v3058 = vld [vmem:[%s3057] ss:$8 sm:$0x7]
        %v3091 = vunpack.c.l.b16 %v3025
        %v3092 = vunpack.c.h.b16 %v3025
        %v3093 = vunpack.c.l.b16 %v3026
        %v3094 = vunpack.c.l.b16 %v3027
        %v3095 = vunpack.c.h.b16 %v3027
        %v3096 = vunpack.c.l.b16 %v3028
        %v3097 = vunpack.c.l.b16 %v3029
        %v3098 = vunpack.c.h.b16 %v3029
        %v3099 = vunpack.c.l.b16 %v3030
        %v3100 = vunpack.c.l.b16 %v3031
        %v3101 = vunpack.c.h.b16 %v3031
        %v3102 = vunpack.c.l.b16 %v3032
        %v3103 = vunpack.c.l.b16 %v3033
        %v3104 = vunpack.c.h.b16 %v3033
        %v3105 = vunpack.c.l.b16 %v3034
        %v3106 = vunpack.c.l.b16 %v3035
        %v3107 = vunpack.c.h.b16 %v3035
        %v3108 = vunpack.c.l.b16 %v3036
        %v3109 = vunpack.c.l.b16 %v3037
        %v3110 = vunpack.c.h.b16 %v3037
        %v3111 = vunpack.c.l.b16 %v3038
        %v3112 = vunpack.c.l.b16 %v3039
        %v3113 = vunpack.c.h.b16 %v3039
        %v3114 = vunpack.c.l.b16 %v3040
        %v3115 = vunpack.c.l.b16 %v3041
        %v3116 = vunpack.c.h.b16 %v3041
        %v3117 = vunpack.c.l.b16 %v3042
        %v3118 = vunpack.c.l.b16 %v3043
        %v3119 = vunpack.c.h.b16 %v3043
        %v3120 = vunpack.c.l.b16 %v3044
        %v3121 = vunpack.c.l.b16 %v3045
        %v3122 = vunpack.c.h.b16 %v3045
        %v3123 = vunpack.c.l.b16 %v3046
        %v3124 = vunpack.c.l.b16 %v3047
        %v3125 = vunpack.c.h.b16 %v3047
        %v3126 = vunpack.c.l.b16 %v3048
        %v3127 = vunpack.c.l.b16 %v3049
        %v3128 = vunpack.c.h.b16 %v3049
        %v3129 = vunpack.c.l.b16 %v3050
        %v3130 = vunpack.c.l.b16 %v3051
        %v3131 = vunpack.c.h.b16 %v3051
        %v3132 = vunpack.c.l.b16 %v3052
        %v3133 = vunpack.c.l.b16 %v3053
        %v3134 = vunpack.c.h.b16 %v3053
        %v3135 = vunpack.c.l.b16 %v3054
        %v3136 = vunpack.c.l.b16 %v3055
        %v3137 = vunpack.c.h.b16 %v3055
        %v3138 = vunpack.c.l.b16 %v3056
        %v3139 = vpack.c.b16 %v3094, %v3091
        %v3140 = vpack.c.b16 %v3095, %v3092
        %v3141 = vpack.c.b16 %v3096, %v3093
        %v3142 = vpack.c.b16 %v3100, %v3097
        %v3143 = vpack.c.b16 %v3101, %v3098
        %v3144 = vpack.c.b16 %v3102, %v3099
        %v3145 = vpack.c.b16 %v3106, %v3103
        %v3146 = vpack.c.b16 %v3107, %v3104
        %v3147 = vpack.c.b16 %v3108, %v3105
        %v3148 = vpack.c.b16 %v3112, %v3109
        %v3149 = vpack.c.b16 %v3113, %v3110
        %v3150 = vpack.c.b16 %v3114, %v3111
        %v3151 = vpack.c.b16 %v3118, %v3115
        %v3152 = vpack.c.b16 %v3119, %v3116
        %v3153 = vpack.c.b16 %v3120, %v3117
        %v3154 = vpack.c.b16 %v3124, %v3121
        %v3155 = vpack.c.b16 %v3125, %v3122
        %v3156 = vpack.c.b16 %v3126, %v3123
        %v3157 = vpack.c.b16 %v3130, %v3127
        %v3158 = vpack.c.b16 %v3131, %v3128
        %v3159 = vpack.c.b16 %v3132, %v3129
        %v3160 = vpack.c.b16 %v3136, %v3133
        %v3161 = vpack.c.b16 %v3137, %v3134
        %v3162 = vpack.c.b16 %v3138, %v3135
        %v3188 = vperm.slane %v3058, 0
        %v3189 = vperm.slane %v3058, 1
        %v3190 = vperm.slane %v3058, 2
        %3194 = vmatpush.bf16.msra.mxu0 %v3160
        %3195 = vmatpush.bf16.msra.mxu0 %v3157
        %3196 = vmatpush.bf16.msra.mxu0 %v3154
        %3197 = vmatpush.bf16.msra.mxu0 %v3151
        %3198 = vmatpush.bf16.msra.mxu0 %v3148
        %3199 = vmatpush.bf16.msra.mxu0 %v3145
        %3200 = vmatpush.bf16.msra.mxu0 %v3142
        %3201 = vmatpush.bf16.msra.mxu0 %v3139
        %3202 = vmatmul.bf16.gmra.mxu0 %v269
        %v3203 = vpop.f32.mrf.mxu0
        %v3204 = vadd.f32 %v3188, %v3203
        %v3205 = vpop.f32.mrf.mxu0
        %3206 = vdwg.mxu0
        %3207 = vmatpush.bf16.msra.mxu0 %v3161
        %3208 = vmatpush.bf16.msra.mxu0 %v3158
        %3209 = vmatpush.bf16.msra.mxu0 %v3155
        %3210 = vmatpush.bf16.msra.mxu0 %v3152
        %3211 = vmatpush.bf16.msra.mxu0 %v3149
        %3212 = vmatpush.bf16.msra.mxu0 %v3146
        %3213 = vmatpush.bf16.msra.mxu0 %v3143
        %3214 = vmatpush.bf16.msra.mxu0 %v3140
        %3215 = vmatmul.bf16.gmra.mxu0 %v269
        %v3216 = vpop.f32.mrf.mxu0
        %v3217 = vadd.f32 %v3189, %v3216
        %v3218 = vpop.f32.mrf.mxu0
        %3219 = vdwg.mxu0
        %3220 = vmatpush.bf16.msra.mxu0 %v3162
        %3221 = vmatpush.bf16.msra.mxu0 %v3159
        %3222 = vmatpush.bf16.msra.mxu0 %v3156
        %3223 = vmatpush.bf16.msra.mxu0 %v3153
        %3224 = vmatpush.bf16.msra.mxu0 %v3150
        %3225 = vmatpush.bf16.msra.mxu0 %v3147
        %3226 = vmatpush.bf16.msra.mxu0 %v3144
        %3227 = vmatpush.bf16.msra.mxu0 %v3141
        %3228 = vmatmul.bf16.gmra.mxu0 %v269
        %v3229 = vpop.f32.mrf.mxu0
        %v3230 = vadd.f32 %v3190, %v3229
        %v3231 = vpop.f32.mrf.mxu0
        %3232 = vdwg.mxu0
        %v3233 = vmax.f32 %v3204, 0.0
        %v3234 = vmax.f32 %v3217, 0.0
        %v3235 = vmax.f32 %v3230, 0.0
        %s3236 = scalar_lea.vmem [#allocation2], 2688
        %v3237 = vld [vmem:[%s3236] sm:$0xff]
        %v3238 = vld [vmem:[%s3236 + $0x8] sm:$0xf]
        %v3239 = vld [vmem:[%s3236 + $0xc] sm:$0xff]
        %v3240 = vld [vmem:[%s3236 + $0x14] sm:$0xf]
        %v3241 = vld [vmem:[%s3236 + $0x18] sm:$0xff]
        %v3242 = vld [vmem:[%s3236 + $0x20] sm:$0xf]
        %v3243 = vld [vmem:[%s3236 + $0x24] sm:$0xff]
        %v3244 = vld [vmem:[%s3236 + $0x2c] sm:$0xf]
        %v3245 = vld [vmem:[%s3236 + $0x30] sm:$0xff]
        %v3246 = vld [vmem:[%s3236 + $0x38] sm:$0xf]
        %v3247 = vld [vmem:[%s3236 + $0x3c] sm:$0xff]
        %v3248 = vld [vmem:[%s3236 + $0x44] sm:$0xf]
        %v3249 = vld [vmem:[%s3236 + $0x48] sm:$0xff]
        %v3250 = vld [vmem:[%s3236 + $0x50] sm:$0xf]
        %v3251 = vld [vmem:[%s3236 + $0x54] sm:$0xff]
        %v3252 = vld [vmem:[%s3236 + $0x5c] sm:$0xf]
        %v3253 = vld [vmem:[%s3236 + $0x60] sm:$0xff]
        %v3254 = vld [vmem:[%s3236 + $0x68] sm:$0xf]
        %v3255 = vld [vmem:[%s3236 + $0x6c] sm:$0xff]
        %v3256 = vld [vmem:[%s3236 + $0x74] sm:$0xf]
        %v3257 = vld [vmem:[%s3236 + $0x78] sm:$0xff]
        %v3258 = vld [vmem:[%s3236 + $0x80] sm:$0xf]
        %v3259 = vld [vmem:[%s3236 + $0x84] sm:$0xff]
        %v3260 = vld [vmem:[%s3236 + $0x8c] sm:$0xf]
        %v3261 = vld [vmem:[%s3236 + $0x90] sm:$0xff]
        %v3262 = vld [vmem:[%s3236 + $0x98] sm:$0xf]
        %v3263 = vld [vmem:[%s3236 + $0x9c] sm:$0xff]
        %v3264 = vld [vmem:[%s3236 + $0xa4] sm:$0xf]
        %v3265 = vld [vmem:[%s3236 + $0xa8] sm:$0xff]
        %v3266 = vld [vmem:[%s3236 + $0xb0] sm:$0xf]
        %v3267 = vld [vmem:[%s3236 + $0xb4] sm:$0xff]
        %v3268 = vld [vmem:[%s3236 + $0xbc] sm:$0xf]
        %s3269 = scalar_lea.vmem [#allocation4], 30
        %v3270 = vld [vmem:[%s3269] ss:$8 sm:$0x7]
        %v3303 = vunpack.c.l.b16 %v3237
        %v3304 = vunpack.c.h.b16 %v3237
        %v3305 = vunpack.c.l.b16 %v3238
        %v3306 = vunpack.c.l.b16 %v3239
        %v3307 = vunpack.c.h.b16 %v3239
        %v3308 = vunpack.c.l.b16 %v3240
        %v3309 = vunpack.c.l.b16 %v3241
        %v3310 = vunpack.c.h.b16 %v3241
        %v3311 = vunpack.c.l.b16 %v3242
        %v3312 = vunpack.c.l.b16 %v3243
        %v3313 = vunpack.c.h.b16 %v3243
        %v3314 = vunpack.c.l.b16 %v3244
        %v3315 = vunpack.c.l.b16 %v3245
        %v3316 = vunpack.c.h.b16 %v3245
        %v3317 = vunpack.c.l.b16 %v3246
        %v3318 = vunpack.c.l.b16 %v3247
        %v3319 = vunpack.c.h.b16 %v3247
        %v3320 = vunpack.c.l.b16 %v3248
        %v3321 = vunpack.c.l.b16 %v3249
        %v3322 = vunpack.c.h.b16 %v3249
        %v3323 = vunpack.c.l.b16 %v3250
        %v3324 = vunpack.c.l.b16 %v3251
        %v3325 = vunpack.c.h.b16 %v3251
        %v3326 = vunpack.c.l.b16 %v3252
        %v3327 = vunpack.c.l.b16 %v3253
        %v3328 = vunpack.c.h.b16 %v3253
        %v3329 = vunpack.c.l.b16 %v3254
        %v3330 = vunpack.c.l.b16 %v3255
        %v3331 = vunpack.c.h.b16 %v3255
        %v3332 = vunpack.c.l.b16 %v3256
        %v3333 = vunpack.c.l.b16 %v3257
        %v3334 = vunpack.c.h.b16 %v3257
        %v3335 = vunpack.c.l.b16 %v3258
        %v3336 = vunpack.c.l.b16 %v3259
        %v3337 = vunpack.c.h.b16 %v3259
        %v3338 = vunpack.c.l.b16 %v3260
        %v3339 = vunpack.c.l.b16 %v3261
        %v3340 = vunpack.c.h.b16 %v3261
        %v3341 = vunpack.c.l.b16 %v3262
        %v3342 = vunpack.c.l.b16 %v3263
        %v3343 = vunpack.c.h.b16 %v3263
        %v3344 = vunpack.c.l.b16 %v3264
        %v3345 = vunpack.c.l.b16 %v3265
        %v3346 = vunpack.c.h.b16 %v3265
        %v3347 = vunpack.c.l.b16 %v3266
        %v3348 = vunpack.c.l.b16 %v3267
        %v3349 = vunpack.c.h.b16 %v3267
        %v3350 = vunpack.c.l.b16 %v3268
        %v3351 = vpack.c.b16 %v3306, %v3303
        %v3352 = vpack.c.b16 %v3307, %v3304
        %v3353 = vpack.c.b16 %v3308, %v3305
        %v3354 = vpack.c.b16 %v3312, %v3309
        %v3355 = vpack.c.b16 %v3313, %v3310
        %v3356 = vpack.c.b16 %v3314, %v3311
        %v3357 = vpack.c.b16 %v3318, %v3315
        %v3358 = vpack.c.b16 %v3319, %v3316
        %v3359 = vpack.c.b16 %v3320, %v3317
        %v3360 = vpack.c.b16 %v3324, %v3321
        %v3361 = vpack.c.b16 %v3325, %v3322
        %v3362 = vpack.c.b16 %v3326, %v3323
        %v3363 = vpack.c.b16 %v3330, %v3327
        %v3364 = vpack.c.b16 %v3331, %v3328
        %v3365 = vpack.c.b16 %v3332, %v3329
        %v3366 = vpack.c.b16 %v3336, %v3333
        %v3367 = vpack.c.b16 %v3337, %v3334
        %v3368 = vpack.c.b16 %v3338, %v3335
        %v3369 = vpack.c.b16 %v3342, %v3339
        %v3370 = vpack.c.b16 %v3343, %v3340
        %v3371 = vpack.c.b16 %v3344, %v3341
        %v3372 = vpack.c.b16 %v3348, %v3345
        %v3373 = vpack.c.b16 %v3349, %v3346
        %v3374 = vpack.c.b16 %v3350, %v3347
        %v3400 = vperm.slane %v3270, 0
        %v3401 = vperm.slane %v3270, 1
        %v3402 = vperm.slane %v3270, 2
        %3406 = vmatpush.bf16.msra.mxu0 %v3372
        %3407 = vmatpush.bf16.msra.mxu0 %v3369
        %3408 = vmatpush.bf16.msra.mxu0 %v3366
        %3409 = vmatpush.bf16.msra.mxu0 %v3363
        %3410 = vmatpush.bf16.msra.mxu0 %v3360
        %3411 = vmatpush.bf16.msra.mxu0 %v3357
        %3412 = vmatpush.bf16.msra.mxu0 %v3354
        %3413 = vmatpush.bf16.msra.mxu0 %v3351
        %3414 = vmatmul.bf16.gmra.mxu0 %v269
        %v3415 = vpop.f32.mrf.mxu0
        %v3416 = vadd.f32 %v3400, %v3415
        %v3417 = vpop.f32.mrf.mxu0
        %3418 = vdwg.mxu0
        %3419 = vmatpush.bf16.msra.mxu0 %v3373
        %3420 = vmatpush.bf16.msra.mxu0 %v3370
        %3421 = vmatpush.bf16.msra.mxu0 %v3367
        %3422 = vmatpush.bf16.msra.mxu0 %v3364
        %3423 = vmatpush.bf16.msra.mxu0 %v3361
        %3424 = vmatpush.bf16.msra.mxu0 %v3358
        %3425 = vmatpush.bf16.msra.mxu0 %v3355
        %3426 = vmatpush.bf16.msra.mxu0 %v3352
        %3427 = vmatmul.bf16.gmra.mxu0 %v269
        %v3428 = vpop.f32.mrf.mxu0
        %v3429 = vadd.f32 %v3401, %v3428
        %v3430 = vpop.f32.mrf.mxu0
        %3431 = vdwg.mxu0
        %3432 = vmatpush.bf16.msra.mxu0 %v3374
        %3433 = vmatpush.bf16.msra.mxu0 %v3371
        %3434 = vmatpush.bf16.msra.mxu0 %v3368
        %3435 = vmatpush.bf16.msra.mxu0 %v3365
        %3436 = vmatpush.bf16.msra.mxu0 %v3362
        %3437 = vmatpush.bf16.msra.mxu0 %v3359
        %3438 = vmatpush.bf16.msra.mxu0 %v3356
        %3439 = vmatpush.bf16.msra.mxu0 %v3353
        %3440 = vmatmul.bf16.gmra.mxu0 %v269
        %v3441 = vpop.f32.mrf.mxu0
        %v3442 = vadd.f32 %v3402, %v3441
        %v3443 = vpop.f32.mrf.mxu0
        %3444 = vdwg.mxu0
        %v3445 = vmax.f32 %v3416, 0.0
        %v3446 = vmax.f32 %v3429, 0.0
        %v3447 = vmax.f32 %v3442, 0.0
        %s3448 = scalar_lea.vmem [#allocation2], 2880
        %v3449 = vld [vmem:[%s3448] sm:$0xff]
        %v3450 = vld [vmem:[%s3448 + $0x8] sm:$0xf]
        %v3451 = vld [vmem:[%s3448 + $0xc] sm:$0xff]
        %v3452 = vld [vmem:[%s3448 + $0x14] sm:$0xf]
        %v3453 = vld [vmem:[%s3448 + $0x18] sm:$0xff]
        %v3454 = vld [vmem:[%s3448 + $0x20] sm:$0xf]
        %v3455 = vld [vmem:[%s3448 + $0x24] sm:$0xff]
        %v3456 = vld [vmem:[%s3448 + $0x2c] sm:$0xf]
        %v3457 = vld [vmem:[%s3448 + $0x30] sm:$0xff]
        %v3458 = vld [vmem:[%s3448 + $0x38] sm:$0xf]
        %v3459 = vld [vmem:[%s3448 + $0x3c] sm:$0xff]
        %v3460 = vld [vmem:[%s3448 + $0x44] sm:$0xf]
        %v3461 = vld [vmem:[%s3448 + $0x48] sm:$0xff]
        %v3462 = vld [vmem:[%s3448 + $0x50] sm:$0xf]
        %v3463 = vld [vmem:[%s3448 + $0x54] sm:$0xff]
        %v3464 = vld [vmem:[%s3448 + $0x5c] sm:$0xf]
        %v3465 = vld [vmem:[%s3448 + $0x60] sm:$0xff]
        %v3466 = vld [vmem:[%s3448 + $0x68] sm:$0xf]
        %v3467 = vld [vmem:[%s3448 + $0x6c] sm:$0xff]
        %v3468 = vld [vmem:[%s3448 + $0x74] sm:$0xf]
        %v3469 = vld [vmem:[%s3448 + $0x78] sm:$0xff]
        %v3470 = vld [vmem:[%s3448 + $0x80] sm:$0xf]
        %v3471 = vld [vmem:[%s3448 + $0x84] sm:$0xff]
        %v3472 = vld [vmem:[%s3448 + $0x8c] sm:$0xf]
        %v3473 = vld [vmem:[%s3448 + $0x90] sm:$0xff]
        %v3474 = vld [vmem:[%s3448 + $0x98] sm:$0xf]
        %v3475 = vld [vmem:[%s3448 + $0x9c] sm:$0xff]
        %v3476 = vld [vmem:[%s3448 + $0xa4] sm:$0xf]
        %v3477 = vld [vmem:[%s3448 + $0xa8] sm:$0xff]
        %v3478 = vld [vmem:[%s3448 + $0xb0] sm:$0xf]
        %v3479 = vld [vmem:[%s3448 + $0xb4] sm:$0xff]
        %v3480 = vld [vmem:[%s3448 + $0xbc] sm:$0xf]
        %s3481 = scalar_lea.vmem [#allocation4], 31
        %v3482 = vld [vmem:[%s3481] ss:$8 sm:$0x7]
        %v3515 = vunpack.c.l.b16 %v3449
        %v3516 = vunpack.c.h.b16 %v3449
        %v3517 = vunpack.c.l.b16 %v3450
        %v3518 = vunpack.c.l.b16 %v3451
        %v3519 = vunpack.c.h.b16 %v3451
        %v3520 = vunpack.c.l.b16 %v3452
        %v3521 = vunpack.c.l.b16 %v3453
        %v3522 = vunpack.c.h.b16 %v3453
        %v3523 = vunpack.c.l.b16 %v3454
        %v3524 = vunpack.c.l.b16 %v3455
        %v3525 = vunpack.c.h.b16 %v3455
        %v3526 = vunpack.c.l.b16 %v3456
        %v3527 = vunpack.c.l.b16 %v3457
        %v3528 = vunpack.c.h.b16 %v3457
        %v3529 = vunpack.c.l.b16 %v3458
        %v3530 = vunpack.c.l.b16 %v3459
        %v3531 = vunpack.c.h.b16 %v3459
        %v3532 = vunpack.c.l.b16 %v3460
        %v3533 = vunpack.c.l.b16 %v3461
        %v3534 = vunpack.c.h.b16 %v3461
        %v3535 = vunpack.c.l.b16 %v3462
        %v3536 = vunpack.c.l.b16 %v3463
        %v3537 = vunpack.c.h.b16 %v3463
        %v3538 = vunpack.c.l.b16 %v3464
        %v3539 = vunpack.c.l.b16 %v3465
        %v3540 = vunpack.c.h.b16 %v3465
        %v3541 = vunpack.c.l.b16 %v3466
        %v3542 = vunpack.c.l.b16 %v3467
        %v3543 = vunpack.c.h.b16 %v3467
        %v3544 = vunpack.c.l.b16 %v3468
        %v3545 = vunpack.c.l.b16 %v3469
        %v3546 = vunpack.c.h.b16 %v3469
        %v3547 = vunpack.c.l.b16 %v3470
        %v3548 = vunpack.c.l.b16 %v3471
        %v3549 = vunpack.c.h.b16 %v3471
        %v3550 = vunpack.c.l.b16 %v3472
        %v3551 = vunpack.c.l.b16 %v3473
        %v3552 = vunpack.c.h.b16 %v3473
        %v3553 = vunpack.c.l.b16 %v3474
        %v3554 = vunpack.c.l.b16 %v3475
        %v3555 = vunpack.c.h.b16 %v3475
        %v3556 = vunpack.c.l.b16 %v3476
        %v3557 = vunpack.c.l.b16 %v3477
        %v3558 = vunpack.c.h.b16 %v3477
        %v3559 = vunpack.c.l.b16 %v3478
        %v3560 = vunpack.c.l.b16 %v3479
        %v3561 = vunpack.c.h.b16 %v3479
        %v3562 = vunpack.c.l.b16 %v3480
        %v3563 = vpack.c.b16 %v3518, %v3515
        %v3564 = vpack.c.b16 %v3519, %v3516
        %v3565 = vpack.c.b16 %v3520, %v3517
        %v3566 = vpack.c.b16 %v3524, %v3521
        %v3567 = vpack.c.b16 %v3525, %v3522
        %v3568 = vpack.c.b16 %v3526, %v3523
        %v3569 = vpack.c.b16 %v3530, %v3527
        %v3570 = vpack.c.b16 %v3531, %v3528
        %v3571 = vpack.c.b16 %v3532, %v3529
        %v3572 = vpack.c.b16 %v3536, %v3533
        %v3573 = vpack.c.b16 %v3537, %v3534
        %v3574 = vpack.c.b16 %v3538, %v3535
        %v3575 = vpack.c.b16 %v3542, %v3539
        %v3576 = vpack.c.b16 %v3543, %v3540
        %v3577 = vpack.c.b16 %v3544, %v3541
        %v3578 = vpack.c.b16 %v3548, %v3545
        %v3579 = vpack.c.b16 %v3549, %v3546
        %v3580 = vpack.c.b16 %v3550, %v3547
        %v3581 = vpack.c.b16 %v3554, %v3551
        %v3582 = vpack.c.b16 %v3555, %v3552
        %v3583 = vpack.c.b16 %v3556, %v3553
        %v3584 = vpack.c.b16 %v3560, %v3557
        %v3585 = vpack.c.b16 %v3561, %v3558
        %v3586 = vpack.c.b16 %v3562, %v3559
        %v3612 = vperm.slane %v3482, 0
        %v3613 = vperm.slane %v3482, 1
        %v3614 = vperm.slane %v3482, 2
        %3618 = vmatpush.bf16.msra.mxu0 %v3584
        %3619 = vmatpush.bf16.msra.mxu0 %v3581
        %3620 = vmatpush.bf16.msra.mxu0 %v3578
        %3621 = vmatpush.bf16.msra.mxu0 %v3575
        %3622 = vmatpush.bf16.msra.mxu0 %v3572
        %3623 = vmatpush.bf16.msra.mxu0 %v3569
        %3624 = vmatpush.bf16.msra.mxu0 %v3566
        %3625 = vmatpush.bf16.msra.mxu0 %v3563
        %3626 = vmatmul.bf16.gmra.mxu0 %v269
        %v3627 = vpop.f32.mrf.mxu0
        %v3628 = vadd.f32 %v3612, %v3627
        %v3629 = vpop.f32.mrf.mxu0
        %3630 = vdwg.mxu0
        %3631 = vmatpush.bf16.msra.mxu0 %v3585
        %3632 = vmatpush.bf16.msra.mxu0 %v3582
        %3633 = vmatpush.bf16.msra.mxu0 %v3579
        %3634 = vmatpush.bf16.msra.mxu0 %v3576
        %3635 = vmatpush.bf16.msra.mxu0 %v3573
        %3636 = vmatpush.bf16.msra.mxu0 %v3570
        %3637 = vmatpush.bf16.msra.mxu0 %v3567
        %3638 = vmatpush.bf16.msra.mxu0 %v3564
        %3639 = vmatmul.bf16.gmra.mxu0 %v269
        %v3640 = vpop.f32.mrf.mxu0
        %v3641 = vadd.f32 %v3613, %v3640
        %v3642 = vpop.f32.mrf.mxu0
        %3643 = vdwg.mxu0
        %3644 = vmatpush.bf16.msra.mxu0 %v3586
        %3645 = vmatpush.bf16.msra.mxu0 %v3583
        %3646 = vmatpush.bf16.msra.mxu0 %v3580
        %3647 = vmatpush.bf16.msra.mxu0 %v3577
        %3648 = vmatpush.bf16.msra.mxu0 %v3574
        %3649 = vmatpush.bf16.msra.mxu0 %v3571
        %3650 = vmatpush.bf16.msra.mxu0 %v3568
        %3651 = vmatpush.bf16.msra.mxu0 %v3565
        %3652 = vmatmul.bf16.gmra.mxu0 %v269
        %v3653 = vpop.f32.mrf.mxu0
        %v3654 = vadd.f32 %v3614, %v3653
        %v3655 = vpop.f32.mrf.mxu0
        %3656 = vdwg.mxu0
        %v3657 = vmax.f32 %v3628, 0.0
        %v3658 = vmax.f32 %v3641, 0.0
        %v3659 = vmax.f32 %v3654, 0.0
        %v3663 = vrot.slane %v689, 7
        %v3664 = vrot.slane %v690, 7
        %v3665 = vrot.slane %v691, 7
        %v3672 = vrot.slane %v901, 6
        %v3673 = vrot.slane %v902, 6
        %v3674 = vrot.slane %v903, 6
        %v3681 = vrot.slane %v1113, 5
        %v3682 = vrot.slane %v1114, 5
        %v3683 = vrot.slane %v1115, 5
        %v3690 = vrot.slane %v1325, 4
        %v3691 = vrot.slane %v1326, 4
        %v3692 = vrot.slane %v1327, 4
        %v3699 = vrot.slane %v1537, 3
        %v3700 = vrot.slane %v1538, 3
        %v3701 = vrot.slane %v1539, 3
        %v3708 = vrot.slane %v1749, 2
        %v3709 = vrot.slane %v1750, 2
        %v3710 = vrot.slane %v1751, 2
        %v3717 = vrot.slane %v1961, 1
        %v3718 = vrot.slane %v1962, 1
        %v3719 = vrot.slane %v1963, 1
        %v3726 = vrot.slane %v2385, 7
        %v3727 = vrot.slane %v2386, 7
        %v3728 = vrot.slane %v2387, 7
        %v3735 = vrot.slane %v2597, 6
        %v3736 = vrot.slane %v2598, 6
        %v3737 = vrot.slane %v2599, 6
        %v3744 = vrot.slane %v2809, 5
        %v3745 = vrot.slane %v2810, 5
        %v3746 = vrot.slane %v2811, 5
        %v3753 = vrot.slane %v3021, 4
        %v3754 = vrot.slane %v3022, 4
        %v3755 = vrot.slane %v3023, 4
        %v3762 = vrot.slane %v3233, 3
        %v3763 = vrot.slane %v3234, 3
        %v3764 = vrot.slane %v3235, 3
        %v3771 = vrot.slane %v3445, 2
        %v3772 = vrot.slane %v3446, 2
        %v3773 = vrot.slane %v3447, 2
        %v3780 = vrot.slane %v3657, 1
        %v3781 = vrot.slane %v3658, 1
        %v3782 = vrot.slane %v3659, 1
        %vm3786 = vcmask 1040384
        %v3787 = vsel %vm3786, %v477, %v3663
        %v3788 = vsel %vm3786, %v478, %v3664
        %v3789 = vsel %vm3786, %v479, %v3665
        %vm3790 = vcmask 1041408
        %v3791 = vsel %vm3790, %v3787, %v3672
        %v3792 = vsel %vm3790, %v3788, %v3673
        %v3793 = vsel %vm3790, %v3789, %v3674
        %vm3794 = vcmask 1042432
        %v3795 = vsel %vm3794, %v3791, %v3681
        %v3796 = vsel %vm3794, %v3792, %v3682
        %v3797 = vsel %vm3794, %v3793, %v3683
        %vm3798 = vcmask 1043456
        %v3799 = vsel %vm3798, %v3795, %v3690
        %v3800 = vsel %vm3798, %v3796, %v3691
        %v3801 = vsel %vm3798, %v3797, %v3692
        %vm3802 = vcmask 1044480
        %v3803 = vsel %vm3802, %v3799, %v3699
        %v3804 = vsel %vm3802, %v3800, %v3700
        %v3805 = vsel %vm3802, %v3801, %v3701
        %vm3806 = vcmask 1045504
        %v3807 = vsel %vm3806, %v3803, %v3708
        %v3808 = vsel %vm3806, %v3804, %v3709
        %v3809 = vsel %vm3806, %v3805, %v3710
        %vm3810 = vcmask 1046528
        %v3811 = vsel %vm3810, %v3807, %v3717
        %v3812 = vsel %vm3810, %v3808, %v3718
        %v3813 = vsel %vm3810, %v3809, %v3719
        %v3814 = vsel %vm3786, %v2173, %v3726
        %v3815 = vsel %vm3786, %v2174, %v3727
        %v3816 = vsel %vm3786, %v2175, %v3728
        %v3817 = vsel %vm3790, %v3814, %v3735
        %v3818 = vsel %vm3790, %v3815, %v3736
        %v3819 = vsel %vm3790, %v3816, %v3737
        %v3820 = vsel %vm3794, %v3817, %v3744
        %v3821 = vsel %vm3794, %v3818, %v3745
        %v3822 = vsel %vm3794, %v3819, %v3746
        %v3823 = vsel %vm3798, %v3820, %v3753
        %v3824 = vsel %vm3798, %v3821, %v3754
        %v3825 = vsel %vm3798, %v3822, %v3755
        %v3826 = vsel %vm3802, %v3823, %v3762
        %v3827 = vsel %vm3802, %v3824, %v3763
        %v3828 = vsel %vm3802, %v3825, %v3764
        %v3829 = vsel %vm3806, %v3826, %v3771
        %v3830 = vsel %vm3806, %v3827, %v3772
        %v3831 = vsel %vm3806, %v3828, %v3773
        %v3832 = vsel %vm3810, %v3829, %v3780
        %v3833 = vsel %vm3810, %v3830, %v3781
        %v3834 = vsel %vm3810, %v3831, %v3782
        %3841 = vrot.lane.b32.xlu0 %v3811, 127
        %v3842 = vpop.permute.xlu0 %3841
        %3843 = vrot.lane.b32.xlu0 %v3812, 127
        %v3844 = vpop.permute.xlu0 %3843
        %3845 = vrot.lane.b32.xlu0 %v3813, 127
        %v3846 = vpop.permute.xlu0 %3845
        %3847 = vrot.lane.b32.xlu0 %v3832, 127
        %v3848 = vpop.permute.xlu0 %3847
        %3849 = vrot.lane.b32.xlu0 %v3833, 127
        %v3850 = vpop.permute.xlu0 %3849
        %3851 = vrot.lane.b32.xlu0 %v3834, 127
        %v3852 = vpop.permute.xlu0 %3851
        %vm3853 = vcmask 1039360
        %v3854 = vsel %vm3853, %v3842, %v3844
        %v3855 = vsel %vm3853, %v3844, %v3846
        %v3856 = vsel %vm3853, %v3848, %v3850
        %v3857 = vsel %vm3853, %v3850, %v3852
        %3864 = vrot.lane.b32.xlu0 %v3811, 126
        %v3865 = vpop.permute.xlu0 %3864
        %3866 = vrot.lane.b32.xlu0 %v3812, 126
        %v3867 = vpop.permute.xlu0 %3866
        %3868 = vrot.lane.b32.xlu0 %v3813, 126
        %v3869 = vpop.permute.xlu0 %3868
        %3870 = vrot.lane.b32.xlu0 %v3832, 126
        %v3871 = vpop.permute.xlu0 %3870
        %3872 = vrot.lane.b32.xlu0 %v3833, 126
        %v3873 = vpop.permute.xlu0 %3872
        %3874 = vrot.lane.b32.xlu0 %v3834, 126
        %v3875 = vpop.permute.xlu0 %3874
        %vm3876 = vcmask 1031168
        %v3877 = vsel %vm3876, %v3865, %v3867
        %v3878 = vsel %vm3876, %v3867, %v3869
        %v3879 = vsel %vm3876, %v3871, %v3873
        %v3880 = vsel %vm3876, %v3873, %v3875
        %3887 = vrot.lane.b32.xlu0 %v3811, 110
        %v3888 = vpop.permute.xlu0 %3887
        %3889 = vrot.lane.b32.xlu0 %v3812, 110
        %v3890 = vpop.permute.xlu0 %3889
        %3891 = vrot.lane.b32.xlu0 %v3813, 110
        %v3892 = vpop.permute.xlu0 %3891
        %3893 = vrot.lane.b32.xlu0 %v3832, 110
        %v3894 = vpop.permute.xlu0 %3893
        %3895 = vrot.lane.b32.xlu0 %v3833, 110
        %v3896 = vpop.permute.xlu0 %3895
        %3897 = vrot.lane.b32.xlu0 %v3834, 110
        %v3898 = vpop.permute.xlu0 %3897
        %vm3899 = vcmask 900096
        %v3900 = vsel %vm3899, %v3888, %v3890
        %v3901 = vsel %vm3899, %v3890, %v3892
        %v3902 = vsel %vm3899, %v3894, %v3896
        %v3903 = vsel %vm3899, %v3896, %v3898
        %3910 = vrot.lane.b32.xlu0 %v3811, 109
        %v3911 = vpop.permute.xlu0 %3910
        %3912 = vrot.lane.b32.xlu0 %v3812, 109
        %v3913 = vpop.permute.xlu0 %3912
        %3914 = vrot.lane.b32.xlu0 %v3813, 109
        %v3915 = vpop.permute.xlu0 %3914
        %3916 = vrot.lane.b32.xlu0 %v3832, 109
        %v3917 = vpop.permute.xlu0 %3916
        %3918 = vrot.lane.b32.xlu0 %v3833, 109
        %v3919 = vpop.permute.xlu0 %3918
        %3920 = vrot.lane.b32.xlu0 %v3834, 109
        %v3921 = vpop.permute.xlu0 %3920
        %vm3922 = vcmask 891904
        %v3923 = vsel %vm3922, %v3911, %v3913
        %v3924 = vsel %vm3922, %v3913, %v3915
        %v3925 = vsel %vm3922, %v3917, %v3919
        %v3926 = vsel %vm3922, %v3919, %v3921
        %3933 = vrot.lane.b32.xlu0 %v3811, 108
        %v3934 = vpop.permute.xlu0 %3933
        %3935 = vrot.lane.b32.xlu0 %v3812, 108
        %v3936 = vpop.permute.xlu0 %3935
        %3937 = vrot.lane.b32.xlu0 %v3813, 108
        %v3938 = vpop.permute.xlu0 %3937
        %3939 = vrot.lane.b32.xlu0 %v3832, 108
        %v3940 = vpop.permute.xlu0 %3939
        %3941 = vrot.lane.b32.xlu0 %v3833, 108
        %v3942 = vpop.permute.xlu0 %3941
        %3943 = vrot.lane.b32.xlu0 %v3834, 108
        %v3944 = vpop.permute.xlu0 %3943
        %vm3945 = vcmask 883712
        %v3946 = vsel %vm3945, %v3934, %v3936
        %v3947 = vsel %vm3945, %v3936, %v3938
        %v3948 = vsel %vm3945, %v3940, %v3942
        %v3949 = vsel %vm3945, %v3942, %v3944
        %3956 = vrot.lane.b32.xlu0 %v3811, 92
        %v3957 = vpop.permute.xlu0 %3956
        %3958 = vrot.lane.b32.xlu0 %v3812, 92
        %v3959 = vpop.permute.xlu0 %3958
        %3960 = vrot.lane.b32.xlu0 %v3813, 92
        %v3961 = vpop.permute.xlu0 %3960
        %3962 = vrot.lane.b32.xlu0 %v3832, 92
        %v3963 = vpop.permute.xlu0 %3962
        %3964 = vrot.lane.b32.xlu0 %v3833, 92
        %v3965 = vpop.permute.xlu0 %3964
        %3966 = vrot.lane.b32.xlu0 %v3834, 92
        %v3967 = vpop.permute.xlu0 %3966
        %vm3968 = vcmask 752640
        %v3969 = vsel %vm3968, %v3957, %v3959
        %v3970 = vsel %vm3968, %v3959, %v3961
        %v3971 = vsel %vm3968, %v3963, %v3965
        %v3972 = vsel %vm3968, %v3965, %v3967
        %3979 = vrot.lane.b32.xlu0 %v3811, 91
        %v3980 = vpop.permute.xlu0 %3979
        %3981 = vrot.lane.b32.xlu0 %v3812, 91
        %v3982 = vpop.permute.xlu0 %3981
        %3983 = vrot.lane.b32.xlu0 %v3813, 91
        %v3984 = vpop.permute.xlu0 %3983
        %3985 = vrot.lane.b32.xlu0 %v3832, 91
        %v3986 = vpop.permute.xlu0 %3985
        %3987 = vrot.lane.b32.xlu0 %v3833, 91
        %v3988 = vpop.permute.xlu0 %3987
        %3989 = vrot.lane.b32.xlu0 %v3834, 91
        %v3990 = vpop.permute.xlu0 %3989
        %vm3991 = vcmask 744448
        %v3992 = vsel %vm3991, %v3980, %v3982
        %v3993 = vsel %vm3991, %v3982, %v3984
        %v3994 = vsel %vm3991, %v3986, %v3988
        %v3995 = vsel %vm3991, %v3988, %v3990
        %4002 = vrot.lane.b32.xlu0 %v3811, 90
        %v4003 = vpop.permute.xlu0 %4002
        %4004 = vrot.lane.b32.xlu0 %v3812, 90
        %v4005 = vpop.permute.xlu0 %4004
        %4006 = vrot.lane.b32.xlu0 %v3813, 90
        %v4007 = vpop.permute.xlu0 %4006
        %4008 = vrot.lane.b32.xlu0 %v3832, 90
        %v4009 = vpop.permute.xlu0 %4008
        %4010 = vrot.lane.b32.xlu0 %v3833, 90
        %v4011 = vpop.permute.xlu0 %4010
        %4012 = vrot.lane.b32.xlu0 %v3834, 90
        %v4013 = vpop.permute.xlu0 %4012
        %vm4014 = vcmask 736256
        %v4015 = vsel %vm4014, %v4003, %v4005
        %v4016 = vsel %vm4014, %v4005, %v4007
        %v4017 = vsel %vm4014, %v4009, %v4011
        %v4018 = vsel %vm4014, %v4011, %v4013
        %v4025 = vpack.c.bf16 %v3832, %v3811
        %v4026 = vpack.c.bf16 %v3833, %v3812
        %v4027 = vpack.c.bf16 %v3834, %v3813
        %v4028 = vpack.c.bf16 %v3856, %v3854
        %v4029 = vpack.c.bf16 %v3857, %v3855
        %v4030 = vpack.c.bf16 %v3852, %v3846
        %v4031 = vpack.c.bf16 %v3879, %v3877
        %v4032 = vpack.c.bf16 %v3880, %v3878
        %v4033 = vpack.c.bf16 %v3875, %v3869
        %v4034 = vpack.c.bf16 %v3902, %v3900
        %v4035 = vpack.c.bf16 %v3903, %v3901
        %v4036 = vpack.c.bf16 %v3898, %v3892
        %v4037 = vpack.c.bf16 %v3925, %v3923
        %v4038 = vpack.c.bf16 %v3926, %v3924
        %v4039 = vpack.c.bf16 %v3921, %v3915
        %v4040 = vpack.c.bf16 %v3948, %v3946
        %v4041 = vpack.c.bf16 %v3949, %v3947
        %v4042 = vpack.c.bf16 %v3944, %v3938
        %v4043 = vpack.c.bf16 %v3971, %v3969
        %v4044 = vpack.c.bf16 %v3972, %v3970
        %v4045 = vpack.c.bf16 %v3967, %v3961
        %v4046 = vpack.c.bf16 %v3994, %v3992
        %v4047 = vpack.c.bf16 %v3995, %v3993
        %v4048 = vpack.c.bf16 %v3990, %v3984
        %v4049 = vpack.c.bf16 %v4017, %v4015
        %v4050 = vpack.c.bf16 %v4018, %v4016
        %v4051 = vpack.c.bf16 %v4013, %v4007
        %v4052 = vld [vmem:[#allocation6] sm:$0xff]
        %v4053 = vld [vmem:[%s4] sm:$0xff]
        %4055 = vset.pattern.permute.xlu0 0
        %4056 = vperm.xlu0 %4055, %v4053
        %v4057 = vpop.permute.xlu0 %4056
        %v4060 = vunpack.c.l.b16 %v4052
        %v4061 = vunpack.c.h.b16 %v4052
        %v4062 = vpack.c.b16 %v4060, %v4060
        %v4063 = vpack.c.b16 %v4061, %v4061
        %vm4065 = vcmask 130048
        %v4067 = vsel %vm4065, %v4063, 0
        %4069 = vmatpush.bf16.msra.mxu0 %v4046
        %4070 = vmatpush.bf16.msra.mxu0 %v4043
        %4071 = vmatpush.bf16.msra.mxu0 %v4040
        %4072 = vmatpush.bf16.msra.mxu0 %v4037
        %4073 = vmatpush.bf16.msra.mxu0 %v4034
        %4074 = vmatpush.bf16.msra.mxu0 %v4031
        %4075 = vmatpush.bf16.msra.mxu0 %v4028
        %4076 = vmatpush.bf16.msra.mxu0 %v4025
        %4077 = vmatmul.bf16.gmra.mxu0 %v4062
        %v4078 = vpop.f32.mrf.mxu0
        %v4079 = vadd.f32 %v4057, %v4078
        %v4080 = vpop.f32.mrf.mxu0
        %4081 = vdwg.mxu0
        %4082 = vmatpush.bf16.msra.mxu0 0
        %4083 = vmatpush.bf16.msra.mxu0 0
        %4084 = vmatpush.bf16.msra.mxu0 0
        %4085 = vmatpush.bf16.msra.mxu0 0
        %4086 = vmatpush.bf16.msra.mxu0 0
        %4087 = vmatpush.bf16.msra.mxu0 0
        %4088 = vmatpush.bf16.msra.mxu0 0
        %4089 = vmatpush.bf16.msra.mxu0 %v4049
        %4090 = vmatmul.bf16.gmra.mxu0 %v4067
        %v4091 = vpop.f32.mrf.mxu0
        %v4092 = vadd.f32 %v4079, %v4091
        %v4093 = vpop.f32.mrf.mxu0
        %4094 = vdwg.mxu0
        %4095 = vmatpush.bf16.msra.mxu0 %v4047
        %4096 = vmatpush.bf16.msra.mxu0 %v4044
        %4097 = vmatpush.bf16.msra.mxu0 %v4041
        %4098 = vmatpush.bf16.msra.mxu0 %v4038
        %4099 = vmatpush.bf16.msra.mxu0 %v4035
        %4100 = vmatpush.bf16.msra.mxu0 %v4032
        %4101 = vmatpush.bf16.msra.mxu0 %v4029
        %4102 = vmatpush.bf16.msra.mxu0 %v4026
        %4103 = vmatmul.bf16.gmra.mxu0 %v4062
        %v4104 = vpop.f32.mrf.mxu0
        %v4105 = vadd.f32 %v4057, %v4104
        %v4106 = vpop.f32.mrf.mxu0
        %4107 = vdwg.mxu0
        %4108 = vmatpush.bf16.msra.mxu0 0
        %4109 = vmatpush.bf16.msra.mxu0 0
        %4110 = vmatpush.bf16.msra.mxu0 0
        %4111 = vmatpush.bf16.msra.mxu0 0
        %4112 = vmatpush.bf16.msra.mxu0 0
        %4113 = vmatpush.bf16.msra.mxu0 0
        %4114 = vmatpush.bf16.msra.mxu0 0
        %4115 = vmatpush.bf16.msra.mxu0 %v4050
        %4116 = vmatmul.bf16.gmra.mxu0 %v4067
        %v4117 = vpop.f32.mrf.mxu0
        %v4118 = vadd.f32 %v4105, %v4117
        %v4119 = vpop.f32.mrf.mxu0
        %4120 = vdwg.mxu0
        %4121 = vmatpush.bf16.msra.mxu0 %v4048
        %4122 = vmatpush.bf16.msra.mxu0 %v4045
        %4123 = vmatpush.bf16.msra.mxu0 %v4042
        %4124 = vmatpush.bf16.msra.mxu0 %v4039
        %4125 = vmatpush.bf16.msra.mxu0 %v4036
        %4126 = vmatpush.bf16.msra.mxu0 %v4033
        %4127 = vmatpush.bf16.msra.mxu0 %v4030
        %4128 = vmatpush.bf16.msra.mxu0 %v4027
        %4129 = vmatmul.bf16.gmra.mxu0 %v4062
        %v4130 = vpop.f32.mrf.mxu0
        %v4131 = vadd.f32 %v4057, %v4130
        %v4132 = vpop.f32.mrf.mxu0
        %4133 = vdwg.mxu0
        %4134 = vmatpush.bf16.msra.mxu0 0
        %4135 = vmatpush.bf16.msra.mxu0 0
        %4136 = vmatpush.bf16.msra.mxu0 0
        %4137 = vmatpush.bf16.msra.mxu0 0
        %4138 = vmatpush.bf16.msra.mxu0 0
        %4139 = vmatpush.bf16.msra.mxu0 0
        %4140 = vmatpush.bf16.msra.mxu0 0
        %4141 = vmatpush.bf16.msra.mxu0 %v4051
        %4142 = vmatmul.bf16.gmra.mxu0 %v4067
        %v4143 = vpop.f32.mrf.mxu0
        %v4144 = vadd.f32 %v4131, %v4143
        %v4145 = vpop.f32.mrf.mxu0
        %4146 = vdwg.mxu0
        %4147 = vst [vmem:[%s266] sm:$0xff] %v4092
        %4148 = vst [vmem:[%s266 + $0x8] sm:$0xff] %v4118
        %vm4149 = vcmask 261120
        %4150 = vst.msk [vmem:[%s266 + $0x10] sm:$0xff] %vm4149, %v4144
        %p4151 = scmp.lt.s32.totalorder %s18, 1
        %s4152 = scalar_select %p4151, %s18, 1
        %s4153 = smul.addr %s4152, 3
        %s4154 = smul.addr %s4153, 8
        %s4155 = scalar_lea.vmem %s5, %s4154
        // Predicated region
        $region53: #{vae_forward.3} parent=39 // pred_check
          %p4156 = pneg %p146
        $region54: #{vae_forward.3} parent=39 // pred_check_branch
          %4158 = sbr.rel (%p4156) target = $region56
        $region55: #{vae_forward.3} parent=39 // pred_region
          _
        $region56: #{vae_forward.3} parent=39 // pred_fallthru
          _
      $region40: #{vae_forward.3} parent=5 // pred_fallthru
        _
      %p4159 = scmp.le.s32.totalorder 2, %s13
      // Predicated region
      $region57: #{vae_forward.3} parent=5 // pred_check
        %p4160 = pneg %p4159
      $region58: #{vae_forward.3} parent=5 // pred_check_branch
        %4162 = sbr.rel (%p4160) target = $region60
      $region59: #{vae_forward.3} parent=5 // pred_region
        %s4163 = ssub.s32 %s13, 2
        // Predicated region
        $region61: #{vae_forward.3} parent=59 // pred_check
          %p4164 = pneg %p152
        $region62: #{vae_forward.3} parent=59 // pred_check_branch
          %4166 = sbr.rel (%p4164) target = $region64
        $region63: #{vae_forward.3} parent=59 // pred_region
          %p4167 = scmp.lt.s32.totalorder %s19, 1
          %s4168 = scalar_select %p4167, %s19, 1
          %s4169 = smul.addr %s4168, 3
          %s4170 = smul.addr %s4169, 8
          %s4171 = scalar_lea.vmem %s5, %s4170
        $region64: #{vae_forward.3} parent=59 // pred_fallthru
          _
      $region60: #{vae_forward.3} parent=5 // pred_fallthru
        _
    $region6: #{vae_forward.3} parent=1 // loop_footer
      %s17 = sadd.s32 1, %s13
    $region7: #{vae_forward.3} parent=1 // loop_footer_branch
      %12 = sbr.rel target = $region3
    $region8: #{vae_forward.3} parent=1 // loop_exit
      _
    %4172 = vsyncpa [#allocation3], 1
    %s4173 = scalar_lea.sflag [#allocation3], 1
    %4174 = vsyncpa %s4173, 1
    %4175 = vsyncpa [#allocation5], 1

// kernel: vae_forward.2
$region0: #{vae_forward.2}
  #allocation0 [shape = 'u32[]', space=smem, size = 0x4, offset = 0x4, fixed_abs, tag = 'smem constant byte address 0x4 - core index']
  #allocation1 [shape = 'u32[72,128]{1,0:T(1,128)}', space=vmem, size = 0x9000, scoped, tag = 'internal scratch']
  %s0 = inlined_call_operand.vmem [shape: bf16[2,8,384], index: 0, kind: input, shape index: {}]
  %s1 = inlined_call_operand.hbm [shape: bf16[16,72], index: 1, kind: input, shape index: {}]
  %s2 = inlined_call_operand.vmem [shape: f32[16,1], index: 2, kind: input, shape index: {}]
  %s3 = inlined_call_operand.hbm [shape: bf16[16,288,256], index: 3, kind: input, shape index: {}]
  %s4 = inlined_call_operand.hbm [shape: f32[1,256], index: 4, kind: input, shape index: {}]
  %s5 = inlined_call_operand.vmem [shape: f32[2,1,128], index: 5, kind: input, shape index: {}]
  %s6 = inlined_call_operand.vmem [shape: f32[2,1,256], index: 6, kind: output, shape index: {0}]
  %s7 = inlined_call_operand.vmem [shape: f32[2,1,128], index: 7, kind: output, shape index: {1}]
  %8 = xla_tuple %s6, %s7
  %s9 = sld [smem:[#allocation0]]
  $region77: #{vae_forward.2} parent=0
    _
  %s11 = ssub.s32 1, %s9
  %s12 = scalar_select 0, %s11, %s9
  $region1: #{vae_forward.2} parent=0
    #allocation2 [shape = 'u8[4096]{0}', space=vmem, size = 0x1000, scoped, tag = 'input window, operand 1, single buffered']
    #allocation3 [shape = 's32[2]{0}', space=sflag, size = 0x8, scoped, tag = 'scoped memory for vae_forward.2']
    #allocation4 [shape = 'u8[2359296]{0}', space=vmem, size = 0x240000, scoped, tag = 'input window, operand 3, single buffered']
    #allocation5 [shape = 's32[1]{0}', space=sflag, size = 0x4, scoped, tag = 'scoped memory for vae_forward.2']
    #allocation6 [shape = 'u8[1024]{0}', space=vmem, size = 0x400, scoped, tag = 'input window, operand 4, single buffered']
    %13 = vsyncpa [#allocation3], 0
    %14 = vsyncpa [#allocation5], 0
    loop: start=0, step=1, limit=4
    $region2: #{vae_forward.2} parent=1 // loop_pre_header
      _
    $region3: #{vae_forward.2} parent=1 // loop_header
      %s16 = sphi 0, %s20
      %p17 = scmp.ge.s32.totalorder %s16, 4
      %s26 = sphi 0, %s28
      %s29 = sphi 0, %s26
      %s30 = sphi 0, %s29
      %s46 = sphi 0, %s30
      %s50 = sphi 0, %s50
      %s52 = sphi 0, %s50
      %s53 = sphi 0, %s52
      %s67 = sphi 0, %s53
      %s71 = sphi 0, %s71
      %s73 = sphi 0, %s71
      %s74 = sphi 0, %s73
      %s88 = sphi 0, %s74
      %s92 = sphi 0, %s92
      %s94 = sphi 0, %s92
      %s95 = sphi 0, %s94
      %s109 = sphi 0, %s95
      %s113 = sphi 0, %s113
      %s115 = sphi 0, %s113
      %s116 = sphi 0, %s115
      %s130 = sphi 0, %s116
      %s136 = sphi 0, %s138
      %s139 = sphi 0, %s136
      %s140 = sphi 0, %s139
      %s156 = sphi 0, %s140
      %s162 = sphi 0, %s164
      %s165 = sphi 0, %s162
      %s166 = sphi 0, %s165
      %s182 = sphi 0, %s166
      %s188 = sphi 0, %s190
      %s191 = sphi 0, %s188
      %s192 = sphi 0, %s191
      %s208 = sphi 0, %s192
    $region4: #{vae_forward.2} parent=1 // loop_header_branch
      %19 = sbr.rel (%p17) target = $region8
    $region5: #{vae_forward.2} parent=1 // loop_body
      %s21 = ssub.s32 %s16, 1
      %s22 = ssub.s32 %s16, 2
      %s23 = sadd.s32 %s16, 1
      %s24 = ssub.s32 %s16, %s23
      %p25 = scmp.eq.s32.totalorder %s24, 0
      %s27 = sadd.s32 %s26, 1
      %s28 = scalar_select %p25, %s26, %s27
      %p31 = pneg %p25
      %p32 = scmp.eq.s32.totalorder %s16, 1
      %p33 = por %p31, %p32
      %p34 = scmp.ne.s32.totalorder %s26, %s29
      %p35 = scmp.eq.s32.totalorder %s16, 0
      %p36 = por %p34, %p35
      %p37 = scmp.ne.s32.totalorder %s26, %s29
      %p38 = scmp.eq.s32.totalorder %s21, 1
      %p39 = por %p37, %p38
      %p40 = scmp.ne.s32.totalorder %s29, %s30
      %p41 = scmp.eq.s32.totalorder %s21, 0
      %p42 = por %p40, %p41
      %p43 = scmp.ne.s32.totalorder %s29, %s30
      %p44 = scmp.eq.s32.totalorder %s22, 1
      %p45 = por %p43, %p44
      %p47 = scmp.ne.s32.totalorder %s30, %s46
      %p48 = scmp.eq.s32.totalorder %s22, 0
      %p49 = por %p47, %p48
      %s51 = sadd.s32 %s50, 1
      %p54 = scmp.eq.s32.totalorder %s16, 1
      %p55 = scmp.ne.s32.totalorder %s50, %s52
      %p56 = scmp.eq.s32.totalorder %s16, 0
      %p57 = por %p55, %p56
      %p58 = scmp.ne.s32.totalorder %s50, %s52
      %p59 = scmp.eq.s32.totalorder %s21, 1
      %p60 = por %p58, %p59
      %p61 = scmp.ne.s32.totalorder %s52, %s53
      %p62 = scmp.eq.s32.totalorder %s21, 0
      %p63 = por %p61, %p62
      %p64 = scmp.ne.s32.totalorder %s52, %s53
      %p65 = scmp.eq.s32.totalorder %s22, 1
      %p66 = por %p64, %p65
      %p68 = scmp.ne.s32.totalorder %s53, %s67
      %p69 = scmp.eq.s32.totalorder %s22, 0
      %p70 = por %p68, %p69
      %s72 = sadd.s32 %s71, 1
      %p75 = scmp.eq.s32.totalorder %s16, 1
      %p76 = scmp.ne.s32.totalorder %s71, %s73
      %p77 = scmp.eq.s32.totalorder %s16, 0
      %p78 = por %p76, %p77
      %p79 = scmp.ne.s32.totalorder %s71, %s73
      %p80 = scmp.eq.s32.totalorder %s21, 1
      %p81 = por %p79, %p80
      %p82 = scmp.ne.s32.totalorder %s73, %s74
      %p83 = scmp.eq.s32.totalorder %s21, 0
      %p84 = por %p82, %p83
      %p85 = scmp.ne.s32.totalorder %s73, %s74
      %p86 = scmp.eq.s32.totalorder %s22, 1
      %p87 = por %p85, %p86
      %p89 = scmp.ne.s32.totalorder %s74, %s88
      %p90 = scmp.eq.s32.totalorder %s22, 0
      %p91 = por %p89, %p90
      %s93 = sadd.s32 %s92, 1
      %p96 = scmp.eq.s32.totalorder %s16, 1
      %p97 = scmp.ne.s32.totalorder %s92, %s94
      %p98 = scmp.eq.s32.totalorder %s16, 0
      %p99 = por %p97, %p98
      %p100 = scmp.ne.s32.totalorder %s92, %s94
      %p101 = scmp.eq.s32.totalorder %s21, 1
      %p102 = por %p100, %p101
      %p103 = scmp.ne.s32.totalorder %s94, %s95
      %p104 = scmp.eq.s32.totalorder %s21, 0
      %p105 = por %p103, %p104
      %p106 = scmp.ne.s32.totalorder %s94, %s95
      %p107 = scmp.eq.s32.totalorder %s22, 1
      %p108 = por %p106, %p107
      %p110 = scmp.ne.s32.totalorder %s95, %s109
      %p111 = scmp.eq.s32.totalorder %s22, 0
      %p112 = por %p110, %p111
      %s114 = sadd.s32 %s113, 1
      %p117 = scmp.eq.s32.totalorder %s16, 1
      %p118 = scmp.ne.s32.totalorder %s113, %s115
      %p119 = scmp.eq.s32.totalorder %s16, 0
      %p120 = por %p118, %p119
      %p121 = scmp.ne.s32.totalorder %s113, %s115
      %p122 = scmp.eq.s32.totalorder %s21, 1
      %p123 = por %p121, %p122
      %p124 = scmp.ne.s32.totalorder %s115, %s116
      %p125 = scmp.eq.s32.totalorder %s21, 0
      %p126 = por %p124, %p125
      %p127 = scmp.ne.s32.totalorder %s115, %s116
      %p128 = scmp.eq.s32.totalorder %s22, 1
      %p129 = por %p127, %p128
      %p131 = scmp.ne.s32.totalorder %s116, %s130
      %p132 = scmp.eq.s32.totalorder %s22, 0
      %p133 = por %p131, %p132
      %s134 = ssub.s32 %s16, %s23
      %p135 = scmp.eq.s32.totalorder %s134, 0
      %s137 = sadd.s32 %s136, 1
      %s138 = scalar_select %p135, %s136, %s137
      %p141 = pneg %p135
      %p142 = scmp.eq.s32.totalorder %s16, 1
      %p143 = por %p141, %p142
      %p144 = scmp.ne.s32.totalorder %s136, %s139
      %p145 = scmp.eq.s32.totalorder %s16, 0
      %p146 = por %p144, %p145
      %p147 = scmp.ne.s32.totalorder %s136, %s139
      %p148 = scmp.eq.s32.totalorder %s21, 1
      %p149 = por %p147, %p148
      %p150 = scmp.ne.s32.totalorder %s139, %s140
      %p151 = scmp.eq.s32.totalorder %s21, 0
      %p152 = por %p150, %p151
      %p153 = scmp.ne.s32.totalorder %s139, %s140
      %p154 = scmp.eq.s32.totalorder %s22, 1
      %p155 = por %p153, %p154
      %p157 = scmp.ne.s32.totalorder %s140, %s156
      %p158 = scmp.eq.s32.totalorder %s22, 0
      %p159 = por %p157, %p158
      %s160 = ssub.s32 %s16, %s23
      %p161 = scmp.eq.s32.totalorder %s160, 0
      %s163 = sadd.s32 %s162, 1
      %s164 = scalar_select %p161, %s162, %s163
      %p167 = pneg %p161
      %p168 = scmp.eq.s32.totalorder %s16, 1
      %p169 = por %p167, %p168
      %p170 = scmp.ne.s32.totalorder %s162, %s165
      %p171 = scmp.eq.s32.totalorder %s16, 0
      %p172 = por %p170, %p171
      %p173 = scmp.ne.s32.totalorder %s162, %s165
      %p174 = scmp.eq.s32.totalorder %s21, 1
      %p175 = por %p173, %p174
      %p176 = scmp.ne.s32.totalorder %s165, %s166
      %p177 = scmp.eq.s32.totalorder %s21, 0
      %p178 = por %p176, %p177
      %p179 = scmp.ne.s32.totalorder %s165, %s166
      %p180 = scmp.eq.s32.totalorder %s22, 1
      %p181 = por %p179, %p180
      %p183 = scmp.ne.s32.totalorder %s166, %s182
      %p184 = scmp.eq.s32.totalorder %s22, 0
      %p185 = por %p183, %p184
      %s186 = ssub.s32 %s16, %s23
      %p187 = scmp.eq.s32.totalorder %s186, 0
      %s189 = sadd.s32 %s188, 1
      %s190 = scalar_select %p187, %s188, %s189
      %p193 = pneg %p187
      %p194 = scmp.eq.s32.totalorder %s16, 1
      %p195 = por %p193, %p194
      %p196 = scmp.ne.s32.totalorder %s188, %s191
      %p197 = scmp.eq.s32.totalorder %s16, 0
      %p198 = por %p196, %p197
      %p199 = scmp.ne.s32.totalorder %s188, %s191
      %p200 = scmp.eq.s32.totalorder %s21, 1
      %p201 = por %p199, %p200
      %p202 = scmp.ne.s32.totalorder %s191, %s192
      %p203 = scmp.eq.s32.totalorder %s21, 0
      %p204 = por %p202, %p203
      %p205 = scmp.ne.s32.totalorder %s191, %s192
      %p206 = scmp.eq.s32.totalorder %s22, 1
      %p207 = por %p205, %p206
      %p209 = scmp.ne.s32.totalorder %s192, %s208
      %p210 = scmp.eq.s32.totalorder %s22, 0
      %p211 = por %p209, %p210
      %p212 = scmp.le.s32.totalorder 1, %s16
      %p213 = scmp.lt.s32.totalorder %s16, 3
      %p214 = pnand %p212, %p213
      %p215 = pneg %p214
      // Predicated region
      $region9: #{vae_forward.2} parent=5 // pred_check
        _
      $region10: #{vae_forward.2} parent=5 // pred_check_branch
        %217 = sbr.rel (%p214) target = $region12
      $region11: #{vae_forward.2} parent=5 // pred_region
        %s218 = ssub.s32 %s16, 1
        // Predicated region
        $region13: #{vae_forward.2} parent=11 // pred_check
          %p219 = pneg %p63
        $region14: #{vae_forward.2} parent=11 // pred_check_branch
          %221 = sbr.rel (%p219) target = $region16
        $region15: #{vae_forward.2} parent=11 // pred_region
          %223 = vsyncadd [#allocation3], 0
          %s224 = sshll.u32 %s1, 4
          %s225 = int_to_ptr.hbm [resolvable:$true] %s224
          %s226 = sshll.u32 [#allocation2], 4
          %s227 = int_to_ptr.vmem [resolvable:$true] %s226
          %232 = dma.hbm_to_vmem [thread:$0]  %s225, 128, %s227, [#allocation3], 64, 64, 4
        $region16: #{vae_forward.2} parent=11 // pred_fallthru
          _
        // Predicated region
        $region17: #{vae_forward.2} parent=11 // pred_check
          %p233 = pneg %p84
        $region18: #{vae_forward.2} parent=11 // pred_check_branch
          %235 = sbr.rel (%p233) target = $region20
        $region19: #{vae_forward.2} parent=11 // pred_region
          _
        $region20: #{vae_forward.2} parent=11 // pred_fallthru
          _
        // Predicated region
        $region21: #{vae_forward.2} parent=11 // pred_check
          %p236 = pneg %p105
        $region22: #{vae_forward.2} parent=11 // pred_check_branch
          %238 = sbr.rel (%p236) target = $region24
        $region23: #{vae_forward.2} parent=11 // pred_region
          %240 = vsyncadd [#allocation5], 0
          %s241 = sshll.u32 %s3, 4
          %s242 = int_to_ptr.hbm [resolvable:$true] %s241
          %s243 = sshll.u32 [#allocation4], 4
          %s244 = int_to_ptr.vmem [resolvable:$true] %s243
          %249 = dma.hbm_to_vmem [thread:$0]  %s242, 73728, %s244, [#allocation5], 128, 128, 8
        $region24: #{vae_forward.2} parent=11 // pred_fallthru
          _
        // Predicated region
        $region25: #{vae_forward.2} parent=11 // pred_check
          %p250 = pneg %p126
        $region26: #{vae_forward.2} parent=11 // pred_check_branch
          %252 = sbr.rel (%p250) target = $region28
        $region27: #{vae_forward.2} parent=11 // pred_region
          %254 = vsyncadd [#allocation5], 0
          %s256 = sshll.u32 %s4, 4
          %s257 = int_to_ptr.hbm [resolvable:$true] %s256
          %s258 = sshll.u32 [#allocation6], 4
          %s259 = int_to_ptr.vmem [resolvable:$true] %s258
          %261 = dma.hbm_to_vmem [thread:$0]  %s257, 32, %s259, [#allocation5]
        $region28: #{vae_forward.2} parent=11 // pred_fallthru
          _
      $region12: #{vae_forward.2} parent=5 // pred_fallthru
        _
      %p262 = scmp.lt.s32.totalorder %s16, 2
      // Predicated region
      $region29: #{vae_forward.2} parent=5 // pred_check
        %p263 = pneg %p262
      $region30: #{vae_forward.2} parent=5 // pred_check_branch
        %265 = sbr.rel (%p263) target = $region32
      $region31: #{vae_forward.2} parent=5 // pred_region
        // Predicated region
        $region33: #{vae_forward.2} parent=31 // pred_check
          %p266 = pneg %p36
        $region34: #{vae_forward.2} parent=31 // pred_check_branch
          %268 = sbr.rel (%p266) target = $region36
        $region35: #{vae_forward.2} parent=31 // pred_region
          %p269 = scmp.lt.s32.totalorder %s16, 1
          %s270 = scalar_select %p269, %s16, 1
          %s271 = smul.addr %s270, 3
          %s272 = smul.addr %s271, 4
          %s273 = scalar_lea.vmem %s0, %s272
        $region36: #{vae_forward.2} parent=31 // pred_fallthru
          _
        // Predicated region
        $region37: #{vae_forward.2} parent=31 // pred_check
          %p274 = pneg %p146
        $region38: #{vae_forward.2} parent=31 // pred_check_branch
          %276 = sbr.rel (%p274) target = $region40
        $region39: #{vae_forward.2} parent=31 // pred_region
          %p277 = scmp.lt.s32.totalorder %s16, 1
          %s278 = scalar_select %p277, %s16, 1
          %s279 = scalar_lea.vmem %s5, %s278
        $region40: #{vae_forward.2} parent=31 // pred_fallthru
          _
      $region32: #{vae_forward.2} parent=5 // pred_fallthru
        _
      %p280 = scmp.le.s32.totalorder 1, %s16
      %p281 = scmp.lt.s32.totalorder %s16, 3
      %p282 = pnand %p280, %p281
      %p283 = pneg %p282
      // Predicated region
      $region41: #{vae_forward.2} parent=5 // pred_check
        _
      $region42: #{vae_forward.2} parent=5 // pred_check_branch
        %285 = sbr.rel (%p282) target = $region44
      $region43: #{vae_forward.2} parent=5 // pred_region
        %s286 = ssub.s32 %s16, 1
        // Predicated region
        $region45: #{vae_forward.2} parent=43 // pred_check
          %p287 = pneg %p63
        $region46: #{vae_forward.2} parent=43 // pred_check_branch
          %289 = sbr.rel (%p287) target = $region48
        $region47: #{vae_forward.2} parent=43 // pred_region
          %291 = dma.done [#allocation3], 128
        $region48: #{vae_forward.2} parent=43 // pred_fallthru
          _
        // Predicated region
        $region49: #{vae_forward.2} parent=43 // pred_check
          %p292 = pneg %p105
        $region50: #{vae_forward.2} parent=43 // pred_check_branch
          %294 = sbr.rel (%p292) target = $region52
        $region51: #{vae_forward.2} parent=43 // pred_region
          %296 = dma.done [#allocation5], 73728
        $region52: #{vae_forward.2} parent=43 // pred_fallthru
          _
        // Predicated region
        $region53: #{vae_forward.2} parent=43 // pred_check
          %p297 = pneg %p126
        $region54: #{vae_forward.2} parent=43 // pred_check_branch
          %299 = sbr.rel (%p297) target = $region56
        $region55: #{vae_forward.2} parent=43 // pred_region
          %301 = dma.done [#allocation5], 32
        $region56: #{vae_forward.2} parent=43 // pred_fallthru
          _
        %p302 = scmp.lt.s32.totalorder %s21, 1
        %s303 = scalar_select %p302, %s21, 1
        %s304 = smul.addr %s303, 3
        %s305 = smul.addr %s304, 4
        %s306 = scalar_lea.vmem %s0, %s305
        %p307 = pneg %p42
        %p308 = pneg %p39
        %p309 = pneg %p63
        %p310 = pneg %p60
        %p311 = pneg %p84
        %p312 = pneg %p81
        %p313 = pneg %p105
        %p314 = pneg %p102
        %p315 = pneg %p126
        %p316 = pneg %p123
        %p317 = scmp.lt.s32.totalorder %s21, 1
        %s318 = scalar_select %p317, %s21, 1
        %s319 = scalar_lea.vmem %s5, %s318
        %p320 = pneg %p152
        %p321 = pneg %p149
        %p322 = pneg %p178
        %p323 = pneg %p175
        %p324 = scmp.lt.s32.totalorder %s21, 1
        %s325 = scalar_select %p324, %s21, 1
        %s326 = smul.addr %s325, 2
        %s327 = scalar_lea.vmem %s6, %s326
        %p328 = pneg %p204
        %p329 = pneg %p201
        %p330 = scmp.lt.s32.totalorder %s21, 1
        %s331 = scalar_select %p330, %s21, 1
        %s332 = scalar_lea.vmem %s7, %s331
        %p333 = scmp.lt.s32.totalorder %s21, 1
        %s334 = scalar_select %p333, %s21, 1
        %s335 = smul.addr %s334, 3
        %s336 = smul.addr %s335, 4
        %s337 = scalar_lea.vmem %s0, %s336
        %p338 = scmp.lt.s32.totalorder %s21, 1
        %s339 = scalar_select %p338, %s21, 1
        %s340 = scalar_lea.vmem %s5, %s339
        %p341 = scmp.lt.s32.totalorder %s21, 1
        %s342 = scalar_select %p341, %s21, 1
        %s343 = smul.addr %s342, 2
        %s344 = scalar_lea.vmem %s6, %s343
        %p345 = scmp.lt.s32.totalorder %s21, 1
        %s346 = scalar_select %p345, %s21, 1
        %s347 = scalar_lea.vmem %s7, %s346
        %v349 = vld [vmem:[%s337] sm:$0xff]
        %v350 = vld [vmem:[%s337 + $0x8] sm:$0xf]
        %v351 = vunpack.c.l.bf16 %v349
        %v352 = vunpack.c.h.bf16 %v349
        %v353 = vunpack.c.l.bf16 %v350
        %357 = vrot.lane.b32.xlu0 %v351, 127
        %v358 = vpop.permute.xlu0 %357
        %359 = vrot.lane.b32.xlu0 %v352, 127
        %v360 = vpop.permute.xlu0 %359
        %361 = vrot.lane.b32.xlu0 %v353, 127
        %v362 = vpop.permute.xlu0 %361
        %vm363 = vcmask 1039360
        %v364 = vsel %vm363, %v358, %v360
        %v365 = vsel %vm363, %v360, %v362
        %369 = vrot.lane.b32.xlu0 %v351, 126
        %v370 = vpop.permute.xlu0 %369
        %371 = vrot.lane.b32.xlu0 %v352, 126
        %v372 = vpop.permute.xlu0 %371
        %373 = vrot.lane.b32.xlu0 %v353, 126
        %v374 = vpop.permute.xlu0 %373
        %vm375 = vcmask 1031168
        %v376 = vsel %vm375, %v370, %v372
        %v377 = vsel %vm375, %v372, %v374
        %381 = vrot.lane.b32.xlu0 %v351, 110
        %v382 = vpop.permute.xlu0 %381
        %383 = vrot.lane.b32.xlu0 %v352, 110
        %v384 = vpop.permute.xlu0 %383
        %385 = vrot.lane.b32.xlu0 %v353, 110
        %v386 = vpop.permute.xlu0 %385
        %vm387 = vcmask 900096
        %v388 = vsel %vm387, %v382, %v384
        %v389 = vsel %vm387, %v384, %v386
        %393 = vrot.lane.b32.xlu0 %v351, 109
        %v394 = vpop.permute.xlu0 %393
        %395 = vrot.lane.b32.xlu0 %v352, 109
        %v396 = vpop.permute.xlu0 %395
        %397 = vrot.lane.b32.xlu0 %v353, 109
        %v398 = vpop.permute.xlu0 %397
        %vm399 = vcmask 891904
        %v400 = vsel %vm399, %v394, %v396
        %v401 = vsel %vm399, %v396, %v398
        %405 = vrot.lane.b32.xlu0 %v351, 108
        %v406 = vpop.permute.xlu0 %405
        %407 = vrot.lane.b32.xlu0 %v352, 108
        %v408 = vpop.permute.xlu0 %407
        %409 = vrot.lane.b32.xlu0 %v353, 108
        %v410 = vpop.permute.xlu0 %409
        %vm411 = vcmask 883712
        %v412 = vsel %vm411, %v406, %v408
        %v413 = vsel %vm411, %v408, %v410
        %417 = vrot.lane.b32.xlu0 %v351, 92
        %v418 = vpop.permute.xlu0 %417
        %419 = vrot.lane.b32.xlu0 %v352, 92
        %v420 = vpop.permute.xlu0 %419
        %421 = vrot.lane.b32.xlu0 %v353, 92
        %v422 = vpop.permute.xlu0 %421
        %vm423 = vcmask 752640
        %v424 = vsel %vm423, %v418, %v420
        %v425 = vsel %vm423, %v420, %v422
        %429 = vrot.lane.b32.xlu0 %v351, 91
        %v430 = vpop.permute.xlu0 %429
        %431 = vrot.lane.b32.xlu0 %v352, 91
        %v432 = vpop.permute.xlu0 %431
        %433 = vrot.lane.b32.xlu0 %v353, 91
        %v434 = vpop.permute.xlu0 %433
        %vm435 = vcmask 744448
        %v436 = vsel %vm435, %v430, %v432
        %v437 = vsel %vm435, %v432, %v434
        %441 = vrot.lane.b32.xlu0 %v351, 90
        %v442 = vpop.permute.xlu0 %441
        %443 = vrot.lane.b32.xlu0 %v352, 90
        %v444 = vpop.permute.xlu0 %443
        %445 = vrot.lane.b32.xlu0 %v353, 90
        %v446 = vpop.permute.xlu0 %445
        %vm447 = vcmask 736256
        %v448 = vsel %vm447, %v442, %v444
        %v449 = vsel %vm447, %v444, %v446
        %v453 = vpack.c.bf16 %v364, %v351
        %v454 = vpack.c.bf16 %v365, %v352
        %v455 = vpack.c.bf16 %v362, %v353
        %v456 = vpack.c.bf16 %v388, %v376
        %v457 = vpack.c.bf16 %v389, %v377
        %v458 = vpack.c.bf16 %v386, %v374
        %v459 = vpack.c.bf16 %v412, %v400
        %v460 = vpack.c.bf16 %v413, %v401
        %v461 = vpack.c.bf16 %v410, %v398
        %v462 = vpack.c.bf16 %v436, %v424
        %v463 = vpack.c.bf16 %v437, %v425
        %v464 = vpack.c.bf16 %v434, %v422
        %v465 = vpack.c.bf16 %v448, %v448
        %v466 = vpack.c.bf16 %v449, %v449
        %v467 = vpack.c.bf16 %v446, %v446
        %v468 = vld [vmem:[#allocation2] sm:$0xf]
        %v469 = vld [vmem:[#allocation2 + $0x4] sm:$0xf]
        %v470 = vld [vmem:[%s2] sm:$0xff]
        %v471 = vld [vmem:[%s2 + $0x8] sm:$0xff]
        %473 = vset.pattern.permute.xlu0 0
        %474 = vperm.xlu0 %473, %v470
        %v475 = vpop.permute.xlu0 %474
        %478 = vset.pattern.permute.xlu0 0
        %479 = vperm.xlu0 %478, %v471
        %v480 = vpop.permute.xlu0 %479
        %v484 = vunpack.c.l.b16 %v468
        %v485 = vunpack.c.l.b16 %v469
        %v486 = vpack.c.b16 %v485, %v484
        %vm487 = vcmask 588800
        %v489 = vsel %vm487, %v486, 0
        %vm491 = vcmask 1043456
        %v493 = vsel %vm491, %v465, 0
        %v496 = vsel %vm491, %v466, 0
        %v499 = vsel %vm491, %v467, 0
        %501 = vmatpush.bf16.msra.mxu0 0
        %502 = vmatpush.bf16.msra.mxu0 0
        %503 = vmatpush.bf16.msra.mxu0 0
        %504 = vmatpush.bf16.msra.mxu0 %v493
        %505 = vmatpush.bf16.msra.mxu0 %v462
        %506 = vmatpush.bf16.msra.mxu0 %v459
        %507 = vmatpush.bf16.msra.mxu0 %v456
        %508 = vmatpush.bf16.msra.mxu0 %v453
        %509 = vmatmul.bf16.gmra.mxu0 %v489
        %v510 = vpop.f32.mrf.mxu0
        %v511 = vadd.f32 %v475, %v510
        %v512 = vpop.f32.mrf.mxu0
        %v513 = vadd.f32 %v480, %v512
        %514 = vdwg.mxu0
        %515 = vmatpush.bf16.msra.mxu0 0
        %516 = vmatpush.bf16.msra.mxu0 0
        %517 = vmatpush.bf16.msra.mxu0 0
        %518 = vmatpush.bf16.msra.mxu0 %v496
        %519 = vmatpush.bf16.msra.mxu0 %v463
        %520 = vmatpush.bf16.msra.mxu0 %v460
        %521 = vmatpush.bf16.msra.mxu0 %v457
        %522 = vmatpush.bf16.msra.mxu0 %v454
        %523 = vmatmul.bf16.gmra.mxu0 %v489
        %v524 = vpop.f32.mrf.mxu0
        %v525 = vadd.f32 %v475, %v524
        %v526 = vpop.f32.mrf.mxu0
        %v527 = vadd.f32 %v480, %v526
        %528 = vdwg.mxu0
        %529 = vmatpush.bf16.msra.mxu0 0
        %530 = vmatpush.bf16.msra.mxu0 0
        %531 = vmatpush.bf16.msra.mxu0 0
        %532 = vmatpush.bf16.msra.mxu0 %v499
        %533 = vmatpush.bf16.msra.mxu0 %v464
        %534 = vmatpush.bf16.msra.mxu0 %v461
        %535 = vmatpush.bf16.msra.mxu0 %v458
        %536 = vmatpush.bf16.msra.mxu0 %v455
        %537 = vmatmul.bf16.gmra.mxu0 %v489
        %v538 = vpop.f32.mrf.mxu0
        %v539 = vadd.f32 %v475, %v538
        %v540 = vpop.f32.mrf.mxu0
        %v541 = vadd.f32 %v480, %v540
        %542 = vdwg.mxu0
        %v543 = vmax.f32 %v511, 0.0
        %v544 = vmax.f32 %v525, 0.0
        %v545 = vmax.f32 %v539, 0.0
        %v546 = vmax.f32 %v513, 0.0
        %v547 = vmax.f32 %v527, 0.0
        %v548 = vmax.f32 %v541, 0.0
        %v549 = vpack.c.bf16 %v543, %v543
        %v550 = vpack.c.bf16 %v544, %v544
        %v551 = vpack.c.bf16 %v545, %v545
        %v552 = vld [vmem:[#allocation4] sm:$0xff]
        %v553 = vld [vmem:[#allocation4 + $0x8] sm:$0xff]
        %v554 = vld [vmem:[#allocation4 + $0x10] sm:$0xff]
        %v555 = vld [vmem:[#allocation4 + $0x18] sm:$0xff]
        %v556 = vld [vmem:[#allocation4 + $0x20] sm:$0xff]
        %v557 = vld [vmem:[#allocation4 + $0x28] sm:$0xff]
        %v558 = vld [vmem:[#allocation4 + $0x30] sm:$0xff]
        %v559 = vld [vmem:[#allocation4 + $0x38] sm:$0xff]
        %v560 = vld [vmem:[#allocation4 + $0x40] sm:$0xff]
        %v561 = vld [vmem:[#allocation4 + $0x48] sm:$0xff]
        %v562 = vld [vmem:[#allocation4 + $0x50] sm:$0xff]
        %v563 = vld [vmem:[#allocation4 + $0x58] sm:$0xff]
        %v564 = vld [vmem:[#allocation4 + $0x60] sm:$0xff]
        %v565 = vld [vmem:[#allocation4 + $0x68] sm:$0xff]
        %v566 = vld [vmem:[#allocation4 + $0x70] sm:$0xff]
        %v567 = vld [vmem:[#allocation4 + $0x78] sm:$0xff]
        %v568 = vld [vmem:[#allocation4 + $0x80] sm:$0xff]
        %v569 = vld [vmem:[#allocation4 + $0x88] sm:$0xff]
        %v570 = vld [vmem:[#allocation4 + $0x90] sm:$0xff]
        %v571 = vld [vmem:[#allocation4 + $0x98] sm:$0xff]
        %v572 = vld [vmem:[#allocation4 + $0xa0] sm:$0xff]
        %v573 = vld [vmem:[#allocation4 + $0xa8] sm:$0xff]
        %v574 = vld [vmem:[#allocation4 + $0xb0] sm:$0xff]
        %v575 = vld [vmem:[#allocation4 + $0xb8] sm:$0xff]
        %v576 = vld [vmem:[#allocation4 + $0xc0] sm:$0xff]
        %v577 = vld [vmem:[#allocation4 + $0xc8] sm:$0xff]
        %v578 = vld [vmem:[#allocation4 + $0xd0] sm:$0xff]
        %v579 = vld [vmem:[#allocation4 + $0xd8] sm:$0xff]
        %v580 = vld [vmem:[#allocation4 + $0xe0] sm:$0xff]
        %v581 = vld [vmem:[#allocation4 + $0xe8] sm:$0xff]
        %v582 = vld [vmem:[#allocation4 + $0xf0] sm:$0xff]
        %v583 = vld [vmem:[#allocation4 + $0xf8] sm:$0xff]
        %v584 = vld [vmem:[#allocation4 + $0x100] sm:$0xff]
        %v585 = vld [vmem:[#allocation4 + $0x108] sm:$0xff]
        %v586 = vld [vmem:[#allocation4 + $0x110] sm:$0xff]
        %v587 = vld [vmem:[#allocation4 + $0x118] sm:$0xff]
        %s588 = scalar_lea.vmem [#allocation4], 288
        %v589 = vld [vmem:[%s588] sm:$0xff]
        %v590 = vld [vmem:[%s588 + $0x8] sm:$0xff]
        %v591 = vld [vmem:[%s588 + $0x10] sm:$0xff]
        %v592 = vld [vmem:[%s588 + $0x18] sm:$0xff]
        %v593 = vld [vmem:[%s588 + $0x20] sm:$0xff]
        %v594 = vld [vmem:[%s588 + $0x28] sm:$0xff]
        %v595 = vld [vmem:[%s588 + $0x30] sm:$0xff]
        %v596 = vld [vmem:[%s588 + $0x38] sm:$0xff]
        %v597 = vld [vmem:[%s588 + $0x40] sm:$0xff]
        %v598 = vld [vmem:[%s588 + $0x48] sm:$0xff]
        %v599 = vld [vmem:[%s588 + $0x50] sm:$0xff]
        %v600 = vld [vmem:[%s588 + $0x58] sm:$0xff]
        %v601 = vld [vmem:[%s588 + $0x60] sm:$0xff]
        %v602 = vld [vmem:[%s588 + $0x68] sm:$0xff]
        %v603 = vld [vmem:[%s588 + $0x70] sm:$0xff]
        %v604 = vld [vmem:[%s588 + $0x78] sm:$0xff]
        %v605 = vld [vmem:[%s588 + $0x80] sm:$0xff]
        %v606 = vld [vmem:[%s588 + $0x88] sm:$0xff]
        %v607 = vld [vmem:[%s588 + $0x90] sm:$0xff]
        %v608 = vld [vmem:[%s588 + $0x98] sm:$0xff]
        %v609 = vld [vmem:[%s588 + $0xa0] sm:$0xff]
        %v610 = vld [vmem:[%s588 + $0xa8] sm:$0xff]
        %v611 = vld [vmem:[%s588 + $0xb0] sm:$0xff]
        %v612 = vld [vmem:[%s588 + $0xb8] sm:$0xff]
        %v613 = vld [vmem:[%s588 + $0xc0] sm:$0xff]
        %v614 = vld [vmem:[%s588 + $0xc8] sm:$0xff]
        %v615 = vld [vmem:[%s588 + $0xd0] sm:$0xff]
        %v616 = vld [vmem:[%s588 + $0xd8] sm:$0xff]
        %v617 = vld [vmem:[%s588 + $0xe0] sm:$0xff]
        %v618 = vld [vmem:[%s588 + $0xe8] sm:$0xff]
        %v619 = vld [vmem:[%s588 + $0xf0] sm:$0xff]
        %v620 = vld [vmem:[%s588 + $0xf8] sm:$0xff]
        %v621 = vld [vmem:[%s588 + $0x100] sm:$0xff]
        %v622 = vld [vmem:[%s588 + $0x108] sm:$0xff]
        %v623 = vld [vmem:[%s588 + $0x110] sm:$0xff]
        %v624 = vld [vmem:[%s588 + $0x118] sm:$0xff]
        %v626 = vshrl.u32 %v549, 16
        %v629 = vshrl.u32 %v550, 16
        %v632 = vshrl.u32 %v551, 16
        %v672 = vunpack.c.l.b16 %v589
        %v673 = vunpack.c.h.b16 %v589
        %v674 = vunpack.c.l.b16 %v590
        %v675 = vunpack.c.h.b16 %v590
        %v676 = vunpack.c.l.b16 %v591
        %v677 = vunpack.c.h.b16 %v591
        %v678 = vunpack.c.l.b16 %v592
        %v679 = vunpack.c.h.b16 %v592
        %v680 = vunpack.c.l.b16 %v593
        %v681 = vunpack.c.h.b16 %v593
        %v682 = vunpack.c.l.b16 %v594
        %v683 = vunpack.c.h.b16 %v594
        %v684 = vunpack.c.l.b16 %v595
        %v685 = vunpack.c.h.b16 %v595
        %v686 = vunpack.c.l.b16 %v596
        %v687 = vunpack.c.h.b16 %v596
        %v688 = vunpack.c.l.b16 %v597
        %v689 = vunpack.c.h.b16 %v597
        %v690 = vunpack.c.l.b16 %v598
        %v691 = vunpack.c.h.b16 %v598
        %v692 = vunpack.c.l.b16 %v599
        %v693 = vunpack.c.h.b16 %v599
        %v694 = vunpack.c.l.b16 %v600
        %v695 = vunpack.c.h.b16 %v600
        %v696 = vunpack.c.l.b16 %v601
        %v697 = vunpack.c.h.b16 %v601
        %v698 = vunpack.c.l.b16 %v602
        %v699 = vunpack.c.h.b16 %v602
        %v700 = vunpack.c.l.b16 %v603
        %v701 = vunpack.c.h.b16 %v603
        %v702 = vunpack.c.l.b16 %v604
        %v703 = vunpack.c.h.b16 %v604
        %v704 = vunpack.c.l.b16 %v605
        %v705 = vunpack.c.h.b16 %v605
        %v706 = vunpack.c.l.b16 %v606
        %v707 = vunpack.c.h.b16 %v606
        %v708 = vunpack.c.l.b16 %v607
        %v709 = vunpack.c.h.b16 %v607
        %v710 = vunpack.c.l.b16 %v608
        %v711 = vunpack.c.h.b16 %v608
        %v712 = vunpack.c.l.b16 %v609
        %v713 = vunpack.c.h.b16 %v609
        %v714 = vunpack.c.l.b16 %v610
        %v715 = vunpack.c.h.b16 %v610
        %v716 = vunpack.c.l.b16 %v611
        %v717 = vunpack.c.h.b16 %v611
        %v718 = vunpack.c.l.b16 %v612
        %v719 = vunpack.c.h.b16 %v612
        %v720 = vunpack.c.l.b16 %v613
        %v721 = vunpack.c.h.b16 %v613
        %v722 = vunpack.c.l.b16 %v614
        %v723 = vunpack.c.h.b16 %v614
        %v724 = vunpack.c.l.b16 %v615
        %v725 = vunpack.c.h.b16 %v615
        %v726 = vunpack.c.l.b16 %v616
        %v727 = vunpack.c.h.b16 %v616
        %v728 = vunpack.c.l.b16 %v617
        %v729 = vunpack.c.h.b16 %v617
        %v730 = vunpack.c.l.b16 %v618
        %v731 = vunpack.c.h.b16 %v618
        %v732 = vunpack.c.l.b16 %v619
        %v733 = vunpack.c.h.b16 %v619
        %v734 = vunpack.c.l.b16 %v620
        %v735 = vunpack.c.h.b16 %v620
        %v736 = vunpack.c.l.b16 %v621
        %v737 = vunpack.c.h.b16 %v621
        %v738 = vunpack.c.l.b16 %v622
        %v739 = vunpack.c.h.b16 %v622
        %v740 = vunpack.c.l.b16 %v623
        %v741 = vunpack.c.h.b16 %v623
        %v742 = vunpack.c.l.b16 %v624
        %v743 = vunpack.c.h.b16 %v624
        %v744 = vpack.c.b16 %v674, %v672
        %v745 = vpack.c.b16 %v675, %v673
        %v746 = vpack.c.b16 %v678, %v676
        %v747 = vpack.c.b16 %v679, %v677
        %v748 = vpack.c.b16 %v682, %v680
        %v749 = vpack.c.b16 %v683, %v681
        %v750 = vpack.c.b16 %v686, %v684
        %v751 = vpack.c.b16 %v687, %v685
        %v752 = vpack.c.b16 %v690, %v688
        %v753 = vpack.c.b16 %v691, %v689
        %v754 = vpack.c.b16 %v694, %v692
        %v755 = vpack.c.b16 %v695, %v693
        %v756 = vpack.c.b16 %v698, %v696
        %v757 = vpack.c.b16 %v699, %v697
        %v758 = vpack.c.b16 %v702, %v700
        %v759 = vpack.c.b16 %v703, %v701
        %v760 = vpack.c.b16 %v706, %v704
        %v761 = vpack.c.b16 %v707, %v705
        %v762 = vpack.c.b16 %v710, %v708
        %v763 = vpack.c.b16 %v711, %v709
        %v764 = vpack.c.b16 %v714, %v712
        %v765 = vpack.c.b16 %v715, %v713
        %v766 = vpack.c.b16 %v718, %v716
        %v767 = vpack.c.b16 %v719, %v717
        %v768 = vpack.c.b16 %v722, %v720
        %v769 = vpack.c.b16 %v723, %v721
        %v770 = vpack.c.b16 %v726, %v724
        %v771 = vpack.c.b16 %v727, %v725
        %v772 = vpack.c.b16 %v730, %v728
        %v773 = vpack.c.b16 %v731, %v729
        %v774 = vpack.c.b16 %v734, %v732
        %v775 = vpack.c.b16 %v735, %v733
        %v776 = vpack.c.b16 %v738, %v736
        %v777 = vpack.c.b16 %v739, %v737
        %v778 = vpack.c.b16 %v742, %v740
        %v779 = vpack.c.b16 %v743, %v741
        %vm816 = vcmask 261120
        %v818 = vsel %vm816, %v632, 0
        %820 = vmatpush.bf16.msra.mxu0 %v758
        %821 = vmatpush.bf16.msra.mxu0 %v756
        %822 = vmatpush.bf16.msra.mxu0 %v754
        %823 = vmatpush.bf16.msra.mxu0 %v752
        %824 = vmatpush.bf16.msra.mxu0 %v750
        %825 = vmatpush.bf16.msra.mxu0 %v748
        %826 = vmatpush.bf16.msra.mxu0 %v746
        %827 = vmatpush.bf16.msra.mxu0 %v744
        %828 = vmatmul.bf16.gmra.mxu0 %v626
        %v829 = vpop.f32.mrf.mxu0
        %v830 = vadd.f32 0.0, %v829
        %v831 = vpop.f32.mrf.mxu0
        %832 = vdwg.mxu0
        %833 = vmatpush.bf16.msra.mxu0 %v774
        %834 = vmatpush.bf16.msra.mxu0 %v772
        %835 = vmatpush.bf16.msra.mxu0 %v770
        %836 = vmatpush.bf16.msra.mxu0 %v768
        %837 = vmatpush.bf16.msra.mxu0 %v766
        %838 = vmatpush.bf16.msra.mxu0 %v764
        %839 = vmatpush.bf16.msra.mxu0 %v762
        %840 = vmatpush.bf16.msra.mxu0 %v760
        %841 = vmatmul.bf16.gmra.mxu0 %v629
        %v842 = vpop.f32.mrf.mxu0
        %v843 = vadd.f32 %v830, %v842
        %v844 = vpop.f32.mrf.mxu0
        %845 = vdwg.mxu0
        %846 = vmatpush.bf16.msra.mxu0 0
        %847 = vmatpush.bf16.msra.mxu0 0
        %848 = vmatpush.bf16.msra.mxu0 0
        %849 = vmatpush.bf16.msra.mxu0 0
        %850 = vmatpush.bf16.msra.mxu0 0
        %851 = vmatpush.bf16.msra.mxu0 0
        %852 = vmatpush.bf16.msra.mxu0 %v778
        %853 = vmatpush.bf16.msra.mxu0 %v776
        %854 = vmatmul.bf16.gmra.mxu0 %v818
        %v855 = vpop.f32.mrf.mxu0
        %v856 = vadd.f32 %v843, %v855
        %v857 = vpop.f32.mrf.mxu0
        %858 = vdwg.mxu0
        %859 = vmatpush.bf16.msra.mxu0 %v759
        %860 = vmatpush.bf16.msra.mxu0 %v757
        %861 = vmatpush.bf16.msra.mxu0 %v755
        %862 = vmatpush.bf16.msra.mxu0 %v753
        %863 = vmatpush.bf16.msra.mxu0 %v751
        %864 = vmatpush.bf16.msra.mxu0 %v749
        %865 = vmatpush.bf16.msra.mxu0 %v747
        %866 = vmatpush.bf16.msra.mxu0 %v745
        %867 = vmatmul.bf16.gmra.mxu0 %v626
        %v868 = vpop.f32.mrf.mxu0
        %v869 = vadd.f32 0.0, %v868
        %v870 = vpop.f32.mrf.mxu0
        %871 = vdwg.mxu0
        %872 = vmatpush.bf16.msra.mxu0 %v775
        %873 = vmatpush.bf16.msra.mxu0 %v773
        %874 = vmatpush.bf16.msra.mxu0 %v771
        %875 = vmatpush.bf16.msra.mxu0 %v769
        %876 = vmatpush.bf16.msra.mxu0 %v767
        %877 = vmatpush.bf16.msra.mxu0 %v765
        %878 = vmatpush.bf16.msra.mxu0 %v763
        %879 = vmatpush.bf16.msra.mxu0 %v761
        %880 = vmatmul.bf16.gmra.mxu0 %v629
        %v881 = vpop.f32.mrf.mxu0
        %v882 = vadd.f32 %v869, %v881
        %v883 = vpop.f32.mrf.mxu0
        %884 = vdwg.mxu0
        %885 = vmatpush.bf16.msra.mxu0 0
        %886 = vmatpush.bf16.msra.mxu0 0
        %887 = vmatpush.bf16.msra.mxu0 0
        %888 = vmatpush.bf16.msra.mxu0 0
        %889 = vmatpush.bf16.msra.mxu0 0
        %890 = vmatpush.bf16.msra.mxu0 0
        %891 = vmatpush.bf16.msra.mxu0 %v779
        %892 = vmatpush.bf16.msra.mxu0 %v777
        %893 = vmatmul.bf16.gmra.mxu0 %v818
        %v894 = vpop.f32.mrf.mxu0
        %v895 = vadd.f32 %v882, %v894
        %v896 = vpop.f32.mrf.mxu0
        %897 = vdwg.mxu0
        %v934 = vunpack.c.l.b16 %v552
        %v935 = vunpack.c.h.b16 %v552
        %v936 = vunpack.c.l.b16 %v553
        %v937 = vunpack.c.h.b16 %v553
        %v938 = vunpack.c.l.b16 %v554
        %v939 = vunpack.c.h.b16 %v554
        %v940 = vunpack.c.l.b16 %v555
        %v941 = vunpack.c.h.b16 %v555
        %v942 = vunpack.c.l.b16 %v556
        %v943 = vunpack.c.h.b16 %v556
        %v944 = vunpack.c.l.b16 %v557
        %v945 = vunpack.c.h.b16 %v557
        %v946 = vunpack.c.l.b16 %v558
        %v947 = vunpack.c.h.b16 %v558
        %v948 = vunpack.c.l.b16 %v559
        %v949 = vunpack.c.h.b16 %v559
        %v950 = vunpack.c.l.b16 %v560
        %v951 = vunpack.c.h.b16 %v560
        %v952 = vunpack.c.l.b16 %v561
        %v953 = vunpack.c.h.b16 %v561
        %v954 = vunpack.c.l.b16 %v562
        %v955 = vunpack.c.h.b16 %v562
        %v956 = vunpack.c.l.b16 %v563
        %v957 = vunpack.c.h.b16 %v563
        %v958 = vunpack.c.l.b16 %v564
        %v959 = vunpack.c.h.b16 %v564
        %v960 = vunpack.c.l.b16 %v565
        %v961 = vunpack.c.h.b16 %v565
        %v962 = vunpack.c.l.b16 %v566
        %v963 = vunpack.c.h.b16 %v566
        %v964 = vunpack.c.l.b16 %v567
        %v965 = vunpack.c.h.b16 %v567
        %v966 = vunpack.c.l.b16 %v568
        %v967 = vunpack.c.h.b16 %v568
        %v968 = vunpack.c.l.b16 %v569
        %v969 = vunpack.c.h.b16 %v569
        %v970 = vunpack.c.l.b16 %v570
        %v971 = vunpack.c.h.b16 %v570
        %v972 = vunpack.c.l.b16 %v571
        %v973 = vunpack.c.h.b16 %v571
        %v974 = vunpack.c.l.b16 %v572
        %v975 = vunpack.c.h.b16 %v572
        %v976 = vunpack.c.l.b16 %v573
        %v977 = vunpack.c.h.b16 %v573
        %v978 = vunpack.c.l.b16 %v574
        %v979 = vunpack.c.h.b16 %v574
        %v980 = vunpack.c.l.b16 %v575
        %v981 = vunpack.c.h.b16 %v575
        %v982 = vunpack.c.l.b16 %v576
        %v983 = vunpack.c.h.b16 %v576
        %v984 = vunpack.c.l.b16 %v577
        %v985 = vunpack.c.h.b16 %v577
        %v986 = vunpack.c.l.b16 %v578
        %v987 = vunpack.c.h.b16 %v578
        %v988 = vunpack.c.l.b16 %v579
        %v989 = vunpack.c.h.b16 %v579
        %v990 = vunpack.c.l.b16 %v580
        %v991 = vunpack.c.h.b16 %v580
        %v992 = vunpack.c.l.b16 %v581
        %v993 = vunpack.c.h.b16 %v581
        %v994 = vunpack.c.l.b16 %v582
        %v995 = vunpack.c.h.b16 %v582
        %v996 = vunpack.c.l.b16 %v583
        %v997 = vunpack.c.h.b16 %v583
        %v998 = vunpack.c.l.b16 %v584
        %v999 = vunpack.c.h.b16 %v584
        %v1000 = vunpack.c.l.b16 %v585
        %v1001 = vunpack.c.h.b16 %v585
        %v1002 = vunpack.c.l.b16 %v586
        %v1003 = vunpack.c.h.b16 %v586
        %v1004 = vunpack.c.l.b16 %v587
        %v1005 = vunpack.c.h.b16 %v587
        %v1006 = vpack.c.b16 %v936, %v934
        %v1007 = vpack.c.b16 %v937, %v935
        %v1008 = vpack.c.b16 %v940, %v938
        %v1009 = vpack.c.b16 %v941, %v939
        %v1010 = vpack.c.b16 %v944, %v942
        %v1011 = vpack.c.b16 %v945, %v943
        %v1012 = vpack.c.b16 %v948, %v946
        %v1013 = vpack.c.b16 %v949, %v947
        %v1014 = vpack.c.b16 %v952, %v950
        %v1015 = vpack.c.b16 %v953, %v951
        %v1016 = vpack.c.b16 %v956, %v954
        %v1017 = vpack.c.b16 %v957, %v955
        %v1018 = vpack.c.b16 %v960, %v958
        %v1019 = vpack.c.b16 %v961, %v959
        %v1020 = vpack.c.b16 %v964, %v962
        %v1021 = vpack.c.b16 %v965, %v963
        %v1022 = vpack.c.b16 %v968, %v966
        %v1023 = vpack.c.b16 %v969, %v967
        %v1024 = vpack.c.b16 %v972, %v970
        %v1025 = vpack.c.b16 %v973, %v971
        %v1026 = vpack.c.b16 %v976, %v974
        %v1027 = vpack.c.b16 %v977, %v975
        %v1028 = vpack.c.b16 %v980, %v978
        %v1029 = vpack.c.b16 %v981, %v979
        %v1030 = vpack.c.b16 %v984, %v982
        %v1031 = vpack.c.b16 %v985, %v983
        %v1032 = vpack.c.b16 %v988, %v986
        %v1033 = vpack.c.b16 %v989, %v987
        %v1034 = vpack.c.b16 %v992, %v990
        %v1035 = vpack.c.b16 %v993, %v991
        %v1036 = vpack.c.b16 %v996, %v994
        %v1037 = vpack.c.b16 %v997, %v995
        %v1038 = vpack.c.b16 %v1000, %v998
        %v1039 = vpack.c.b16 %v1001, %v999
        %v1040 = vpack.c.b16 %v1004, %v1002
        %v1041 = vpack.c.b16 %v1005, %v1003
        %v1078 = vsel %vm816, %v551, 0
        %1080 = vmatpush.bf16.msra.mxu0 %v1020
        %1081 = vmatpush.bf16.msra.mxu0 %v1018
        %1082 = vmatpush.bf16.msra.mxu0 %v1016
        %1083 = vmatpush.bf16.msra.mxu0 %v1014
        %1084 = vmatpush.bf16.msra.mxu0 %v1012
        %1085 = vmatpush.bf16.msra.mxu0 %v1010
        %1086 = vmatpush.bf16.msra.mxu0 %v1008
        %1087 = vmatpush.bf16.msra.mxu0 %v1006
        %1088 = vmatmul.bf16.gmra.mxu0 %v549
        %v1089 = vpop.f32.mrf.mxu0
        %v1090 = vadd.f32 %v856, %v1089
        %v1091 = vpop.f32.mrf.mxu0
        %1092 = vdwg.mxu0
        %1093 = vmatpush.bf16.msra.mxu0 %v1036
        %1094 = vmatpush.bf16.msra.mxu0 %v1034
        %1095 = vmatpush.bf16.msra.mxu0 %v1032
        %1096 = vmatpush.bf16.msra.mxu0 %v1030
        %1097 = vmatpush.bf16.msra.mxu0 %v1028
        %1098 = vmatpush.bf16.msra.mxu0 %v1026
        %1099 = vmatpush.bf16.msra.mxu0 %v1024
        %1100 = vmatpush.bf16.msra.mxu0 %v1022
        %1101 = vmatmul.bf16.gmra.mxu0 %v550
        %v1102 = vpop.f32.mrf.mxu0
        %v1103 = vadd.f32 %v1090, %v1102
        %v1104 = vpop.f32.mrf.mxu0
        %1105 = vdwg.mxu0
        %1106 = vmatpush.bf16.msra.mxu0 0
        %1107 = vmatpush.bf16.msra.mxu0 0
        %1108 = vmatpush.bf16.msra.mxu0 0
        %1109 = vmatpush.bf16.msra.mxu0 0
        %1110 = vmatpush.bf16.msra.mxu0 0
        %1111 = vmatpush.bf16.msra.mxu0 0
        %1112 = vmatpush.bf16.msra.mxu0 %v1040
        %1113 = vmatpush.bf16.msra.mxu0 %v1038
        %1114 = vmatmul.bf16.gmra.mxu0 %v1078
        %v1115 = vpop.f32.mrf.mxu0
        %v1116 = vadd.f32 %v1103, %v1115
        %v1117 = vpop.f32.mrf.mxu0
        %1118 = vdwg.mxu0
        %1119 = vmatpush.bf16.msra.mxu0 %v1021
        %1120 = vmatpush.bf16.msra.mxu0 %v1019
        %1121 = vmatpush.bf16.msra.mxu0 %v1017
        %1122 = vmatpush.bf16.msra.mxu0 %v1015
        %1123 = vmatpush.bf16.msra.mxu0 %v1013
        %1124 = vmatpush.bf16.msra.mxu0 %v1011
        %1125 = vmatpush.bf16.msra.mxu0 %v1009
        %1126 = vmatpush.bf16.msra.mxu0 %v1007
        %1127 = vmatmul.bf16.gmra.mxu0 %v549
        %v1128 = vpop.f32.mrf.mxu0
        %v1129 = vadd.f32 %v895, %v1128
        %v1130 = vpop.f32.mrf.mxu0
        %1131 = vdwg.mxu0
        %1132 = vmatpush.bf16.msra.mxu0 %v1037
        %1133 = vmatpush.bf16.msra.mxu0 %v1035
        %1134 = vmatpush.bf16.msra.mxu0 %v1033
        %1135 = vmatpush.bf16.msra.mxu0 %v1031
        %1136 = vmatpush.bf16.msra.mxu0 %v1029
        %1137 = vmatpush.bf16.msra.mxu0 %v1027
        %1138 = vmatpush.bf16.msra.mxu0 %v1025
        %1139 = vmatpush.bf16.msra.mxu0 %v1023
        %1140 = vmatmul.bf16.gmra.mxu0 %v550
        %v1141 = vpop.f32.mrf.mxu0
        %v1142 = vadd.f32 %v1129, %v1141
        %v1143 = vpop.f32.mrf.mxu0
        %1144 = vdwg.mxu0
        %1145 = vmatpush.bf16.msra.mxu0 0
        %1146 = vmatpush.bf16.msra.mxu0 0
        %1147 = vmatpush.bf16.msra.mxu0 0
        %1148 = vmatpush.bf16.msra.mxu0 0
        %1149 = vmatpush.bf16.msra.mxu0 0
        %1150 = vmatpush.bf16.msra.mxu0 0
        %1151 = vmatpush.bf16.msra.mxu0 %v1041
        %1152 = vmatpush.bf16.msra.mxu0 %v1039
        %1153 = vmatmul.bf16.gmra.mxu0 %v1078
        %v1154 = vpop.f32.mrf.mxu0
        %v1155 = vadd.f32 %v1142, %v1154
        %v1156 = vpop.f32.mrf.mxu0
        %1157 = vdwg.mxu0
        %s1158 = scalar_lea.vmem [#allocation4], 576
        %v1159 = vld [vmem:[%s1158] sm:$0xff]
        %v1160 = vld [vmem:[%s1158 + $0x8] sm:$0xff]
        %v1161 = vld [vmem:[%s1158 + $0x10] sm:$0xff]
        %v1162 = vld [vmem:[%s1158 + $0x18] sm:$0xff]
        %v1163 = vld [vmem:[%s1158 + $0x20] sm:$0xff]
        %v1164 = vld [vmem:[%s1158 + $0x28] sm:$0xff]
        %v1165 = vld [vmem:[%s1158 + $0x30] sm:$0xff]
        %v1166 = vld [vmem:[%s1158 + $0x38] sm:$0xff]
        %v1167 = vld [vmem:[%s1158 + $0x40] sm:$0xff]
        %v1168 = vld [vmem:[%s1158 + $0x48] sm:$0xff]
        %v1169 = vld [vmem:[%s1158 + $0x50] sm:$0xff]
        %v1170 = vld [vmem:[%s1158 + $0x58] sm:$0xff]
        %v1171 = vld [vmem:[%s1158 + $0x60] sm:$0xff]
        %v1172 = vld [vmem:[%s1158 + $0x68] sm:$0xff]
        %v1173 = vld [vmem:[%s1158 + $0x70] sm:$0xff]
        %v1174 = vld [vmem:[%s1158 + $0x78] sm:$0xff]
        %v1175 = vld [vmem:[%s1158 + $0x80] sm:$0xff]
        %v1176 = vld [vmem:[%s1158 + $0x88] sm:$0xff]
        %v1177 = vld [vmem:[%s1158 + $0x90] sm:$0xff]
        %v1178 = vld [vmem:[%s1158 + $0x98] sm:$0xff]
        %v1179 = vld [vmem:[%s1158 + $0xa0] sm:$0xff]
        %v1180 = vld [vmem:[%s1158 + $0xa8] sm:$0xff]
        %v1181 = vld [vmem:[%s1158 + $0xb0] sm:$0xff]
        %v1182 = vld [vmem:[%s1158 + $0xb8] sm:$0xff]
        %v1183 = vld [vmem:[%s1158 + $0xc0] sm:$0xff]
        %v1184 = vld [vmem:[%s1158 + $0xc8] sm:$0xff]
        %v1185 = vld [vmem:[%s1158 + $0xd0] sm:$0xff]
        %v1186 = vld [vmem:[%s1158 + $0xd8] sm:$0xff]
        %v1187 = vld [vmem:[%s1158 + $0xe0] sm:$0xff]
        %v1188 = vld [vmem:[%s1158 + $0xe8] sm:$0xff]
        %v1189 = vld [vmem:[%s1158 + $0xf0] sm:$0xff]
        %v1190 = vld [vmem:[%s1158 + $0xf8] sm:$0xff]
        %v1191 = vld [vmem:[%s1158 + $0x100] sm:$0xff]
        %v1192 = vld [vmem:[%s1158 + $0x108] sm:$0xff]
        %v1193 = vld [vmem:[%s1158 + $0x110] sm:$0xff]
        %v1194 = vld [vmem:[%s1158 + $0x118] sm:$0xff]
        %v1198 = vrot.slane %v549, 1
        %v1199 = vrot.slane %v550, 1
        %v1200 = vrot.slane %v551, 1
        %v1239 = vunpack.c.l.b16 %v1159
        %v1240 = vunpack.c.h.b16 %v1159
        %v1241 = vunpack.c.l.b16 %v1160
        %v1242 = vunpack.c.h.b16 %v1160
        %v1243 = vunpack.c.l.b16 %v1161
        %v1244 = vunpack.c.h.b16 %v1161
        %v1245 = vunpack.c.l.b16 %v1162
        %v1246 = vunpack.c.h.b16 %v1162
        %v1247 = vunpack.c.l.b16 %v1163
        %v1248 = vunpack.c.h.b16 %v1163
        %v1249 = vunpack.c.l.b16 %v1164
        %v1250 = vunpack.c.h.b16 %v1164
        %v1251 = vunpack.c.l.b16 %v1165
        %v1252 = vunpack.c.h.b16 %v1165
        %v1253 = vunpack.c.l.b16 %v1166
        %v1254 = vunpack.c.h.b16 %v1166
        %v1255 = vunpack.c.l.b16 %v1167
        %v1256 = vunpack.c.h.b16 %v1167
        %v1257 = vunpack.c.l.b16 %v1168
        %v1258 = vunpack.c.h.b16 %v1168
        %v1259 = vunpack.c.l.b16 %v1169
        %v1260 = vunpack.c.h.b16 %v1169
        %v1261 = vunpack.c.l.b16 %v1170
        %v1262 = vunpack.c.h.b16 %v1170
        %v1263 = vunpack.c.l.b16 %v1171
        %v1264 = vunpack.c.h.b16 %v1171
        %v1265 = vunpack.c.l.b16 %v1172
        %v1266 = vunpack.c.h.b16 %v1172
        %v1267 = vunpack.c.l.b16 %v1173
        %v1268 = vunpack.c.h.b16 %v1173
        %v1269 = vunpack.c.l.b16 %v1174
        %v1270 = vunpack.c.h.b16 %v1174
        %v1271 = vunpack.c.l.b16 %v1175
        %v1272 = vunpack.c.h.b16 %v1175
        %v1273 = vunpack.c.l.b16 %v1176
        %v1274 = vunpack.c.h.b16 %v1176
        %v1275 = vunpack.c.l.b16 %v1177
        %v1276 = vunpack.c.h.b16 %v1177
        %v1277 = vunpack.c.l.b16 %v1178
        %v1278 = vunpack.c.h.b16 %v1178
        %v1279 = vunpack.c.l.b16 %v1179
        %v1280 = vunpack.c.h.b16 %v1179
        %v1281 = vunpack.c.l.b16 %v1180
        %v1282 = vunpack.c.h.b16 %v1180
        %v1283 = vunpack.c.l.b16 %v1181
        %v1284 = vunpack.c.h.b16 %v1181
        %v1285 = vunpack.c.l.b16 %v1182
        %v1286 = vunpack.c.h.b16 %v1182
        %v1287 = vunpack.c.l.b16 %v1183
        %v1288 = vunpack.c.h.b16 %v1183
        %v1289 = vunpack.c.l.b16 %v1184
        %v1290 = vunpack.c.h.b16 %v1184
        %v1291 = vunpack.c.l.b16 %v1185
        %v1292 = vunpack.c.h.b16 %v1185
        %v1293 = vunpack.c.l.b16 %v1186
        %v1294 = vunpack.c.h.b16 %v1186
        %v1295 = vunpack.c.l.b16 %v1187
        %v1296 = vunpack.c.h.b16 %v1187
        %v1297 = vunpack.c.l.b16 %v1188
        %v1298 = vunpack.c.h.b16 %v1188
        %v1299 = vunpack.c.l.b16 %v1189
        %v1300 = vunpack.c.h.b16 %v1189
        %v1301 = vunpack.c.l.b16 %v1190
        %v1302 = vunpack.c.h.b16 %v1190
        %v1303 = vunpack.c.l.b16 %v1191
        %v1304 = vunpack.c.h.b16 %v1191
        %v1305 = vunpack.c.l.b16 %v1192
        %v1306 = vunpack.c.h.b16 %v1192
        %v1307 = vunpack.c.l.b16 %v1193
        %v1308 = vunpack.c.h.b16 %v1193
        %v1309 = vunpack.c.l.b16 %v1194
        %v1310 = vunpack.c.h.b16 %v1194
        %v1311 = vpack.c.b16 %v1241, %v1239
        %v1312 = vpack.c.b16 %v1242, %v1240
        %v1313 = vpack.c.b16 %v1245, %v1243
        %v1314 = vpack.c.b16 %v1246, %v1244
        %v1315 = vpack.c.b16 %v1249, %v1247
        %v1316 = vpack.c.b16 %v1250, %v1248
        %v1317 = vpack.c.b16 %v1253, %v1251
        %v1318 = vpack.c.b16 %v1254, %v1252
        %v1319 = vpack.c.b16 %v1257, %v1255
        %v1320 = vpack.c.b16 %v1258, %v1256
        %v1321 = vpack.c.b16 %v1261, %v1259
        %v1322 = vpack.c.b16 %v1262, %v1260
        %v1323 = vpack.c.b16 %v1265, %v1263
        %v1324 = vpack.c.b16 %v1266, %v1264
        %v1325 = vpack.c.b16 %v1269, %v1267
        %v1326 = vpack.c.b16 %v1270, %v1268
        %v1327 = vpack.c.b16 %v1273, %v1271
        %v1328 = vpack.c.b16 %v1274, %v1272
        %v1329 = vpack.c.b16 %v1277, %v1275
        %v1330 = vpack.c.b16 %v1278, %v1276
        %v1331 = vpack.c.b16 %v1281, %v1279
        %v1332 = vpack.c.b16 %v1282, %v1280
        %v1333 = vpack.c.b16 %v1285, %v1283
        %v1334 = vpack.c.b16 %v1286, %v1284
        %v1335 = vpack.c.b16 %v1289, %v1287
        %v1336 = vpack.c.b16 %v1290, %v1288
        %v1337 = vpack.c.b16 %v1293, %v1291
        %v1338 = vpack.c.b16 %v1294, %v1292
        %v1339 = vpack.c.b16 %v1297, %v1295
        %v1340 = vpack.c.b16 %v1298, %v1296
        %v1341 = vpack.c.b16 %v1301, %v1299
        %v1342 = vpack.c.b16 %v1302, %v1300
        %v1343 = vpack.c.b16 %v1305, %v1303
        %v1344 = vpack.c.b16 %v1306, %v1304
        %v1345 = vpack.c.b16 %v1309, %v1307
        %v1346 = vpack.c.b16 %v1310, %v1308
        %v1384 = vsel %vm816, %v1200, 0
        %1386 = vmatpush.bf16.msra.mxu0 %v1325
        %1387 = vmatpush.bf16.msra.mxu0 %v1323
        %1388 = vmatpush.bf16.msra.mxu0 %v1321
        %1389 = vmatpush.bf16.msra.mxu0 %v1319
        %1390 = vmatpush.bf16.msra.mxu0 %v1317
        %1391 = vmatpush.bf16.msra.mxu0 %v1315
        %1392 = vmatpush.bf16.msra.mxu0 %v1313
        %1393 = vmatpush.bf16.msra.mxu0 %v1311
        %1394 = vmatmul.bf16.gmra.mxu0 %v1198
        %v1395 = vpop.f32.mrf.mxu0
        %v1396 = vadd.f32 0.0, %v1395
        %v1397 = vpop.f32.mrf.mxu0
        %1398 = vdwg.mxu0
        %1399 = vmatpush.bf16.msra.mxu0 %v1341
        %1400 = vmatpush.bf16.msra.mxu0 %v1339
        %1401 = vmatpush.bf16.msra.mxu0 %v1337
        %1402 = vmatpush.bf16.msra.mxu0 %v1335
        %1403 = vmatpush.bf16.msra.mxu0 %v1333
        %1404 = vmatpush.bf16.msra.mxu0 %v1331
        %1405 = vmatpush.bf16.msra.mxu0 %v1329
        %1406 = vmatpush.bf16.msra.mxu0 %v1327
        %1407 = vmatmul.bf16.gmra.mxu0 %v1199
        %v1408 = vpop.f32.mrf.mxu0
        %v1409 = vadd.f32 %v1396, %v1408
        %v1410 = vpop.f32.mrf.mxu0
        %1411 = vdwg.mxu0
        %1412 = vmatpush.bf16.msra.mxu0 0
        %1413 = vmatpush.bf16.msra.mxu0 0
        %1414 = vmatpush.bf16.msra.mxu0 0
        %1415 = vmatpush.bf16.msra.mxu0 0
        %1416 = vmatpush.bf16.msra.mxu0 0
        %1417 = vmatpush.bf16.msra.mxu0 0
        %1418 = vmatpush.bf16.msra.mxu0 %v1345
        %1419 = vmatpush.bf16.msra.mxu0 %v1343
        %1420 = vmatmul.bf16.gmra.mxu0 %v1384
        %v1421 = vpop.f32.mrf.mxu0
        %v1422 = vadd.f32 %v1409, %v1421
        %v1423 = vpop.f32.mrf.mxu0
        %1424 = vdwg.mxu0
        %1425 = vmatpush.bf16.msra.mxu0 %v1326
        %1426 = vmatpush.bf16.msra.mxu0 %v1324
        %1427 = vmatpush.bf16.msra.mxu0 %v1322
        %1428 = vmatpush.bf16.msra.mxu0 %v1320
        %1429 = vmatpush.bf16.msra.mxu0 %v1318
        %1430 = vmatpush.bf16.msra.mxu0 %v1316
        %1431 = vmatpush.bf16.msra.mxu0 %v1314
        %1432 = vmatpush.bf16.msra.mxu0 %v1312
        %1433 = vmatmul.bf16.gmra.mxu0 %v1198
        %v1434 = vpop.f32.mrf.mxu0
        %v1435 = vadd.f32 0.0, %v1434
        %v1436 = vpop.f32.mrf.mxu0
        %1437 = vdwg.mxu0
        %1438 = vmatpush.bf16.msra.mxu0 %v1342
        %1439 = vmatpush.bf16.msra.mxu0 %v1340
        %1440 = vmatpush.bf16.msra.mxu0 %v1338
        %1441 = vmatpush.bf16.msra.mxu0 %v1336
        %1442 = vmatpush.bf16.msra.mxu0 %v1334
        %1443 = vmatpush.bf16.msra.mxu0 %v1332
        %1444 = vmatpush.bf16.msra.mxu0 %v1330
        %1445 = vmatpush.bf16.msra.mxu0 %v1328
        %1446 = vmatmul.bf16.gmra.mxu0 %v1199
        %v1447 = vpop.f32.mrf.mxu0
        %v1448 = vadd.f32 %v1435, %v1447
        %v1449 = vpop.f32.mrf.mxu0
        %1450 = vdwg.mxu0
        %1451 = vmatpush.bf16.msra.mxu0 0
        %1452 = vmatpush.bf16.msra.mxu0 0
        %1453 = vmatpush.bf16.msra.mxu0 0
        %1454 = vmatpush.bf16.msra.mxu0 0
        %1455 = vmatpush.bf16.msra.mxu0 0
        %1456 = vmatpush.bf16.msra.mxu0 0
        %1457 = vmatpush.bf16.msra.mxu0 %v1346
        %1458 = vmatpush.bf16.msra.mxu0 %v1344
        %1459 = vmatmul.bf16.gmra.mxu0 %v1384
        %v1460 = vpop.f32.mrf.mxu0
        %v1461 = vadd.f32 %v1448, %v1460
        %v1462 = vpop.f32.mrf.mxu0
        %1463 = vdwg.mxu0
        %v1464 = vadd.f32 %v1116, %v1422
        %v1465 = vadd.f32 %v1155, %v1461
        %s1466 = scalar_lea.vmem [#allocation4], 864
        %v1467 = vld [vmem:[%s1466] sm:$0xff]
        %v1468 = vld [vmem:[%s1466 + $0x8] sm:$0xff]
        %v1469 = vld [vmem:[%s1466 + $0x10] sm:$0xff]
        %v1470 = vld [vmem:[%s1466 + $0x18] sm:$0xff]
        %v1471 = vld [vmem:[%s1466 + $0x20] sm:$0xff]
        %v1472 = vld [vmem:[%s1466 + $0x28] sm:$0xff]
        %v1473 = vld [vmem:[%s1466 + $0x30] sm:$0xff]
        %v1474 = vld [vmem:[%s1466 + $0x38] sm:$0xff]
        %v1475 = vld [vmem:[%s1466 + $0x40] sm:$0xff]
        %v1476 = vld [vmem:[%s1466 + $0x48] sm:$0xff]
        %v1477 = vld [vmem:[%s1466 + $0x50] sm:$0xff]
        %v1478 = vld [vmem:[%s1466 + $0x58] sm:$0xff]
        %v1479 = vld [vmem:[%s1466 + $0x60] sm:$0xff]
        %v1480 = vld [vmem:[%s1466 + $0x68] sm:$0xff]
        %v1481 = vld [vmem:[%s1466 + $0x70] sm:$0xff]
        %v1482 = vld [vmem:[%s1466 + $0x78] sm:$0xff]
        %v1483 = vld [vmem:[%s1466 + $0x80] sm:$0xff]
        %v1484 = vld [vmem:[%s1466 + $0x88] sm:$0xff]
        %v1485 = vld [vmem:[%s1466 + $0x90] sm:$0xff]
        %v1486 = vld [vmem:[%s1466 + $0x98] sm:$0xff]
        %v1487 = vld [vmem:[%s1466 + $0xa0] sm:$0xff]
        %v1488 = vld [vmem:[%s1466 + $0xa8] sm:$0xff]
        %v1489 = vld [vmem:[%s1466 + $0xb0] sm:$0xff]
        %v1490 = vld [vmem:[%s1466 + $0xb8] sm:$0xff]
        %v1491 = vld [vmem:[%s1466 + $0xc0] sm:$0xff]
        %v1492 = vld [vmem:[%s1466 + $0xc8] sm:$0xff]
        %v1493 = vld [vmem:[%s1466 + $0xd0] sm:$0xff]
        %v1494 = vld [vmem:[%s1466 + $0xd8] sm:$0xff]
        %v1495 = vld [vmem:[%s1466 + $0xe0] sm:$0xff]
        %v1496 = vld [vmem:[%s1466 + $0xe8] sm:$0xff]
        %v1497 = vld [vmem:[%s1466 + $0xf0] sm:$0xff]
        %v1498 = vld [vmem:[%s1466 + $0xf8] sm:$0xff]
        %v1499 = vld [vmem:[%s1466 + $0x100] sm:$0xff]
        %v1500 = vld [vmem:[%s1466 + $0x108] sm:$0xff]
        %v1501 = vld [vmem:[%s1466 + $0x110] sm:$0xff]
        %v1502 = vld [vmem:[%s1466 + $0x118] sm:$0xff]
        %v1503 = vrot.slane %v626, 1
        %v1504 = vrot.slane %v629, 1
        %v1505 = vrot.slane %v632, 1
        %v1544 = vunpack.c.l.b16 %v1467
        %v1545 = vunpack.c.h.b16 %v1467
        %v1546 = vunpack.c.l.b16 %v1468
        %v1547 = vunpack.c.h.b16 %v1468
        %v1548 = vunpack.c.l.b16 %v1469
        %v1549 = vunpack.c.h.b16 %v1469
        %v1550 = vunpack.c.l.b16 %v1470
        %v1551 = vunpack.c.h.b16 %v1470
        %v1552 = vunpack.c.l.b16 %v1471
        %v1553 = vunpack.c.h.b16 %v1471
        %v1554 = vunpack.c.l.b16 %v1472
        %v1555 = vunpack.c.h.b16 %v1472
        %v1556 = vunpack.c.l.b16 %v1473
        %v1557 = vunpack.c.h.b16 %v1473
        %v1558 = vunpack.c.l.b16 %v1474
        %v1559 = vunpack.c.h.b16 %v1474
        %v1560 = vunpack.c.l.b16 %v1475
        %v1561 = vunpack.c.h.b16 %v1475
        %v1562 = vunpack.c.l.b16 %v1476
        %v1563 = vunpack.c.h.b16 %v1476
        %v1564 = vunpack.c.l.b16 %v1477
        %v1565 = vunpack.c.h.b16 %v1477
        %v1566 = vunpack.c.l.b16 %v1478
        %v1567 = vunpack.c.h.b16 %v1478
        %v1568 = vunpack.c.l.b16 %v1479
        %v1569 = vunpack.c.h.b16 %v1479
        %v1570 = vunpack.c.l.b16 %v1480
        %v1571 = vunpack.c.h.b16 %v1480
        %v1572 = vunpack.c.l.b16 %v1481
        %v1573 = vunpack.c.h.b16 %v1481
        %v1574 = vunpack.c.l.b16 %v1482
        %v1575 = vunpack.c.h.b16 %v1482
        %v1576 = vunpack.c.l.b16 %v1483
        %v1577 = vunpack.c.h.b16 %v1483
        %v1578 = vunpack.c.l.b16 %v1484
        %v1579 = vunpack.c.h.b16 %v1484
        %v1580 = vunpack.c.l.b16 %v1485
        %v1581 = vunpack.c.h.b16 %v1485
        %v1582 = vunpack.c.l.b16 %v1486
        %v1583 = vunpack.c.h.b16 %v1486
        %v1584 = vunpack.c.l.b16 %v1487
        %v1585 = vunpack.c.h.b16 %v1487
        %v1586 = vunpack.c.l.b16 %v1488
        %v1587 = vunpack.c.h.b16 %v1488
        %v1588 = vunpack.c.l.b16 %v1489
        %v1589 = vunpack.c.h.b16 %v1489
        %v1590 = vunpack.c.l.b16 %v1490
        %v1591 = vunpack.c.h.b16 %v1490
        %v1592 = vunpack.c.l.b16 %v1491
        %v1593 = vunpack.c.h.b16 %v1491
        %v1594 = vunpack.c.l.b16 %v1492
        %v1595 = vunpack.c.h.b16 %v1492
        %v1596 = vunpack.c.l.b16 %v1493
        %v1597 = vunpack.c.h.b16 %v1493
        %v1598 = vunpack.c.l.b16 %v1494
        %v1599 = vunpack.c.h.b16 %v1494
        %v1600 = vunpack.c.l.b16 %v1495
        %v1601 = vunpack.c.h.b16 %v1495
        %v1602 = vunpack.c.l.b16 %v1496
        %v1603 = vunpack.c.h.b16 %v1496
        %v1604 = vunpack.c.l.b16 %v1497
        %v1605 = vunpack.c.h.b16 %v1497
        %v1606 = vunpack.c.l.b16 %v1498
        %v1607 = vunpack.c.h.b16 %v1498
        %v1608 = vunpack.c.l.b16 %v1499
        %v1609 = vunpack.c.h.b16 %v1499
        %v1610 = vunpack.c.l.b16 %v1500
        %v1611 = vunpack.c.h.b16 %v1500
        %v1612 = vunpack.c.l.b16 %v1501
        %v1613 = vunpack.c.h.b16 %v1501
        %v1614 = vunpack.c.l.b16 %v1502
        %v1615 = vunpack.c.h.b16 %v1502
        %v1616 = vpack.c.b16 %v1546, %v1544
        %v1617 = vpack.c.b16 %v1547, %v1545
        %v1618 = vpack.c.b16 %v1550, %v1548
        %v1619 = vpack.c.b16 %v1551, %v1549
        %v1620 = vpack.c.b16 %v1554, %v1552
        %v1621 = vpack.c.b16 %v1555, %v1553
        %v1622 = vpack.c.b16 %v1558, %v1556
        %v1623 = vpack.c.b16 %v1559, %v1557
        %v1624 = vpack.c.b16 %v1562, %v1560
        %v1625 = vpack.c.b16 %v1563, %v1561
        %v1626 = vpack.c.b16 %v1566, %v1564
        %v1627 = vpack.c.b16 %v1567, %v1565
        %v1628 = vpack.c.b16 %v1570, %v1568
        %v1629 = vpack.c.b16 %v1571, %v1569
        %v1630 = vpack.c.b16 %v1574, %v1572
        %v1631 = vpack.c.b16 %v1575, %v1573
        %v1632 = vpack.c.b16 %v1578, %v1576
        %v1633 = vpack.c.b16 %v1579, %v1577
        %v1634 = vpack.c.b16 %v1582, %v1580
        %v1635 = vpack.c.b16 %v1583, %v1581
        %v1636 = vpack.c.b16 %v1586, %v1584
        %v1637 = vpack.c.b16 %v1587, %v1585
        %v1638 = vpack.c.b16 %v1590, %v1588
        %v1639 = vpack.c.b16 %v1591, %v1589
        %v1640 = vpack.c.b16 %v1594, %v1592
        %v1641 = vpack.c.b16 %v1595, %v1593
        %v1642 = vpack.c.b16 %v1598, %v1596
        %v1643 = vpack.c.b16 %v1599, %v1597
        %v1644 = vpack.c.b16 %v1602, %v1600
        %v1645 = vpack.c.b16 %v1603, %v1601
        %v1646 = vpack.c.b16 %v1606, %v1604
        %v1647 = vpack.c.b16 %v1607, %v1605
        %v1648 = vpack.c.b16 %v1610, %v1608
        %v1649 = vpack.c.b16 %v1611, %v1609
        %v1650 = vpack.c.b16 %v1614, %v1612
        %v1651 = vpack.c.b16 %v1615, %v1613
        %v1689 = vsel %vm816, %v1505, 0
        %1691 = vmatpush.bf16.msra.mxu0 %v1630
        %1692 = vmatpush.bf16.msra.mxu0 %v1628
        %1693 = vmatpush.bf16.msra.mxu0 %v1626
        %1694 = vmatpush.bf16.msra.mxu0 %v1624
        %1695 = vmatpush.bf16.msra.mxu0 %v1622
        %1696 = vmatpush.bf16.msra.mxu0 %v1620
        %1697 = vmatpush.bf16.msra.mxu0 %v1618
        %1698 = vmatpush.bf16.msra.mxu0 %v1616
        %1699 = vmatmul.bf16.gmra.mxu0 %v1503
        %v1700 = vpop.f32.mrf.mxu0
        %v1701 = vadd.f32 0.0, %v1700
        %v1702 = vpop.f32.mrf.mxu0
        %1703 = vdwg.mxu0
        %1704 = vmatpush.bf16.msra.mxu0 %v1646
        %1705 = vmatpush.bf16.msra.mxu0 %v1644
        %1706 = vmatpush.bf16.msra.mxu0 %v1642
        %1707 = vmatpush.bf16.msra.mxu0 %v1640
        %1708 = vmatpush.bf16.msra.mxu0 %v1638
        %1709 = vmatpush.bf16.msra.mxu0 %v1636
        %1710 = vmatpush.bf16.msra.mxu0 %v1634
        %1711 = vmatpush.bf16.msra.mxu0 %v1632
        %1712 = vmatmul.bf16.gmra.mxu0 %v1504
        %v1713 = vpop.f32.mrf.mxu0
        %v1714 = vadd.f32 %v1701, %v1713
        %v1715 = vpop.f32.mrf.mxu0
        %1716 = vdwg.mxu0
        %1717 = vmatpush.bf16.msra.mxu0 0
        %1718 = vmatpush.bf16.msra.mxu0 0
        %1719 = vmatpush.bf16.msra.mxu0 0
        %1720 = vmatpush.bf16.msra.mxu0 0
        %1721 = vmatpush.bf16.msra.mxu0 0
        %1722 = vmatpush.bf16.msra.mxu0 0
        %1723 = vmatpush.bf16.msra.mxu0 %v1650
        %1724 = vmatpush.bf16.msra.mxu0 %v1648
        %1725 = vmatmul.bf16.gmra.mxu0 %v1689
        %v1726 = vpop.f32.mrf.mxu0
        %v1727 = vadd.f32 %v1714, %v1726
        %v1728 = vpop.f32.mrf.mxu0
        %1729 = vdwg.mxu0
        %1730 = vmatpush.bf16.msra.mxu0 %v1631
        %1731 = vmatpush.bf16.msra.mxu0 %v1629
        %1732 = vmatpush.bf16.msra.mxu0 %v1627
        %1733 = vmatpush.bf16.msra.mxu0 %v1625
        %1734 = vmatpush.bf16.msra.mxu0 %v1623
        %1735 = vmatpush.bf16.msra.mxu0 %v1621
        %1736 = vmatpush.bf16.msra.mxu0 %v1619
        %1737 = vmatpush.bf16.msra.mxu0 %v1617
        %1738 = vmatmul.bf16.gmra.mxu0 %v1503
        %v1739 = vpop.f32.mrf.mxu0
        %v1740 = vadd.f32 0.0, %v1739
        %v1741 = vpop.f32.mrf.mxu0
        %1742 = vdwg.mxu0
        %1743 = vmatpush.bf16.msra.mxu0 %v1647
        %1744 = vmatpush.bf16.msra.mxu0 %v1645
        %1745 = vmatpush.bf16.msra.mxu0 %v1643
        %1746 = vmatpush.bf16.msra.mxu0 %v1641
        %1747 = vmatpush.bf16.msra.mxu0 %v1639
        %1748 = vmatpush.bf16.msra.mxu0 %v1637
        %1749 = vmatpush.bf16.msra.mxu0 %v1635
        %1750 = vmatpush.bf16.msra.mxu0 %v1633
        %1751 = vmatmul.bf16.gmra.mxu0 %v1504
        %v1752 = vpop.f32.mrf.mxu0
        %v1753 = vadd.f32 %v1740, %v1752
        %v1754 = vpop.f32.mrf.mxu0
        %1755 = vdwg.mxu0
        %1756 = vmatpush.bf16.msra.mxu0 0
        %1757 = vmatpush.bf16.msra.mxu0 0
        %1758 = vmatpush.bf16.msra.mxu0 0
        %1759 = vmatpush.bf16.msra.mxu0 0
        %1760 = vmatpush.bf16.msra.mxu0 0
        %1761 = vmatpush.bf16.msra.mxu0 0
        %1762 = vmatpush.bf16.msra.mxu0 %v1651
        %1763 = vmatpush.bf16.msra.mxu0 %v1649
        %1764 = vmatmul.bf16.gmra.mxu0 %v1689
        %v1765 = vpop.f32.mrf.mxu0
        %v1766 = vadd.f32 %v1753, %v1765
        %v1767 = vpop.f32.mrf.mxu0
        %1768 = vdwg.mxu0
        %v1769 = vadd.f32 %v1464, %v1727
        %v1770 = vadd.f32 %v1465, %v1766
        %s1771 = scalar_lea.vmem [#allocation4], 1152
        %v1772 = vld [vmem:[%s1771] sm:$0xff]
        %v1773 = vld [vmem:[%s1771 + $0x8] sm:$0xff]
        %v1774 = vld [vmem:[%s1771 + $0x10] sm:$0xff]
        %v1775 = vld [vmem:[%s1771 + $0x18] sm:$0xff]
        %v1776 = vld [vmem:[%s1771 + $0x20] sm:$0xff]
        %v1777 = vld [vmem:[%s1771 + $0x28] sm:$0xff]
        %v1778 = vld [vmem:[%s1771 + $0x30] sm:$0xff]
        %v1779 = vld [vmem:[%s1771 + $0x38] sm:$0xff]
        %v1780 = vld [vmem:[%s1771 + $0x40] sm:$0xff]
        %v1781 = vld [vmem:[%s1771 + $0x48] sm:$0xff]
        %v1782 = vld [vmem:[%s1771 + $0x50] sm:$0xff]
        %v1783 = vld [vmem:[%s1771 + $0x58] sm:$0xff]
        %v1784 = vld [vmem:[%s1771 + $0x60] sm:$0xff]
        %v1785 = vld [vmem:[%s1771 + $0x68] sm:$0xff]
        %v1786 = vld [vmem:[%s1771 + $0x70] sm:$0xff]
        %v1787 = vld [vmem:[%s1771 + $0x78] sm:$0xff]
        %v1788 = vld [vmem:[%s1771 + $0x80] sm:$0xff]
        %v1789 = vld [vmem:[%s1771 + $0x88] sm:$0xff]
        %v1790 = vld [vmem:[%s1771 + $0x90] sm:$0xff]
        %v1791 = vld [vmem:[%s1771 + $0x98] sm:$0xff]
        %v1792 = vld [vmem:[%s1771 + $0xa0] sm:$0xff]
        %v1793 = vld [vmem:[%s1771 + $0xa8] sm:$0xff]
        %v1794 = vld [vmem:[%s1771 + $0xb0] sm:$0xff]
        %v1795 = vld [vmem:[%s1771 + $0xb8] sm:$0xff]
        %v1796 = vld [vmem:[%s1771 + $0xc0] sm:$0xff]
        %v1797 = vld [vmem:[%s1771 + $0xc8] sm:$0xff]
        %v1798 = vld [vmem:[%s1771 + $0xd0] sm:$0xff]
        %v1799 = vld [vmem:[%s1771 + $0xd8] sm:$0xff]
        %v1800 = vld [vmem:[%s1771 + $0xe0] sm:$0xff]
        %v1801 = vld [vmem:[%s1771 + $0xe8] sm:$0xff]
        %v1802 = vld [vmem:[%s1771 + $0xf0] sm:$0xff]
        %v1803 = vld [vmem:[%s1771 + $0xf8] sm:$0xff]
        %v1804 = vld [vmem:[%s1771 + $0x100] sm:$0xff]
        %v1805 = vld [vmem:[%s1771 + $0x108] sm:$0xff]
        %v1806 = vld [vmem:[%s1771 + $0x110] sm:$0xff]
        %v1807 = vld [vmem:[%s1771 + $0x118] sm:$0xff]
        %v1808 = vrot.slane %v549, 2
        %v1809 = vrot.slane %v550, 2
        %v1810 = vrot.slane %v551, 2
        %v1849 = vunpack.c.l.b16 %v1772
        %v1850 = vunpack.c.h.b16 %v1772
        %v1851 = vunpack.c.l.b16 %v1773
        %v1852 = vunpack.c.h.b16 %v1773
        %v1853 = vunpack.c.l.b16 %v1774
        %v1854 = vunpack.c.h.b16 %v1774
        %v1855 = vunpack.c.l.b16 %v1775
        %v1856 = vunpack.c.h.b16 %v1775
        %v1857 = vunpack.c.l.b16 %v1776
        %v1858 = vunpack.c.h.b16 %v1776
        %v1859 = vunpack.c.l.b16 %v1777
        %v1860 = vunpack.c.h.b16 %v1777
        %v1861 = vunpack.c.l.b16 %v1778
        %v1862 = vunpack.c.h.b16 %v1778
        %v1863 = vunpack.c.l.b16 %v1779
        %v1864 = vunpack.c.h.b16 %v1779
        %v1865 = vunpack.c.l.b16 %v1780
        %v1866 = vunpack.c.h.b16 %v1780
        %v1867 = vunpack.c.l.b16 %v1781
        %v1868 = vunpack.c.h.b16 %v1781
        %v1869 = vunpack.c.l.b16 %v1782
        %v1870 = vunpack.c.h.b16 %v1782
        %v1871 = vunpack.c.l.b16 %v1783
        %v1872 = vunpack.c.h.b16 %v1783
        %v1873 = vunpack.c.l.b16 %v1784
        %v1874 = vunpack.c.h.b16 %v1784
        %v1875 = vunpack.c.l.b16 %v1785
        %v1876 = vunpack.c.h.b16 %v1785
        %v1877 = vunpack.c.l.b16 %v1786
        %v1878 = vunpack.c.h.b16 %v1786
        %v1879 = vunpack.c.l.b16 %v1787
        %v1880 = vunpack.c.h.b16 %v1787
        %v1881 = vunpack.c.l.b16 %v1788
        %v1882 = vunpack.c.h.b16 %v1788
        %v1883 = vunpack.c.l.b16 %v1789
        %v1884 = vunpack.c.h.b16 %v1789
        %v1885 = vunpack.c.l.b16 %v1790
        %v1886 = vunpack.c.h.b16 %v1790
        %v1887 = vunpack.c.l.b16 %v1791
        %v1888 = vunpack.c.h.b16 %v1791
        %v1889 = vunpack.c.l.b16 %v1792
        %v1890 = vunpack.c.h.b16 %v1792
        %v1891 = vunpack.c.l.b16 %v1793
        %v1892 = vunpack.c.h.b16 %v1793
        %v1893 = vunpack.c.l.b16 %v1794
        %v1894 = vunpack.c.h.b16 %v1794
        %v1895 = vunpack.c.l.b16 %v1795
        %v1896 = vunpack.c.h.b16 %v1795
        %v1897 = vunpack.c.l.b16 %v1796
        %v1898 = vunpack.c.h.b16 %v1796
        %v1899 = vunpack.c.l.b16 %v1797
        %v1900 = vunpack.c.h.b16 %v1797
        %v1901 = vunpack.c.l.b16 %v1798
        %v1902 = vunpack.c.h.b16 %v1798
        %v1903 = vunpack.c.l.b16 %v1799
        %v1904 = vunpack.c.h.b16 %v1799
        %v1905 = vunpack.c.l.b16 %v1800
        %v1906 = vunpack.c.h.b16 %v1800
        %v1907 = vunpack.c.l.b16 %v1801
        %v1908 = vunpack.c.h.b16 %v1801
        %v1909 = vunpack.c.l.b16 %v1802
        %v1910 = vunpack.c.h.b16 %v1802
        %v1911 = vunpack.c.l.b16 %v1803
        %v1912 = vunpack.c.h.b16 %v1803
        %v1913 = vunpack.c.l.b16 %v1804
        %v1914 = vunpack.c.h.b16 %v1804
        %v1915 = vunpack.c.l.b16 %v1805
        %v1916 = vunpack.c.h.b16 %v1805
        %v1917 = vunpack.c.l.b16 %v1806
        %v1918 = vunpack.c.h.b16 %v1806
        %v1919 = vunpack.c.l.b16 %v1807
        %v1920 = vunpack.c.h.b16 %v1807
        %v1921 = vpack.c.b16 %v1851, %v1849
        %v1922 = vpack.c.b16 %v1852, %v1850
        %v1923 = vpack.c.b16 %v1855, %v1853
        %v1924 = vpack.c.b16 %v1856, %v1854
        %v1925 = vpack.c.b16 %v1859, %v1857
        %v1926 = vpack.c.b16 %v1860, %v1858
        %v1927 = vpack.c.b16 %v1863, %v1861
        %v1928 = vpack.c.b16 %v1864, %v1862
        %v1929 = vpack.c.b16 %v1867, %v1865
        %v1930 = vpack.c.b16 %v1868, %v1866
        %v1931 = vpack.c.b16 %v1871, %v1869
        %v1932 = vpack.c.b16 %v1872, %v1870
        %v1933 = vpack.c.b16 %v1875, %v1873
        %v1934 = vpack.c.b16 %v1876, %v1874
        %v1935 = vpack.c.b16 %v1879, %v1877
        %v1936 = vpack.c.b16 %v1880, %v1878
        %v1937 = vpack.c.b16 %v1883, %v1881
        %v1938 = vpack.c.b16 %v1884, %v1882
        %v1939 = vpack.c.b16 %v1887, %v1885
        %v1940 = vpack.c.b16 %v1888, %v1886
        %v1941 = vpack.c.b16 %v1891, %v1889
        %v1942 = vpack.c.b16 %v1892, %v1890
        %v1943 = vpack.c.b16 %v1895, %v1893
        %v1944 = vpack.c.b16 %v1896, %v1894
        %v1945 = vpack.c.b16 %v1899, %v1897
        %v1946 = vpack.c.b16 %v1900, %v1898
        %v1947 = vpack.c.b16 %v1903, %v1901
        %v1948 = vpack.c.b16 %v1904, %v1902
        %v1949 = vpack.c.b16 %v1907, %v1905
        %v1950 = vpack.c.b16 %v1908, %v1906
        %v1951 = vpack.c.b16 %v1911, %v1909
        %v1952 = vpack.c.b16 %v1912, %v1910
        %v1953 = vpack.c.b16 %v1915, %v1913
        %v1954 = vpack.c.b16 %v1916, %v1914
        %v1955 = vpack.c.b16 %v1919, %v1917
        %v1956 = vpack.c.b16 %v1920, %v1918
        %v1994 = vsel %vm816, %v1810, 0
        %1996 = vmatpush.bf16.msra.mxu0 %v1935
        %1997 = vmatpush.bf16.msra.mxu0 %v1933
        %1998 = vmatpush.bf16.msra.mxu0 %v1931
        %1999 = vmatpush.bf16.msra.mxu0 %v1929
        %2000 = vmatpush.bf16.msra.mxu0 %v1927
        %2001 = vmatpush.bf16.msra.mxu0 %v1925
        %2002 = vmatpush.bf16.msra.mxu0 %v1923
        %2003 = vmatpush.bf16.msra.mxu0 %v1921
        %2004 = vmatmul.bf16.gmra.mxu0 %v1808
        %v2005 = vpop.f32.mrf.mxu0
        %v2006 = vadd.f32 0.0, %v2005
        %v2007 = vpop.f32.mrf.mxu0
        %2008 = vdwg.mxu0
        %2009 = vmatpush.bf16.msra.mxu0 %v1951
        %2010 = vmatpush.bf16.msra.mxu0 %v1949
        %2011 = vmatpush.bf16.msra.mxu0 %v1947
        %2012 = vmatpush.bf16.msra.mxu0 %v1945
        %2013 = vmatpush.bf16.msra.mxu0 %v1943
        %2014 = vmatpush.bf16.msra.mxu0 %v1941
        %2015 = vmatpush.bf16.msra.mxu0 %v1939
        %2016 = vmatpush.bf16.msra.mxu0 %v1937
        %2017 = vmatmul.bf16.gmra.mxu0 %v1809
        %v2018 = vpop.f32.mrf.mxu0
        %v2019 = vadd.f32 %v2006, %v2018
        %v2020 = vpop.f32.mrf.mxu0
        %2021 = vdwg.mxu0
        %2022 = vmatpush.bf16.msra.mxu0 0
        %2023 = vmatpush.bf16.msra.mxu0 0
        %2024 = vmatpush.bf16.msra.mxu0 0
        %2025 = vmatpush.bf16.msra.mxu0 0
        %2026 = vmatpush.bf16.msra.mxu0 0
        %2027 = vmatpush.bf16.msra.mxu0 0
        %2028 = vmatpush.bf16.msra.mxu0 %v1955
        %2029 = vmatpush.bf16.msra.mxu0 %v1953
        %2030 = vmatmul.bf16.gmra.mxu0 %v1994
        %v2031 = vpop.f32.mrf.mxu0
        %v2032 = vadd.f32 %v2019, %v2031
        %v2033 = vpop.f32.mrf.mxu0
        %2034 = vdwg.mxu0
        %2035 = vmatpush.bf16.msra.mxu0 %v1936
        %2036 = vmatpush.bf16.msra.mxu0 %v1934
        %2037 = vmatpush.bf16.msra.mxu0 %v1932
        %2038 = vmatpush.bf16.msra.mxu0 %v1930
        %2039 = vmatpush.bf16.msra.mxu0 %v1928
        %2040 = vmatpush.bf16.msra.mxu0 %v1926
        %2041 = vmatpush.bf16.msra.mxu0 %v1924
        %2042 = vmatpush.bf16.msra.mxu0 %v1922
        %2043 = vmatmul.bf16.gmra.mxu0 %v1808
        %v2044 = vpop.f32.mrf.mxu0
        %v2045 = vadd.f32 0.0, %v2044
        %v2046 = vpop.f32.mrf.mxu0
        %2047 = vdwg.mxu0
        %2048 = vmatpush.bf16.msra.mxu0 %v1952
        %2049 = vmatpush.bf16.msra.mxu0 %v1950
        %2050 = vmatpush.bf16.msra.mxu0 %v1948
        %2051 = vmatpush.bf16.msra.mxu0 %v1946
        %2052 = vmatpush.bf16.msra.mxu0 %v1944
        %2053 = vmatpush.bf16.msra.mxu0 %v1942
        %2054 = vmatpush.bf16.msra.mxu0 %v1940
        %2055 = vmatpush.bf16.msra.mxu0 %v1938
        %2056 = vmatmul.bf16.gmra.mxu0 %v1809
        %v2057 = vpop.f32.mrf.mxu0
        %v2058 = vadd.f32 %v2045, %v2057
        %v2059 = vpop.f32.mrf.mxu0
        %2060 = vdwg.mxu0
        %2061 = vmatpush.bf16.msra.mxu0 0
        %2062 = vmatpush.bf16.msra.mxu0 0
        %2063 = vmatpush.bf16.msra.mxu0 0
        %2064 = vmatpush.bf16.msra.mxu0 0
        %2065 = vmatpush.bf16.msra.mxu0 0
        %2066 = vmatpush.bf16.msra.mxu0 0
        %2067 = vmatpush.bf16.msra.mxu0 %v1956
        %2068 = vmatpush.bf16.msra.mxu0 %v1954
        %2069 = vmatmul.bf16.gmra.mxu0 %v1994
        %v2070 = vpop.f32.mrf.mxu0
        %v2071 = vadd.f32 %v2058, %v2070
        %v2072 = vpop.f32.mrf.mxu0
        %2073 = vdwg.mxu0
        %v2074 = vadd.f32 %v1769, %v2032
        %v2075 = vadd.f32 %v1770, %v2071
        %s2076 = scalar_lea.vmem [#allocation4], 1440
        %v2077 = vld [vmem:[%s2076] sm:$0xff]
        %v2078 = vld [vmem:[%s2076 + $0x8] sm:$0xff]
        %v2079 = vld [vmem:[%s2076 + $0x10] sm:$0xff]
        %v2080 = vld [vmem:[%s2076 + $0x18] sm:$0xff]
        %v2081 = vld [vmem:[%s2076 + $0x20] sm:$0xff]
        %v2082 = vld [vmem:[%s2076 + $0x28] sm:$0xff]
        %v2083 = vld [vmem:[%s2076 + $0x30] sm:$0xff]
        %v2084 = vld [vmem:[%s2076 + $0x38] sm:$0xff]
        %v2085 = vld [vmem:[%s2076 + $0x40] sm:$0xff]
        %v2086 = vld [vmem:[%s2076 + $0x48] sm:$0xff]
        %v2087 = vld [vmem:[%s2076 + $0x50] sm:$0xff]
        %v2088 = vld [vmem:[%s2076 + $0x58] sm:$0xff]
        %v2089 = vld [vmem:[%s2076 + $0x60] sm:$0xff]
        %v2090 = vld [vmem:[%s2076 + $0x68] sm:$0xff]
        %v2091 = vld [vmem:[%s2076 + $0x70] sm:$0xff]
        %v2092 = vld [vmem:[%s2076 + $0x78] sm:$0xff]
        %v2093 = vld [vmem:[%s2076 + $0x80] sm:$0xff]
        %v2094 = vld [vmem:[%s2076 + $0x88] sm:$0xff]
        %v2095 = vld [vmem:[%s2076 + $0x90] sm:$0xff]
        %v2096 = vld [vmem:[%s2076 + $0x98] sm:$0xff]
        %v2097 = vld [vmem:[%s2076 + $0xa0] sm:$0xff]
        %v2098 = vld [vmem:[%s2076 + $0xa8] sm:$0xff]
        %v2099 = vld [vmem:[%s2076 + $0xb0] sm:$0xff]
        %v2100 = vld [vmem:[%s2076 + $0xb8] sm:$0xff]
        %v2101 = vld [vmem:[%s2076 + $0xc0] sm:$0xff]
        %v2102 = vld [vmem:[%s2076 + $0xc8] sm:$0xff]
        %v2103 = vld [vmem:[%s2076 + $0xd0] sm:$0xff]
        %v2104 = vld [vmem:[%s2076 + $0xd8] sm:$0xff]
        %v2105 = vld [vmem:[%s2076 + $0xe0] sm:$0xff]
        %v2106 = vld [vmem:[%s2076 + $0xe8] sm:$0xff]
        %v2107 = vld [vmem:[%s2076 + $0xf0] sm:$0xff]
        %v2108 = vld [vmem:[%s2076 + $0xf8] sm:$0xff]
        %v2109 = vld [vmem:[%s2076 + $0x100] sm:$0xff]
        %v2110 = vld [vmem:[%s2076 + $0x108] sm:$0xff]
        %v2111 = vld [vmem:[%s2076 + $0x110] sm:$0xff]
        %v2112 = vld [vmem:[%s2076 + $0x118] sm:$0xff]
        %v2113 = vrot.slane %v626, 2
        %v2114 = vrot.slane %v629, 2
        %v2115 = vrot.slane %v632, 2
        %v2154 = vunpack.c.l.b16 %v2077
        %v2155 = vunpack.c.h.b16 %v2077
        %v2156 = vunpack.c.l.b16 %v2078
        %v2157 = vunpack.c.h.b16 %v2078
        %v2158 = vunpack.c.l.b16 %v2079
        %v2159 = vunpack.c.h.b16 %v2079
        %v2160 = vunpack.c.l.b16 %v2080
        %v2161 = vunpack.c.h.b16 %v2080
        %v2162 = vunpack.c.l.b16 %v2081
        %v2163 = vunpack.c.h.b16 %v2081
        %v2164 = vunpack.c.l.b16 %v2082
        %v2165 = vunpack.c.h.b16 %v2082
        %v2166 = vunpack.c.l.b16 %v2083
        %v2167 = vunpack.c.h.b16 %v2083
        %v2168 = vunpack.c.l.b16 %v2084
        %v2169 = vunpack.c.h.b16 %v2084
        %v2170 = vunpack.c.l.b16 %v2085
        %v2171 = vunpack.c.h.b16 %v2085
        %v2172 = vunpack.c.l.b16 %v2086
        %v2173 = vunpack.c.h.b16 %v2086
        %v2174 = vunpack.c.l.b16 %v2087
        %v2175 = vunpack.c.h.b16 %v2087
        %v2176 = vunpack.c.l.b16 %v2088
        %v2177 = vunpack.c.h.b16 %v2088
        %v2178 = vunpack.c.l.b16 %v2089
        %v2179 = vunpack.c.h.b16 %v2089
        %v2180 = vunpack.c.l.b16 %v2090
        %v2181 = vunpack.c.h.b16 %v2090
        %v2182 = vunpack.c.l.b16 %v2091
        %v2183 = vunpack.c.h.b16 %v2091
        %v2184 = vunpack.c.l.b16 %v2092
        %v2185 = vunpack.c.h.b16 %v2092
        %v2186 = vunpack.c.l.b16 %v2093
        %v2187 = vunpack.c.h.b16 %v2093
        %v2188 = vunpack.c.l.b16 %v2094
        %v2189 = vunpack.c.h.b16 %v2094
        %v2190 = vunpack.c.l.b16 %v2095
        %v2191 = vunpack.c.h.b16 %v2095
        %v2192 = vunpack.c.l.b16 %v2096
        %v2193 = vunpack.c.h.b16 %v2096
        %v2194 = vunpack.c.l.b16 %v2097
        %v2195 = vunpack.c.h.b16 %v2097
        %v2196 = vunpack.c.l.b16 %v2098
        %v2197 = vunpack.c.h.b16 %v2098
        %v2198 = vunpack.c.l.b16 %v2099
        %v2199 = vunpack.c.h.b16 %v2099
        %v2200 = vunpack.c.l.b16 %v2100
        %v2201 = vunpack.c.h.b16 %v2100
        %v2202 = vunpack.c.l.b16 %v2101
        %v2203 = vunpack.c.h.b16 %v2101
        %v2204 = vunpack.c.l.b16 %v2102
        %v2205 = vunpack.c.h.b16 %v2102
        %v2206 = vunpack.c.l.b16 %v2103
        %v2207 = vunpack.c.h.b16 %v2103
        %v2208 = vunpack.c.l.b16 %v2104
        %v2209 = vunpack.c.h.b16 %v2104
        %v2210 = vunpack.c.l.b16 %v2105
        %v2211 = vunpack.c.h.b16 %v2105
        %v2212 = vunpack.c.l.b16 %v2106
        %v2213 = vunpack.c.h.b16 %v2106
        %v2214 = vunpack.c.l.b16 %v2107
        %v2215 = vunpack.c.h.b16 %v2107
        %v2216 = vunpack.c.l.b16 %v2108
        %v2217 = vunpack.c.h.b16 %v2108
        %v2218 = vunpack.c.l.b16 %v2109
        %v2219 = vunpack.c.h.b16 %v2109
        %v2220 = vunpack.c.l.b16 %v2110
        %v2221 = vunpack.c.h.b16 %v2110
        %v2222 = vunpack.c.l.b16 %v2111
        %v2223 = vunpack.c.h.b16 %v2111
        %v2224 = vunpack.c.l.b16 %v2112
        %v2225 = vunpack.c.h.b16 %v2112
        %v2226 = vpack.c.b16 %v2156, %v2154
        %v2227 = vpack.c.b16 %v2157, %v2155
        %v2228 = vpack.c.b16 %v2160, %v2158
        %v2229 = vpack.c.b16 %v2161, %v2159
        %v2230 = vpack.c.b16 %v2164, %v2162
        %v2231 = vpack.c.b16 %v2165, %v2163
        %v2232 = vpack.c.b16 %v2168, %v2166
        %v2233 = vpack.c.b16 %v2169, %v2167
        %v2234 = vpack.c.b16 %v2172, %v2170
        %v2235 = vpack.c.b16 %v2173, %v2171
        %v2236 = vpack.c.b16 %v2176, %v2174
        %v2237 = vpack.c.b16 %v2177, %v2175
        %v2238 = vpack.c.b16 %v2180, %v2178
        %v2239 = vpack.c.b16 %v2181, %v2179
        %v2240 = vpack.c.b16 %v2184, %v2182
        %v2241 = vpack.c.b16 %v2185, %v2183
        %v2242 = vpack.c.b16 %v2188, %v2186
        %v2243 = vpack.c.b16 %v2189, %v2187
        %v2244 = vpack.c.b16 %v2192, %v2190
        %v2245 = vpack.c.b16 %v2193, %v2191
        %v2246 = vpack.c.b16 %v2196, %v2194
        %v2247 = vpack.c.b16 %v2197, %v2195
        %v2248 = vpack.c.b16 %v2200, %v2198
        %v2249 = vpack.c.b16 %v2201, %v2199
        %v2250 = vpack.c.b16 %v2204, %v2202
        %v2251 = vpack.c.b16 %v2205, %v2203
        %v2252 = vpack.c.b16 %v2208, %v2206
        %v2253 = vpack.c.b16 %v2209, %v2207
        %v2254 = vpack.c.b16 %v2212, %v2210
        %v2255 = vpack.c.b16 %v2213, %v2211
        %v2256 = vpack.c.b16 %v2216, %v2214
        %v2257 = vpack.c.b16 %v2217, %v2215
        %v2258 = vpack.c.b16 %v2220, %v2218
        %v2259 = vpack.c.b16 %v2221, %v2219
        %v2260 = vpack.c.b16 %v2224, %v2222
        %v2261 = vpack.c.b16 %v2225, %v2223
        %v2299 = vsel %vm816, %v2115, 0
        %2301 = vmatpush.bf16.msra.mxu0 %v2240
        %2302 = vmatpush.bf16.msra.mxu0 %v2238
        %2303 = vmatpush.bf16.msra.mxu0 %v2236
        %2304 = vmatpush.bf16.msra.mxu0 %v2234
        %2305 = vmatpush.bf16.msra.mxu0 %v2232
        %2306 = vmatpush.bf16.msra.mxu0 %v2230
        %2307 = vmatpush.bf16.msra.mxu0 %v2228
        %2308 = vmatpush.bf16.msra.mxu0 %v2226
        %2309 = vmatmul.bf16.gmra.mxu0 %v2113
        %v2310 = vpop.f32.mrf.mxu0
        %v2311 = vadd.f32 0.0, %v2310
        %v2312 = vpop.f32.mrf.mxu0
        %2313 = vdwg.mxu0
        %2314 = vmatpush.bf16.msra.mxu0 %v2256
        %2315 = vmatpush.bf16.msra.mxu0 %v2254
        %2316 = vmatpush.bf16.msra.mxu0 %v2252
        %2317 = vmatpush.bf16.msra.mxu0 %v2250
        %2318 = vmatpush.bf16.msra.mxu0 %v2248
        %2319 = vmatpush.bf16.msra.mxu0 %v2246
        %2320 = vmatpush.bf16.msra.mxu0 %v2244
        %2321 = vmatpush.bf16.msra.mxu0 %v2242
        %2322 = vmatmul.bf16.gmra.mxu0 %v2114
        %v2323 = vpop.f32.mrf.mxu0
        %v2324 = vadd.f32 %v2311, %v2323
        %v2325 = vpop.f32.mrf.mxu0
        %2326 = vdwg.mxu0
        %2327 = vmatpush.bf16.msra.mxu0 0
        %2328 = vmatpush.bf16.msra.mxu0 0
        %2329 = vmatpush.bf16.msra.mxu0 0
        %2330 = vmatpush.bf16.msra.mxu0 0
        %2331 = vmatpush.bf16.msra.mxu0 0
        %2332 = vmatpush.bf16.msra.mxu0 0
        %2333 = vmatpush.bf16.msra.mxu0 %v2260
        %2334 = vmatpush.bf16.msra.mxu0 %v2258
        %2335 = vmatmul.bf16.gmra.mxu0 %v2299
        %v2336 = vpop.f32.mrf.mxu0
        %v2337 = vadd.f32 %v2324, %v2336
        %v2338 = vpop.f32.mrf.mxu0
        %2339 = vdwg.mxu0
        %2340 = vmatpush.bf16.msra.mxu0 %v2241
        %2341 = vmatpush.bf16.msra.mxu0 %v2239
        %2342 = vmatpush.bf16.msra.mxu0 %v2237
        %2343 = vmatpush.bf16.msra.mxu0 %v2235
        %2344 = vmatpush.bf16.msra.mxu0 %v2233
        %2345 = vmatpush.bf16.msra.mxu0 %v2231
        %2346 = vmatpush.bf16.msra.mxu0 %v2229
        %2347 = vmatpush.bf16.msra.mxu0 %v2227
        %2348 = vmatmul.bf16.gmra.mxu0 %v2113
        %v2349 = vpop.f32.mrf.mxu0
        %v2350 = vadd.f32 0.0, %v2349
        %v2351 = vpop.f32.mrf.mxu0
        %2352 = vdwg.mxu0
        %2353 = vmatpush.bf16.msra.mxu0 %v2257
        %2354 = vmatpush.bf16.msra.mxu0 %v2255
        %2355 = vmatpush.bf16.msra.mxu0 %v2253
        %2356 = vmatpush.bf16.msra.mxu0 %v2251
        %2357 = vmatpush.bf16.msra.mxu0 %v2249
        %2358 = vmatpush.bf16.msra.mxu0 %v2247
        %2359 = vmatpush.bf16.msra.mxu0 %v2245
        %2360 = vmatpush.bf16.msra.mxu0 %v2243
        %2361 = vmatmul.bf16.gmra.mxu0 %v2114
        %v2362 = vpop.f32.mrf.mxu0
        %v2363 = vadd.f32 %v2350, %v2362
        %v2364 = vpop.f32.mrf.mxu0
        %2365 = vdwg.mxu0
        %2366 = vmatpush.bf16.msra.mxu0 0
        %2367 = vmatpush.bf16.msra.mxu0 0
        %2368 = vmatpush.bf16.msra.mxu0 0
        %2369 = vmatpush.bf16.msra.mxu0 0
        %2370 = vmatpush.bf16.msra.mxu0 0
        %2371 = vmatpush.bf16.msra.mxu0 0
        %2372 = vmatpush.bf16.msra.mxu0 %v2261
        %2373 = vmatpush.bf16.msra.mxu0 %v2259
        %2374 = vmatmul.bf16.gmra.mxu0 %v2299
        %v2375 = vpop.f32.mrf.mxu0
        %v2376 = vadd.f32 %v2363, %v2375
        %v2377 = vpop.f32.mrf.mxu0
        %2378 = vdwg.mxu0
        %v2379 = vadd.f32 %v2074, %v2337
        %v2380 = vadd.f32 %v2075, %v2376
        %s2381 = scalar_lea.vmem [#allocation4], 1728
        %v2382 = vld [vmem:[%s2381] sm:$0xff]
        %v2383 = vld [vmem:[%s2381 + $0x8] sm:$0xff]
        %v2384 = vld [vmem:[%s2381 + $0x10] sm:$0xff]
        %v2385 = vld [vmem:[%s2381 + $0x18] sm:$0xff]
        %v2386 = vld [vmem:[%s2381 + $0x20] sm:$0xff]
        %v2387 = vld [vmem:[%s2381 + $0x28] sm:$0xff]
        %v2388 = vld [vmem:[%s2381 + $0x30] sm:$0xff]
        %v2389 = vld [vmem:[%s2381 + $0x38] sm:$0xff]
        %v2390 = vld [vmem:[%s2381 + $0x40] sm:$0xff]
        %v2391 = vld [vmem:[%s2381 + $0x48] sm:$0xff]
        %v2392 = vld [vmem:[%s2381 + $0x50] sm:$0xff]
        %v2393 = vld [vmem:[%s2381 + $0x58] sm:$0xff]
        %v2394 = vld [vmem:[%s2381 + $0x60] sm:$0xff]
        %v2395 = vld [vmem:[%s2381 + $0x68] sm:$0xff]
        %v2396 = vld [vmem:[%s2381 + $0x70] sm:$0xff]
        %v2397 = vld [vmem:[%s2381 + $0x78] sm:$0xff]
        %v2398 = vld [vmem:[%s2381 + $0x80] sm:$0xff]
        %v2399 = vld [vmem:[%s2381 + $0x88] sm:$0xff]
        %v2400 = vld [vmem:[%s2381 + $0x90] sm:$0xff]
        %v2401 = vld [vmem:[%s2381 + $0x98] sm:$0xff]
        %v2402 = vld [vmem:[%s2381 + $0xa0] sm:$0xff]
        %v2403 = vld [vmem:[%s2381 + $0xa8] sm:$0xff]
        %v2404 = vld [vmem:[%s2381 + $0xb0] sm:$0xff]
        %v2405 = vld [vmem:[%s2381 + $0xb8] sm:$0xff]
        %v2406 = vld [vmem:[%s2381 + $0xc0] sm:$0xff]
        %v2407 = vld [vmem:[%s2381 + $0xc8] sm:$0xff]
        %v2408 = vld [vmem:[%s2381 + $0xd0] sm:$0xff]
        %v2409 = vld [vmem:[%s2381 + $0xd8] sm:$0xff]
        %v2410 = vld [vmem:[%s2381 + $0xe0] sm:$0xff]
        %v2411 = vld [vmem:[%s2381 + $0xe8] sm:$0xff]
        %v2412 = vld [vmem:[%s2381 + $0xf0] sm:$0xff]
        %v2413 = vld [vmem:[%s2381 + $0xf8] sm:$0xff]
        %v2414 = vld [vmem:[%s2381 + $0x100] sm:$0xff]
        %v2415 = vld [vmem:[%s2381 + $0x108] sm:$0xff]
        %v2416 = vld [vmem:[%s2381 + $0x110] sm:$0xff]
        %v2417 = vld [vmem:[%s2381 + $0x118] sm:$0xff]
        %v2418 = vrot.slane %v549, 3
        %v2419 = vrot.slane %v550, 3
        %v2420 = vrot.slane %v551, 3
        %v2459 = vunpack.c.l.b16 %v2382
        %v2460 = vunpack.c.h.b16 %v2382
        %v2461 = vunpack.c.l.b16 %v2383
        %v2462 = vunpack.c.h.b16 %v2383
        %v2463 = vunpack.c.l.b16 %v2384
        %v2464 = vunpack.c.h.b16 %v2384
        %v2465 = vunpack.c.l.b16 %v2385
        %v2466 = vunpack.c.h.b16 %v2385
        %v2467 = vunpack.c.l.b16 %v2386
        %v2468 = vunpack.c.h.b16 %v2386
        %v2469 = vunpack.c.l.b16 %v2387
        %v2470 = vunpack.c.h.b16 %v2387
        %v2471 = vunpack.c.l.b16 %v2388
        %v2472 = vunpack.c.h.b16 %v2388
        %v2473 = vunpack.c.l.b16 %v2389
        %v2474 = vunpack.c.h.b16 %v2389
        %v2475 = vunpack.c.l.b16 %v2390
        %v2476 = vunpack.c.h.b16 %v2390
        %v2477 = vunpack.c.l.b16 %v2391
        %v2478 = vunpack.c.h.b16 %v2391
        %v2479 = vunpack.c.l.b16 %v2392
        %v2480 = vunpack.c.h.b16 %v2392
        %v2481 = vunpack.c.l.b16 %v2393
        %v2482 = vunpack.c.h.b16 %v2393
        %v2483 = vunpack.c.l.b16 %v2394
        %v2484 = vunpack.c.h.b16 %v2394
        %v2485 = vunpack.c.l.b16 %v2395
        %v2486 = vunpack.c.h.b16 %v2395
        %v2487 = vunpack.c.l.b16 %v2396
        %v2488 = vunpack.c.h.b16 %v2396
        %v2489 = vunpack.c.l.b16 %v2397
        %v2490 = vunpack.c.h.b16 %v2397
        %v2491 = vunpack.c.l.b16 %v2398
        %v2492 = vunpack.c.h.b16 %v2398
        %v2493 = vunpack.c.l.b16 %v2399
        %v2494 = vunpack.c.h.b16 %v2399
        %v2495 = vunpack.c.l.b16 %v2400
        %v2496 = vunpack.c.h.b16 %v2400
        %v2497 = vunpack.c.l.b16 %v2401
        %v2498 = vunpack.c.h.b16 %v2401
        %v2499 = vunpack.c.l.b16 %v2402
        %v2500 = vunpack.c.h.b16 %v2402
        %v2501 = vunpack.c.l.b16 %v2403
        %v2502 = vunpack.c.h.b16 %v2403
        %v2503 = vunpack.c.l.b16 %v2404
        %v2504 = vunpack.c.h.b16 %v2404
        %v2505 = vunpack.c.l.b16 %v2405
        %v2506 = vunpack.c.h.b16 %v2405
        %v2507 = vunpack.c.l.b16 %v2406
        %v2508 = vunpack.c.h.b16 %v2406
        %v2509 = vunpack.c.l.b16 %v2407
        %v2510 = vunpack.c.h.b16 %v2407
        %v2511 = vunpack.c.l.b16 %v2408
        %v2512 = vunpack.c.h.b16 %v2408
        %v2513 = vunpack.c.l.b16 %v2409
        %v2514 = vunpack.c.h.b16 %v2409
        %v2515 = vunpack.c.l.b16 %v2410
        %v2516 = vunpack.c.h.b16 %v2410
        %v2517 = vunpack.c.l.b16 %v2411
        %v2518 = vunpack.c.h.b16 %v2411
        %v2519 = vunpack.c.l.b16 %v2412
        %v2520 = vunpack.c.h.b16 %v2412
        %v2521 = vunpack.c.l.b16 %v2413
        %v2522 = vunpack.c.h.b16 %v2413
        %v2523 = vunpack.c.l.b16 %v2414
        %v2524 = vunpack.c.h.b16 %v2414
        %v2525 = vunpack.c.l.b16 %v2415
        %v2526 = vunpack.c.h.b16 %v2415
        %v2527 = vunpack.c.l.b16 %v2416
        %v2528 = vunpack.c.h.b16 %v2416
        %v2529 = vunpack.c.l.b16 %v2417
        %v2530 = vunpack.c.h.b16 %v2417
        %v2531 = vpack.c.b16 %v2461, %v2459
        %v2532 = vpack.c.b16 %v2462, %v2460
        %v2533 = vpack.c.b16 %v2465, %v2463
        %v2534 = vpack.c.b16 %v2466, %v2464
        %v2535 = vpack.c.b16 %v2469, %v2467
        %v2536 = vpack.c.b16 %v2470, %v2468
        %v2537 = vpack.c.b16 %v2473, %v2471
        %v2538 = vpack.c.b16 %v2474, %v2472
        %v2539 = vpack.c.b16 %v2477, %v2475
        %v2540 = vpack.c.b16 %v2478, %v2476
        %v2541 = vpack.c.b16 %v2481, %v2479
        %v2542 = vpack.c.b16 %v2482, %v2480
        %v2543 = vpack.c.b16 %v2485, %v2483
        %v2544 = vpack.c.b16 %v2486, %v2484
        %v2545 = vpack.c.b16 %v2489, %v2487
        %v2546 = vpack.c.b16 %v2490, %v2488
        %v2547 = vpack.c.b16 %v2493, %v2491
        %v2548 = vpack.c.b16 %v2494, %v2492
        %v2549 = vpack.c.b16 %v2497, %v2495
        %v2550 = vpack.c.b16 %v2498, %v2496
        %v2551 = vpack.c.b16 %v2501, %v2499
        %v2552 = vpack.c.b16 %v2502, %v2500
        %v2553 = vpack.c.b16 %v2505, %v2503
        %v2554 = vpack.c.b16 %v2506, %v2504
        %v2555 = vpack.c.b16 %v2509, %v2507
        %v2556 = vpack.c.b16 %v2510, %v2508
        %v2557 = vpack.c.b16 %v2513, %v2511
        %v2558 = vpack.c.b16 %v2514, %v2512
        %v2559 = vpack.c.b16 %v2517, %v2515
        %v2560 = vpack.c.b16 %v2518, %v2516
        %v2561 = vpack.c.b16 %v2521, %v2519
        %v2562 = vpack.c.b16 %v2522, %v2520
        %v2563 = vpack.c.b16 %v2525, %v2523
        %v2564 = vpack.c.b16 %v2526, %v2524
        %v2565 = vpack.c.b16 %v2529, %v2527
        %v2566 = vpack.c.b16 %v2530, %v2528
        %v2604 = vsel %vm816, %v2420, 0
        %2606 = vmatpush.bf16.msra.mxu0 %v2545
        %2607 = vmatpush.bf16.msra.mxu0 %v2543
        %2608 = vmatpush.bf16.msra.mxu0 %v2541
        %2609 = vmatpush.bf16.msra.mxu0 %v2539
        %2610 = vmatpush.bf16.msra.mxu0 %v2537
        %2611 = vmatpush.bf16.msra.mxu0 %v2535
        %2612 = vmatpush.bf16.msra.mxu0 %v2533
        %2613 = vmatpush.bf16.msra.mxu0 %v2531
        %2614 = vmatmul.bf16.gmra.mxu0 %v2418
        %v2615 = vpop.f32.mrf.mxu0
        %v2616 = vadd.f32 0.0, %v2615
        %v2617 = vpop.f32.mrf.mxu0
        %2618 = vdwg.mxu0
        %2619 = vmatpush.bf16.msra.mxu0 %v2561
        %2620 = vmatpush.bf16.msra.mxu0 %v2559
        %2621 = vmatpush.bf16.msra.mxu0 %v2557
        %2622 = vmatpush.bf16.msra.mxu0 %v2555
        %2623 = vmatpush.bf16.msra.mxu0 %v2553
        %2624 = vmatpush.bf16.msra.mxu0 %v2551
        %2625 = vmatpush.bf16.msra.mxu0 %v2549
        %2626 = vmatpush.bf16.msra.mxu0 %v2547
        %2627 = vmatmul.bf16.gmra.mxu0 %v2419
        %v2628 = vpop.f32.mrf.mxu0
        %v2629 = vadd.f32 %v2616, %v2628
        %v2630 = vpop.f32.mrf.mxu0
        %2631 = vdwg.mxu0
        %2632 = vmatpush.bf16.msra.mxu0 0
        %2633 = vmatpush.bf16.msra.mxu0 0
        %2634 = vmatpush.bf16.msra.mxu0 0
        %2635 = vmatpush.bf16.msra.mxu0 0
        %2636 = vmatpush.bf16.msra.mxu0 0
        %2637 = vmatpush.bf16.msra.mxu0 0
        %2638 = vmatpush.bf16.msra.mxu0 %v2565
        %2639 = vmatpush.bf16.msra.mxu0 %v2563
        %2640 = vmatmul.bf16.gmra.mxu0 %v2604
        %v2641 = vpop.f32.mrf.mxu0
        %v2642 = vadd.f32 %v2629, %v2641
        %v2643 = vpop.f32.mrf.mxu0
        %2644 = vdwg.mxu0
        %2645 = vmatpush.bf16.msra.mxu0 %v2546
        %2646 = vmatpush.bf16.msra.mxu0 %v2544
        %2647 = vmatpush.bf16.msra.mxu0 %v2542
        %2648 = vmatpush.bf16.msra.mxu0 %v2540
        %2649 = vmatpush.bf16.msra.mxu0 %v2538
        %2650 = vmatpush.bf16.msra.mxu0 %v2536
        %2651 = vmatpush.bf16.msra.mxu0 %v2534
        %2652 = vmatpush.bf16.msra.mxu0 %v2532
        %2653 = vmatmul.bf16.gmra.mxu0 %v2418
        %v2654 = vpop.f32.mrf.mxu0
        %v2655 = vadd.f32 0.0, %v2654
        %v2656 = vpop.f32.mrf.mxu0
        %2657 = vdwg.mxu0
        %2658 = vmatpush.bf16.msra.mxu0 %v2562
        %2659 = vmatpush.bf16.msra.mxu0 %v2560
        %2660 = vmatpush.bf16.msra.mxu0 %v2558
        %2661 = vmatpush.bf16.msra.mxu0 %v2556
        %2662 = vmatpush.bf16.msra.mxu0 %v2554
        %2663 = vmatpush.bf16.msra.mxu0 %v2552
        %2664 = vmatpush.bf16.msra.mxu0 %v2550
        %2665 = vmatpush.bf16.msra.mxu0 %v2548
        %2666 = vmatmul.bf16.gmra.mxu0 %v2419
        %v2667 = vpop.f32.mrf.mxu0
        %v2668 = vadd.f32 %v2655, %v2667
        %v2669 = vpop.f32.mrf.mxu0
        %2670 = vdwg.mxu0
        %2671 = vmatpush.bf16.msra.mxu0 0
        %2672 = vmatpush.bf16.msra.mxu0 0
        %2673 = vmatpush.bf16.msra.mxu0 0
        %2674 = vmatpush.bf16.msra.mxu0 0
        %2675 = vmatpush.bf16.msra.mxu0 0
        %2676 = vmatpush.bf16.msra.mxu0 0
        %2677 = vmatpush.bf16.msra.mxu0 %v2566
        %2678 = vmatpush.bf16.msra.mxu0 %v2564
        %2679 = vmatmul.bf16.gmra.mxu0 %v2604
        %v2680 = vpop.f32.mrf.mxu0
        %v2681 = vadd.f32 %v2668, %v2680
        %v2682 = vpop.f32.mrf.mxu0
        %2683 = vdwg.mxu0
        %v2684 = vadd.f32 %v2379, %v2642
        %v2685 = vadd.f32 %v2380, %v2681
        %s2686 = scalar_lea.vmem [#allocation4], 2016
        %v2687 = vld [vmem:[%s2686] sm:$0xff]
        %v2688 = vld [vmem:[%s2686 + $0x8] sm:$0xff]
        %v2689 = vld [vmem:[%s2686 + $0x10] sm:$0xff]
        %v2690 = vld [vmem:[%s2686 + $0x18] sm:$0xff]
        %v2691 = vld [vmem:[%s2686 + $0x20] sm:$0xff]
        %v2692 = vld [vmem:[%s2686 + $0x28] sm:$0xff]
        %v2693 = vld [vmem:[%s2686 + $0x30] sm:$0xff]
        %v2694 = vld [vmem:[%s2686 + $0x38] sm:$0xff]
        %v2695 = vld [vmem:[%s2686 + $0x40] sm:$0xff]
        %v2696 = vld [vmem:[%s2686 + $0x48] sm:$0xff]
        %v2697 = vld [vmem:[%s2686 + $0x50] sm:$0xff]
        %v2698 = vld [vmem:[%s2686 + $0x58] sm:$0xff]
        %v2699 = vld [vmem:[%s2686 + $0x60] sm:$0xff]
        %v2700 = vld [vmem:[%s2686 + $0x68] sm:$0xff]
        %v2701 = vld [vmem:[%s2686 + $0x70] sm:$0xff]
        %v2702 = vld [vmem:[%s2686 + $0x78] sm:$0xff]
        %v2703 = vld [vmem:[%s2686 + $0x80] sm:$0xff]
        %v2704 = vld [vmem:[%s2686 + $0x88] sm:$0xff]
        %v2705 = vld [vmem:[%s2686 + $0x90] sm:$0xff]
        %v2706 = vld [vmem:[%s2686 + $0x98] sm:$0xff]
        %v2707 = vld [vmem:[%s2686 + $0xa0] sm:$0xff]
        %v2708 = vld [vmem:[%s2686 + $0xa8] sm:$0xff]
        %v2709 = vld [vmem:[%s2686 + $0xb0] sm:$0xff]
        %v2710 = vld [vmem:[%s2686 + $0xb8] sm:$0xff]
        %v2711 = vld [vmem:[%s2686 + $0xc0] sm:$0xff]
        %v2712 = vld [vmem:[%s2686 + $0xc8] sm:$0xff]
        %v2713 = vld [vmem:[%s2686 + $0xd0] sm:$0xff]
        %v2714 = vld [vmem:[%s2686 + $0xd8] sm:$0xff]
        %v2715 = vld [vmem:[%s2686 + $0xe0] sm:$0xff]
        %v2716 = vld [vmem:[%s2686 + $0xe8] sm:$0xff]
        %v2717 = vld [vmem:[%s2686 + $0xf0] sm:$0xff]
        %v2718 = vld [vmem:[%s2686 + $0xf8] sm:$0xff]
        %v2719 = vld [vmem:[%s2686 + $0x100] sm:$0xff]
        %v2720 = vld [vmem:[%s2686 + $0x108] sm:$0xff]
        %v2721 = vld [vmem:[%s2686 + $0x110] sm:$0xff]
        %v2722 = vld [vmem:[%s2686 + $0x118] sm:$0xff]
        %v2723 = vrot.slane %v626, 3
        %v2724 = vrot.slane %v629, 3
        %v2725 = vrot.slane %v632, 3
        %v2764 = vunpack.c.l.b16 %v2687
        %v2765 = vunpack.c.h.b16 %v2687
        %v2766 = vunpack.c.l.b16 %v2688
        %v2767 = vunpack.c.h.b16 %v2688
        %v2768 = vunpack.c.l.b16 %v2689
        %v2769 = vunpack.c.h.b16 %v2689
        %v2770 = vunpack.c.l.b16 %v2690
        %v2771 = vunpack.c.h.b16 %v2690
        %v2772 = vunpack.c.l.b16 %v2691
        %v2773 = vunpack.c.h.b16 %v2691
        %v2774 = vunpack.c.l.b16 %v2692
        %v2775 = vunpack.c.h.b16 %v2692
        %v2776 = vunpack.c.l.b16 %v2693
        %v2777 = vunpack.c.h.b16 %v2693
        %v2778 = vunpack.c.l.b16 %v2694
        %v2779 = vunpack.c.h.b16 %v2694
        %v2780 = vunpack.c.l.b16 %v2695
        %v2781 = vunpack.c.h.b16 %v2695
        %v2782 = vunpack.c.l.b16 %v2696
        %v2783 = vunpack.c.h.b16 %v2696
        %v2784 = vunpack.c.l.b16 %v2697
        %v2785 = vunpack.c.h.b16 %v2697
        %v2786 = vunpack.c.l.b16 %v2698
        %v2787 = vunpack.c.h.b16 %v2698
        %v2788 = vunpack.c.l.b16 %v2699
        %v2789 = vunpack.c.h.b16 %v2699
        %v2790 = vunpack.c.l.b16 %v2700
        %v2791 = vunpack.c.h.b16 %v2700
        %v2792 = vunpack.c.l.b16 %v2701
        %v2793 = vunpack.c.h.b16 %v2701
        %v2794 = vunpack.c.l.b16 %v2702
        %v2795 = vunpack.c.h.b16 %v2702
        %v2796 = vunpack.c.l.b16 %v2703
        %v2797 = vunpack.c.h.b16 %v2703
        %v2798 = vunpack.c.l.b16 %v2704
        %v2799 = vunpack.c.h.b16 %v2704
        %v2800 = vunpack.c.l.b16 %v2705
        %v2801 = vunpack.c.h.b16 %v2705
        %v2802 = vunpack.c.l.b16 %v2706
        %v2803 = vunpack.c.h.b16 %v2706
        %v2804 = vunpack.c.l.b16 %v2707
        %v2805 = vunpack.c.h.b16 %v2707
        %v2806 = vunpack.c.l.b16 %v2708
        %v2807 = vunpack.c.h.b16 %v2708
        %v2808 = vunpack.c.l.b16 %v2709
        %v2809 = vunpack.c.h.b16 %v2709
        %v2810 = vunpack.c.l.b16 %v2710
        %v2811 = vunpack.c.h.b16 %v2710
        %v2812 = vunpack.c.l.b16 %v2711
        %v2813 = vunpack.c.h.b16 %v2711
        %v2814 = vunpack.c.l.b16 %v2712
        %v2815 = vunpack.c.h.b16 %v2712
        %v2816 = vunpack.c.l.b16 %v2713
        %v2817 = vunpack.c.h.b16 %v2713
        %v2818 = vunpack.c.l.b16 %v2714
        %v2819 = vunpack.c.h.b16 %v2714
        %v2820 = vunpack.c.l.b16 %v2715
        %v2821 = vunpack.c.h.b16 %v2715
        %v2822 = vunpack.c.l.b16 %v2716
        %v2823 = vunpack.c.h.b16 %v2716
        %v2824 = vunpack.c.l.b16 %v2717
        %v2825 = vunpack.c.h.b16 %v2717
        %v2826 = vunpack.c.l.b16 %v2718
        %v2827 = vunpack.c.h.b16 %v2718
        %v2828 = vunpack.c.l.b16 %v2719
        %v2829 = vunpack.c.h.b16 %v2719
        %v2830 = vunpack.c.l.b16 %v2720
        %v2831 = vunpack.c.h.b16 %v2720
        %v2832 = vunpack.c.l.b16 %v2721
        %v2833 = vunpack.c.h.b16 %v2721
        %v2834 = vunpack.c.l.b16 %v2722
        %v2835 = vunpack.c.h.b16 %v2722
        %v2836 = vpack.c.b16 %v2766, %v2764
        %v2837 = vpack.c.b16 %v2767, %v2765
        %v2838 = vpack.c.b16 %v2770, %v2768
        %v2839 = vpack.c.b16 %v2771, %v2769
        %v2840 = vpack.c.b16 %v2774, %v2772
        %v2841 = vpack.c.b16 %v2775, %v2773
        %v2842 = vpack.c.b16 %v2778, %v2776
        %v2843 = vpack.c.b16 %v2779, %v2777
        %v2844 = vpack.c.b16 %v2782, %v2780
        %v2845 = vpack.c.b16 %v2783, %v2781
        %v2846 = vpack.c.b16 %v2786, %v2784
        %v2847 = vpack.c.b16 %v2787, %v2785
        %v2848 = vpack.c.b16 %v2790, %v2788
        %v2849 = vpack.c.b16 %v2791, %v2789
        %v2850 = vpack.c.b16 %v2794, %v2792
        %v2851 = vpack.c.b16 %v2795, %v2793
        %v2852 = vpack.c.b16 %v2798, %v2796
        %v2853 = vpack.c.b16 %v2799, %v2797
        %v2854 = vpack.c.b16 %v2802, %v2800
        %v2855 = vpack.c.b16 %v2803, %v2801
        %v2856 = vpack.c.b16 %v2806, %v2804
        %v2857 = vpack.c.b16 %v2807, %v2805
        %v2858 = vpack.c.b16 %v2810, %v2808
        %v2859 = vpack.c.b16 %v2811, %v2809
        %v2860 = vpack.c.b16 %v2814, %v2812
        %v2861 = vpack.c.b16 %v2815, %v2813
        %v2862 = vpack.c.b16 %v2818, %v2816
        %v2863 = vpack.c.b16 %v2819, %v2817
        %v2864 = vpack.c.b16 %v2822, %v2820
        %v2865 = vpack.c.b16 %v2823, %v2821
        %v2866 = vpack.c.b16 %v2826, %v2824
        %v2867 = vpack.c.b16 %v2827, %v2825
        %v2868 = vpack.c.b16 %v2830, %v2828
        %v2869 = vpack.c.b16 %v2831, %v2829
        %v2870 = vpack.c.b16 %v2834, %v2832
        %v2871 = vpack.c.b16 %v2835, %v2833
        %v2909 = vsel %vm816, %v2725, 0
        %2911 = vmatpush.bf16.msra.mxu0 %v2850
        %2912 = vmatpush.bf16.msra.mxu0 %v2848
        %2913 = vmatpush.bf16.msra.mxu0 %v2846
        %2914 = vmatpush.bf16.msra.mxu0 %v2844
        %2915 = vmatpush.bf16.msra.mxu0 %v2842
        %2916 = vmatpush.bf16.msra.mxu0 %v2840
        %2917 = vmatpush.bf16.msra.mxu0 %v2838
        %2918 = vmatpush.bf16.msra.mxu0 %v2836
        %2919 = vmatmul.bf16.gmra.mxu0 %v2723
        %v2920 = vpop.f32.mrf.mxu0
        %v2921 = vadd.f32 0.0, %v2920
        %v2922 = vpop.f32.mrf.mxu0
        %2923 = vdwg.mxu0
        %2924 = vmatpush.bf16.msra.mxu0 %v2866
        %2925 = vmatpush.bf16.msra.mxu0 %v2864
        %2926 = vmatpush.bf16.msra.mxu0 %v2862
        %2927 = vmatpush.bf16.msra.mxu0 %v2860
        %2928 = vmatpush.bf16.msra.mxu0 %v2858
        %2929 = vmatpush.bf16.msra.mxu0 %v2856
        %2930 = vmatpush.bf16.msra.mxu0 %v2854
        %2931 = vmatpush.bf16.msra.mxu0 %v2852
        %2932 = vmatmul.bf16.gmra.mxu0 %v2724
        %v2933 = vpop.f32.mrf.mxu0
        %v2934 = vadd.f32 %v2921, %v2933
        %v2935 = vpop.f32.mrf.mxu0
        %2936 = vdwg.mxu0
        %2937 = vmatpush.bf16.msra.mxu0 0
        %2938 = vmatpush.bf16.msra.mxu0 0
        %2939 = vmatpush.bf16.msra.mxu0 0
        %2940 = vmatpush.bf16.msra.mxu0 0
        %2941 = vmatpush.bf16.msra.mxu0 0
        %2942 = vmatpush.bf16.msra.mxu0 0
        %2943 = vmatpush.bf16.msra.mxu0 %v2870
        %2944 = vmatpush.bf16.msra.mxu0 %v2868
        %2945 = vmatmul.bf16.gmra.mxu0 %v2909
        %v2946 = vpop.f32.mrf.mxu0
        %v2947 = vadd.f32 %v2934, %v2946
        %v2948 = vpop.f32.mrf.mxu0
        %2949 = vdwg.mxu0
        %2950 = vmatpush.bf16.msra.mxu0 %v2851
        %2951 = vmatpush.bf16.msra.mxu0 %v2849
        %2952 = vmatpush.bf16.msra.mxu0 %v2847
        %2953 = vmatpush.bf16.msra.mxu0 %v2845
        %2954 = vmatpush.bf16.msra.mxu0 %v2843
        %2955 = vmatpush.bf16.msra.mxu0 %v2841
        %2956 = vmatpush.bf16.msra.mxu0 %v2839
        %2957 = vmatpush.bf16.msra.mxu0 %v2837
        %2958 = vmatmul.bf16.gmra.mxu0 %v2723
        %v2959 = vpop.f32.mrf.mxu0
        %v2960 = vadd.f32 0.0, %v2959
        %v2961 = vpop.f32.mrf.mxu0
        %2962 = vdwg.mxu0
        %2963 = vmatpush.bf16.msra.mxu0 %v2867
        %2964 = vmatpush.bf16.msra.mxu0 %v2865
        %2965 = vmatpush.bf16.msra.mxu0 %v2863
        %2966 = vmatpush.bf16.msra.mxu0 %v2861
        %2967 = vmatpush.bf16.msra.mxu0 %v2859
        %2968 = vmatpush.bf16.msra.mxu0 %v2857
        %2969 = vmatpush.bf16.msra.mxu0 %v2855
        %2970 = vmatpush.bf16.msra.mxu0 %v2853
        %2971 = vmatmul.bf16.gmra.mxu0 %v2724
        %v2972 = vpop.f32.mrf.mxu0
        %v2973 = vadd.f32 %v2960, %v2972
        %v2974 = vpop.f32.mrf.mxu0
        %2975 = vdwg.mxu0
        %2976 = vmatpush.bf16.msra.mxu0 0
        %2977 = vmatpush.bf16.msra.mxu0 0
        %2978 = vmatpush.bf16.msra.mxu0 0
        %2979 = vmatpush.bf16.msra.mxu0 0
        %2980 = vmatpush.bf16.msra.mxu0 0
        %2981 = vmatpush.bf16.msra.mxu0 0
        %2982 = vmatpush.bf16.msra.mxu0 %v2871
        %2983 = vmatpush.bf16.msra.mxu0 %v2869
        %2984 = vmatmul.bf16.gmra.mxu0 %v2909
        %v2985 = vpop.f32.mrf.mxu0
        %v2986 = vadd.f32 %v2973, %v2985
        %v2987 = vpop.f32.mrf.mxu0
        %2988 = vdwg.mxu0
        %v2989 = vadd.f32 %v2684, %v2947
        %v2990 = vadd.f32 %v2685, %v2986
        %v2991 = vpack.c.bf16 %v546, %v546
        %v2992 = vpack.c.bf16 %v547, %v547
        %v2993 = vpack.c.bf16 %v548, %v548
        %s2994 = scalar_lea.vmem [#allocation4], 2304
        %v2995 = vld [vmem:[%s2994] sm:$0xff]
        %v2996 = vld [vmem:[%s2994 + $0x8] sm:$0xff]
        %v2997 = vld [vmem:[%s2994 + $0x10] sm:$0xff]
        %v2998 = vld [vmem:[%s2994 + $0x18] sm:$0xff]
        %v2999 = vld [vmem:[%s2994 + $0x20] sm:$0xff]
        %v3000 = vld [vmem:[%s2994 + $0x28] sm:$0xff]
        %v3001 = vld [vmem:[%s2994 + $0x30] sm:$0xff]
        %v3002 = vld [vmem:[%s2994 + $0x38] sm:$0xff]
        %v3003 = vld [vmem:[%s2994 + $0x40] sm:$0xff]
        %v3004 = vld [vmem:[%s2994 + $0x48] sm:$0xff]
        %v3005 = vld [vmem:[%s2994 + $0x50] sm:$0xff]
        %v3006 = vld [vmem:[%s2994 + $0x58] sm:$0xff]
        %v3007 = vld [vmem:[%s2994 + $0x60] sm:$0xff]
        %v3008 = vld [vmem:[%s2994 + $0x68] sm:$0xff]
        %v3009 = vld [vmem:[%s2994 + $0x70] sm:$0xff]
        %v3010 = vld [vmem:[%s2994 + $0x78] sm:$0xff]
        %v3011 = vld [vmem:[%s2994 + $0x80] sm:$0xff]
        %v3012 = vld [vmem:[%s2994 + $0x88] sm:$0xff]
        %v3013 = vld [vmem:[%s2994 + $0x90] sm:$0xff]
        %v3014 = vld [vmem:[%s2994 + $0x98] sm:$0xff]
        %v3015 = vld [vmem:[%s2994 + $0xa0] sm:$0xff]
        %v3016 = vld [vmem:[%s2994 + $0xa8] sm:$0xff]
        %v3017 = vld [vmem:[%s2994 + $0xb0] sm:$0xff]
        %v3018 = vld [vmem:[%s2994 + $0xb8] sm:$0xff]
        %v3019 = vld [vmem:[%s2994 + $0xc0] sm:$0xff]
        %v3020 = vld [vmem:[%s2994 + $0xc8] sm:$0xff]
        %v3021 = vld [vmem:[%s2994 + $0xd0] sm:$0xff]
        %v3022 = vld [vmem:[%s2994 + $0xd8] sm:$0xff]
        %v3023 = vld [vmem:[%s2994 + $0xe0] sm:$0xff]
        %v3024 = vld [vmem:[%s2994 + $0xe8] sm:$0xff]
        %v3025 = vld [vmem:[%s2994 + $0xf0] sm:$0xff]
        %v3026 = vld [vmem:[%s2994 + $0xf8] sm:$0xff]
        %v3027 = vld [vmem:[%s2994 + $0x100] sm:$0xff]
        %v3028 = vld [vmem:[%s2994 + $0x108] sm:$0xff]
        %v3029 = vld [vmem:[%s2994 + $0x110] sm:$0xff]
        %v3030 = vld [vmem:[%s2994 + $0x118] sm:$0xff]
        %v3067 = vunpack.c.l.b16 %v2995
        %v3068 = vunpack.c.h.b16 %v2995
        %v3069 = vunpack.c.l.b16 %v2996
        %v3070 = vunpack.c.h.b16 %v2996
        %v3071 = vunpack.c.l.b16 %v2997
        %v3072 = vunpack.c.h.b16 %v2997
        %v3073 = vunpack.c.l.b16 %v2998
        %v3074 = vunpack.c.h.b16 %v2998
        %v3075 = vunpack.c.l.b16 %v2999
        %v3076 = vunpack.c.h.b16 %v2999
        %v3077 = vunpack.c.l.b16 %v3000
        %v3078 = vunpack.c.h.b16 %v3000
        %v3079 = vunpack.c.l.b16 %v3001
        %v3080 = vunpack.c.h.b16 %v3001
        %v3081 = vunpack.c.l.b16 %v3002
        %v3082 = vunpack.c.h.b16 %v3002
        %v3083 = vunpack.c.l.b16 %v3003
        %v3084 = vunpack.c.h.b16 %v3003
        %v3085 = vunpack.c.l.b16 %v3004
        %v3086 = vunpack.c.h.b16 %v3004
        %v3087 = vunpack.c.l.b16 %v3005
        %v3088 = vunpack.c.h.b16 %v3005
        %v3089 = vunpack.c.l.b16 %v3006
        %v3090 = vunpack.c.h.b16 %v3006
        %v3091 = vunpack.c.l.b16 %v3007
        %v3092 = vunpack.c.h.b16 %v3007
        %v3093 = vunpack.c.l.b16 %v3008
        %v3094 = vunpack.c.h.b16 %v3008
        %v3095 = vunpack.c.l.b16 %v3009
        %v3096 = vunpack.c.h.b16 %v3009
        %v3097 = vunpack.c.l.b16 %v3010
        %v3098 = vunpack.c.h.b16 %v3010
        %v3099 = vunpack.c.l.b16 %v3011
        %v3100 = vunpack.c.h.b16 %v3011
        %v3101 = vunpack.c.l.b16 %v3012
        %v3102 = vunpack.c.h.b16 %v3012
        %v3103 = vunpack.c.l.b16 %v3013
        %v3104 = vunpack.c.h.b16 %v3013
        %v3105 = vunpack.c.l.b16 %v3014
        %v3106 = vunpack.c.h.b16 %v3014
        %v3107 = vunpack.c.l.b16 %v3015
        %v3108 = vunpack.c.h.b16 %v3015
        %v3109 = vunpack.c.l.b16 %v3016
        %v3110 = vunpack.c.h.b16 %v3016
        %v3111 = vunpack.c.l.b16 %v3017
        %v3112 = vunpack.c.h.b16 %v3017
        %v3113 = vunpack.c.l.b16 %v3018
        %v3114 = vunpack.c.h.b16 %v3018
        %v3115 = vunpack.c.l.b16 %v3019
        %v3116 = vunpack.c.h.b16 %v3019
        %v3117 = vunpack.c.l.b16 %v3020
        %v3118 = vunpack.c.h.b16 %v3020
        %v3119 = vunpack.c.l.b16 %v3021
        %v3120 = vunpack.c.h.b16 %v3021
        %v3121 = vunpack.c.l.b16 %v3022
        %v3122 = vunpack.c.h.b16 %v3022
        %v3123 = vunpack.c.l.b16 %v3023
        %v3124 = vunpack.c.h.b16 %v3023
        %v3125 = vunpack.c.l.b16 %v3024
        %v3126 = vunpack.c.h.b16 %v3024
        %v3127 = vunpack.c.l.b16 %v3025
        %v3128 = vunpack.c.h.b16 %v3025
        %v3129 = vunpack.c.l.b16 %v3026
        %v3130 = vunpack.c.h.b16 %v3026
        %v3131 = vunpack.c.l.b16 %v3027
        %v3132 = vunpack.c.h.b16 %v3027
        %v3133 = vunpack.c.l.b16 %v3028
        %v3134 = vunpack.c.h.b16 %v3028
        %v3135 = vunpack.c.l.b16 %v3029
        %v3136 = vunpack.c.h.b16 %v3029
        %v3137 = vunpack.c.l.b16 %v3030
        %v3138 = vunpack.c.h.b16 %v3030
        %v3139 = vpack.c.b16 %v3069, %v3067
        %v3140 = vpack.c.b16 %v3070, %v3068
        %v3141 = vpack.c.b16 %v3073, %v3071
        %v3142 = vpack.c.b16 %v3074, %v3072
        %v3143 = vpack.c.b16 %v3077, %v3075
        %v3144 = vpack.c.b16 %v3078, %v3076
        %v3145 = vpack.c.b16 %v3081, %v3079
        %v3146 = vpack.c.b16 %v3082, %v3080
        %v3147 = vpack.c.b16 %v3085, %v3083
        %v3148 = vpack.c.b16 %v3086, %v3084
        %v3149 = vpack.c.b16 %v3089, %v3087
        %v3150 = vpack.c.b16 %v3090, %v3088
        %v3151 = vpack.c.b16 %v3093, %v3091
        %v3152 = vpack.c.b16 %v3094, %v3092
        %v3153 = vpack.c.b16 %v3097, %v3095
        %v3154 = vpack.c.b16 %v3098, %v3096
        %v3155 = vpack.c.b16 %v3101, %v3099
        %v3156 = vpack.c.b16 %v3102, %v3100
        %v3157 = vpack.c.b16 %v3105, %v3103
        %v3158 = vpack.c.b16 %v3106, %v3104
        %v3159 = vpack.c.b16 %v3109, %v3107
        %v3160 = vpack.c.b16 %v3110, %v3108
        %v3161 = vpack.c.b16 %v3113, %v3111
        %v3162 = vpack.c.b16 %v3114, %v3112
        %v3163 = vpack.c.b16 %v3117, %v3115
        %v3164 = vpack.c.b16 %v3118, %v3116
        %v3165 = vpack.c.b16 %v3121, %v3119
        %v3166 = vpack.c.b16 %v3122, %v3120
        %v3167 = vpack.c.b16 %v3125, %v3123
        %v3168 = vpack.c.b16 %v3126, %v3124
        %v3169 = vpack.c.b16 %v3129, %v3127
        %v3170 = vpack.c.b16 %v3130, %v3128
        %v3171 = vpack.c.b16 %v3133, %v3131
        %v3172 = vpack.c.b16 %v3134, %v3132
        %v3173 = vpack.c.b16 %v3137, %v3135
        %v3174 = vpack.c.b16 %v3138, %v3136
        %v3212 = vsel %vm816, %v2993, 0
        %3214 = vmatpush.bf16.msra.mxu0 %v3153
        %3215 = vmatpush.bf16.msra.mxu0 %v3151
        %3216 = vmatpush.bf16.msra.mxu0 %v3149
        %3217 = vmatpush.bf16.msra.mxu0 %v3147
        %3218 = vmatpush.bf16.msra.mxu0 %v3145
        %3219 = vmatpush.bf16.msra.mxu0 %v3143
        %3220 = vmatpush.bf16.msra.mxu0 %v3141
        %3221 = vmatpush.bf16.msra.mxu0 %v3139
        %3222 = vmatmul.bf16.gmra.mxu0 %v2991
        %v3223 = vpop.f32.mrf.mxu0
        %v3224 = vadd.f32 0.0, %v3223
        %v3225 = vpop.f32.mrf.mxu0
        %3226 = vdwg.mxu0
        %3227 = vmatpush.bf16.msra.mxu0 %v3169
        %3228 = vmatpush.bf16.msra.mxu0 %v3167
        %3229 = vmatpush.bf16.msra.mxu0 %v3165
        %3230 = vmatpush.bf16.msra.mxu0 %v3163
        %3231 = vmatpush.bf16.msra.mxu0 %v3161
        %3232 = vmatpush.bf16.msra.mxu0 %v3159
        %3233 = vmatpush.bf16.msra.mxu0 %v3157
        %3234 = vmatpush.bf16.msra.mxu0 %v3155
        %3235 = vmatmul.bf16.gmra.mxu0 %v2992
        %v3236 = vpop.f32.mrf.mxu0
        %v3237 = vadd.f32 %v3224, %v3236
        %v3238 = vpop.f32.mrf.mxu0
        %3239 = vdwg.mxu0
        %3240 = vmatpush.bf16.msra.mxu0 0
        %3241 = vmatpush.bf16.msra.mxu0 0
        %3242 = vmatpush.bf16.msra.mxu0 0
        %3243 = vmatpush.bf16.msra.mxu0 0
        %3244 = vmatpush.bf16.msra.mxu0 0
        %3245 = vmatpush.bf16.msra.mxu0 0
        %3246 = vmatpush.bf16.msra.mxu0 %v3173
        %3247 = vmatpush.bf16.msra.mxu0 %v3171
        %3248 = vmatmul.bf16.gmra.mxu0 %v3212
        %v3249 = vpop.f32.mrf.mxu0
        %v3250 = vadd.f32 %v3237, %v3249
        %v3251 = vpop.f32.mrf.mxu0
        %3252 = vdwg.mxu0
        %3253 = vmatpush.bf16.msra.mxu0 %v3154
        %3254 = vmatpush.bf16.msra.mxu0 %v3152
        %3255 = vmatpush.bf16.msra.mxu0 %v3150
        %3256 = vmatpush.bf16.msra.mxu0 %v3148
        %3257 = vmatpush.bf16.msra.mxu0 %v3146
        %3258 = vmatpush.bf16.msra.mxu0 %v3144
        %3259 = vmatpush.bf16.msra.mxu0 %v3142
        %3260 = vmatpush.bf16.msra.mxu0 %v3140
        %3261 = vmatmul.bf16.gmra.mxu0 %v2991
        %v3262 = vpop.f32.mrf.mxu0
        %v3263 = vadd.f32 0.0, %v3262
        %v3264 = vpop.f32.mrf.mxu0
        %3265 = vdwg.mxu0
        %3266 = vmatpush.bf16.msra.mxu0 %v3170
        %3267 = vmatpush.bf16.msra.mxu0 %v3168
        %3268 = vmatpush.bf16.msra.mxu0 %v3166
        %3269 = vmatpush.bf16.msra.mxu0 %v3164
        %3270 = vmatpush.bf16.msra.mxu0 %v3162
        %3271 = vmatpush.bf16.msra.mxu0 %v3160
        %3272 = vmatpush.bf16.msra.mxu0 %v3158
        %3273 = vmatpush.bf16.msra.mxu0 %v3156
        %3274 = vmatmul.bf16.gmra.mxu0 %v2992
        %v3275 = vpop.f32.mrf.mxu0
        %v3276 = vadd.f32 %v3263, %v3275
        %v3277 = vpop.f32.mrf.mxu0
        %3278 = vdwg.mxu0
        %3279 = vmatpush.bf16.msra.mxu0 0
        %3280 = vmatpush.bf16.msra.mxu0 0
        %3281 = vmatpush.bf16.msra.mxu0 0
        %3282 = vmatpush.bf16.msra.mxu0 0
        %3283 = vmatpush.bf16.msra.mxu0 0
        %3284 = vmatpush.bf16.msra.mxu0 0
        %3285 = vmatpush.bf16.msra.mxu0 %v3174
        %3286 = vmatpush.bf16.msra.mxu0 %v3172
        %3287 = vmatmul.bf16.gmra.mxu0 %v3212
        %v3288 = vpop.f32.mrf.mxu0
        %v3289 = vadd.f32 %v3276, %v3288
        %v3290 = vpop.f32.mrf.mxu0
        %3291 = vdwg.mxu0
        %v3292 = vadd.f32 %v2989, %v3250
        %v3293 = vadd.f32 %v2990, %v3289
        %s3294 = scalar_lea.vmem [#allocation4], 2592
        %v3295 = vld [vmem:[%s3294] sm:$0xff]
        %v3296 = vld [vmem:[%s3294 + $0x8] sm:$0xff]
        %v3297 = vld [vmem:[%s3294 + $0x10] sm:$0xff]
        %v3298 = vld [vmem:[%s3294 + $0x18] sm:$0xff]
        %v3299 = vld [vmem:[%s3294 + $0x20] sm:$0xff]
        %v3300 = vld [vmem:[%s3294 + $0x28] sm:$0xff]
        %v3301 = vld [vmem:[%s3294 + $0x30] sm:$0xff]
        %v3302 = vld [vmem:[%s3294 + $0x38] sm:$0xff]
        %v3303 = vld [vmem:[%s3294 + $0x40] sm:$0xff]
        %v3304 = vld [vmem:[%s3294 + $0x48] sm:$0xff]
        %v3305 = vld [vmem:[%s3294 + $0x50] sm:$0xff]
        %v3306 = vld [vmem:[%s3294 + $0x58] sm:$0xff]
        %v3307 = vld [vmem:[%s3294 + $0x60] sm:$0xff]
        %v3308 = vld [vmem:[%s3294 + $0x68] sm:$0xff]
        %v3309 = vld [vmem:[%s3294 + $0x70] sm:$0xff]
        %v3310 = vld [vmem:[%s3294 + $0x78] sm:$0xff]
        %v3311 = vld [vmem:[%s3294 + $0x80] sm:$0xff]
        %v3312 = vld [vmem:[%s3294 + $0x88] sm:$0xff]
        %v3313 = vld [vmem:[%s3294 + $0x90] sm:$0xff]
        %v3314 = vld [vmem:[%s3294 + $0x98] sm:$0xff]
        %v3315 = vld [vmem:[%s3294 + $0xa0] sm:$0xff]
        %v3316 = vld [vmem:[%s3294 + $0xa8] sm:$0xff]
        %v3317 = vld [vmem:[%s3294 + $0xb0] sm:$0xff]
        %v3318 = vld [vmem:[%s3294 + $0xb8] sm:$0xff]
        %v3319 = vld [vmem:[%s3294 + $0xc0] sm:$0xff]
        %v3320 = vld [vmem:[%s3294 + $0xc8] sm:$0xff]
        %v3321 = vld [vmem:[%s3294 + $0xd0] sm:$0xff]
        %v3322 = vld [vmem:[%s3294 + $0xd8] sm:$0xff]
        %v3323 = vld [vmem:[%s3294 + $0xe0] sm:$0xff]
        %v3324 = vld [vmem:[%s3294 + $0xe8] sm:$0xff]
        %v3325 = vld [vmem:[%s3294 + $0xf0] sm:$0xff]
        %v3326 = vld [vmem:[%s3294 + $0xf8] sm:$0xff]
        %v3327 = vld [vmem:[%s3294 + $0x100] sm:$0xff]
        %v3328 = vld [vmem:[%s3294 + $0x108] sm:$0xff]
        %v3329 = vld [vmem:[%s3294 + $0x110] sm:$0xff]
        %v3330 = vld [vmem:[%s3294 + $0x118] sm:$0xff]
        %v3332 = vshrl.u32 %v2991, 16
        %v3335 = vshrl.u32 %v2992, 16
        %v3337 = vshrl.u32 %v2993, 16
        %v3377 = vunpack.c.l.b16 %v3295
        %v3378 = vunpack.c.h.b16 %v3295
        %v3379 = vunpack.c.l.b16 %v3296
        %v3380 = vunpack.c.h.b16 %v3296
        %v3381 = vunpack.c.l.b16 %v3297
        %v3382 = vunpack.c.h.b16 %v3297
        %v3383 = vunpack.c.l.b16 %v3298
        %v3384 = vunpack.c.h.b16 %v3298
        %v3385 = vunpack.c.l.b16 %v3299
        %v3386 = vunpack.c.h.b16 %v3299
        %v3387 = vunpack.c.l.b16 %v3300
        %v3388 = vunpack.c.h.b16 %v3300
        %v3389 = vunpack.c.l.b16 %v3301
        %v3390 = vunpack.c.h.b16 %v3301
        %v3391 = vunpack.c.l.b16 %v3302
        %v3392 = vunpack.c.h.b16 %v3302
        %v3393 = vunpack.c.l.b16 %v3303
        %v3394 = vunpack.c.h.b16 %v3303
        %v3395 = vunpack.c.l.b16 %v3304
        %v3396 = vunpack.c.h.b16 %v3304
        %v3397 = vunpack.c.l.b16 %v3305
        %v3398 = vunpack.c.h.b16 %v3305
        %v3399 = vunpack.c.l.b16 %v3306
        %v3400 = vunpack.c.h.b16 %v3306
        %v3401 = vunpack.c.l.b16 %v3307
        %v3402 = vunpack.c.h.b16 %v3307
        %v3403 = vunpack.c.l.b16 %v3308
        %v3404 = vunpack.c.h.b16 %v3308
        %v3405 = vunpack.c.l.b16 %v3309
        %v3406 = vunpack.c.h.b16 %v3309
        %v3407 = vunpack.c.l.b16 %v3310
        %v3408 = vunpack.c.h.b16 %v3310
        %v3409 = vunpack.c.l.b16 %v3311
        %v3410 = vunpack.c.h.b16 %v3311
        %v3411 = vunpack.c.l.b16 %v3312
        %v3412 = vunpack.c.h.b16 %v3312
        %v3413 = vunpack.c.l.b16 %v3313
        %v3414 = vunpack.c.h.b16 %v3313
        %v3415 = vunpack.c.l.b16 %v3314
        %v3416 = vunpack.c.h.b16 %v3314
        %v3417 = vunpack.c.l.b16 %v3315
        %v3418 = vunpack.c.h.b16 %v3315
        %v3419 = vunpack.c.l.b16 %v3316
        %v3420 = vunpack.c.h.b16 %v3316
        %v3421 = vunpack.c.l.b16 %v3317
        %v3422 = vunpack.c.h.b16 %v3317
        %v3423 = vunpack.c.l.b16 %v3318
        %v3424 = vunpack.c.h.b16 %v3318
        %v3425 = vunpack.c.l.b16 %v3319
        %v3426 = vunpack.c.h.b16 %v3319
        %v3427 = vunpack.c.l.b16 %v3320
        %v3428 = vunpack.c.h.b16 %v3320
        %v3429 = vunpack.c.l.b16 %v3321
        %v3430 = vunpack.c.h.b16 %v3321
        %v3431 = vunpack.c.l.b16 %v3322
        %v3432 = vunpack.c.h.b16 %v3322
        %v3433 = vunpack.c.l.b16 %v3323
        %v3434 = vunpack.c.h.b16 %v3323
        %v3435 = vunpack.c.l.b16 %v3324
        %v3436 = vunpack.c.h.b16 %v3324
        %v3437 = vunpack.c.l.b16 %v3325
        %v3438 = vunpack.c.h.b16 %v3325
        %v3439 = vunpack.c.l.b16 %v3326
        %v3440 = vunpack.c.h.b16 %v3326
        %v3441 = vunpack.c.l.b16 %v3327
        %v3442 = vunpack.c.h.b16 %v3327
        %v3443 = vunpack.c.l.b16 %v3328
        %v3444 = vunpack.c.h.b16 %v3328
        %v3445 = vunpack.c.l.b16 %v3329
        %v3446 = vunpack.c.h.b16 %v3329
        %v3447 = vunpack.c.l.b16 %v3330
        %v3448 = vunpack.c.h.b16 %v3330
        %v3449 = vpack.c.b16 %v3379, %v3377
        %v3450 = vpack.c.b16 %v3380, %v3378
        %v3451 = vpack.c.b16 %v3383, %v3381
        %v3452 = vpack.c.b16 %v3384, %v3382
        %v3453 = vpack.c.b16 %v3387, %v3385
        %v3454 = vpack.c.b16 %v3388, %v3386
        %v3455 = vpack.c.b16 %v3391, %v3389
        %v3456 = vpack.c.b16 %v3392, %v3390
        %v3457 = vpack.c.b16 %v3395, %v3393
        %v3458 = vpack.c.b16 %v3396, %v3394
        %v3459 = vpack.c.b16 %v3399, %v3397
        %v3460 = vpack.c.b16 %v3400, %v3398
        %v3461 = vpack.c.b16 %v3403, %v3401
        %v3462 = vpack.c.b16 %v3404, %v3402
        %v3463 = vpack.c.b16 %v3407, %v3405
        %v3464 = vpack.c.b16 %v3408, %v3406
        %v3465 = vpack.c.b16 %v3411, %v3409
        %v3466 = vpack.c.b16 %v3412, %v3410
        %v3467 = vpack.c.b16 %v3415, %v3413
        %v3468 = vpack.c.b16 %v3416, %v3414
        %v3469 = vpack.c.b16 %v3419, %v3417
        %v3470 = vpack.c.b16 %v3420, %v3418
        %v3471 = vpack.c.b16 %v3423, %v3421
        %v3472 = vpack.c.b16 %v3424, %v3422
        %v3473 = vpack.c.b16 %v3427, %v3425
        %v3474 = vpack.c.b16 %v3428, %v3426
        %v3475 = vpack.c.b16 %v3431, %v3429
        %v3476 = vpack.c.b16 %v3432, %v3430
        %v3477 = vpack.c.b16 %v3435, %v3433
        %v3478 = vpack.c.b16 %v3436, %v3434
        %v3479 = vpack.c.b16 %v3439, %v3437
        %v3480 = vpack.c.b16 %v3440, %v3438
        %v3481 = vpack.c.b16 %v3443, %v3441
        %v3482 = vpack.c.b16 %v3444, %v3442
        %v3483 = vpack.c.b16 %v3447, %v3445
        %v3484 = vpack.c.b16 %v3448, %v3446
        %v3522 = vsel %vm816, %v3337, 0
        %3524 = vmatpush.bf16.msra.mxu0 %v3463
        %3525 = vmatpush.bf16.msra.mxu0 %v3461
        %3526 = vmatpush.bf16.msra.mxu0 %v3459
        %3527 = vmatpush.bf16.msra.mxu0 %v3457
        %3528 = vmatpush.bf16.msra.mxu0 %v3455
        %3529 = vmatpush.bf16.msra.mxu0 %v3453
        %3530 = vmatpush.bf16.msra.mxu0 %v3451
        %3531 = vmatpush.bf16.msra.mxu0 %v3449
        %3532 = vmatmul.bf16.gmra.mxu0 %v3332
        %v3533 = vpop.f32.mrf.mxu0
        %v3534 = vadd.f32 0.0, %v3533
        %v3535 = vpop.f32.mrf.mxu0
        %3536 = vdwg.mxu0
        %3537 = vmatpush.bf16.msra.mxu0 %v3479
        %3538 = vmatpush.bf16.msra.mxu0 %v3477
        %3539 = vmatpush.bf16.msra.mxu0 %v3475
        %3540 = vmatpush.bf16.msra.mxu0 %v3473
        %3541 = vmatpush.bf16.msra.mxu0 %v3471
        %3542 = vmatpush.bf16.msra.mxu0 %v3469
        %3543 = vmatpush.bf16.msra.mxu0 %v3467
        %3544 = vmatpush.bf16.msra.mxu0 %v3465
        %3545 = vmatmul.bf16.gmra.mxu0 %v3335
        %v3546 = vpop.f32.mrf.mxu0
        %v3547 = vadd.f32 %v3534, %v3546
        %v3548 = vpop.f32.mrf.mxu0
        %3549 = vdwg.mxu0
        %3550 = vmatpush.bf16.msra.mxu0 0
        %3551 = vmatpush.bf16.msra.mxu0 0
        %3552 = vmatpush.bf16.msra.mxu0 0
        %3553 = vmatpush.bf16.msra.mxu0 0
        %3554 = vmatpush.bf16.msra.mxu0 0
        %3555 = vmatpush.bf16.msra.mxu0 0
        %3556 = vmatpush.bf16.msra.mxu0 %v3483
        %3557 = vmatpush.bf16.msra.mxu0 %v3481
        %3558 = vmatmul.bf16.gmra.mxu0 %v3522
        %v3559 = vpop.f32.mrf.mxu0
        %v3560 = vadd.f32 %v3547, %v3559
        %v3561 = vpop.f32.mrf.mxu0
        %3562 = vdwg.mxu0
        %3563 = vmatpush.bf16.msra.mxu0 %v3464
        %3564 = vmatpush.bf16.msra.mxu0 %v3462
        %3565 = vmatpush.bf16.msra.mxu0 %v3460
        %3566 = vmatpush.bf16.msra.mxu0 %v3458
        %3567 = vmatpush.bf16.msra.mxu0 %v3456
        %3568 = vmatpush.bf16.msra.mxu0 %v3454
        %3569 = vmatpush.bf16.msra.mxu0 %v3452
        %3570 = vmatpush.bf16.msra.mxu0 %v3450
        %3571 = vmatmul.bf16.gmra.mxu0 %v3332
        %v3572 = vpop.f32.mrf.mxu0
        %v3573 = vadd.f32 0.0, %v3572
        %v3574 = vpop.f32.mrf.mxu0
        %3575 = vdwg.mxu0
        %3576 = vmatpush.bf16.msra.mxu0 %v3480
        %3577 = vmatpush.bf16.msra.mxu0 %v3478
        %3578 = vmatpush.bf16.msra.mxu0 %v3476
        %3579 = vmatpush.bf16.msra.mxu0 %v3474
        %3580 = vmatpush.bf16.msra.mxu0 %v3472
        %3581 = vmatpush.bf16.msra.mxu0 %v3470
        %3582 = vmatpush.bf16.msra.mxu0 %v3468
        %3583 = vmatpush.bf16.msra.mxu0 %v3466
        %3584 = vmatmul.bf16.gmra.mxu0 %v3335
        %v3585 = vpop.f32.mrf.mxu0
        %v3586 = vadd.f32 %v3573, %v3585
        %v3587 = vpop.f32.mrf.mxu0
        %3588 = vdwg.mxu0
        %3589 = vmatpush.bf16.msra.mxu0 0
        %3590 = vmatpush.bf16.msra.mxu0 0
        %3591 = vmatpush.bf16.msra.mxu0 0
        %3592 = vmatpush.bf16.msra.mxu0 0
        %3593 = vmatpush.bf16.msra.mxu0 0
        %3594 = vmatpush.bf16.msra.mxu0 0
        %3595 = vmatpush.bf16.msra.mxu0 %v3484
        %3596 = vmatpush.bf16.msra.mxu0 %v3482
        %3597 = vmatmul.bf16.gmra.mxu0 %v3522
        %v3598 = vpop.f32.mrf.mxu0
        %v3599 = vadd.f32 %v3586, %v3598
        %v3600 = vpop.f32.mrf.mxu0
        %3601 = vdwg.mxu0
        %v3602 = vadd.f32 %v3292, %v3560
        %v3603 = vadd.f32 %v3293, %v3599
        %s3604 = scalar_lea.vmem [#allocation4], 2880
        %v3605 = vld [vmem:[%s3604] sm:$0xff]
        %v3606 = vld [vmem:[%s3604 + $0x8] sm:$0xff]
        %v3607 = vld [vmem:[%s3604 + $0x10] sm:$0xff]
        %v3608 = vld [vmem:[%s3604 + $0x18] sm:$0xff]
        %v3609 = vld [vmem:[%s3604 + $0x20] sm:$0xff]
        %v3610 = vld [vmem:[%s3604 + $0x28] sm:$0xff]
        %v3611 = vld [vmem:[%s3604 + $0x30] sm:$0xff]
        %v3612 = vld [vmem:[%s3604 + $0x38] sm:$0xff]
        %v3613 = vld [vmem:[%s3604 + $0x40] sm:$0xff]
        %v3614 = vld [vmem:[%s3604 + $0x48] sm:$0xff]
        %v3615 = vld [vmem:[%s3604 + $0x50] sm:$0xff]
        %v3616 = vld [vmem:[%s3604 + $0x58] sm:$0xff]
        %v3617 = vld [vmem:[%s3604 + $0x60] sm:$0xff]
        %v3618 = vld [vmem:[%s3604 + $0x68] sm:$0xff]
        %v3619 = vld [vmem:[%s3604 + $0x70] sm:$0xff]
        %v3620 = vld [vmem:[%s3604 + $0x78] sm:$0xff]
        %v3621 = vld [vmem:[%s3604 + $0x80] sm:$0xff]
        %v3622 = vld [vmem:[%s3604 + $0x88] sm:$0xff]
        %v3623 = vld [vmem:[%s3604 + $0x90] sm:$0xff]
        %v3624 = vld [vmem:[%s3604 + $0x98] sm:$0xff]
        %v3625 = vld [vmem:[%s3604 + $0xa0] sm:$0xff]
        %v3626 = vld [vmem:[%s3604 + $0xa8] sm:$0xff]
        %v3627 = vld [vmem:[%s3604 + $0xb0] sm:$0xff]
        %v3628 = vld [vmem:[%s3604 + $0xb8] sm:$0xff]
        %v3629 = vld [vmem:[%s3604 + $0xc0] sm:$0xff]
        %v3630 = vld [vmem:[%s3604 + $0xc8] sm:$0xff]
        %v3631 = vld [vmem:[%s3604 + $0xd0] sm:$0xff]
        %v3632 = vld [vmem:[%s3604 + $0xd8] sm:$0xff]
        %v3633 = vld [vmem:[%s3604 + $0xe0] sm:$0xff]
        %v3634 = vld [vmem:[%s3604 + $0xe8] sm:$0xff]
        %v3635 = vld [vmem:[%s3604 + $0xf0] sm:$0xff]
        %v3636 = vld [vmem:[%s3604 + $0xf8] sm:$0xff]
        %v3637 = vld [vmem:[%s3604 + $0x100] sm:$0xff]
        %v3638 = vld [vmem:[%s3604 + $0x108] sm:$0xff]
        %v3639 = vld [vmem:[%s3604 + $0x110] sm:$0xff]
        %v3640 = vld [vmem:[%s3604 + $0x118] sm:$0xff]
        %v3644 = vrot.slane %v2991, 1
        %v3645 = vrot.slane %v2992, 1
        %v3646 = vrot.slane %v2993, 1
        %v3685 = vunpack.c.l.b16 %v3605
        %v3686 = vunpack.c.h.b16 %v3605
        %v3687 = vunpack.c.l.b16 %v3606
        %v3688 = vunpack.c.h.b16 %v3606
        %v3689 = vunpack.c.l.b16 %v3607
        %v3690 = vunpack.c.h.b16 %v3607
        %v3691 = vunpack.c.l.b16 %v3608
        %v3692 = vunpack.c.h.b16 %v3608
        %v3693 = vunpack.c.l.b16 %v3609
        %v3694 = vunpack.c.h.b16 %v3609
        %v3695 = vunpack.c.l.b16 %v3610
        %v3696 = vunpack.c.h.b16 %v3610
        %v3697 = vunpack.c.l.b16 %v3611
        %v3698 = vunpack.c.h.b16 %v3611
        %v3699 = vunpack.c.l.b16 %v3612
        %v3700 = vunpack.c.h.b16 %v3612
        %v3701 = vunpack.c.l.b16 %v3613
        %v3702 = vunpack.c.h.b16 %v3613
        %v3703 = vunpack.c.l.b16 %v3614
        %v3704 = vunpack.c.h.b16 %v3614
        %v3705 = vunpack.c.l.b16 %v3615
        %v3706 = vunpack.c.h.b16 %v3615
        %v3707 = vunpack.c.l.b16 %v3616
        %v3708 = vunpack.c.h.b16 %v3616
        %v3709 = vunpack.c.l.b16 %v3617
        %v3710 = vunpack.c.h.b16 %v3617
        %v3711 = vunpack.c.l.b16 %v3618
        %v3712 = vunpack.c.h.b16 %v3618
        %v3713 = vunpack.c.l.b16 %v3619
        %v3714 = vunpack.c.h.b16 %v3619
        %v3715 = vunpack.c.l.b16 %v3620
        %v3716 = vunpack.c.h.b16 %v3620
        %v3717 = vunpack.c.l.b16 %v3621
        %v3718 = vunpack.c.h.b16 %v3621
        %v3719 = vunpack.c.l.b16 %v3622
        %v3720 = vunpack.c.h.b16 %v3622
        %v3721 = vunpack.c.l.b16 %v3623
        %v3722 = vunpack.c.h.b16 %v3623
        %v3723 = vunpack.c.l.b16 %v3624
        %v3724 = vunpack.c.h.b16 %v3624
        %v3725 = vunpack.c.l.b16 %v3625
        %v3726 = vunpack.c.h.b16 %v3625
        %v3727 = vunpack.c.l.b16 %v3626
        %v3728 = vunpack.c.h.b16 %v3626
        %v3729 = vunpack.c.l.b16 %v3627
        %v3730 = vunpack.c.h.b16 %v3627
        %v3731 = vunpack.c.l.b16 %v3628
        %v3732 = vunpack.c.h.b16 %v3628
        %v3733 = vunpack.c.l.b16 %v3629
        %v3734 = vunpack.c.h.b16 %v3629
        %v3735 = vunpack.c.l.b16 %v3630
        %v3736 = vunpack.c.h.b16 %v3630
        %v3737 = vunpack.c.l.b16 %v3631
        %v3738 = vunpack.c.h.b16 %v3631
        %v3739 = vunpack.c.l.b16 %v3632
        %v3740 = vunpack.c.h.b16 %v3632
        %v3741 = vunpack.c.l.b16 %v3633
        %v3742 = vunpack.c.h.b16 %v3633
        %v3743 = vunpack.c.l.b16 %v3634
        %v3744 = vunpack.c.h.b16 %v3634
        %v3745 = vunpack.c.l.b16 %v3635
        %v3746 = vunpack.c.h.b16 %v3635
        %v3747 = vunpack.c.l.b16 %v3636
        %v3748 = vunpack.c.h.b16 %v3636
        %v3749 = vunpack.c.l.b16 %v3637
        %v3750 = vunpack.c.h.b16 %v3637
        %v3751 = vunpack.c.l.b16 %v3638
        %v3752 = vunpack.c.h.b16 %v3638
        %v3753 = vunpack.c.l.b16 %v3639
        %v3754 = vunpack.c.h.b16 %v3639
        %v3755 = vunpack.c.l.b16 %v3640
        %v3756 = vunpack.c.h.b16 %v3640
        %v3757 = vpack.c.b16 %v3687, %v3685
        %v3758 = vpack.c.b16 %v3688, %v3686
        %v3759 = vpack.c.b16 %v3691, %v3689
        %v3760 = vpack.c.b16 %v3692, %v3690
        %v3761 = vpack.c.b16 %v3695, %v3693
        %v3762 = vpack.c.b16 %v3696, %v3694
        %v3763 = vpack.c.b16 %v3699, %v3697
        %v3764 = vpack.c.b16 %v3700, %v3698
        %v3765 = vpack.c.b16 %v3703, %v3701
        %v3766 = vpack.c.b16 %v3704, %v3702
        %v3767 = vpack.c.b16 %v3707, %v3705
        %v3768 = vpack.c.b16 %v3708, %v3706
        %v3769 = vpack.c.b16 %v3711, %v3709
        %v3770 = vpack.c.b16 %v3712, %v3710
        %v3771 = vpack.c.b16 %v3715, %v3713
        %v3772 = vpack.c.b16 %v3716, %v3714
        %v3773 = vpack.c.b16 %v3719, %v3717
        %v3774 = vpack.c.b16 %v3720, %v3718
        %v3775 = vpack.c.b16 %v3723, %v3721
        %v3776 = vpack.c.b16 %v3724, %v3722
        %v3777 = vpack.c.b16 %v3727, %v3725
        %v3778 = vpack.c.b16 %v3728, %v3726
        %v3779 = vpack.c.b16 %v3731, %v3729
        %v3780 = vpack.c.b16 %v3732, %v3730
        %v3781 = vpack.c.b16 %v3735, %v3733
        %v3782 = vpack.c.b16 %v3736, %v3734
        %v3783 = vpack.c.b16 %v3739, %v3737
        %v3784 = vpack.c.b16 %v3740, %v3738
        %v3785 = vpack.c.b16 %v3743, %v3741
        %v3786 = vpack.c.b16 %v3744, %v3742
        %v3787 = vpack.c.b16 %v3747, %v3745
        %v3788 = vpack.c.b16 %v3748, %v3746
        %v3789 = vpack.c.b16 %v3751, %v3749
        %v3790 = vpack.c.b16 %v3752, %v3750
        %v3791 = vpack.c.b16 %v3755, %v3753
        %v3792 = vpack.c.b16 %v3756, %v3754
        %v3830 = vsel %vm816, %v3646, 0
        %3832 = vmatpush.bf16.msra.mxu0 %v3771
        %3833 = vmatpush.bf16.msra.mxu0 %v3769
        %3834 = vmatpush.bf16.msra.mxu0 %v3767
        %3835 = vmatpush.bf16.msra.mxu0 %v3765
        %3836 = vmatpush.bf16.msra.mxu0 %v3763
        %3837 = vmatpush.bf16.msra.mxu0 %v3761
        %3838 = vmatpush.bf16.msra.mxu0 %v3759
        %3839 = vmatpush.bf16.msra.mxu0 %v3757
        %3840 = vmatmul.bf16.gmra.mxu0 %v3644
        %v3841 = vpop.f32.mrf.mxu0
        %v3842 = vadd.f32 0.0, %v3841
        %v3843 = vpop.f32.mrf.mxu0
        %3844 = vdwg.mxu0
        %3845 = vmatpush.bf16.msra.mxu0 %v3787
        %3846 = vmatpush.bf16.msra.mxu0 %v3785
        %3847 = vmatpush.bf16.msra.mxu0 %v3783
        %3848 = vmatpush.bf16.msra.mxu0 %v3781
        %3849 = vmatpush.bf16.msra.mxu0 %v3779
        %3850 = vmatpush.bf16.msra.mxu0 %v3777
        %3851 = vmatpush.bf16.msra.mxu0 %v3775
        %3852 = vmatpush.bf16.msra.mxu0 %v3773
        %3853 = vmatmul.bf16.gmra.mxu0 %v3645
        %v3854 = vpop.f32.mrf.mxu0
        %v3855 = vadd.f32 %v3842, %v3854
        %v3856 = vpop.f32.mrf.mxu0
        %3857 = vdwg.mxu0
        %3858 = vmatpush.bf16.msra.mxu0 0
        %3859 = vmatpush.bf16.msra.mxu0 0
        %3860 = vmatpush.bf16.msra.mxu0 0
        %3861 = vmatpush.bf16.msra.mxu0 0
        %3862 = vmatpush.bf16.msra.mxu0 0
        %3863 = vmatpush.bf16.msra.mxu0 0
        %3864 = vmatpush.bf16.msra.mxu0 %v3791
        %3865 = vmatpush.bf16.msra.mxu0 %v3789
        %3866 = vmatmul.bf16.gmra.mxu0 %v3830
        %v3867 = vpop.f32.mrf.mxu0
        %v3868 = vadd.f32 %v3855, %v3867
        %v3869 = vpop.f32.mrf.mxu0
        %3870 = vdwg.mxu0
        %3871 = vmatpush.bf16.msra.mxu0 %v3772
        %3872 = vmatpush.bf16.msra.mxu0 %v3770
        %3873 = vmatpush.bf16.msra.mxu0 %v3768
        %3874 = vmatpush.bf16.msra.mxu0 %v3766
        %3875 = vmatpush.bf16.msra.mxu0 %v3764
        %3876 = vmatpush.bf16.msra.mxu0 %v3762
        %3877 = vmatpush.bf16.msra.mxu0 %v3760
        %3878 = vmatpush.bf16.msra.mxu0 %v3758
        %3879 = vmatmul.bf16.gmra.mxu0 %v3644
        %v3880 = vpop.f32.mrf.mxu0
        %v3881 = vadd.f32 0.0, %v3880
        %v3882 = vpop.f32.mrf.mxu0
        %3883 = vdwg.mxu0
        %3884 = vmatpush.bf16.msra.mxu0 %v3788
        %3885 = vmatpush.bf16.msra.mxu0 %v3786
        %3886 = vmatpush.bf16.msra.mxu0 %v3784
        %3887 = vmatpush.bf16.msra.mxu0 %v3782
        %3888 = vmatpush.bf16.msra.mxu0 %v3780
        %3889 = vmatpush.bf16.msra.mxu0 %v3778
        %3890 = vmatpush.bf16.msra.mxu0 %v3776
        %3891 = vmatpush.bf16.msra.mxu0 %v3774
        %3892 = vmatmul.bf16.gmra.mxu0 %v3645
        %v3893 = vpop.f32.mrf.mxu0
        %v3894 = vadd.f32 %v3881, %v3893
        %v3895 = vpop.f32.mrf.mxu0
        %3896 = vdwg.mxu0
        %3897 = vmatpush.bf16.msra.mxu0 0
        %3898 = vmatpush.bf16.msra.mxu0 0
        %3899 = vmatpush.bf16.msra.mxu0 0
        %3900 = vmatpush.bf16.msra.mxu0 0
        %3901 = vmatpush.bf16.msra.mxu0 0
        %3902 = vmatpush.bf16.msra.mxu0 0
        %3903 = vmatpush.bf16.msra.mxu0 %v3792
        %3904 = vmatpush.bf16.msra.mxu0 %v3790
        %3905 = vmatmul.bf16.gmra.mxu0 %v3830
        %v3906 = vpop.f32.mrf.mxu0
        %v3907 = vadd.f32 %v3894, %v3906
        %v3908 = vpop.f32.mrf.mxu0
        %3909 = vdwg.mxu0
        %v3910 = vadd.f32 %v3602, %v3868
        %v3911 = vadd.f32 %v3603, %v3907
        %s3912 = scalar_lea.vmem [#allocation4], 3168
        %v3913 = vld [vmem:[%s3912] sm:$0xff]
        %v3914 = vld [vmem:[%s3912 + $0x8] sm:$0xff]
        %v3915 = vld [vmem:[%s3912 + $0x10] sm:$0xff]
        %v3916 = vld [vmem:[%s3912 + $0x18] sm:$0xff]
        %v3917 = vld [vmem:[%s3912 + $0x20] sm:$0xff]
        %v3918 = vld [vmem:[%s3912 + $0x28] sm:$0xff]
        %v3919 = vld [vmem:[%s3912 + $0x30] sm:$0xff]
        %v3920 = vld [vmem:[%s3912 + $0x38] sm:$0xff]
        %v3921 = vld [vmem:[%s3912 + $0x40] sm:$0xff]
        %v3922 = vld [vmem:[%s3912 + $0x48] sm:$0xff]
        %v3923 = vld [vmem:[%s3912 + $0x50] sm:$0xff]
        %v3924 = vld [vmem:[%s3912 + $0x58] sm:$0xff]
        %v3925 = vld [vmem:[%s3912 + $0x60] sm:$0xff]
        %v3926 = vld [vmem:[%s3912 + $0x68] sm:$0xff]
        %v3927 = vld [vmem:[%s3912 + $0x70] sm:$0xff]
        %v3928 = vld [vmem:[%s3912 + $0x78] sm:$0xff]
        %v3929 = vld [vmem:[%s3912 + $0x80] sm:$0xff]
        %v3930 = vld [vmem:[%s3912 + $0x88] sm:$0xff]
        %v3931 = vld [vmem:[%s3912 + $0x90] sm:$0xff]
        %v3932 = vld [vmem:[%s3912 + $0x98] sm:$0xff]
        %v3933 = vld [vmem:[%s3912 + $0xa0] sm:$0xff]
        %v3934 = vld [vmem:[%s3912 + $0xa8] sm:$0xff]
        %v3935 = vld [vmem:[%s3912 + $0xb0] sm:$0xff]
        %v3936 = vld [vmem:[%s3912 + $0xb8] sm:$0xff]
        %v3937 = vld [vmem:[%s3912 + $0xc0] sm:$0xff]
        %v3938 = vld [vmem:[%s3912 + $0xc8] sm:$0xff]
        %v3939 = vld [vmem:[%s3912 + $0xd0] sm:$0xff]
        %v3940 = vld [vmem:[%s3912 + $0xd8] sm:$0xff]
        %v3941 = vld [vmem:[%s3912 + $0xe0] sm:$0xff]
        %v3942 = vld [vmem:[%s3912 + $0xe8] sm:$0xff]
        %v3943 = vld [vmem:[%s3912 + $0xf0] sm:$0xff]
        %v3944 = vld [vmem:[%s3912 + $0xf8] sm:$0xff]
        %v3945 = vld [vmem:[%s3912 + $0x100] sm:$0xff]
        %v3946 = vld [vmem:[%s3912 + $0x108] sm:$0xff]
        %v3947 = vld [vmem:[%s3912 + $0x110] sm:$0xff]
        %v3948 = vld [vmem:[%s3912 + $0x118] sm:$0xff]
        %v3949 = vrot.slane %v3332, 1
        %v3950 = vrot.slane %v3335, 1
        %v3951 = vrot.slane %v3337, 1
        %v3990 = vunpack.c.l.b16 %v3913
        %v3991 = vunpack.c.h.b16 %v3913
        %v3992 = vunpack.c.l.b16 %v3914
        %v3993 = vunpack.c.h.b16 %v3914
        %v3994 = vunpack.c.l.b16 %v3915
        %v3995 = vunpack.c.h.b16 %v3915
        %v3996 = vunpack.c.l.b16 %v3916
        %v3997 = vunpack.c.h.b16 %v3916
        %v3998 = vunpack.c.l.b16 %v3917
        %v3999 = vunpack.c.h.b16 %v3917
        %v4000 = vunpack.c.l.b16 %v3918
        %v4001 = vunpack.c.h.b16 %v3918
        %v4002 = vunpack.c.l.b16 %v3919
        %v4003 = vunpack.c.h.b16 %v3919
        %v4004 = vunpack.c.l.b16 %v3920
        %v4005 = vunpack.c.h.b16 %v3920
        %v4006 = vunpack.c.l.b16 %v3921
        %v4007 = vunpack.c.h.b16 %v3921
        %v4008 = vunpack.c.l.b16 %v3922
        %v4009 = vunpack.c.h.b16 %v3922
        %v4010 = vunpack.c.l.b16 %v3923
        %v4011 = vunpack.c.h.b16 %v3923
        %v4012 = vunpack.c.l.b16 %v3924
        %v4013 = vunpack.c.h.b16 %v3924
        %v4014 = vunpack.c.l.b16 %v3925
        %v4015 = vunpack.c.h.b16 %v3925
        %v4016 = vunpack.c.l.b16 %v3926
        %v4017 = vunpack.c.h.b16 %v3926
        %v4018 = vunpack.c.l.b16 %v3927
        %v4019 = vunpack.c.h.b16 %v3927
        %v4020 = vunpack.c.l.b16 %v3928
        %v4021 = vunpack.c.h.b16 %v3928
        %v4022 = vunpack.c.l.b16 %v3929
        %v4023 = vunpack.c.h.b16 %v3929
        %v4024 = vunpack.c.l.b16 %v3930
        %v4025 = vunpack.c.h.b16 %v3930
        %v4026 = vunpack.c.l.b16 %v3931
        %v4027 = vunpack.c.h.b16 %v3931
        %v4028 = vunpack.c.l.b16 %v3932
        %v4029 = vunpack.c.h.b16 %v3932
        %v4030 = vunpack.c.l.b16 %v3933
        %v4031 = vunpack.c.h.b16 %v3933
        %v4032 = vunpack.c.l.b16 %v3934
        %v4033 = vunpack.c.h.b16 %v3934
        %v4034 = vunpack.c.l.b16 %v3935
        %v4035 = vunpack.c.h.b16 %v3935
        %v4036 = vunpack.c.l.b16 %v3936
        %v4037 = vunpack.c.h.b16 %v3936
        %v4038 = vunpack.c.l.b16 %v3937
        %v4039 = vunpack.c.h.b16 %v3937
        %v4040 = vunpack.c.l.b16 %v3938
        %v4041 = vunpack.c.h.b16 %v3938
        %v4042 = vunpack.c.l.b16 %v3939
        %v4043 = vunpack.c.h.b16 %v3939
        %v4044 = vunpack.c.l.b16 %v3940
        %v4045 = vunpack.c.h.b16 %v3940
        %v4046 = vunpack.c.l.b16 %v3941
        %v4047 = vunpack.c.h.b16 %v3941
        %v4048 = vunpack.c.l.b16 %v3942
        %v4049 = vunpack.c.h.b16 %v3942
        %v4050 = vunpack.c.l.b16 %v3943
        %v4051 = vunpack.c.h.b16 %v3943
        %v4052 = vunpack.c.l.b16 %v3944
        %v4053 = vunpack.c.h.b16 %v3944
        %v4054 = vunpack.c.l.b16 %v3945
        %v4055 = vunpack.c.h.b16 %v3945
        %v4056 = vunpack.c.l.b16 %v3946
        %v4057 = vunpack.c.h.b16 %v3946
        %v4058 = vunpack.c.l.b16 %v3947
        %v4059 = vunpack.c.h.b16 %v3947
        %v4060 = vunpack.c.l.b16 %v3948
        %v4061 = vunpack.c.h.b16 %v3948
        %v4062 = vpack.c.b16 %v3992, %v3990
        %v4063 = vpack.c.b16 %v3993, %v3991
        %v4064 = vpack.c.b16 %v3996, %v3994
        %v4065 = vpack.c.b16 %v3997, %v3995
        %v4066 = vpack.c.b16 %v4000, %v3998
        %v4067 = vpack.c.b16 %v4001, %v3999
        %v4068 = vpack.c.b16 %v4004, %v4002
        %v4069 = vpack.c.b16 %v4005, %v4003
        %v4070 = vpack.c.b16 %v4008, %v4006
        %v4071 = vpack.c.b16 %v4009, %v4007
        %v4072 = vpack.c.b16 %v4012, %v4010
        %v4073 = vpack.c.b16 %v4013, %v4011
        %v4074 = vpack.c.b16 %v4016, %v4014
        %v4075 = vpack.c.b16 %v4017, %v4015
        %v4076 = vpack.c.b16 %v4020, %v4018
        %v4077 = vpack.c.b16 %v4021, %v4019
        %v4078 = vpack.c.b16 %v4024, %v4022
        %v4079 = vpack.c.b16 %v4025, %v4023
        %v4080 = vpack.c.b16 %v4028, %v4026
        %v4081 = vpack.c.b16 %v4029, %v4027
        %v4082 = vpack.c.b16 %v4032, %v4030
        %v4083 = vpack.c.b16 %v4033, %v4031
        %v4084 = vpack.c.b16 %v4036, %v4034
        %v4085 = vpack.c.b16 %v4037, %v4035
        %v4086 = vpack.c.b16 %v4040, %v4038
        %v4087 = vpack.c.b16 %v4041, %v4039
        %v4088 = vpack.c.b16 %v4044, %v4042
        %v4089 = vpack.c.b16 %v4045, %v4043
        %v4090 = vpack.c.b16 %v4048, %v4046
        %v4091 = vpack.c.b16 %v4049, %v4047
        %v4092 = vpack.c.b16 %v4052, %v4050
        %v4093 = vpack.c.b16 %v4053, %v4051
        %v4094 = vpack.c.b16 %v4056, %v4054
        %v4095 = vpack.c.b16 %v4057, %v4055
        %v4096 = vpack.c.b16 %v4060, %v4058
        %v4097 = vpack.c.b16 %v4061, %v4059
        %v4135 = vsel %vm816, %v3951, 0
        %4137 = vmatpush.bf16.msra.mxu0 %v4076
        %4138 = vmatpush.bf16.msra.mxu0 %v4074
        %4139 = vmatpush.bf16.msra.mxu0 %v4072
        %4140 = vmatpush.bf16.msra.mxu0 %v4070
        %4141 = vmatpush.bf16.msra.mxu0 %v4068
        %4142 = vmatpush.bf16.msra.mxu0 %v4066
        %4143 = vmatpush.bf16.msra.mxu0 %v4064
        %4144 = vmatpush.bf16.msra.mxu0 %v4062
        %4145 = vmatmul.bf16.gmra.mxu0 %v3949
        %v4146 = vpop.f32.mrf.mxu0
        %v4147 = vadd.f32 0.0, %v4146
        %v4148 = vpop.f32.mrf.mxu0
        %4149 = vdwg.mxu0
        %4150 = vmatpush.bf16.msra.mxu0 %v4092
        %4151 = vmatpush.bf16.msra.mxu0 %v4090
        %4152 = vmatpush.bf16.msra.mxu0 %v4088
        %4153 = vmatpush.bf16.msra.mxu0 %v4086
        %4154 = vmatpush.bf16.msra.mxu0 %v4084
        %4155 = vmatpush.bf16.msra.mxu0 %v4082
        %4156 = vmatpush.bf16.msra.mxu0 %v4080
        %4157 = vmatpush.bf16.msra.mxu0 %v4078
        %4158 = vmatmul.bf16.gmra.mxu0 %v3950
        %v4159 = vpop.f32.mrf.mxu0
        %v4160 = vadd.f32 %v4147, %v4159
        %v4161 = vpop.f32.mrf.mxu0
        %4162 = vdwg.mxu0
        %4163 = vmatpush.bf16.msra.mxu0 0
        %4164 = vmatpush.bf16.msra.mxu0 0
        %4165 = vmatpush.bf16.msra.mxu0 0
        %4166 = vmatpush.bf16.msra.mxu0 0
        %4167 = vmatpush.bf16.msra.mxu0 0
        %4168 = vmatpush.bf16.msra.mxu0 0
        %4169 = vmatpush.bf16.msra.mxu0 %v4096
        %4170 = vmatpush.bf16.msra.mxu0 %v4094
        %4171 = vmatmul.bf16.gmra.mxu0 %v4135
        %v4172 = vpop.f32.mrf.mxu0
        %v4173 = vadd.f32 %v4160, %v4172
        %v4174 = vpop.f32.mrf.mxu0
        %4175 = vdwg.mxu0
        %4176 = vmatpush.bf16.msra.mxu0 %v4077
        %4177 = vmatpush.bf16.msra.mxu0 %v4075
        %4178 = vmatpush.bf16.msra.mxu0 %v4073
        %4179 = vmatpush.bf16.msra.mxu0 %v4071
        %4180 = vmatpush.bf16.msra.mxu0 %v4069
        %4181 = vmatpush.bf16.msra.mxu0 %v4067
        %4182 = vmatpush.bf16.msra.mxu0 %v4065
        %4183 = vmatpush.bf16.msra.mxu0 %v4063
        %4184 = vmatmul.bf16.gmra.mxu0 %v3949
        %v4185 = vpop.f32.mrf.mxu0
        %v4186 = vadd.f32 0.0, %v4185
        %v4187 = vpop.f32.mrf.mxu0
        %4188 = vdwg.mxu0
        %4189 = vmatpush.bf16.msra.mxu0 %v4093
        %4190 = vmatpush.bf16.msra.mxu0 %v4091
        %4191 = vmatpush.bf16.msra.mxu0 %v4089
        %4192 = vmatpush.bf16.msra.mxu0 %v4087
        %4193 = vmatpush.bf16.msra.mxu0 %v4085
        %4194 = vmatpush.bf16.msra.mxu0 %v4083
        %4195 = vmatpush.bf16.msra.mxu0 %v4081
        %4196 = vmatpush.bf16.msra.mxu0 %v4079
        %4197 = vmatmul.bf16.gmra.mxu0 %v3950
        %v4198 = vpop.f32.mrf.mxu0
        %v4199 = vadd.f32 %v4186, %v4198
        %v4200 = vpop.f32.mrf.mxu0
        %4201 = vdwg.mxu0
        %4202 = vmatpush.bf16.msra.mxu0 0
        %4203 = vmatpush.bf16.msra.mxu0 0
        %4204 = vmatpush.bf16.msra.mxu0 0
        %4205 = vmatpush.bf16.msra.mxu0 0
        %4206 = vmatpush.bf16.msra.mxu0 0
        %4207 = vmatpush.bf16.msra.mxu0 0
        %4208 = vmatpush.bf16.msra.mxu0 %v4097
        %4209 = vmatpush.bf16.msra.mxu0 %v4095
        %4210 = vmatmul.bf16.gmra.mxu0 %v4135
        %v4211 = vpop.f32.mrf.mxu0
        %v4212 = vadd.f32 %v4199, %v4211
        %v4213 = vpop.f32.mrf.mxu0
        %4214 = vdwg.mxu0
        %v4215 = vadd.f32 %v3910, %v4173
        %v4216 = vadd.f32 %v3911, %v4212
        %s4217 = scalar_lea.vmem [#allocation4], 3456
        %v4218 = vld [vmem:[%s4217] sm:$0xff]
        %v4219 = vld [vmem:[%s4217 + $0x8] sm:$0xff]
        %v4220 = vld [vmem:[%s4217 + $0x10] sm:$0xff]
        %v4221 = vld [vmem:[%s4217 + $0x18] sm:$0xff]
        %v4222 = vld [vmem:[%s4217 + $0x20] sm:$0xff]
        %v4223 = vld [vmem:[%s4217 + $0x28] sm:$0xff]
        %v4224 = vld [vmem:[%s4217 + $0x30] sm:$0xff]
        %v4225 = vld [vmem:[%s4217 + $0x38] sm:$0xff]
        %v4226 = vld [vmem:[%s4217 + $0x40] sm:$0xff]
        %v4227 = vld [vmem:[%s4217 + $0x48] sm:$0xff]
        %v4228 = vld [vmem:[%s4217 + $0x50] sm:$0xff]
        %v4229 = vld [vmem:[%s4217 + $0x58] sm:$0xff]
        %v4230 = vld [vmem:[%s4217 + $0x60] sm:$0xff]
        %v4231 = vld [vmem:[%s4217 + $0x68] sm:$0xff]
        %v4232 = vld [vmem:[%s4217 + $0x70] sm:$0xff]
        %v4233 = vld [vmem:[%s4217 + $0x78] sm:$0xff]
        %v4234 = vld [vmem:[%s4217 + $0x80] sm:$0xff]
        %v4235 = vld [vmem:[%s4217 + $0x88] sm:$0xff]
        %v4236 = vld [vmem:[%s4217 + $0x90] sm:$0xff]
        %v4237 = vld [vmem:[%s4217 + $0x98] sm:$0xff]
        %v4238 = vld [vmem:[%s4217 + $0xa0] sm:$0xff]
        %v4239 = vld [vmem:[%s4217 + $0xa8] sm:$0xff]
        %v4240 = vld [vmem:[%s4217 + $0xb0] sm:$0xff]
        %v4241 = vld [vmem:[%s4217 + $0xb8] sm:$0xff]
        %v4242 = vld [vmem:[%s4217 + $0xc0] sm:$0xff]
        %v4243 = vld [vmem:[%s4217 + $0xc8] sm:$0xff]
        %v4244 = vld [vmem:[%s4217 + $0xd0] sm:$0xff]
        %v4245 = vld [vmem:[%s4217 + $0xd8] sm:$0xff]
        %v4246 = vld [vmem:[%s4217 + $0xe0] sm:$0xff]
        %v4247 = vld [vmem:[%s4217 + $0xe8] sm:$0xff]
        %v4248 = vld [vmem:[%s4217 + $0xf0] sm:$0xff]
        %v4249 = vld [vmem:[%s4217 + $0xf8] sm:$0xff]
        %v4250 = vld [vmem:[%s4217 + $0x100] sm:$0xff]
        %v4251 = vld [vmem:[%s4217 + $0x108] sm:$0xff]
        %v4252 = vld [vmem:[%s4217 + $0x110] sm:$0xff]
        %v4253 = vld [vmem:[%s4217 + $0x118] sm:$0xff]
        %v4254 = vrot.slane %v2991, 2
        %v4255 = vrot.slane %v2992, 2
        %v4256 = vrot.slane %v2993, 2
        %v4295 = vunpack.c.l.b16 %v4218
        %v4296 = vunpack.c.h.b16 %v4218
        %v4297 = vunpack.c.l.b16 %v4219
        %v4298 = vunpack.c.h.b16 %v4219
        %v4299 = vunpack.c.l.b16 %v4220
        %v4300 = vunpack.c.h.b16 %v4220
        %v4301 = vunpack.c.l.b16 %v4221
        %v4302 = vunpack.c.h.b16 %v4221
        %v4303 = vunpack.c.l.b16 %v4222
        %v4304 = vunpack.c.h.b16 %v4222
        %v4305 = vunpack.c.l.b16 %v4223
        %v4306 = vunpack.c.h.b16 %v4223
        %v4307 = vunpack.c.l.b16 %v4224
        %v4308 = vunpack.c.h.b16 %v4224
        %v4309 = vunpack.c.l.b16 %v4225
        %v4310 = vunpack.c.h.b16 %v4225
        %v4311 = vunpack.c.l.b16 %v4226
        %v4312 = vunpack.c.h.b16 %v4226
        %v4313 = vunpack.c.l.b16 %v4227
        %v4314 = vunpack.c.h.b16 %v4227
        %v4315 = vunpack.c.l.b16 %v4228
        %v4316 = vunpack.c.h.b16 %v4228
        %v4317 = vunpack.c.l.b16 %v4229
        %v4318 = vunpack.c.h.b16 %v4229
        %v4319 = vunpack.c.l.b16 %v4230
        %v4320 = vunpack.c.h.b16 %v4230
        %v4321 = vunpack.c.l.b16 %v4231
        %v4322 = vunpack.c.h.b16 %v4231
        %v4323 = vunpack.c.l.b16 %v4232
        %v4324 = vunpack.c.h.b16 %v4232
        %v4325 = vunpack.c.l.b16 %v4233
        %v4326 = vunpack.c.h.b16 %v4233
        %v4327 = vunpack.c.l.b16 %v4234
        %v4328 = vunpack.c.h.b16 %v4234
        %v4329 = vunpack.c.l.b16 %v4235
        %v4330 = vunpack.c.h.b16 %v4235
        %v4331 = vunpack.c.l.b16 %v4236
        %v4332 = vunpack.c.h.b16 %v4236
        %v4333 = vunpack.c.l.b16 %v4237
        %v4334 = vunpack.c.h.b16 %v4237
        %v4335 = vunpack.c.l.b16 %v4238
        %v4336 = vunpack.c.h.b16 %v4238
        %v4337 = vunpack.c.l.b16 %v4239
        %v4338 = vunpack.c.h.b16 %v4239
        %v4339 = vunpack.c.l.b16 %v4240
        %v4340 = vunpack.c.h.b16 %v4240
        %v4341 = vunpack.c.l.b16 %v4241
        %v4342 = vunpack.c.h.b16 %v4241
        %v4343 = vunpack.c.l.b16 %v4242
        %v4344 = vunpack.c.h.b16 %v4242
        %v4345 = vunpack.c.l.b16 %v4243
        %v4346 = vunpack.c.h.b16 %v4243
        %v4347 = vunpack.c.l.b16 %v4244
        %v4348 = vunpack.c.h.b16 %v4244
        %v4349 = vunpack.c.l.b16 %v4245
        %v4350 = vunpack.c.h.b16 %v4245
        %v4351 = vunpack.c.l.b16 %v4246
        %v4352 = vunpack.c.h.b16 %v4246
        %v4353 = vunpack.c.l.b16 %v4247
        %v4354 = vunpack.c.h.b16 %v4247
        %v4355 = vunpack.c.l.b16 %v4248
        %v4356 = vunpack.c.h.b16 %v4248
        %v4357 = vunpack.c.l.b16 %v4249
        %v4358 = vunpack.c.h.b16 %v4249
        %v4359 = vunpack.c.l.b16 %v4250
        %v4360 = vunpack.c.h.b16 %v4250
        %v4361 = vunpack.c.l.b16 %v4251
        %v4362 = vunpack.c.h.b16 %v4251
        %v4363 = vunpack.c.l.b16 %v4252
        %v4364 = vunpack.c.h.b16 %v4252
        %v4365 = vunpack.c.l.b16 %v4253
        %v4366 = vunpack.c.h.b16 %v4253
        %v4367 = vpack.c.b16 %v4297, %v4295
        %v4368 = vpack.c.b16 %v4298, %v4296
        %v4369 = vpack.c.b16 %v4301, %v4299
        %v4370 = vpack.c.b16 %v4302, %v4300
        %v4371 = vpack.c.b16 %v4305, %v4303
        %v4372 = vpack.c.b16 %v4306, %v4304
        %v4373 = vpack.c.b16 %v4309, %v4307
        %v4374 = vpack.c.b16 %v4310, %v4308
        %v4375 = vpack.c.b16 %v4313, %v4311
        %v4376 = vpack.c.b16 %v4314, %v4312
        %v4377 = vpack.c.b16 %v4317, %v4315
        %v4378 = vpack.c.b16 %v4318, %v4316
        %v4379 = vpack.c.b16 %v4321, %v4319
        %v4380 = vpack.c.b16 %v4322, %v4320
        %v4381 = vpack.c.b16 %v4325, %v4323
        %v4382 = vpack.c.b16 %v4326, %v4324
        %v4383 = vpack.c.b16 %v4329, %v4327
        %v4384 = vpack.c.b16 %v4330, %v4328
        %v4385 = vpack.c.b16 %v4333, %v4331
        %v4386 = vpack.c.b16 %v4334, %v4332
        %v4387 = vpack.c.b16 %v4337, %v4335
        %v4388 = vpack.c.b16 %v4338, %v4336
        %v4389 = vpack.c.b16 %v4341, %v4339
        %v4390 = vpack.c.b16 %v4342, %v4340
        %v4391 = vpack.c.b16 %v4345, %v4343
        %v4392 = vpack.c.b16 %v4346, %v4344
        %v4393 = vpack.c.b16 %v4349, %v4347
        %v4394 = vpack.c.b16 %v4350, %v4348
        %v4395 = vpack.c.b16 %v4353, %v4351
        %v4396 = vpack.c.b16 %v4354, %v4352
        %v4397 = vpack.c.b16 %v4357, %v4355
        %v4398 = vpack.c.b16 %v4358, %v4356
        %v4399 = vpack.c.b16 %v4361, %v4359
        %v4400 = vpack.c.b16 %v4362, %v4360
        %v4401 = vpack.c.b16 %v4365, %v4363
        %v4402 = vpack.c.b16 %v4366, %v4364
        %v4440 = vsel %vm816, %v4256, 0
        %4442 = vmatpush.bf16.msra.mxu0 %v4381
        %4443 = vmatpush.bf16.msra.mxu0 %v4379
        %4444 = vmatpush.bf16.msra.mxu0 %v4377
        %4445 = vmatpush.bf16.msra.mxu0 %v4375
        %4446 = vmatpush.bf16.msra.mxu0 %v4373
        %4447 = vmatpush.bf16.msra.mxu0 %v4371
        %4448 = vmatpush.bf16.msra.mxu0 %v4369
        %4449 = vmatpush.bf16.msra.mxu0 %v4367
        %4450 = vmatmul.bf16.gmra.mxu0 %v4254
        %v4451 = vpop.f32.mrf.mxu0
        %v4452 = vadd.f32 0.0, %v4451
        %v4453 = vpop.f32.mrf.mxu0
        %4454 = vdwg.mxu0
        %4455 = vmatpush.bf16.msra.mxu0 %v4397
        %4456 = vmatpush.bf16.msra.mxu0 %v4395
        %4457 = vmatpush.bf16.msra.mxu0 %v4393
        %4458 = vmatpush.bf16.msra.mxu0 %v4391
        %4459 = vmatpush.bf16.msra.mxu0 %v4389
        %4460 = vmatpush.bf16.msra.mxu0 %v4387
        %4461 = vmatpush.bf16.msra.mxu0 %v4385
        %4462 = vmatpush.bf16.msra.mxu0 %v4383
        %4463 = vmatmul.bf16.gmra.mxu0 %v4255
        %v4464 = vpop.f32.mrf.mxu0
        %v4465 = vadd.f32 %v4452, %v4464
        %v4466 = vpop.f32.mrf.mxu0
        %4467 = vdwg.mxu0
        %4468 = vmatpush.bf16.msra.mxu0 0
        %4469 = vmatpush.bf16.msra.mxu0 0
        %4470 = vmatpush.bf16.msra.mxu0 0
        %4471 = vmatpush.bf16.msra.mxu0 0
        %4472 = vmatpush.bf16.msra.mxu0 0
        %4473 = vmatpush.bf16.msra.mxu0 0
        %4474 = vmatpush.bf16.msra.mxu0 %v4401
        %4475 = vmatpush.bf16.msra.mxu0 %v4399
        %4476 = vmatmul.bf16.gmra.mxu0 %v4440
        %v4477 = vpop.f32.mrf.mxu0
        %v4478 = vadd.f32 %v4465, %v4477
        %v4479 = vpop.f32.mrf.mxu0
        %4480 = vdwg.mxu0
        %4481 = vmatpush.bf16.msra.mxu0 %v4382
        %4482 = vmatpush.bf16.msra.mxu0 %v4380
        %4483 = vmatpush.bf16.msra.mxu0 %v4378
        %4484 = vmatpush.bf16.msra.mxu0 %v4376
        %4485 = vmatpush.bf16.msra.mxu0 %v4374
        %4486 = vmatpush.bf16.msra.mxu0 %v4372
        %4487 = vmatpush.bf16.msra.mxu0 %v4370
        %4488 = vmatpush.bf16.msra.mxu0 %v4368
        %4489 = vmatmul.bf16.gmra.mxu0 %v4254
        %v4490 = vpop.f32.mrf.mxu0
        %v4491 = vadd.f32 0.0, %v4490
        %v4492 = vpop.f32.mrf.mxu0
        %4493 = vdwg.mxu0
        %4494 = vmatpush.bf16.msra.mxu0 %v4398
        %4495 = vmatpush.bf16.msra.mxu0 %v4396
        %4496 = vmatpush.bf16.msra.mxu0 %v4394
        %4497 = vmatpush.bf16.msra.mxu0 %v4392
        %4498 = vmatpush.bf16.msra.mxu0 %v4390
        %4499 = vmatpush.bf16.msra.mxu0 %v4388
        %4500 = vmatpush.bf16.msra.mxu0 %v4386
        %4501 = vmatpush.bf16.msra.mxu0 %v4384
        %4502 = vmatmul.bf16.gmra.mxu0 %v4255
        %v4503 = vpop.f32.mrf.mxu0
        %v4504 = vadd.f32 %v4491, %v4503
        %v4505 = vpop.f32.mrf.mxu0
        %4506 = vdwg.mxu0
        %4507 = vmatpush.bf16.msra.mxu0 0
        %4508 = vmatpush.bf16.msra.mxu0 0
        %4509 = vmatpush.bf16.msra.mxu0 0
        %4510 = vmatpush.bf16.msra.mxu0 0
        %4511 = vmatpush.bf16.msra.mxu0 0
        %4512 = vmatpush.bf16.msra.mxu0 0
        %4513 = vmatpush.bf16.msra.mxu0 %v4402
        %4514 = vmatpush.bf16.msra.mxu0 %v4400
        %4515 = vmatmul.bf16.gmra.mxu0 %v4440
        %v4516 = vpop.f32.mrf.mxu0
        %v4517 = vadd.f32 %v4504, %v4516
        %v4518 = vpop.f32.mrf.mxu0
        %4519 = vdwg.mxu0
        %v4520 = vadd.f32 %v4215, %v4478
        %v4521 = vadd.f32 %v4216, %v4517
        %s4522 = scalar_lea.vmem [#allocation4], 3744
        %v4523 = vld [vmem:[%s4522] sm:$0xff]
        %v4524 = vld [vmem:[%s4522 + $0x8] sm:$0xff]
        %v4525 = vld [vmem:[%s4522 + $0x10] sm:$0xff]
        %v4526 = vld [vmem:[%s4522 + $0x18] sm:$0xff]
        %v4527 = vld [vmem:[%s4522 + $0x20] sm:$0xff]
        %v4528 = vld [vmem:[%s4522 + $0x28] sm:$0xff]
        %v4529 = vld [vmem:[%s4522 + $0x30] sm:$0xff]
        %v4530 = vld [vmem:[%s4522 + $0x38] sm:$0xff]
        %v4531 = vld [vmem:[%s4522 + $0x40] sm:$0xff]
        %v4532 = vld [vmem:[%s4522 + $0x48] sm:$0xff]
        %v4533 = vld [vmem:[%s4522 + $0x50] sm:$0xff]
        %v4534 = vld [vmem:[%s4522 + $0x58] sm:$0xff]
        %v4535 = vld [vmem:[%s4522 + $0x60] sm:$0xff]
        %v4536 = vld [vmem:[%s4522 + $0x68] sm:$0xff]
        %v4537 = vld [vmem:[%s4522 + $0x70] sm:$0xff]
        %v4538 = vld [vmem:[%s4522 + $0x78] sm:$0xff]
        %v4539 = vld [vmem:[%s4522 + $0x80] sm:$0xff]
        %v4540 = vld [vmem:[%s4522 + $0x88] sm:$0xff]
        %v4541 = vld [vmem:[%s4522 + $0x90] sm:$0xff]
        %v4542 = vld [vmem:[%s4522 + $0x98] sm:$0xff]
        %v4543 = vld [vmem:[%s4522 + $0xa0] sm:$0xff]
        %v4544 = vld [vmem:[%s4522 + $0xa8] sm:$0xff]
        %v4545 = vld [vmem:[%s4522 + $0xb0] sm:$0xff]
        %v4546 = vld [vmem:[%s4522 + $0xb8] sm:$0xff]
        %v4547 = vld [vmem:[%s4522 + $0xc0] sm:$0xff]
        %v4548 = vld [vmem:[%s4522 + $0xc8] sm:$0xff]
        %v4549 = vld [vmem:[%s4522 + $0xd0] sm:$0xff]
        %v4550 = vld [vmem:[%s4522 + $0xd8] sm:$0xff]
        %v4551 = vld [vmem:[%s4522 + $0xe0] sm:$0xff]
        %v4552 = vld [vmem:[%s4522 + $0xe8] sm:$0xff]
        %v4553 = vld [vmem:[%s4522 + $0xf0] sm:$0xff]
        %v4554 = vld [vmem:[%s4522 + $0xf8] sm:$0xff]
        %v4555 = vld [vmem:[%s4522 + $0x100] sm:$0xff]
        %v4556 = vld [vmem:[%s4522 + $0x108] sm:$0xff]
        %v4557 = vld [vmem:[%s4522 + $0x110] sm:$0xff]
        %v4558 = vld [vmem:[%s4522 + $0x118] sm:$0xff]
        %v4559 = vrot.slane %v3332, 2
        %v4560 = vrot.slane %v3335, 2
        %v4561 = vrot.slane %v3337, 2
        %v4600 = vunpack.c.l.b16 %v4523
        %v4601 = vunpack.c.h.b16 %v4523
        %v4602 = vunpack.c.l.b16 %v4524
        %v4603 = vunpack.c.h.b16 %v4524
        %v4604 = vunpack.c.l.b16 %v4525
        %v4605 = vunpack.c.h.b16 %v4525
        %v4606 = vunpack.c.l.b16 %v4526
        %v4607 = vunpack.c.h.b16 %v4526
        %v4608 = vunpack.c.l.b16 %v4527
        %v4609 = vunpack.c.h.b16 %v4527
        %v4610 = vunpack.c.l.b16 %v4528
        %v4611 = vunpack.c.h.b16 %v4528
        %v4612 = vunpack.c.l.b16 %v4529
        %v4613 = vunpack.c.h.b16 %v4529
        %v4614 = vunpack.c.l.b16 %v4530
        %v4615 = vunpack.c.h.b16 %v4530
        %v4616 = vunpack.c.l.b16 %v4531
        %v4617 = vunpack.c.h.b16 %v4531
        %v4618 = vunpack.c.l.b16 %v4532
        %v4619 = vunpack.c.h.b16 %v4532
        %v4620 = vunpack.c.l.b16 %v4533
        %v4621 = vunpack.c.h.b16 %v4533
        %v4622 = vunpack.c.l.b16 %v4534
        %v4623 = vunpack.c.h.b16 %v4534
        %v4624 = vunpack.c.l.b16 %v4535
        %v4625 = vunpack.c.h.b16 %v4535
        %v4626 = vunpack.c.l.b16 %v4536
        %v4627 = vunpack.c.h.b16 %v4536
        %v4628 = vunpack.c.l.b16 %v4537
        %v4629 = vunpack.c.h.b16 %v4537
        %v4630 = vunpack.c.l.b16 %v4538
        %v4631 = vunpack.c.h.b16 %v4538
        %v4632 = vunpack.c.l.b16 %v4539
        %v4633 = vunpack.c.h.b16 %v4539
        %v4634 = vunpack.c.l.b16 %v4540
        %v4635 = vunpack.c.h.b16 %v4540
        %v4636 = vunpack.c.l.b16 %v4541
        %v4637 = vunpack.c.h.b16 %v4541
        %v4638 = vunpack.c.l.b16 %v4542
        %v4639 = vunpack.c.h.b16 %v4542
        %v4640 = vunpack.c.l.b16 %v4543
        %v4641 = vunpack.c.h.b16 %v4543
        %v4642 = vunpack.c.l.b16 %v4544
        %v4643 = vunpack.c.h.b16 %v4544
        %v4644 = vunpack.c.l.b16 %v4545
        %v4645 = vunpack.c.h.b16 %v4545
        %v4646 = vunpack.c.l.b16 %v4546
        %v4647 = vunpack.c.h.b16 %v4546
        %v4648 = vunpack.c.l.b16 %v4547
        %v4649 = vunpack.c.h.b16 %v4547
        %v4650 = vunpack.c.l.b16 %v4548
        %v4651 = vunpack.c.h.b16 %v4548
        %v4652 = vunpack.c.l.b16 %v4549
        %v4653 = vunpack.c.h.b16 %v4549
        %v4654 = vunpack.c.l.b16 %v4550
        %v4655 = vunpack.c.h.b16 %v4550
        %v4656 = vunpack.c.l.b16 %v4551
        %v4657 = vunpack.c.h.b16 %v4551
        %v4658 = vunpack.c.l.b16 %v4552
        %v4659 = vunpack.c.h.b16 %v4552
        %v4660 = vunpack.c.l.b16 %v4553
        %v4661 = vunpack.c.h.b16 %v4553
        %v4662 = vunpack.c.l.b16 %v4554
        %v4663 = vunpack.c.h.b16 %v4554
        %v4664 = vunpack.c.l.b16 %v4555
        %v4665 = vunpack.c.h.b16 %v4555
        %v4666 = vunpack.c.l.b16 %v4556
        %v4667 = vunpack.c.h.b16 %v4556
        %v4668 = vunpack.c.l.b16 %v4557
        %v4669 = vunpack.c.h.b16 %v4557
        %v4670 = vunpack.c.l.b16 %v4558
        %v4671 = vunpack.c.h.b16 %v4558
        %v4672 = vpack.c.b16 %v4602, %v4600
        %v4673 = vpack.c.b16 %v4603, %v4601
        %v4674 = vpack.c.b16 %v4606, %v4604
        %v4675 = vpack.c.b16 %v4607, %v4605
        %v4676 = vpack.c.b16 %v4610, %v4608
        %v4677 = vpack.c.b16 %v4611, %v4609
        %v4678 = vpack.c.b16 %v4614, %v4612
        %v4679 = vpack.c.b16 %v4615, %v4613
        %v4680 = vpack.c.b16 %v4618, %v4616
        %v4681 = vpack.c.b16 %v4619, %v4617
        %v4682 = vpack.c.b16 %v4622, %v4620
        %v4683 = vpack.c.b16 %v4623, %v4621
        %v4684 = vpack.c.b16 %v4626, %v4624
        %v4685 = vpack.c.b16 %v4627, %v4625
        %v4686 = vpack.c.b16 %v4630, %v4628
        %v4687 = vpack.c.b16 %v4631, %v4629
        %v4688 = vpack.c.b16 %v4634, %v4632
        %v4689 = vpack.c.b16 %v4635, %v4633
        %v4690 = vpack.c.b16 %v4638, %v4636
        %v4691 = vpack.c.b16 %v4639, %v4637
        %v4692 = vpack.c.b16 %v4642, %v4640
        %v4693 = vpack.c.b16 %v4643, %v4641
        %v4694 = vpack.c.b16 %v4646, %v4644
        %v4695 = vpack.c.b16 %v4647, %v4645
        %v4696 = vpack.c.b16 %v4650, %v4648
        %v4697 = vpack.c.b16 %v4651, %v4649
        %v4698 = vpack.c.b16 %v4654, %v4652
        %v4699 = vpack.c.b16 %v4655, %v4653
        %v4700 = vpack.c.b16 %v4658, %v4656
        %v4701 = vpack.c.b16 %v4659, %v4657
        %v4702 = vpack.c.b16 %v4662, %v4660
        %v4703 = vpack.c.b16 %v4663, %v4661
        %v4704 = vpack.c.b16 %v4666, %v4664
        %v4705 = vpack.c.b16 %v4667, %v4665
        %v4706 = vpack.c.b16 %v4670, %v4668
        %v4707 = vpack.c.b16 %v4671, %v4669
        %v4745 = vsel %vm816, %v4561, 0
        %4747 = vmatpush.bf16.msra.mxu0 %v4686
        %4748 = vmatpush.bf16.msra.mxu0 %v4684
        %4749 = vmatpush.bf16.msra.mxu0 %v4682
        %4750 = vmatpush.bf16.msra.mxu0 %v4680
        %4751 = vmatpush.bf16.msra.mxu0 %v4678
        %4752 = vmatpush.bf16.msra.mxu0 %v4676
        %4753 = vmatpush.bf16.msra.mxu0 %v4674
        %4754 = vmatpush.bf16.msra.mxu0 %v4672
        %4755 = vmatmul.bf16.gmra.mxu0 %v4559
        %v4756 = vpop.f32.mrf.mxu0
        %v4757 = vadd.f32 0.0, %v4756
        %v4758 = vpop.f32.mrf.mxu0
        %4759 = vdwg.mxu0
        %4760 = vmatpush.bf16.msra.mxu0 %v4702
        %4761 = vmatpush.bf16.msra.mxu0 %v4700
        %4762 = vmatpush.bf16.msra.mxu0 %v4698
        %4763 = vmatpush.bf16.msra.mxu0 %v4696
        %4764 = vmatpush.bf16.msra.mxu0 %v4694
        %4765 = vmatpush.bf16.msra.mxu0 %v4692
        %4766 = vmatpush.bf16.msra.mxu0 %v4690
        %4767 = vmatpush.bf16.msra.mxu0 %v4688
        %4768 = vmatmul.bf16.gmra.mxu0 %v4560
        %v4769 = vpop.f32.mrf.mxu0
        %v4770 = vadd.f32 %v4757, %v4769
        %v4771 = vpop.f32.mrf.mxu0
        %4772 = vdwg.mxu0
        %4773 = vmatpush.bf16.msra.mxu0 0
        %4774 = vmatpush.bf16.msra.mxu0 0
        %4775 = vmatpush.bf16.msra.mxu0 0
        %4776 = vmatpush.bf16.msra.mxu0 0
        %4777 = vmatpush.bf16.msra.mxu0 0
        %4778 = vmatpush.bf16.msra.mxu0 0
        %4779 = vmatpush.bf16.msra.mxu0 %v4706
        %4780 = vmatpush.bf16.msra.mxu0 %v4704
        %4781 = vmatmul.bf16.gmra.mxu0 %v4745
        %v4782 = vpop.f32.mrf.mxu0
        %v4783 = vadd.f32 %v4770, %v4782
        %v4784 = vpop.f32.mrf.mxu0
        %4785 = vdwg.mxu0
        %4786 = vmatpush.bf16.msra.mxu0 %v4687
        %4787 = vmatpush.bf16.msra.mxu0 %v4685
        %4788 = vmatpush.bf16.msra.mxu0 %v4683
        %4789 = vmatpush.bf16.msra.mxu0 %v4681
        %4790 = vmatpush.bf16.msra.mxu0 %v4679
        %4791 = vmatpush.bf16.msra.mxu0 %v4677
        %4792 = vmatpush.bf16.msra.mxu0 %v4675
        %4793 = vmatpush.bf16.msra.mxu0 %v4673
        %4794 = vmatmul.bf16.gmra.mxu0 %v4559
        %v4795 = vpop.f32.mrf.mxu0
        %v4796 = vadd.f32 0.0, %v4795
        %v4797 = vpop.f32.mrf.mxu0
        %4798 = vdwg.mxu0
        %4799 = vmatpush.bf16.msra.mxu0 %v4703
        %4800 = vmatpush.bf16.msra.mxu0 %v4701
        %4801 = vmatpush.bf16.msra.mxu0 %v4699
        %4802 = vmatpush.bf16.msra.mxu0 %v4697
        %4803 = vmatpush.bf16.msra.mxu0 %v4695
        %4804 = vmatpush.bf16.msra.mxu0 %v4693
        %4805 = vmatpush.bf16.msra.mxu0 %v4691
        %4806 = vmatpush.bf16.msra.mxu0 %v4689
        %4807 = vmatmul.bf16.gmra.mxu0 %v4560
        %v4808 = vpop.f32.mrf.mxu0
        %v4809 = vadd.f32 %v4796, %v4808
        %v4810 = vpop.f32.mrf.mxu0
        %4811 = vdwg.mxu0
        %4812 = vmatpush.bf16.msra.mxu0 0
        %4813 = vmatpush.bf16.msra.mxu0 0
        %4814 = vmatpush.bf16.msra.mxu0 0
        %4815 = vmatpush.bf16.msra.mxu0 0
        %4816 = vmatpush.bf16.msra.mxu0 0
        %4817 = vmatpush.bf16.msra.mxu0 0
        %4818 = vmatpush.bf16.msra.mxu0 %v4707
        %4819 = vmatpush.bf16.msra.mxu0 %v4705
        %4820 = vmatmul.bf16.gmra.mxu0 %v4745
        %v4821 = vpop.f32.mrf.mxu0
        %v4822 = vadd.f32 %v4809, %v4821
        %v4823 = vpop.f32.mrf.mxu0
        %4824 = vdwg.mxu0
        %v4825 = vadd.f32 %v4520, %v4783
        %v4826 = vadd.f32 %v4521, %v4822
        %s4827 = scalar_lea.vmem [#allocation4], 4032
        %v4828 = vld [vmem:[%s4827] sm:$0xff]
        %v4829 = vld [vmem:[%s4827 + $0x8] sm:$0xff]
        %v4830 = vld [vmem:[%s4827 + $0x10] sm:$0xff]
        %v4831 = vld [vmem:[%s4827 + $0x18] sm:$0xff]
        %v4832 = vld [vmem:[%s4827 + $0x20] sm:$0xff]
        %v4833 = vld [vmem:[%s4827 + $0x28] sm:$0xff]
        %v4834 = vld [vmem:[%s4827 + $0x30] sm:$0xff]
        %v4835 = vld [vmem:[%s4827 + $0x38] sm:$0xff]
        %v4836 = vld [vmem:[%s4827 + $0x40] sm:$0xff]
        %v4837 = vld [vmem:[%s4827 + $0x48] sm:$0xff]
        %v4838 = vld [vmem:[%s4827 + $0x50] sm:$0xff]
        %v4839 = vld [vmem:[%s4827 + $0x58] sm:$0xff]
        %v4840 = vld [vmem:[%s4827 + $0x60] sm:$0xff]
        %v4841 = vld [vmem:[%s4827 + $0x68] sm:$0xff]
        %v4842 = vld [vmem:[%s4827 + $0x70] sm:$0xff]
        %v4843 = vld [vmem:[%s4827 + $0x78] sm:$0xff]
        %v4844 = vld [vmem:[%s4827 + $0x80] sm:$0xff]
        %v4845 = vld [vmem:[%s4827 + $0x88] sm:$0xff]
        %v4846 = vld [vmem:[%s4827 + $0x90] sm:$0xff]
        %v4847 = vld [vmem:[%s4827 + $0x98] sm:$0xff]
        %v4848 = vld [vmem:[%s4827 + $0xa0] sm:$0xff]
        %v4849 = vld [vmem:[%s4827 + $0xa8] sm:$0xff]
        %v4850 = vld [vmem:[%s4827 + $0xb0] sm:$0xff]
        %v4851 = vld [vmem:[%s4827 + $0xb8] sm:$0xff]
        %v4852 = vld [vmem:[%s4827 + $0xc0] sm:$0xff]
        %v4853 = vld [vmem:[%s4827 + $0xc8] sm:$0xff]
        %v4854 = vld [vmem:[%s4827 + $0xd0] sm:$0xff]
        %v4855 = vld [vmem:[%s4827 + $0xd8] sm:$0xff]
        %v4856 = vld [vmem:[%s4827 + $0xe0] sm:$0xff]
        %v4857 = vld [vmem:[%s4827 + $0xe8] sm:$0xff]
        %v4858 = vld [vmem:[%s4827 + $0xf0] sm:$0xff]
        %v4859 = vld [vmem:[%s4827 + $0xf8] sm:$0xff]
        %v4860 = vld [vmem:[%s4827 + $0x100] sm:$0xff]
        %v4861 = vld [vmem:[%s4827 + $0x108] sm:$0xff]
        %v4862 = vld [vmem:[%s4827 + $0x110] sm:$0xff]
        %v4863 = vld [vmem:[%s4827 + $0x118] sm:$0xff]
        %v4864 = vrot.slane %v2991, 3
        %v4865 = vrot.slane %v2992, 3
        %v4866 = vrot.slane %v2993, 3
        %v4905 = vunpack.c.l.b16 %v4828
        %v4906 = vunpack.c.h.b16 %v4828
        %v4907 = vunpack.c.l.b16 %v4829
        %v4908 = vunpack.c.h.b16 %v4829
        %v4909 = vunpack.c.l.b16 %v4830
        %v4910 = vunpack.c.h.b16 %v4830
        %v4911 = vunpack.c.l.b16 %v4831
        %v4912 = vunpack.c.h.b16 %v4831
        %v4913 = vunpack.c.l.b16 %v4832
        %v4914 = vunpack.c.h.b16 %v4832
        %v4915 = vunpack.c.l.b16 %v4833
        %v4916 = vunpack.c.h.b16 %v4833
        %v4917 = vunpack.c.l.b16 %v4834
        %v4918 = vunpack.c.h.b16 %v4834
        %v4919 = vunpack.c.l.b16 %v4835
        %v4920 = vunpack.c.h.b16 %v4835
        %v4921 = vunpack.c.l.b16 %v4836
        %v4922 = vunpack.c.h.b16 %v4836
        %v4923 = vunpack.c.l.b16 %v4837
        %v4924 = vunpack.c.h.b16 %v4837
        %v4925 = vunpack.c.l.b16 %v4838
        %v4926 = vunpack.c.h.b16 %v4838
        %v4927 = vunpack.c.l.b16 %v4839
        %v4928 = vunpack.c.h.b16 %v4839
        %v4929 = vunpack.c.l.b16 %v4840
        %v4930 = vunpack.c.h.b16 %v4840
        %v4931 = vunpack.c.l.b16 %v4841
        %v4932 = vunpack.c.h.b16 %v4841
        %v4933 = vunpack.c.l.b16 %v4842
        %v4934 = vunpack.c.h.b16 %v4842
        %v4935 = vunpack.c.l.b16 %v4843
        %v4936 = vunpack.c.h.b16 %v4843
        %v4937 = vunpack.c.l.b16 %v4844
        %v4938 = vunpack.c.h.b16 %v4844
        %v4939 = vunpack.c.l.b16 %v4845
        %v4940 = vunpack.c.h.b16 %v4845
        %v4941 = vunpack.c.l.b16 %v4846
        %v4942 = vunpack.c.h.b16 %v4846
        %v4943 = vunpack.c.l.b16 %v4847
        %v4944 = vunpack.c.h.b16 %v4847
        %v4945 = vunpack.c.l.b16 %v4848
        %v4946 = vunpack.c.h.b16 %v4848
        %v4947 = vunpack.c.l.b16 %v4849
        %v4948 = vunpack.c.h.b16 %v4849
        %v4949 = vunpack.c.l.b16 %v4850
        %v4950 = vunpack.c.h.b16 %v4850
        %v4951 = vunpack.c.l.b16 %v4851
        %v4952 = vunpack.c.h.b16 %v4851
        %v4953 = vunpack.c.l.b16 %v4852
        %v4954 = vunpack.c.h.b16 %v4852
        %v4955 = vunpack.c.l.b16 %v4853
        %v4956 = vunpack.c.h.b16 %v4853
        %v4957 = vunpack.c.l.b16 %v4854
        %v4958 = vunpack.c.h.b16 %v4854
        %v4959 = vunpack.c.l.b16 %v4855
        %v4960 = vunpack.c.h.b16 %v4855
        %v4961 = vunpack.c.l.b16 %v4856
        %v4962 = vunpack.c.h.b16 %v4856
        %v4963 = vunpack.c.l.b16 %v4857
        %v4964 = vunpack.c.h.b16 %v4857
        %v4965 = vunpack.c.l.b16 %v4858
        %v4966 = vunpack.c.h.b16 %v4858
        %v4967 = vunpack.c.l.b16 %v4859
        %v4968 = vunpack.c.h.b16 %v4859
        %v4969 = vunpack.c.l.b16 %v4860
        %v4970 = vunpack.c.h.b16 %v4860
        %v4971 = vunpack.c.l.b16 %v4861
        %v4972 = vunpack.c.h.b16 %v4861
        %v4973 = vunpack.c.l.b16 %v4862
        %v4974 = vunpack.c.h.b16 %v4862
        %v4975 = vunpack.c.l.b16 %v4863
        %v4976 = vunpack.c.h.b16 %v4863
        %v4977 = vpack.c.b16 %v4907, %v4905
        %v4978 = vpack.c.b16 %v4908, %v4906
        %v4979 = vpack.c.b16 %v4911, %v4909
        %v4980 = vpack.c.b16 %v4912, %v4910
        %v4981 = vpack.c.b16 %v4915, %v4913
        %v4982 = vpack.c.b16 %v4916, %v4914
        %v4983 = vpack.c.b16 %v4919, %v4917
        %v4984 = vpack.c.b16 %v4920, %v4918
        %v4985 = vpack.c.b16 %v4923, %v4921
        %v4986 = vpack.c.b16 %v4924, %v4922
        %v4987 = vpack.c.b16 %v4927, %v4925
        %v4988 = vpack.c.b16 %v4928, %v4926
        %v4989 = vpack.c.b16 %v4931, %v4929
        %v4990 = vpack.c.b16 %v4932, %v4930
        %v4991 = vpack.c.b16 %v4935, %v4933
        %v4992 = vpack.c.b16 %v4936, %v4934
        %v4993 = vpack.c.b16 %v4939, %v4937
        %v4994 = vpack.c.b16 %v4940, %v4938
        %v4995 = vpack.c.b16 %v4943, %v4941
        %v4996 = vpack.c.b16 %v4944, %v4942
        %v4997 = vpack.c.b16 %v4947, %v4945
        %v4998 = vpack.c.b16 %v4948, %v4946
        %v4999 = vpack.c.b16 %v4951, %v4949
        %v5000 = vpack.c.b16 %v4952, %v4950
        %v5001 = vpack.c.b16 %v4955, %v4953
        %v5002 = vpack.c.b16 %v4956, %v4954
        %v5003 = vpack.c.b16 %v4959, %v4957
        %v5004 = vpack.c.b16 %v4960, %v4958
        %v5005 = vpack.c.b16 %v4963, %v4961
        %v5006 = vpack.c.b16 %v4964, %v4962
        %v5007 = vpack.c.b16 %v4967, %v4965
        %v5008 = vpack.c.b16 %v4968, %v4966
        %v5009 = vpack.c.b16 %v4971, %v4969
        %v5010 = vpack.c.b16 %v4972, %v4970
        %v5011 = vpack.c.b16 %v4975, %v4973
        %v5012 = vpack.c.b16 %v4976, %v4974
        %v5050 = vsel %vm816, %v4866, 0
        %5052 = vmatpush.bf16.msra.mxu0 %v4991
        %5053 = vmatpush.bf16.msra.mxu0 %v4989
        %5054 = vmatpush.bf16.msra.mxu0 %v4987
        %5055 = vmatpush.bf16.msra.mxu0 %v4985
        %5056 = vmatpush.bf16.msra.mxu0 %v4983
        %5057 = vmatpush.bf16.msra.mxu0 %v4981
        %5058 = vmatpush.bf16.msra.mxu0 %v4979
        %5059 = vmatpush.bf16.msra.mxu0 %v4977
        %5060 = vmatmul.bf16.gmra.mxu0 %v4864
        %v5061 = vpop.f32.mrf.mxu0
        %v5062 = vadd.f32 0.0, %v5061
        %v5063 = vpop.f32.mrf.mxu0
        %5064 = vdwg.mxu0
        %5065 = vmatpush.bf16.msra.mxu0 %v5007
        %5066 = vmatpush.bf16.msra.mxu0 %v5005
        %5067 = vmatpush.bf16.msra.mxu0 %v5003
        %5068 = vmatpush.bf16.msra.mxu0 %v5001
        %5069 = vmatpush.bf16.msra.mxu0 %v4999
        %5070 = vmatpush.bf16.msra.mxu0 %v4997
        %5071 = vmatpush.bf16.msra.mxu0 %v4995
        %5072 = vmatpush.bf16.msra.mxu0 %v4993
        %5073 = vmatmul.bf16.gmra.mxu0 %v4865
        %v5074 = vpop.f32.mrf.mxu0
        %v5075 = vadd.f32 %v5062, %v5074
        %v5076 = vpop.f32.mrf.mxu0
        %5077 = vdwg.mxu0
        %5078 = vmatpush.bf16.msra.mxu0 0
        %5079 = vmatpush.bf16.msra.mxu0 0
        %5080 = vmatpush.bf16.msra.mxu0 0
        %5081 = vmatpush.bf16.msra.mxu0 0
        %5082 = vmatpush.bf16.msra.mxu0 0
        %5083 = vmatpush.bf16.msra.mxu0 0
        %5084 = vmatpush.bf16.msra.mxu0 %v5011
        %5085 = vmatpush.bf16.msra.mxu0 %v5009
        %5086 = vmatmul.bf16.gmra.mxu0 %v5050
        %v5087 = vpop.f32.mrf.mxu0
        %v5088 = vadd.f32 %v5075, %v5087
        %v5089 = vpop.f32.mrf.mxu0
        %5090 = vdwg.mxu0
        %5091 = vmatpush.bf16.msra.mxu0 %v4992
        %5092 = vmatpush.bf16.msra.mxu0 %v4990
        %5093 = vmatpush.bf16.msra.mxu0 %v4988
        %5094 = vmatpush.bf16.msra.mxu0 %v4986
        %5095 = vmatpush.bf16.msra.mxu0 %v4984
        %5096 = vmatpush.bf16.msra.mxu0 %v4982
        %5097 = vmatpush.bf16.msra.mxu0 %v4980
        %5098 = vmatpush.bf16.msra.mxu0 %v4978
        %5099 = vmatmul.bf16.gmra.mxu0 %v4864
        %v5100 = vpop.f32.mrf.mxu0
        %v5101 = vadd.f32 0.0, %v5100
        %v5102 = vpop.f32.mrf.mxu0
        %5103 = vdwg.mxu0
        %5104 = vmatpush.bf16.msra.mxu0 %v5008
        %5105 = vmatpush.bf16.msra.mxu0 %v5006
        %5106 = vmatpush.bf16.msra.mxu0 %v5004
        %5107 = vmatpush.bf16.msra.mxu0 %v5002
        %5108 = vmatpush.bf16.msra.mxu0 %v5000
        %5109 = vmatpush.bf16.msra.mxu0 %v4998
        %5110 = vmatpush.bf16.msra.mxu0 %v4996
        %5111 = vmatpush.bf16.msra.mxu0 %v4994
        %5112 = vmatmul.bf16.gmra.mxu0 %v4865
        %v5113 = vpop.f32.mrf.mxu0
        %v5114 = vadd.f32 %v5101, %v5113
        %v5115 = vpop.f32.mrf.mxu0
        %5116 = vdwg.mxu0
        %5117 = vmatpush.bf16.msra.mxu0 0
        %5118 = vmatpush.bf16.msra.mxu0 0
        %5119 = vmatpush.bf16.msra.mxu0 0
        %5120 = vmatpush.bf16.msra.mxu0 0
        %5121 = vmatpush.bf16.msra.mxu0 0
        %5122 = vmatpush.bf16.msra.mxu0 0
        %5123 = vmatpush.bf16.msra.mxu0 %v5012
        %5124 = vmatpush.bf16.msra.mxu0 %v5010
        %5125 = vmatmul.bf16.gmra.mxu0 %v5050
        %v5126 = vpop.f32.mrf.mxu0
        %v5127 = vadd.f32 %v5114, %v5126
        %v5128 = vpop.f32.mrf.mxu0
        %5129 = vdwg.mxu0
        %v5130 = vadd.f32 %v4825, %v5088
        %v5131 = vadd.f32 %v4826, %v5127
        %s5132 = scalar_lea.vmem [#allocation4], 4320
        %v5133 = vld [vmem:[%s5132] sm:$0xff]
        %v5134 = vld [vmem:[%s5132 + $0x8] sm:$0xff]
        %v5135 = vld [vmem:[%s5132 + $0x10] sm:$0xff]
        %v5136 = vld [vmem:[%s5132 + $0x18] sm:$0xff]
        %v5137 = vld [vmem:[%s5132 + $0x20] sm:$0xff]
        %v5138 = vld [vmem:[%s5132 + $0x28] sm:$0xff]
        %v5139 = vld [vmem:[%s5132 + $0x30] sm:$0xff]
        %v5140 = vld [vmem:[%s5132 + $0x38] sm:$0xff]
        %v5141 = vld [vmem:[%s5132 + $0x40] sm:$0xff]
        %v5142 = vld [vmem:[%s5132 + $0x48] sm:$0xff]
        %v5143 = vld [vmem:[%s5132 + $0x50] sm:$0xff]
        %v5144 = vld [vmem:[%s5132 + $0x58] sm:$0xff]
        %v5145 = vld [vmem:[%s5132 + $0x60] sm:$0xff]
        %v5146 = vld [vmem:[%s5132 + $0x68] sm:$0xff]
        %v5147 = vld [vmem:[%s5132 + $0x70] sm:$0xff]
        %v5148 = vld [vmem:[%s5132 + $0x78] sm:$0xff]
        %v5149 = vld [vmem:[%s5132 + $0x80] sm:$0xff]
        %v5150 = vld [vmem:[%s5132 + $0x88] sm:$0xff]
        %v5151 = vld [vmem:[%s5132 + $0x90] sm:$0xff]
        %v5152 = vld [vmem:[%s5132 + $0x98] sm:$0xff]
        %v5153 = vld [vmem:[%s5132 + $0xa0] sm:$0xff]
        %v5154 = vld [vmem:[%s5132 + $0xa8] sm:$0xff]
        %v5155 = vld [vmem:[%s5132 + $0xb0] sm:$0xff]
        %v5156 = vld [vmem:[%s5132 + $0xb8] sm:$0xff]
        %v5157 = vld [vmem:[%s5132 + $0xc0] sm:$0xff]
        %v5158 = vld [vmem:[%s5132 + $0xc8] sm:$0xff]
        %v5159 = vld [vmem:[%s5132 + $0xd0] sm:$0xff]
        %v5160 = vld [vmem:[%s5132 + $0xd8] sm:$0xff]
        %v5161 = vld [vmem:[%s5132 + $0xe0] sm:$0xff]
        %v5162 = vld [vmem:[%s5132 + $0xe8] sm:$0xff]
        %v5163 = vld [vmem:[%s5132 + $0xf0] sm:$0xff]
        %v5164 = vld [vmem:[%s5132 + $0xf8] sm:$0xff]
        %v5165 = vld [vmem:[%s5132 + $0x100] sm:$0xff]
        %v5166 = vld [vmem:[%s5132 + $0x108] sm:$0xff]
        %v5167 = vld [vmem:[%s5132 + $0x110] sm:$0xff]
        %v5168 = vld [vmem:[%s5132 + $0x118] sm:$0xff]
        %v5169 = vrot.slane %v3332, 3
        %v5170 = vrot.slane %v3335, 3
        %v5171 = vrot.slane %v3337, 3
        %v5210 = vunpack.c.l.b16 %v5133
        %v5211 = vunpack.c.h.b16 %v5133
        %v5212 = vunpack.c.l.b16 %v5134
        %v5213 = vunpack.c.h.b16 %v5134
        %v5214 = vunpack.c.l.b16 %v5135
        %v5215 = vunpack.c.h.b16 %v5135
        %v5216 = vunpack.c.l.b16 %v5136
        %v5217 = vunpack.c.h.b16 %v5136
        %v5218 = vunpack.c.l.b16 %v5137
        %v5219 = vunpack.c.h.b16 %v5137
        %v5220 = vunpack.c.l.b16 %v5138
        %v5221 = vunpack.c.h.b16 %v5138
        %v5222 = vunpack.c.l.b16 %v5139
        %v5223 = vunpack.c.h.b16 %v5139
        %v5224 = vunpack.c.l.b16 %v5140
        %v5225 = vunpack.c.h.b16 %v5140
        %v5226 = vunpack.c.l.b16 %v5141
        %v5227 = vunpack.c.h.b16 %v5141
        %v5228 = vunpack.c.l.b16 %v5142
        %v5229 = vunpack.c.h.b16 %v5142
        %v5230 = vunpack.c.l.b16 %v5143
        %v5231 = vunpack.c.h.b16 %v5143
        %v5232 = vunpack.c.l.b16 %v5144
        %v5233 = vunpack.c.h.b16 %v5144
        %v5234 = vunpack.c.l.b16 %v5145
        %v5235 = vunpack.c.h.b16 %v5145
        %v5236 = vunpack.c.l.b16 %v5146
        %v5237 = vunpack.c.h.b16 %v5146
        %v5238 = vunpack.c.l.b16 %v5147
        %v5239 = vunpack.c.h.b16 %v5147
        %v5240 = vunpack.c.l.b16 %v5148
        %v5241 = vunpack.c.h.b16 %v5148
        %v5242 = vunpack.c.l.b16 %v5149
        %v5243 = vunpack.c.h.b16 %v5149
        %v5244 = vunpack.c.l.b16 %v5150
        %v5245 = vunpack.c.h.b16 %v5150
        %v5246 = vunpack.c.l.b16 %v5151
        %v5247 = vunpack.c.h.b16 %v5151
        %v5248 = vunpack.c.l.b16 %v5152
        %v5249 = vunpack.c.h.b16 %v5152
        %v5250 = vunpack.c.l.b16 %v5153
        %v5251 = vunpack.c.h.b16 %v5153
        %v5252 = vunpack.c.l.b16 %v5154
        %v5253 = vunpack.c.h.b16 %v5154
        %v5254 = vunpack.c.l.b16 %v5155
        %v5255 = vunpack.c.h.b16 %v5155
        %v5256 = vunpack.c.l.b16 %v5156
        %v5257 = vunpack.c.h.b16 %v5156
        %v5258 = vunpack.c.l.b16 %v5157
        %v5259 = vunpack.c.h.b16 %v5157
        %v5260 = vunpack.c.l.b16 %v5158
        %v5261 = vunpack.c.h.b16 %v5158
        %v5262 = vunpack.c.l.b16 %v5159
        %v5263 = vunpack.c.h.b16 %v5159
        %v5264 = vunpack.c.l.b16 %v5160
        %v5265 = vunpack.c.h.b16 %v5160
        %v5266 = vunpack.c.l.b16 %v5161
        %v5267 = vunpack.c.h.b16 %v5161
        %v5268 = vunpack.c.l.b16 %v5162
        %v5269 = vunpack.c.h.b16 %v5162
        %v5270 = vunpack.c.l.b16 %v5163
        %v5271 = vunpack.c.h.b16 %v5163
        %v5272 = vunpack.c.l.b16 %v5164
        %v5273 = vunpack.c.h.b16 %v5164
        %v5274 = vunpack.c.l.b16 %v5165
        %v5275 = vunpack.c.h.b16 %v5165
        %v5276 = vunpack.c.l.b16 %v5166
        %v5277 = vunpack.c.h.b16 %v5166
        %v5278 = vunpack.c.l.b16 %v5167
        %v5279 = vunpack.c.h.b16 %v5167
        %v5280 = vunpack.c.l.b16 %v5168
        %v5281 = vunpack.c.h.b16 %v5168
        %v5282 = vpack.c.b16 %v5212, %v5210
        %v5283 = vpack.c.b16 %v5213, %v5211
        %v5284 = vpack.c.b16 %v5216, %v5214
        %v5285 = vpack.c.b16 %v5217, %v5215
        %v5286 = vpack.c.b16 %v5220, %v5218
        %v5287 = vpack.c.b16 %v5221, %v5219
        %v5288 = vpack.c.b16 %v5224, %v5222
        %v5289 = vpack.c.b16 %v5225, %v5223
        %v5290 = vpack.c.b16 %v5228, %v5226
        %v5291 = vpack.c.b16 %v5229, %v5227
        %v5292 = vpack.c.b16 %v5232, %v5230
        %v5293 = vpack.c.b16 %v5233, %v5231
        %v5294 = vpack.c.b16 %v5236, %v5234
        %v5295 = vpack.c.b16 %v5237, %v5235
        %v5296 = vpack.c.b16 %v5240, %v5238
        %v5297 = vpack.c.b16 %v5241, %v5239
        %v5298 = vpack.c.b16 %v5244, %v5242
        %v5299 = vpack.c.b16 %v5245, %v5243
        %v5300 = vpack.c.b16 %v5248, %v5246
        %v5301 = vpack.c.b16 %v5249, %v5247
        %v5302 = vpack.c.b16 %v5252, %v5250
        %v5303 = vpack.c.b16 %v5253, %v5251
        %v5304 = vpack.c.b16 %v5256, %v5254
        %v5305 = vpack.c.b16 %v5257, %v5255
        %v5306 = vpack.c.b16 %v5260, %v5258
        %v5307 = vpack.c.b16 %v5261, %v5259
        %v5308 = vpack.c.b16 %v5264, %v5262
        %v5309 = vpack.c.b16 %v5265, %v5263
        %v5310 = vpack.c.b16 %v5268, %v5266
        %v5311 = vpack.c.b16 %v5269, %v5267
        %v5312 = vpack.c.b16 %v5272, %v5270
        %v5313 = vpack.c.b16 %v5273, %v5271
        %v5314 = vpack.c.b16 %v5276, %v5274
        %v5315 = vpack.c.b16 %v5277, %v5275
        %v5316 = vpack.c.b16 %v5280, %v5278
        %v5317 = vpack.c.b16 %v5281, %v5279
        %v5355 = vsel %vm816, %v5171, 0
        %5357 = vmatpush.bf16.msra.mxu0 %v5296
        %5358 = vmatpush.bf16.msra.mxu0 %v5294
        %5359 = vmatpush.bf16.msra.mxu0 %v5292
        %5360 = vmatpush.bf16.msra.mxu0 %v5290
        %5361 = vmatpush.bf16.msra.mxu0 %v5288
        %5362 = vmatpush.bf16.msra.mxu0 %v5286
        %5363 = vmatpush.bf16.msra.mxu0 %v5284
        %5364 = vmatpush.bf16.msra.mxu0 %v5282
        %5365 = vmatmul.bf16.gmra.mxu0 %v5169
        %v5366 = vpop.f32.mrf.mxu0
        %v5367 = vadd.f32 0.0, %v5366
        %v5368 = vpop.f32.mrf.mxu0
        %5369 = vdwg.mxu0
        %5370 = vmatpush.bf16.msra.mxu0 %v5312
        %5371 = vmatpush.bf16.msra.mxu0 %v5310
        %5372 = vmatpush.bf16.msra.mxu0 %v5308
        %5373 = vmatpush.bf16.msra.mxu0 %v5306
        %5374 = vmatpush.bf16.msra.mxu0 %v5304
        %5375 = vmatpush.bf16.msra.mxu0 %v5302
        %5376 = vmatpush.bf16.msra.mxu0 %v5300
        %5377 = vmatpush.bf16.msra.mxu0 %v5298
        %5378 = vmatmul.bf16.gmra.mxu0 %v5170
        %v5379 = vpop.f32.mrf.mxu0
        %v5380 = vadd.f32 %v5367, %v5379
        %v5381 = vpop.f32.mrf.mxu0
        %5382 = vdwg.mxu0
        %5383 = vmatpush.bf16.msra.mxu0 0
        %5384 = vmatpush.bf16.msra.mxu0 0
        %5385 = vmatpush.bf16.msra.mxu0 0
        %5386 = vmatpush.bf16.msra.mxu0 0
        %5387 = vmatpush.bf16.msra.mxu0 0
        %5388 = vmatpush.bf16.msra.mxu0 0
        %5389 = vmatpush.bf16.msra.mxu0 %v5316
        %5390 = vmatpush.bf16.msra.mxu0 %v5314
        %5391 = vmatmul.bf16.gmra.mxu0 %v5355
        %v5392 = vpop.f32.mrf.mxu0
        %v5393 = vadd.f32 %v5380, %v5392
        %v5394 = vpop.f32.mrf.mxu0
        %5395 = vdwg.mxu0
        %5396 = vmatpush.bf16.msra.mxu0 %v5297
        %5397 = vmatpush.bf16.msra.mxu0 %v5295
        %5398 = vmatpush.bf16.msra.mxu0 %v5293
        %5399 = vmatpush.bf16.msra.mxu0 %v5291
        %5400 = vmatpush.bf16.msra.mxu0 %v5289
        %5401 = vmatpush.bf16.msra.mxu0 %v5287
        %5402 = vmatpush.bf16.msra.mxu0 %v5285
        %5403 = vmatpush.bf16.msra.mxu0 %v5283
        %5404 = vmatmul.bf16.gmra.mxu0 %v5169
        %v5405 = vpop.f32.mrf.mxu0
        %v5406 = vadd.f32 0.0, %v5405
        %v5407 = vpop.f32.mrf.mxu0
        %5408 = vdwg.mxu0
        %5409 = vmatpush.bf16.msra.mxu0 %v5313
        %5410 = vmatpush.bf16.msra.mxu0 %v5311
        %5411 = vmatpush.bf16.msra.mxu0 %v5309
        %5412 = vmatpush.bf16.msra.mxu0 %v5307
        %5413 = vmatpush.bf16.msra.mxu0 %v5305
        %5414 = vmatpush.bf16.msra.mxu0 %v5303
        %5415 = vmatpush.bf16.msra.mxu0 %v5301
        %5416 = vmatpush.bf16.msra.mxu0 %v5299
        %5417 = vmatmul.bf16.gmra.mxu0 %v5170
        %v5418 = vpop.f32.mrf.mxu0
        %v5419 = vadd.f32 %v5406, %v5418
        %v5420 = vpop.f32.mrf.mxu0
        %5421 = vdwg.mxu0
        %5422 = vmatpush.bf16.msra.mxu0 0
        %5423 = vmatpush.bf16.msra.mxu0 0
        %5424 = vmatpush.bf16.msra.mxu0 0
        %5425 = vmatpush.bf16.msra.mxu0 0
        %5426 = vmatpush.bf16.msra.mxu0 0
        %5427 = vmatpush.bf16.msra.mxu0 0
        %5428 = vmatpush.bf16.msra.mxu0 %v5317
        %5429 = vmatpush.bf16.msra.mxu0 %v5315
        %5430 = vmatmul.bf16.gmra.mxu0 %v5355
        %v5431 = vpop.f32.mrf.mxu0
        %v5432 = vadd.f32 %v5419, %v5431
        %v5433 = vpop.f32.mrf.mxu0
        %5434 = vdwg.mxu0
        %v5435 = vadd.f32 %v5130, %v5393
        %v5436 = vadd.f32 %v5131, %v5432
        %v5437 = vld [vmem:[#allocation6] sm:$0x3]
        %v5439 = vperm.slane %v5437, 0
        %v5440 = vperm.slane %v5437, 1
        %v5443 = vadd.f32 %v5435, %v5439
        %v5444 = vadd.f32 %v5436, %v5440
        %v5447 = vrot.slane %v5444, 7
        %vm5448 = vcmask 1040384
        %v5449 = vsel %vm5448, %v5443, %v5447
        %v5451 = vlaneseq
        %vm5452 = vcmp.ge.s32.totalorder %v5451, 0
        %vm5453 = vcmp.lt.s32.totalorder %v5451, 256
        %vm5454 = vmand %vm5452, %vm5453
        %5455 = vst.msk [vmem:[%s344] sm:$0x3] %vm5454, %v5449
        %v5456 = vand.u32 2147483647, %v5444
        %v5457 = vsub.f32 0.0, %v5456
        %v5458 = vmul.f32 %v5457, 1.442695
        %v5459 = vpow.pop %v5458
        %v5460 = vadd.f32 %v5459, 1.0
        %v5461 = vlog2.pop %v5460
        %v5462 = vmul.f32 %v5461, 0.6931472
        %v5463 = vmul.f32 -0.5, %v5459
        %v5464 = vadd.f32 %v5463, 1.0
        %v5465 = vmul.f32 %v5464, %v5459
        %v5466 = vand.u32 2147483647, %v5459
        %vm5467 = vcmp.lt.f32.partialorder %v5466, 0.0004427343
        %v5468 = vsel %vm5467, %v5465, %v5462
        %v5469 = vmax.f32 %v5444, 0.0
        %v5470 = vadd.f32 %v5468, %v5469
        %v5471 = vadd.f32 %v5470, 0.01
        %v5472 = vld [vmem:[%s340] sm:$0x1]
        %v5473 = vmul.f32 %v5471, %v5472
        %v5474 = vadd.f32 %v5443, %v5473
        %5475 = vst [vmem:[%s347] sm:$0x1] %v5474
        %p5476 = scmp.lt.s32.totalorder %s21, 1
        %s5477 = scalar_select %p5476, %s21, 1
        %s5478 = smul.addr %s5477, 2
        %s5479 = scalar_lea.vmem %s6, %s5478
        %p5480 = scmp.lt.s32.totalorder %s21, 1
        %s5481 = scalar_select %p5480, %s21, 1
        %s5482 = scalar_lea.vmem %s7, %s5481
        // Predicated region
        $region57: #{vae_forward.2} parent=43 // pred_check
          %p5483 = pneg %p175
        $region58: #{vae_forward.2} parent=43 // pred_check_branch
          %5485 = sbr.rel (%p5483) target = $region60
        $region59: #{vae_forward.2} parent=43 // pred_region
          _
        $region60: #{vae_forward.2} parent=43 // pred_fallthru
          _
        // Predicated region
        $region61: #{vae_forward.2} parent=43 // pred_check
          %p5486 = pneg %p201
        $region62: #{vae_forward.2} parent=43 // pred_check_branch
          %5488 = sbr.rel (%p5486) target = $region64
        $region63: #{vae_forward.2} parent=43 // pred_region
          _
        $region64: #{vae_forward.2} parent=43 // pred_fallthru
          _
      $region44: #{vae_forward.2} parent=5 // pred_fallthru
        _
      %p5489 = scmp.le.s32.totalorder 2, %s16
      // Predicated region
      $region65: #{vae_forward.2} parent=5 // pred_check
        %p5490 = pneg %p5489
      $region66: #{vae_forward.2} parent=5 // pred_check_branch
        %5492 = sbr.rel (%p5490) target = $region68
      $region67: #{vae_forward.2} parent=5 // pred_region
        %s5493 = ssub.s32 %s16, 2
        // Predicated region
        $region69: #{vae_forward.2} parent=67 // pred_check
          %p5494 = pneg %p181
        $region70: #{vae_forward.2} parent=67 // pred_check_branch
          %5496 = sbr.rel (%p5494) target = $region72
        $region71: #{vae_forward.2} parent=67 // pred_region
          %p5497 = scmp.lt.s32.totalorder %s22, 1
          %s5498 = scalar_select %p5497, %s22, 1
          %s5499 = smul.addr %s5498, 2
          %s5500 = scalar_lea.vmem %s6, %s5499
        $region72: #{vae_forward.2} parent=67 // pred_fallthru
          _
        // Predicated region
        $region73: #{vae_forward.2} parent=67 // pred_check
          %p5501 = pneg %p207
        $region74: #{vae_forward.2} parent=67 // pred_check_branch
          %5503 = sbr.rel (%p5501) target = $region76
        $region75: #{vae_forward.2} parent=67 // pred_region
          %p5504 = scmp.lt.s32.totalorder %s22, 1
          %s5505 = scalar_select %p5504, %s22, 1
          %s5506 = scalar_lea.vmem %s7, %s5505
        $region76: #{vae_forward.2} parent=67 // pred_fallthru
          _
      $region68: #{vae_forward.2} parent=5 // pred_fallthru
        _
    $region6: #{vae_forward.2} parent=1 // loop_footer
      %s20 = sadd.s32 1, %s16
    $region7: #{vae_forward.2} parent=1 // loop_footer_branch
      %15 = sbr.rel target = $region3
    $region8: #{vae_forward.2} parent=1 // loop_exit
      _
    %5507 = vsyncpa [#allocation3], 1
    %s5508 = scalar_lea.sflag [#allocation3], 1
    %5509 = vsyncpa %s5508, 1
    %5510 = vsyncpa [#allocation5], 1

</llo_original>
